<compile_context>
chip_gen: v7x
topology: tpu7x:2x2x1
jax: 0.10.0
libtpu: 0.0.40
codegen_flags: <defaults>
</compile_context>

<pallas_src>
import jax
import jax.numpy as jnp
from jax.experimental import pallas as pl
from jax.experimental.pallas import tpu as pltpu

# instant-ngp style spatial hashing primes, wrapped to int32 two's complement so int32
# multiplies reproduce uint32 wrap-around arithmetic.
_PRIMES_U32 = (1, 2654435761, 805459861)
_PRIMES_I32 = tuple(((p + 2**31) % 2**32) - 2**31 for p in _PRIMES_U32)


def _default_tile_m():
    # v6e MXU is 2x256x256 -> prefer M=256; v5e (4x128x128) and v7x (64 MiB VMEM) -> 128.
    try:
        kind = jax.devices()[0].device_kind.lower()
    except Exception:
        return 128
    return 256 if "v6" in kind else 128


def make_mix_kernel(res3, res2, t3_size, t2_size, n_features, ste_binary, tile_m):
    """Fused kernel: encodes a (3, tile_m) tile of points with all four hash grids."""
    l3, l2 = len(res3), len(res2)
    out_dim = (l3 + 3 * l2) * n_features
    gather_dtype = jnp.bfloat16 if ste_binary else jnp.float32

    def kernel(x_ref, t3_ref, txy_ref, txz_ref, tyz_ref, o_ref):
        # x_ref: (3, tile_m) f32 (points on the lane axis); tables: (L, F, T) pre-binarized.
        x = jnp.clip(x_ref[...].astype(jnp.float32), 0.0, 1.0)

        # Hoisted iotas, one per distinct table size (sublane axis = table row id).
        iotas = {}
        for tsize in sorted({t3_size, t2_size}):
            iotas[tsize] = jax.lax.broadcasted_iota(jnp.int32, (tsize, tile_m), 0)

        def encode(dims, resolutions, tbl_ref, table_size):
            ndim = len(dims)
            iota = iotas[table_size]
            feats = []
            for lvl in range(len(resolutions)):
                res = int(resolutions[lvl])
                scale = float(res - 1)
                g0, frac = [], []
                for d in dims:
                    pos = x[d:d + 1, :] * scale            # (1, tile_m), lane-major
                    f0 = jnp.floor(pos)
                    frac.append(pos - f0)
                    g0.append(f0.astype(jnp.int32))
                dense = (res ** ndim) <= table_size        # static per-level decision
                # Accumulate the weighted one-hot over all corners -> ONE matmul per level.
                acc = jnp.zeros((table_size, tile_m), jnp.float32)
                for corner in range(2 ** ndim):
                    w = None
                    idx = None
                    stride = 1
                    for j in range(ndim):
                        off = (corner >> j) & 1
                        cd = jnp.minimum(g0[j] + off, res - 1)      # (1, tile_m) int32
                        wd = frac[j] if off else (1.0 - frac[j])    # (1, tile_m) f32
                        w = wd if w is None else w * wd
                        if dense:
                            term = cd * stride
                            idx = term if idx is None else idx + term
                            stride *= res
                        else:
                            term = cd * _PRIMES_I32[j]
                            idx = term if idx is None else idx ^ term
                    idx = idx & (table_size - 1)                    # (1, tile_m)
                    # broadcast over sublanes: (1,tile_m) vs (T,tile_m)
                    acc = acc + jnp.where(idx == iota, w, 0.0)
                tbl = tbl_ref[lvl]                                  # (F, T), pre-binarized
                emb = jnp.dot(tbl, acc.astype(gather_dtype),
                              preferred_element_type=jnp.float32)   # (F, tile_m)
                feats.append(emb)
            return feats

        outs = []
        outs += encode((0, 1, 2), res3, t3_ref, t3_size)   # xyz
        outs += encode((0, 1), res2, txy_ref, t2_size)     # xy
        outs += encode((0, 2), res2, txz_ref, t2_size)     # xz
        outs += encode((1, 2), res2, tyz_ref, t2_size)     # yz
        # Single lane-dense store of the whole (out_dim, tile_m) block.
        o_ref[...] = jnp.concatenate(outs, axis=0).astype(o_ref.dtype)

    return kernel, out_dim


def mix_hashgrid_encode(x, table_xyz, table_xy, table_xz, table_yz,
                        res3, res2, *, ste_binary, tile_m=None):
    """x: (N, 3) in [0,1]; tables: (L, T, F). Returns (N, out_dim) float32."""
    if tile_m is None:
        tile_m = _default_tile_m()
    n = x.shape[0]
    l3, t3_size, n_features = table_xyz.shape
    l2, t2_size, _ = table_xy.shape

    def prep(t):
        # Binarize (STE_binary forward) ONCE outside the kernel, transpose to (L, F, T) so
        # the in-kernel matmul needs no transpose, and store bf16 (exact for +-1 values).
        if ste_binary:
            t = jnp.sign(t)
        t = jnp.transpose(t, (0, 2, 1))
        return t.astype(jnp.bfloat16 if ste_binary else jnp.float32)

    t3, txy, txz, tyz = prep(table_xyz), prep(table_xy), prep(table_xz), prep(table_yz)

    n_pad = int(pl.cdiv(n, tile_m)) * tile_m
    xt = jnp.transpose(x.astype(jnp.float32), (1, 0))       # (3, N): points on lane axis
    if n_pad != n:
        xt = jnp.pad(xt, ((0, 0), (0, n_pad - n)))

    kernel, out_dim = make_mix_kernel(tuple(res3), tuple(res2), t3_size, t2_size,
                                      n_features, ste_binary, tile_m)

    out_t = pl.pallas_call(
        kernel,
        out_shape=jax.ShapeDtypeStruct((out_dim, n_pad), jnp.float32),
        grid_spec=pltpu.PrefetchScalarGridSpec(
            num_scalar_prefetch=0,
            grid=(n_pad // tile_m,),
            in_specs=[
                pl.BlockSpec((3, tile_m), lambda i: (0, i)),
                # Tables: whole array, constant index -> fetched once, reused every step.
                pl.BlockSpec(t3.shape, lambda i: (0, 0, 0)),
                pl.BlockSpec(txy.shape, lambda i: (0, 0, 0)),
                pl.BlockSpec(txz.shape, lambda i: (0, 0, 0)),
                pl.BlockSpec(tyz.shape, lambda i: (0, 0, 0)),
            ],
            out_specs=pl.BlockSpec((out_dim, tile_m), lambda i: (0, i)),
        ),
        compiler_params=pltpu.CompilerParams(dimension_semantics=("parallel",)),
    )(xt, t3, txy, txz, tyz)

    return jnp.transpose(out_t[:, :n], (1, 0))               # (N, out_dim)


class MixEncoding3D2D:
    """JAX/Pallas port of mix_3D2D_encoding: one 3D hash grid + three 2D plane grids."""

    def __init__(self, key, n_features, resolutions_list, log2_hashmap_size,
                 resolutions_list_2D, log2_hashmap_size_2D, ste_binary=True):
        self.ste_binary = ste_binary
        self.res3 = tuple(int(r) for r in resolutions_list)
        self.res2 = tuple(int(r) for r in resolutions_list_2D)
        t3 = 2 ** log2_hashmap_size
        t2 = 2 ** log2_hashmap_size_2D
        l3, l2 = len(self.res3), len(self.res2)
        std = 1e-4  # torch-ngp GridEncoder init: embeddings ~ U(-1e-4, 1e-4)
        k0, k1, k2, k3 = jax.random.split(key, 4)
        self.table_xyz = jax.random.uniform(k0, (l3, t3, n_features), jnp.float32, -std, std)
        self.table_xy = jax.random.uniform(k1, (l2, t2, n_features), jnp.float32, -std, std)
        self.table_xz = jax.random.uniform(k2, (l2, t2, n_features), jnp.float32, -std, std)
        self.table_yz = jax.random.uniform(k3, (l2, t2, n_features), jnp.float32, -std, std)
        self.output_dim = (l3 + 3 * l2) * n_features

    def __call__(self, x, tile_m=None):
        return mix_hashgrid_encode(x, self.table_xyz, self.table_xy, self.table_xz,
                                   self.table_yz, self.res3, self.res2,
                                   ste_binary=self.ste_binary, tile_m=tile_m)


# ------------------------- pure-JAX reference (for verification) -------------------------
def reference_mix_encoding(x, tables, res3, res2, ste_binary):
    table_xyz, table_xy, table_xz, table_yz = tables

    def enc(coords, table, resolutions):
        L, T, F = table.shape
        tbl = jnp.sign(table) if ste_binary else table
        n, D = coords.shape
        c = jnp.clip(coords.astype(jnp.float32), 0.0, 1.0)
        outs = []
        for lvl in range(L):
            res = int(resolutions[lvl])
            scale = float(res - 1)
            pos = c * scale
            g0 = jnp.floor(pos).astype(jnp.int32)
            frac = pos - jnp.floor(pos)
            dense = (res ** D) <= T
            feat = jnp.zeros((n, F), jnp.float32)
            for corner in range(2 ** D):
                w = jnp.ones((n,), jnp.float32)
                idx = jnp.zeros((n,), jnp.int32)
                stride = 1
                for d in range(D):
                    off = (corner >> d) & 1
                    cd = jnp.minimum(g0[:, d] + off, res - 1)
                    wd = frac[:, d] if off else (1.0 - frac[:, d])
                    w = w * wd
                    if dense:
                        idx = idx + cd * stride
                        stride *= res
                    else:
                        idx = idx ^ (cd * _PRIMES_I32[d])
                idx = idx & (T - 1)
                feat = feat + w[:, None] * tbl[lvl][idx]
            outs.append(feat)
        return jnp.concatenate(outs, axis=-1)

    xx, yy, zz = x[:, 0:1], x[:, 1:2], x[:, 2:3]
    return jnp.concatenate([
        enc(x, table_xyz, res3),
        enc(jnp.concatenate([xx, yy], -1), table_xy, res2),
        enc(jnp.concatenate([xx, zz], -1), table_xz, res2),
        enc(jnp.concatenate([yy, zz], -1), table_yz, res2),
    ], axis=-1)


if __name__ == "__main__":
    key = jax.random.PRNGKey(0)
    k_x, k_p = jax.random.split(key)

    N = 200                                   # exercises the tail-padding path
    x = jax.random.uniform(k_x, (N, 3), jnp.float32)  # points in [0, 1]^3

    enc = MixEncoding3D2D(
        k_p,
        n_features=4,
        resolutions_list=(4, 8),
        log2_hashmap_size=8,
        resolutions_list_2D=(8, 16),
        log2_hashmap_size_2D=8,
        ste_binary=True,
    )

    out = jax.block_until_ready(enc(x))
    assert out.shape == (N, enc.output_dim), (out.shape, enc.output_dim)
    assert bool(jnp.all(jnp.isfinite(out)))

    ref = jax.block_until_ready(reference_mix_encoding(
        x, (enc.table_xyz, enc.table_xy, enc.table_xz, enc.table_yz),
        enc.res3, enc.res2, enc.ste_binary))
    max_err = float(jnp.max(jnp.abs(out - ref)))
    assert max_err < 5e-2, f"max abs err vs reference: {max_err}"

    print("KERNEL_OK")
</pallas_src>

<mosaic_0001>
module attributes {stable_mosaic.version = 11 : i64} {
  func.func @kernel(%arg0: i32, %arg1: memref<3x128xf32, #tpu.memory_space<vmem>>, %arg2: memref<2x4x256xbf16, #tpu.memory_space<vmem>>, %arg3: memref<2x4x256xbf16, #tpu.memory_space<vmem>>, %arg4: memref<2x4x256xbf16, #tpu.memory_space<vmem>>, %arg5: memref<2x4x256xbf16, #tpu.memory_space<vmem>>, %arg6: memref<32x128xf32, #tpu.memory_space<vmem>>) attributes {dimension_semantics = [#tpu.dimension_semantics<parallel>], iteration_bounds = array<i64: 2>, scalar_prefetch = 0 : i64, scratch_operands = 0 : i64, tpu.core_type = #tpu.core_type<tc>, window_params = [{transform_indices = @transform_0, window_bounds = array<i64: 3, 128>}, {pipeline_mode = #tpu.pipeline_mode<synchronous>, transform_indices = @transform_1, window_bounds = array<i64: 2, 4, 256>}, {pipeline_mode = #tpu.pipeline_mode<synchronous>, transform_indices = @transform_2, window_bounds = array<i64: 2, 4, 256>}, {pipeline_mode = #tpu.pipeline_mode<synchronous>, transform_indices = @transform_3, window_bounds = array<i64: 2, 4, 256>}, {pipeline_mode = #tpu.pipeline_mode<synchronous>, transform_indices = @transform_4, window_bounds = array<i64: 2, 4, 256>}, {transform_indices = @transform_5, window_bounds = array<i64: 32, 128>}]} {
    %c0 = arith.constant 0 : index
    %c0_0 = arith.constant 0 : index
    %0 = vector.load %arg1[%c0, %c0_0] : memref<3x128xf32, #tpu.memory_space<vmem>>, vector<3x128xf32>
    %cst = arith.constant 0.000000e+00 : f32
    %cst_1 = arith.constant 1.000000e+00 : f32
    %1 = vector.broadcast %cst : f32 to vector<3x128xf32>
    %2 = arith.maximumf %1, %0 : vector<3x128xf32>
    %3 = vector.broadcast %cst_1 : f32 to vector<3x128xf32>
    %4 = arith.minimumf %3, %2 : vector<3x128xf32>
    %5 = tpu.iota {dimensions = array<i32: 0>} : vector<256x128xi32>
    %6 = vector.extract_strided_slice %4 {offsets = [0, 0], sizes = [1, 128], strides = [1, 1]} : vector<3x128xf32> to vector<1x128xf32>
    %cst_2 = arith.constant 3.000000e+00 : f32
    %7 = vector.broadcast %cst_2 : f32 to vector<1x128xf32>
    %8 = arith.mulf %6, %7 : vector<1x128xf32>
    %9 = math.floor %8 : vector<1x128xf32>
    %10 = arith.subf %8, %9 : vector<1x128xf32>
    %11 = arith.fptosi %9 : vector<1x128xf32> to vector<1x128xi32>
    %12 = vector.extract_strided_slice %4 {offsets = [1, 0], sizes = [1, 128], strides = [1, 1]} : vector<3x128xf32> to vector<1x128xf32>
    %cst_3 = arith.constant 3.000000e+00 : f32
    %13 = vector.broadcast %cst_3 : f32 to vector<1x128xf32>
    %14 = arith.mulf %12, %13 : vector<1x128xf32>
    %15 = math.floor %14 : vector<1x128xf32>
    %16 = arith.subf %14, %15 : vector<1x128xf32>
    %17 = arith.fptosi %15 : vector<1x128xf32> to vector<1x128xi32>
    %18 = vector.extract_strided_slice %4 {offsets = [2, 0], sizes = [1, 128], strides = [1, 1]} : vector<3x128xf32> to vector<1x128xf32>
    %cst_4 = arith.constant 3.000000e+00 : f32
    %19 = vector.broadcast %cst_4 : f32 to vector<1x128xf32>
    %20 = arith.mulf %18, %19 : vector<1x128xf32>
    %21 = math.floor %20 : vector<1x128xf32>
    %22 = arith.subf %20, %21 : vector<1x128xf32>
    %23 = arith.fptosi %21 : vector<1x128xf32> to vector<1x128xi32>
    %cst_5 = arith.constant 0.000000e+00 : f32
    %24 = vector.broadcast %cst_5 : f32 to vector<256x128xf32>
    %c0_i32 = arith.constant 0 : i32
    %25 = vector.broadcast %c0_i32 : i32 to vector<1x128xi32>
    %26 = arith.addi %11, %25 : vector<1x128xi32>
    %c3_i32 = arith.constant 3 : i32
    %27 = vector.broadcast %c3_i32 : i32 to vector<1x128xi32>
    %28 = arith.minsi %26, %27 : vector<1x128xi32>
    %cst_6 = arith.constant 1.000000e+00 : f32
    %29 = vector.broadcast %cst_6 : f32 to vector<1x128xf32>
    %30 = arith.subf %29, %10 : vector<1x128xf32>
    %c1_i32 = arith.constant 1 : i32
    %31 = vector.broadcast %c1_i32 : i32 to vector<1x128xi32>
    %32 = arith.muli %28, %31 : vector<1x128xi32>
    %c0_i32_7 = arith.constant 0 : i32
    %33 = vector.broadcast %c0_i32_7 : i32 to vector<1x128xi32>
    %34 = arith.addi %17, %33 : vector<1x128xi32>
    %c3_i32_8 = arith.constant 3 : i32
    %35 = vector.broadcast %c3_i32_8 : i32 to vector<1x128xi32>
    %36 = arith.minsi %34, %35 : vector<1x128xi32>
    %cst_9 = arith.constant 1.000000e+00 : f32
    %37 = vector.broadcast %cst_9 : f32 to vector<1x128xf32>
    %38 = arith.subf %37, %16 : vector<1x128xf32>
    %39 = arith.mulf %30, %38 : vector<1x128xf32>
    %c4_i32 = arith.constant 4 : i32
    %40 = vector.broadcast %c4_i32 : i32 to vector<1x128xi32>
    %41 = arith.muli %36, %40 : vector<1x128xi32>
    %42 = arith.addi %32, %41 : vector<1x128xi32>
    %c0_i32_10 = arith.constant 0 : i32
    %43 = vector.broadcast %c0_i32_10 : i32 to vector<1x128xi32>
    %44 = arith.addi %23, %43 : vector<1x128xi32>
    %c3_i32_11 = arith.constant 3 : i32
    %45 = vector.broadcast %c3_i32_11 : i32 to vector<1x128xi32>
    %46 = arith.minsi %44, %45 : vector<1x128xi32>
    %cst_12 = arith.constant 1.000000e+00 : f32
    %47 = vector.broadcast %cst_12 : f32 to vector<1x128xf32>
    %48 = arith.subf %47, %22 : vector<1x128xf32>
    %49 = arith.mulf %39, %48 : vector<1x128xf32>
    %c16_i32 = arith.constant 16 : i32
    %50 = vector.broadcast %c16_i32 : i32 to vector<1x128xi32>
    %51 = arith.muli %46, %50 : vector<1x128xi32>
    %52 = arith.addi %42, %51 : vector<1x128xi32>
    %c255_i32 = arith.constant 255 : i32
    %53 = vector.broadcast %c255_i32 : i32 to vector<1x128xi32>
    %54 = arith.andi %52, %53 : vector<1x128xi32>
    %55 = vector.broadcast %54 : vector<1x128xi32> to vector<256x128xi32>
    %56 = arith.cmpi eq, %55, %5 : vector<256x128xi32>
    %cst_13 = arith.constant 0.000000e+00 : f32
    %57 = vector.shape_cast %49 : vector<1x128xf32> to vector<1x128xf32>
    %58 = vector.broadcast %57 : vector<1x128xf32> to vector<256x128xf32>
    %59 = vector.broadcast %cst_13 : f32 to vector<256x128xf32>
    %60 = arith.select %56, %58, %59 : vector<256x128xi1>, vector<256x128xf32>
    %61 = arith.addf %24, %60 : vector<256x128xf32>
    %c1_i32_14 = arith.constant 1 : i32
    %62 = vector.broadcast %c1_i32_14 : i32 to vector<1x128xi32>
    %63 = arith.addi %11, %62 : vector<1x128xi32>
    %c3_i32_15 = arith.constant 3 : i32
    %64 = vector.broadcast %c3_i32_15 : i32 to vector<1x128xi32>
    %65 = arith.minsi %63, %64 : vector<1x128xi32>
    %c1_i32_16 = arith.constant 1 : i32
    %66 = vector.broadcast %c1_i32_16 : i32 to vector<1x128xi32>
    %67 = arith.muli %65, %66 : vector<1x128xi32>
    %c0_i32_17 = arith.constant 0 : i32
    %68 = vector.broadcast %c0_i32_17 : i32 to vector<1x128xi32>
    %69 = arith.addi %17, %68 : vector<1x128xi32>
    %c3_i32_18 = arith.constant 3 : i32
    %70 = vector.broadcast %c3_i32_18 : i32 to vector<1x128xi32>
    %71 = arith.minsi %69, %70 : vector<1x128xi32>
    %cst_19 = arith.constant 1.000000e+00 : f32
    %72 = vector.broadcast %cst_19 : f32 to vector<1x128xf32>
    %73 = arith.subf %72, %16 : vector<1x128xf32>
    %74 = arith.mulf %10, %73 : vector<1x128xf32>
    %c4_i32_20 = arith.constant 4 : i32
    %75 = vector.broadcast %c4_i32_20 : i32 to vector<1x128xi32>
    %76 = arith.muli %71, %75 : vector<1x128xi32>
    %77 = arith.addi %67, %76 : vector<1x128xi32>
    %c0_i32_21 = arith.constant 0 : i32
    %78 = vector.broadcast %c0_i32_21 : i32 to vector<1x128xi32>
    %79 = arith.addi %23, %78 : vector<1x128xi32>
    %c3_i32_22 = arith.constant 3 : i32
    %80 = vector.broadcast %c3_i32_22 : i32 to vector<1x128xi32>
    %81 = arith.minsi %79, %80 : vector<1x128xi32>
    %cst_23 = arith.constant 1.000000e+00 : f32
    %82 = vector.broadcast %cst_23 : f32 to vector<1x128xf32>
    %83 = arith.subf %82, %22 : vector<1x128xf32>
    %84 = arith.mulf %74, %83 : vector<1x128xf32>
    %c16_i32_24 = arith.constant 16 : i32
    %85 = vector.broadcast %c16_i32_24 : i32 to vector<1x128xi32>
    %86 = arith.muli %81, %85 : vector<1x128xi32>
    %87 = arith.addi %77, %86 : vector<1x128xi32>
    %c255_i32_25 = arith.constant 255 : i32
    %88 = vector.broadcast %c255_i32_25 : i32 to vector<1x128xi32>
    %89 = arith.andi %87, %88 : vector<1x128xi32>
    %90 = vector.broadcast %89 : vector<1x128xi32> to vector<256x128xi32>
    %91 = arith.cmpi eq, %90, %5 : vector<256x128xi32>
    %cst_26 = arith.constant 0.000000e+00 : f32
    %92 = vector.shape_cast %84 : vector<1x128xf32> to vector<1x128xf32>
    %93 = vector.broadcast %92 : vector<1x128xf32> to vector<256x128xf32>
    %94 = vector.broadcast %cst_26 : f32 to vector<256x128xf32>
    %95 = arith.select %91, %93, %94 : vector<256x128xi1>, vector<256x128xf32>
    %96 = arith.addf %61, %95 : vector<256x128xf32>
    %c0_i32_27 = arith.constant 0 : i32
    %97 = vector.broadcast %c0_i32_27 : i32 to vector<1x128xi32>
    %98 = arith.addi %11, %97 : vector<1x128xi32>
    %c3_i32_28 = arith.constant 3 : i32
    %99 = vector.broadcast %c3_i32_28 : i32 to vector<1x128xi32>
    %100 = arith.minsi %98, %99 : vector<1x128xi32>
    %cst_29 = arith.constant 1.000000e+00 : f32
    %101 = vector.broadcast %cst_29 : f32 to vector<1x128xf32>
    %102 = arith.subf %101, %10 : vector<1x128xf32>
    %c1_i32_30 = arith.constant 1 : i32
    %103 = vector.broadcast %c1_i32_30 : i32 to vector<1x128xi32>
    %104 = arith.muli %100, %103 : vector<1x128xi32>
    %c1_i32_31 = arith.constant 1 : i32
    %105 = vector.broadcast %c1_i32_31 : i32 to vector<1x128xi32>
    %106 = arith.addi %17, %105 : vector<1x128xi32>
    %c3_i32_32 = arith.constant 3 : i32
    %107 = vector.broadcast %c3_i32_32 : i32 to vector<1x128xi32>
    %108 = arith.minsi %106, %107 : vector<1x128xi32>
    %109 = arith.mulf %102, %16 : vector<1x128xf32>
    %c4_i32_33 = arith.constant 4 : i32
    %110 = vector.broadcast %c4_i32_33 : i32 to vector<1x128xi32>
    %111 = arith.muli %108, %110 : vector<1x128xi32>
    %112 = arith.addi %104, %111 : vector<1x128xi32>
    %c0_i32_34 = arith.constant 0 : i32
    %113 = vector.broadcast %c0_i32_34 : i32 to vector<1x128xi32>
    %114 = arith.addi %23, %113 : vector<1x128xi32>
    %c3_i32_35 = arith.constant 3 : i32
    %115 = vector.broadcast %c3_i32_35 : i32 to vector<1x128xi32>
    %116 = arith.minsi %114, %115 : vector<1x128xi32>
    %cst_36 = arith.constant 1.000000e+00 : f32
    %117 = vector.broadcast %cst_36 : f32 to vector<1x128xf32>
    %118 = arith.subf %117, %22 : vector<1x128xf32>
    %119 = arith.mulf %109, %118 : vector<1x128xf32>
    %c16_i32_37 = arith.constant 16 : i32
    %120 = vector.broadcast %c16_i32_37 : i32 to vector<1x128xi32>
    %121 = arith.muli %116, %120 : vector<1x128xi32>
    %122 = arith.addi %112, %121 : vector<1x128xi32>
    %c255_i32_38 = arith.constant 255 : i32
    %123 = vector.broadcast %c255_i32_38 : i32 to vector<1x128xi32>
    %124 = arith.andi %122, %123 : vector<1x128xi32>
    %125 = vector.broadcast %124 : vector<1x128xi32> to vector<256x128xi32>
    %126 = arith.cmpi eq, %125, %5 : vector<256x128xi32>
    %cst_39 = arith.constant 0.000000e+00 : f32
    %127 = vector.shape_cast %119 : vector<1x128xf32> to vector<1x128xf32>
    %128 = vector.broadcast %127 : vector<1x128xf32> to vector<256x128xf32>
    %129 = vector.broadcast %cst_39 : f32 to vector<256x128xf32>
    %130 = arith.select %126, %128, %129 : vector<256x128xi1>, vector<256x128xf32>
    %131 = arith.addf %96, %130 : vector<256x128xf32>
    %c1_i32_40 = arith.constant 1 : i32
    %132 = vector.broadcast %c1_i32_40 : i32 to vector<1x128xi32>
    %133 = arith.addi %11, %132 : vector<1x128xi32>
    %c3_i32_41 = arith.constant 3 : i32
    %134 = vector.broadcast %c3_i32_41 : i32 to vector<1x128xi32>
    %135 = arith.minsi %133, %134 : vector<1x128xi32>
    %c1_i32_42 = arith.constant 1 : i32
    %136 = vector.broadcast %c1_i32_42 : i32 to vector<1x128xi32>
    %137 = arith.muli %135, %136 : vector<1x128xi32>
    %c1_i32_43 = arith.constant 1 : i32
    %138 = vector.broadcast %c1_i32_43 : i32 to vector<1x128xi32>
    %139 = arith.addi %17, %138 : vector<1x128xi32>
    %c3_i32_44 = arith.constant 3 : i32
    %140 = vector.broadcast %c3_i32_44 : i32 to vector<1x128xi32>
    %141 = arith.minsi %139, %140 : vector<1x128xi32>
    %142 = arith.mulf %10, %16 : vector<1x128xf32>
    %c4_i32_45 = arith.constant 4 : i32
    %143 = vector.broadcast %c4_i32_45 : i32 to vector<1x128xi32>
    %144 = arith.muli %141, %143 : vector<1x128xi32>
    %145 = arith.addi %137, %144 : vector<1x128xi32>
    %c0_i32_46 = arith.constant 0 : i32
    %146 = vector.broadcast %c0_i32_46 : i32 to vector<1x128xi32>
    %147 = arith.addi %23, %146 : vector<1x128xi32>
    %c3_i32_47 = arith.constant 3 : i32
    %148 = vector.broadcast %c3_i32_47 : i32 to vector<1x128xi32>
    %149 = arith.minsi %147, %148 : vector<1x128xi32>
    %cst_48 = arith.constant 1.000000e+00 : f32
    %150 = vector.broadcast %cst_48 : f32 to vector<1x128xf32>
    %151 = arith.subf %150, %22 : vector<1x128xf32>
    %152 = arith.mulf %142, %151 : vector<1x128xf32>
    %c16_i32_49 = arith.constant 16 : i32
    %153 = vector.broadcast %c16_i32_49 : i32 to vector<1x128xi32>
    %154 = arith.muli %149, %153 : vector<1x128xi32>
    %155 = arith.addi %145, %154 : vector<1x128xi32>
    %c255_i32_50 = arith.constant 255 : i32
    %156 = vector.broadcast %c255_i32_50 : i32 to vector<1x128xi32>
    %157 = arith.andi %155, %156 : vector<1x128xi32>
    %158 = vector.broadcast %157 : vector<1x128xi32> to vector<256x128xi32>
    %159 = arith.cmpi eq, %158, %5 : vector<256x128xi32>
    %cst_51 = arith.constant 0.000000e+00 : f32
    %160 = vector.shape_cast %152 : vector<1x128xf32> to vector<1x128xf32>
    %161 = vector.broadcast %160 : vector<1x128xf32> to vector<256x128xf32>
    %162 = vector.broadcast %cst_51 : f32 to vector<256x128xf32>
    %163 = arith.select %159, %161, %162 : vector<256x128xi1>, vector<256x128xf32>
    %164 = arith.addf %131, %163 : vector<256x128xf32>
    %c0_i32_52 = arith.constant 0 : i32
    %165 = vector.broadcast %c0_i32_52 : i32 to vector<1x128xi32>
    %166 = arith.addi %11, %165 : vector<1x128xi32>
    %c3_i32_53 = arith.constant 3 : i32
    %167 = vector.broadcast %c3_i32_53 : i32 to vector<1x128xi32>
    %168 = arith.minsi %166, %167 : vector<1x128xi32>
    %cst_54 = arith.constant 1.000000e+00 : f32
    %169 = vector.broadcast %cst_54 : f32 to vector<1x128xf32>
    %170 = arith.subf %169, %10 : vector<1x128xf32>
    %c1_i32_55 = arith.constant 1 : i32
    %171 = vector.broadcast %c1_i32_55 : i32 to vector<1x128xi32>
    %172 = arith.muli %168, %171 : vector<1x128xi32>
    %c0_i32_56 = arith.constant 0 : i32
    %173 = vector.broadcast %c0_i32_56 : i32 to vector<1x128xi32>
    %174 = arith.addi %17, %173 : vector<1x128xi32>
    %c3_i32_57 = arith.constant 3 : i32
    %175 = vector.broadcast %c3_i32_57 : i32 to vector<1x128xi32>
    %176 = arith.minsi %174, %175 : vector<1x128xi32>
    %cst_58 = arith.constant 1.000000e+00 : f32
    %177 = vector.broadcast %cst_58 : f32 to vector<1x128xf32>
    %178 = arith.subf %177, %16 : vector<1x128xf32>
    %179 = arith.mulf %170, %178 : vector<1x128xf32>
    %c4_i32_59 = arith.constant 4 : i32
    %180 = vector.broadcast %c4_i32_59 : i32 to vector<1x128xi32>
    %181 = arith.muli %176, %180 : vector<1x128xi32>
    %182 = arith.addi %172, %181 : vector<1x128xi32>
    %c1_i32_60 = arith.constant 1 : i32
    %183 = vector.broadcast %c1_i32_60 : i32 to vector<1x128xi32>
    %184 = arith.addi %23, %183 : vector<1x128xi32>
    %c3_i32_61 = arith.constant 3 : i32
    %185 = vector.broadcast %c3_i32_61 : i32 to vector<1x128xi32>
    %186 = arith.minsi %184, %185 : vector<1x128xi32>
    %187 = arith.mulf %179, %22 : vector<1x128xf32>
    %c16_i32_62 = arith.constant 16 : i32
    %188 = vector.broadcast %c16_i32_62 : i32 to vector<1x128xi32>
    %189 = arith.muli %186, %188 : vector<1x128xi32>
    %190 = arith.addi %182, %189 : vector<1x128xi32>
    %c255_i32_63 = arith.constant 255 : i32
    %191 = vector.broadcast %c255_i32_63 : i32 to vector<1x128xi32>
    %192 = arith.andi %190, %191 : vector<1x128xi32>
    %193 = vector.broadcast %192 : vector<1x128xi32> to vector<256x128xi32>
    %194 = arith.cmpi eq, %193, %5 : vector<256x128xi32>
    %cst_64 = arith.constant 0.000000e+00 : f32
    %195 = vector.shape_cast %187 : vector<1x128xf32> to vector<1x128xf32>
    %196 = vector.broadcast %195 : vector<1x128xf32> to vector<256x128xf32>
    %197 = vector.broadcast %cst_64 : f32 to vector<256x128xf32>
    %198 = arith.select %194, %196, %197 : vector<256x128xi1>, vector<256x128xf32>
    %199 = arith.addf %164, %198 : vector<256x128xf32>
    %c1_i32_65 = arith.constant 1 : i32
    %200 = vector.broadcast %c1_i32_65 : i32 to vector<1x128xi32>
    %201 = arith.addi %11, %200 : vector<1x128xi32>
    %c3_i32_66 = arith.constant 3 : i32
    %202 = vector.broadcast %c3_i32_66 : i32 to vector<1x128xi32>
    %203 = arith.minsi %201, %202 : vector<1x128xi32>
    %c1_i32_67 = arith.constant 1 : i32
    %204 = vector.broadcast %c1_i32_67 : i32 to vector<1x128xi32>
    %205 = arith.muli %203, %204 : vector<1x128xi32>
    %c0_i32_68 = arith.constant 0 : i32
    %206 = vector.broadcast %c0_i32_68 : i32 to vector<1x128xi32>
    %207 = arith.addi %17, %206 : vector<1x128xi32>
    %c3_i32_69 = arith.constant 3 : i32
    %208 = vector.broadcast %c3_i32_69 : i32 to vector<1x128xi32>
    %209 = arith.minsi %207, %208 : vector<1x128xi32>
    %cst_70 = arith.constant 1.000000e+00 : f32
    %210 = vector.broadcast %cst_70 : f32 to vector<1x128xf32>
    %211 = arith.subf %210, %16 : vector<1x128xf32>
    %212 = arith.mulf %10, %211 : vector<1x128xf32>
    %c4_i32_71 = arith.constant 4 : i32
    %213 = vector.broadcast %c4_i32_71 : i32 to vector<1x128xi32>
    %214 = arith.muli %209, %213 : vector<1x128xi32>
    %215 = arith.addi %205, %214 : vector<1x128xi32>
    %c1_i32_72 = arith.constant 1 : i32
    %216 = vector.broadcast %c1_i32_72 : i32 to vector<1x128xi32>
    %217 = arith.addi %23, %216 : vector<1x128xi32>
    %c3_i32_73 = arith.constant 3 : i32
    %218 = vector.broadcast %c3_i32_73 : i32 to vector<1x128xi32>
    %219 = arith.minsi %217, %218 : vector<1x128xi32>
    %220 = arith.mulf %212, %22 : vector<1x128xf32>
    %c16_i32_74 = arith.constant 16 : i32
    %221 = vector.broadcast %c16_i32_74 : i32 to vector<1x128xi32>
    %222 = arith.muli %219, %221 : vector<1x128xi32>
    %223 = arith.addi %215, %222 : vector<1x128xi32>
    %c255_i32_75 = arith.constant 255 : i32
    %224 = vector.broadcast %c255_i32_75 : i32 to vector<1x128xi32>
    %225 = arith.andi %223, %224 : vector<1x128xi32>
    %226 = vector.broadcast %225 : vector<1x128xi32> to vector<256x128xi32>
    %227 = arith.cmpi eq, %226, %5 : vector<256x128xi32>
    %cst_76 = arith.constant 0.000000e+00 : f32
    %228 = vector.shape_cast %220 : vector<1x128xf32> to vector<1x128xf32>
    %229 = vector.broadcast %228 : vector<1x128xf32> to vector<256x128xf32>
    %230 = vector.broadcast %cst_76 : f32 to vector<256x128xf32>
    %231 = arith.select %227, %229, %230 : vector<256x128xi1>, vector<256x128xf32>
    %232 = arith.addf %199, %231 : vector<256x128xf32>
    %c0_i32_77 = arith.constant 0 : i32
    %233 = vector.broadcast %c0_i32_77 : i32 to vector<1x128xi32>
    %234 = arith.addi %11, %233 : vector<1x128xi32>
    %c3_i32_78 = arith.constant 3 : i32
    %235 = vector.broadcast %c3_i32_78 : i32 to vector<1x128xi32>
    %236 = arith.minsi %234, %235 : vector<1x128xi32>
    %cst_79 = arith.constant 1.000000e+00 : f32
    %237 = vector.broadcast %cst_79 : f32 to vector<1x128xf32>
    %238 = arith.subf %237, %10 : vector<1x128xf32>
    %c1_i32_80 = arith.constant 1 : i32
    %239 = vector.broadcast %c1_i32_80 : i32 to vector<1x128xi32>
    %240 = arith.muli %236, %239 : vector<1x128xi32>
    %c1_i32_81 = arith.constant 1 : i32
    %241 = vector.broadcast %c1_i32_81 : i32 to vector<1x128xi32>
    %242 = arith.addi %17, %241 : vector<1x128xi32>
    %c3_i32_82 = arith.constant 3 : i32
    %243 = vector.broadcast %c3_i32_82 : i32 to vector<1x128xi32>
    %244 = arith.minsi %242, %243 : vector<1x128xi32>
    %245 = arith.mulf %238, %16 : vector<1x128xf32>
    %c4_i32_83 = arith.constant 4 : i32
    %246 = vector.broadcast %c4_i32_83 : i32 to vector<1x128xi32>
    %247 = arith.muli %244, %246 : vector<1x128xi32>
    %248 = arith.addi %240, %247 : vector<1x128xi32>
    %c1_i32_84 = arith.constant 1 : i32
    %249 = vector.broadcast %c1_i32_84 : i32 to vector<1x128xi32>
    %250 = arith.addi %23, %249 : vector<1x128xi32>
    %c3_i32_85 = arith.constant 3 : i32
    %251 = vector.broadcast %c3_i32_85 : i32 to vector<1x128xi32>
    %252 = arith.minsi %250, %251 : vector<1x128xi32>
    %253 = arith.mulf %245, %22 : vector<1x128xf32>
    %c16_i32_86 = arith.constant 16 : i32
    %254 = vector.broadcast %c16_i32_86 : i32 to vector<1x128xi32>
    %255 = arith.muli %252, %254 : vector<1x128xi32>
    %256 = arith.addi %248, %255 : vector<1x128xi32>
    %c255_i32_87 = arith.constant 255 : i32
    %257 = vector.broadcast %c255_i32_87 : i32 to vector<1x128xi32>
    %258 = arith.andi %256, %257 : vector<1x128xi32>
    %259 = vector.broadcast %258 : vector<1x128xi32> to vector<256x128xi32>
    %260 = arith.cmpi eq, %259, %5 : vector<256x128xi32>
    %cst_88 = arith.constant 0.000000e+00 : f32
    %261 = vector.shape_cast %253 : vector<1x128xf32> to vector<1x128xf32>
    %262 = vector.broadcast %261 : vector<1x128xf32> to vector<256x128xf32>
    %263 = vector.broadcast %cst_88 : f32 to vector<256x128xf32>
    %264 = arith.select %260, %262, %263 : vector<256x128xi1>, vector<256x128xf32>
    %265 = arith.addf %232, %264 : vector<256x128xf32>
    %c1_i32_89 = arith.constant 1 : i32
    %266 = vector.broadcast %c1_i32_89 : i32 to vector<1x128xi32>
    %267 = arith.addi %11, %266 : vector<1x128xi32>
    %c3_i32_90 = arith.constant 3 : i32
    %268 = vector.broadcast %c3_i32_90 : i32 to vector<1x128xi32>
    %269 = arith.minsi %267, %268 : vector<1x128xi32>
    %c1_i32_91 = arith.constant 1 : i32
    %270 = vector.broadcast %c1_i32_91 : i32 to vector<1x128xi32>
    %271 = arith.muli %269, %270 : vector<1x128xi32>
    %c1_i32_92 = arith.constant 1 : i32
    %272 = vector.broadcast %c1_i32_92 : i32 to vector<1x128xi32>
    %273 = arith.addi %17, %272 : vector<1x128xi32>
    %c3_i32_93 = arith.constant 3 : i32
    %274 = vector.broadcast %c3_i32_93 : i32 to vector<1x128xi32>
    %275 = arith.minsi %273, %274 : vector<1x128xi32>
    %276 = arith.mulf %10, %16 : vector<1x128xf32>
    %c4_i32_94 = arith.constant 4 : i32
    %277 = vector.broadcast %c4_i32_94 : i32 to vector<1x128xi32>
    %278 = arith.muli %275, %277 : vector<1x128xi32>
    %279 = arith.addi %271, %278 : vector<1x128xi32>
    %c1_i32_95 = arith.constant 1 : i32
    %280 = vector.broadcast %c1_i32_95 : i32 to vector<1x128xi32>
    %281 = arith.addi %23, %280 : vector<1x128xi32>
    %c3_i32_96 = arith.constant 3 : i32
    %282 = vector.broadcast %c3_i32_96 : i32 to vector<1x128xi32>
    %283 = arith.minsi %281, %282 : vector<1x128xi32>
    %284 = arith.mulf %276, %22 : vector<1x128xf32>
    %c16_i32_97 = arith.constant 16 : i32
    %285 = vector.broadcast %c16_i32_97 : i32 to vector<1x128xi32>
    %286 = arith.muli %283, %285 : vector<1x128xi32>
    %287 = arith.addi %279, %286 : vector<1x128xi32>
    %c255_i32_98 = arith.constant 255 : i32
    %288 = vector.broadcast %c255_i32_98 : i32 to vector<1x128xi32>
    %289 = arith.andi %287, %288 : vector<1x128xi32>
    %290 = vector.broadcast %289 : vector<1x128xi32> to vector<256x128xi32>
    %291 = arith.cmpi eq, %290, %5 : vector<256x128xi32>
    %cst_99 = arith.constant 0.000000e+00 : f32
    %292 = vector.shape_cast %284 : vector<1x128xf32> to vector<1x128xf32>
    %293 = vector.broadcast %292 : vector<1x128xf32> to vector<256x128xf32>
    %294 = vector.broadcast %cst_99 : f32 to vector<256x128xf32>
    %295 = arith.select %291, %293, %294 : vector<256x128xi1>, vector<256x128xf32>
    %296 = arith.addf %265, %295 : vector<256x128xf32>
    %c0_100 = arith.constant 0 : index
    %c0_101 = arith.constant 0 : index
    %c0_102 = arith.constant 0 : index
    %297 = vector.load %arg2[%c0_100, %c0_101, %c0_102] : memref<2x4x256xbf16, #tpu.memory_space<vmem>>, vector<1x4x256xbf16>
    %298 = vector.shape_cast %297 : vector<1x4x256xbf16> to vector<4x256xbf16>
    %299 = arith.truncf %296 : vector<256x128xf32> to vector<256x128xbf16>
    %cst_103 = arith.constant dense<0.000000e+00> : vector<4x128xf32>
    %300 = tpu.matmul %298, %299, %cst_103 {dimension_numbers = #tpu.dot_dimension_numbers<[1], [0], [0], [1], [0, 0, 1, 1], [], []>} : vector<4x256xbf16>, vector<256x128xbf16>, vector<4x128xf32> -> vector<4x128xf32>
    %301 = vector.extract_strided_slice %4 {offsets = [0, 0], sizes = [1, 128], strides = [1, 1]} : vector<3x128xf32> to vector<1x128xf32>
    %cst_104 = arith.constant 7.000000e+00 : f32
    %302 = vector.broadcast %cst_104 : f32 to vector<1x128xf32>
    %303 = arith.mulf %301, %302 : vector<1x128xf32>
    %304 = math.floor %303 : vector<1x128xf32>
    %305 = arith.subf %303, %304 : vector<1x128xf32>
    %306 = arith.fptosi %304 : vector<1x128xf32> to vector<1x128xi32>
    %307 = vector.extract_strided_slice %4 {offsets = [1, 0], sizes = [1, 128], strides = [1, 1]} : vector<3x128xf32> to vector<1x128xf32>
    %cst_105 = arith.constant 7.000000e+00 : f32
    %308 = vector.broadcast %cst_105 : f32 to vector<1x128xf32>
    %309 = arith.mulf %307, %308 : vector<1x128xf32>
    %310 = math.floor %309 : vector<1x128xf32>
    %311 = arith.subf %309, %310 : vector<1x128xf32>
    %312 = arith.fptosi %310 : vector<1x128xf32> to vector<1x128xi32>
    %313 = vector.extract_strided_slice %4 {offsets = [2, 0], sizes = [1, 128], strides = [1, 1]} : vector<3x128xf32> to vector<1x128xf32>
    %cst_106 = arith.constant 7.000000e+00 : f32
    %314 = vector.broadcast %cst_106 : f32 to vector<1x128xf32>
    %315 = arith.mulf %313, %314 : vector<1x128xf32>
    %316 = math.floor %315 : vector<1x128xf32>
    %317 = arith.subf %315, %316 : vector<1x128xf32>
    %318 = arith.fptosi %316 : vector<1x128xf32> to vector<1x128xi32>
    %cst_107 = arith.constant 0.000000e+00 : f32
    %319 = vector.broadcast %cst_107 : f32 to vector<256x128xf32>
    %c0_i32_108 = arith.constant 0 : i32
    %320 = vector.broadcast %c0_i32_108 : i32 to vector<1x128xi32>
    %321 = arith.addi %306, %320 : vector<1x128xi32>
    %c7_i32 = arith.constant 7 : i32
    %322 = vector.broadcast %c7_i32 : i32 to vector<1x128xi32>
    %323 = arith.minsi %321, %322 : vector<1x128xi32>
    %cst_109 = arith.constant 1.000000e+00 : f32
    %324 = vector.broadcast %cst_109 : f32 to vector<1x128xf32>
    %325 = arith.subf %324, %305 : vector<1x128xf32>
    %c1_i32_110 = arith.constant 1 : i32
    %326 = vector.broadcast %c1_i32_110 : i32 to vector<1x128xi32>
    %327 = arith.muli %323, %326 : vector<1x128xi32>
    %c0_i32_111 = arith.constant 0 : i32
    %328 = vector.broadcast %c0_i32_111 : i32 to vector<1x128xi32>
    %329 = arith.addi %312, %328 : vector<1x128xi32>
    %c7_i32_112 = arith.constant 7 : i32
    %330 = vector.broadcast %c7_i32_112 : i32 to vector<1x128xi32>
    %331 = arith.minsi %329, %330 : vector<1x128xi32>
    %cst_113 = arith.constant 1.000000e+00 : f32
    %332 = vector.broadcast %cst_113 : f32 to vector<1x128xf32>
    %333 = arith.subf %332, %311 : vector<1x128xf32>
    %334 = arith.mulf %325, %333 : vector<1x128xf32>
    %c-1640531535_i32 = arith.constant -1640531535 : i32
    %335 = vector.broadcast %c-1640531535_i32 : i32 to vector<1x128xi32>
    %336 = arith.muli %331, %335 : vector<1x128xi32>
    %337 = arith.xori %327, %336 : vector<1x128xi32>
    %c0_i32_114 = arith.constant 0 : i32
    %338 = vector.broadcast %c0_i32_114 : i32 to vector<1x128xi32>
    %339 = arith.addi %318, %338 : vector<1x128xi32>
    %c7_i32_115 = arith.constant 7 : i32
    %340 = vector.broadcast %c7_i32_115 : i32 to vector<1x128xi32>
    %341 = arith.minsi %339, %340 : vector<1x128xi32>
    %cst_116 = arith.constant 1.000000e+00 : f32
    %342 = vector.broadcast %cst_116 : f32 to vector<1x128xf32>
    %343 = arith.subf %342, %317 : vector<1x128xf32>
    %344 = arith.mulf %334, %343 : vector<1x128xf32>
    %c805459861_i32 = arith.constant 805459861 : i32
    %345 = vector.broadcast %c805459861_i32 : i32 to vector<1x128xi32>
    %346 = arith.muli %341, %345 : vector<1x128xi32>
    %347 = arith.xori %337, %346 : vector<1x128xi32>
    %c255_i32_117 = arith.constant 255 : i32
    %348 = vector.broadcast %c255_i32_117 : i32 to vector<1x128xi32>
    %349 = arith.andi %347, %348 : vector<1x128xi32>
    %350 = vector.broadcast %349 : vector<1x128xi32> to vector<256x128xi32>
    %351 = arith.cmpi eq, %350, %5 : vector<256x128xi32>
    %cst_118 = arith.constant 0.000000e+00 : f32
    %352 = vector.shape_cast %344 : vector<1x128xf32> to vector<1x128xf32>
    %353 = vector.broadcast %352 : vector<1x128xf32> to vector<256x128xf32>
    %354 = vector.broadcast %cst_118 : f32 to vector<256x128xf32>
    %355 = arith.select %351, %353, %354 : vector<256x128xi1>, vector<256x128xf32>
    %356 = arith.addf %319, %355 : vector<256x128xf32>
    %c1_i32_119 = arith.constant 1 : i32
    %357 = vector.broadcast %c1_i32_119 : i32 to vector<1x128xi32>
    %358 = arith.addi %306, %357 : vector<1x128xi32>
    %c7_i32_120 = arith.constant 7 : i32
    %359 = vector.broadcast %c7_i32_120 : i32 to vector<1x128xi32>
    %360 = arith.minsi %358, %359 : vector<1x128xi32>
    %c1_i32_121 = arith.constant 1 : i32
    %361 = vector.broadcast %c1_i32_121 : i32 to vector<1x128xi32>
    %362 = arith.muli %360, %361 : vector<1x128xi32>
    %c0_i32_122 = arith.constant 0 : i32
    %363 = vector.broadcast %c0_i32_122 : i32 to vector<1x128xi32>
    %364 = arith.addi %312, %363 : vector<1x128xi32>
    %c7_i32_123 = arith.constant 7 : i32
    %365 = vector.broadcast %c7_i32_123 : i32 to vector<1x128xi32>
    %366 = arith.minsi %364, %365 : vector<1x128xi32>
    %cst_124 = arith.constant 1.000000e+00 : f32
    %367 = vector.broadcast %cst_124 : f32 to vector<1x128xf32>
    %368 = arith.subf %367, %311 : vector<1x128xf32>
    %369 = arith.mulf %305, %368 : vector<1x128xf32>
    %c-1640531535_i32_125 = arith.constant -1640531535 : i32
    %370 = vector.broadcast %c-1640531535_i32_125 : i32 to vector<1x128xi32>
    %371 = arith.muli %366, %370 : vector<1x128xi32>
    %372 = arith.xori %362, %371 : vector<1x128xi32>
    %c0_i32_126 = arith.constant 0 : i32
    %373 = vector.broadcast %c0_i32_126 : i32 to vector<1x128xi32>
    %374 = arith.addi %318, %373 : vector<1x128xi32>
    %c7_i32_127 = arith.constant 7 : i32
    %375 = vector.broadcast %c7_i32_127 : i32 to vector<1x128xi32>
    %376 = arith.minsi %374, %375 : vector<1x128xi32>
    %cst_128 = arith.constant 1.000000e+00 : f32
    %377 = vector.broadcast %cst_128 : f32 to vector<1x128xf32>
    %378 = arith.subf %377, %317 : vector<1x128xf32>
    %379 = arith.mulf %369, %378 : vector<1x128xf32>
    %c805459861_i32_129 = arith.constant 805459861 : i32
    %380 = vector.broadcast %c805459861_i32_129 : i32 to vector<1x128xi32>
    %381 = arith.muli %376, %380 : vector<1x128xi32>
    %382 = arith.xori %372, %381 : vector<1x128xi32>
    %c255_i32_130 = arith.constant 255 : i32
    %383 = vector.broadcast %c255_i32_130 : i32 to vector<1x128xi32>
    %384 = arith.andi %382, %383 : vector<1x128xi32>
    %385 = vector.broadcast %384 : vector<1x128xi32> to vector<256x128xi32>
    %386 = arith.cmpi eq, %385, %5 : vector<256x128xi32>
    %cst_131 = arith.constant 0.000000e+00 : f32
    %387 = vector.shape_cast %379 : vector<1x128xf32> to vector<1x128xf32>
    %388 = vector.broadcast %387 : vector<1x128xf32> to vector<256x128xf32>
    %389 = vector.broadcast %cst_131 : f32 to vector<256x128xf32>
    %390 = arith.select %386, %388, %389 : vector<256x128xi1>, vector<256x128xf32>
    %391 = arith.addf %356, %390 : vector<256x128xf32>
    %c0_i32_132 = arith.constant 0 : i32
    %392 = vector.broadcast %c0_i32_132 : i32 to vector<1x128xi32>
    %393 = arith.addi %306, %392 : vector<1x128xi32>
    %c7_i32_133 = arith.constant 7 : i32
    %394 = vector.broadcast %c7_i32_133 : i32 to vector<1x128xi32>
    %395 = arith.minsi %393, %394 : vector<1x128xi32>
    %cst_134 = arith.constant 1.000000e+00 : f32
    %396 = vector.broadcast %cst_134 : f32 to vector<1x128xf32>
    %397 = arith.subf %396, %305 : vector<1x128xf32>
    %c1_i32_135 = arith.constant 1 : i32
    %398 = vector.broadcast %c1_i32_135 : i32 to vector<1x128xi32>
    %399 = arith.muli %395, %398 : vector<1x128xi32>
    %c1_i32_136 = arith.constant 1 : i32
    %400 = vector.broadcast %c1_i32_136 : i32 to vector<1x128xi32>
    %401 = arith.addi %312, %400 : vector<1x128xi32>
    %c7_i32_137 = arith.constant 7 : i32
    %402 = vector.broadcast %c7_i32_137 : i32 to vector<1x128xi32>
    %403 = arith.minsi %401, %402 : vector<1x128xi32>
    %404 = arith.mulf %397, %311 : vector<1x128xf32>
    %c-1640531535_i32_138 = arith.constant -1640531535 : i32
    %405 = vector.broadcast %c-1640531535_i32_138 : i32 to vector<1x128xi32>
    %406 = arith.muli %403, %405 : vector<1x128xi32>
    %407 = arith.xori %399, %406 : vector<1x128xi32>
    %c0_i32_139 = arith.constant 0 : i32
    %408 = vector.broadcast %c0_i32_139 : i32 to vector<1x128xi32>
    %409 = arith.addi %318, %408 : vector<1x128xi32>
    %c7_i32_140 = arith.constant 7 : i32
    %410 = vector.broadcast %c7_i32_140 : i32 to vector<1x128xi32>
    %411 = arith.minsi %409, %410 : vector<1x128xi32>
    %cst_141 = arith.constant 1.000000e+00 : f32
    %412 = vector.broadcast %cst_141 : f32 to vector<1x128xf32>
    %413 = arith.subf %412, %317 : vector<1x128xf32>
    %414 = arith.mulf %404, %413 : vector<1x128xf32>
    %c805459861_i32_142 = arith.constant 805459861 : i32
    %415 = vector.broadcast %c805459861_i32_142 : i32 to vector<1x128xi32>
    %416 = arith.muli %411, %415 : vector<1x128xi32>
    %417 = arith.xori %407, %416 : vector<1x128xi32>
    %c255_i32_143 = arith.constant 255 : i32
    %418 = vector.broadcast %c255_i32_143 : i32 to vector<1x128xi32>
    %419 = arith.andi %417, %418 : vector<1x128xi32>
    %420 = vector.broadcast %419 : vector<1x128xi32> to vector<256x128xi32>
    %421 = arith.cmpi eq, %420, %5 : vector<256x128xi32>
    %cst_144 = arith.constant 0.000000e+00 : f32
    %422 = vector.shape_cast %414 : vector<1x128xf32> to vector<1x128xf32>
    %423 = vector.broadcast %422 : vector<1x128xf32> to vector<256x128xf32>
    %424 = vector.broadcast %cst_144 : f32 to vector<256x128xf32>
    %425 = arith.select %421, %423, %424 : vector<256x128xi1>, vector<256x128xf32>
    %426 = arith.addf %391, %425 : vector<256x128xf32>
    %c1_i32_145 = arith.constant 1 : i32
    %427 = vector.broadcast %c1_i32_145 : i32 to vector<1x128xi32>
    %428 = arith.addi %306, %427 : vector<1x128xi32>
    %c7_i32_146 = arith.constant 7 : i32
    %429 = vector.broadcast %c7_i32_146 : i32 to vector<1x128xi32>
    %430 = arith.minsi %428, %429 : vector<1x128xi32>
    %c1_i32_147 = arith.constant 1 : i32
    %431 = vector.broadcast %c1_i32_147 : i32 to vector<1x128xi32>
    %432 = arith.muli %430, %431 : vector<1x128xi32>
    %c1_i32_148 = arith.constant 1 : i32
    %433 = vector.broadcast %c1_i32_148 : i32 to vector<1x128xi32>
    %434 = arith.addi %312, %433 : vector<1x128xi32>
    %c7_i32_149 = arith.constant 7 : i32
    %435 = vector.broadcast %c7_i32_149 : i32 to vector<1x128xi32>
    %436 = arith.minsi %434, %435 : vector<1x128xi32>
    %437 = arith.mulf %305, %311 : vector<1x128xf32>
    %c-1640531535_i32_150 = arith.constant -1640531535 : i32
    %438 = vector.broadcast %c-1640531535_i32_150 : i32 to vector<1x128xi32>
    %439 = arith.muli %436, %438 : vector<1x128xi32>
    %440 = arith.xori %432, %439 : vector<1x128xi32>
    %c0_i32_151 = arith.constant 0 : i32
    %441 = vector.broadcast %c0_i32_151 : i32 to vector<1x128xi32>
    %442 = arith.addi %318, %441 : vector<1x128xi32>
    %c7_i32_152 = arith.constant 7 : i32
    %443 = vector.broadcast %c7_i32_152 : i32 to vector<1x128xi32>
    %444 = arith.minsi %442, %443 : vector<1x128xi32>
    %cst_153 = arith.constant 1.000000e+00 : f32
    %445 = vector.broadcast %cst_153 : f32 to vector<1x128xf32>
    %446 = arith.subf %445, %317 : vector<1x128xf32>
    %447 = arith.mulf %437, %446 : vector<1x128xf32>
    %c805459861_i32_154 = arith.constant 805459861 : i32
    %448 = vector.broadcast %c805459861_i32_154 : i32 to vector<1x128xi32>
    %449 = arith.muli %444, %448 : vector<1x128xi32>
    %450 = arith.xori %440, %449 : vector<1x128xi32>
    %c255_i32_155 = arith.constant 255 : i32
    %451 = vector.broadcast %c255_i32_155 : i32 to vector<1x128xi32>
    %452 = arith.andi %450, %451 : vector<1x128xi32>
    %453 = vector.broadcast %452 : vector<1x128xi32> to vector<256x128xi32>
    %454 = arith.cmpi eq, %453, %5 : vector<256x128xi32>
    %cst_156 = arith.constant 0.000000e+00 : f32
    %455 = vector.shape_cast %447 : vector<1x128xf32> to vector<1x128xf32>
    %456 = vector.broadcast %455 : vector<1x128xf32> to vector<256x128xf32>
    %457 = vector.broadcast %cst_156 : f32 to vector<256x128xf32>
    %458 = arith.select %454, %456, %457 : vector<256x128xi1>, vector<256x128xf32>
    %459 = arith.addf %426, %458 : vector<256x128xf32>
    %c0_i32_157 = arith.constant 0 : i32
    %460 = vector.broadcast %c0_i32_157 : i32 to vector<1x128xi32>
    %461 = arith.addi %306, %460 : vector<1x128xi32>
    %c7_i32_158 = arith.constant 7 : i32
    %462 = vector.broadcast %c7_i32_158 : i32 to vector<1x128xi32>
    %463 = arith.minsi %461, %462 : vector<1x128xi32>
    %cst_159 = arith.constant 1.000000e+00 : f32
    %464 = vector.broadcast %cst_159 : f32 to vector<1x128xf32>
    %465 = arith.subf %464, %305 : vector<1x128xf32>
    %c1_i32_160 = arith.constant 1 : i32
    %466 = vector.broadcast %c1_i32_160 : i32 to vector<1x128xi32>
    %467 = arith.muli %463, %466 : vector<1x128xi32>
    %c0_i32_161 = arith.constant 0 : i32
    %468 = vector.broadcast %c0_i32_161 : i32 to vector<1x128xi32>
    %469 = arith.addi %312, %468 : vector<1x128xi32>
    %c7_i32_162 = arith.constant 7 : i32
    %470 = vector.broadcast %c7_i32_162 : i32 to vector<1x128xi32>
    %471 = arith.minsi %469, %470 : vector<1x128xi32>
    %cst_163 = arith.constant 1.000000e+00 : f32
    %472 = vector.broadcast %cst_163 : f32 to vector<1x128xf32>
    %473 = arith.subf %472, %311 : vector<1x128xf32>
    %474 = arith.mulf %465, %473 : vector<1x128xf32>
    %c-1640531535_i32_164 = arith.constant -1640531535 : i32
    %475 = vector.broadcast %c-1640531535_i32_164 : i32 to vector<1x128xi32>
    %476 = arith.muli %471, %475 : vector<1x128xi32>
    %477 = arith.xori %467, %476 : vector<1x128xi32>
    %c1_i32_165 = arith.constant 1 : i32
    %478 = vector.broadcast %c1_i32_165 : i32 to vector<1x128xi32>
    %479 = arith.addi %318, %478 : vector<1x128xi32>
    %c7_i32_166 = arith.constant 7 : i32
    %480 = vector.broadcast %c7_i32_166 : i32 to vector<1x128xi32>
    %481 = arith.minsi %479, %480 : vector<1x128xi32>
    %482 = arith.mulf %474, %317 : vector<1x128xf32>
    %c805459861_i32_167 = arith.constant 805459861 : i32
    %483 = vector.broadcast %c805459861_i32_167 : i32 to vector<1x128xi32>
    %484 = arith.muli %481, %483 : vector<1x128xi32>
    %485 = arith.xori %477, %484 : vector<1x128xi32>
    %c255_i32_168 = arith.constant 255 : i32
    %486 = vector.broadcast %c255_i32_168 : i32 to vector<1x128xi32>
    %487 = arith.andi %485, %486 : vector<1x128xi32>
    %488 = vector.broadcast %487 : vector<1x128xi32> to vector<256x128xi32>
    %489 = arith.cmpi eq, %488, %5 : vector<256x128xi32>
    %cst_169 = arith.constant 0.000000e+00 : f32
    %490 = vector.shape_cast %482 : vector<1x128xf32> to vector<1x128xf32>
    %491 = vector.broadcast %490 : vector<1x128xf32> to vector<256x128xf32>
    %492 = vector.broadcast %cst_169 : f32 to vector<256x128xf32>
    %493 = arith.select %489, %491, %492 : vector<256x128xi1>, vector<256x128xf32>
    %494 = arith.addf %459, %493 : vector<256x128xf32>
    %c1_i32_170 = arith.constant 1 : i32
    %495 = vector.broadcast %c1_i32_170 : i32 to vector<1x128xi32>
    %496 = arith.addi %306, %495 : vector<1x128xi32>
    %c7_i32_171 = arith.constant 7 : i32
    %497 = vector.broadcast %c7_i32_171 : i32 to vector<1x128xi32>
    %498 = arith.minsi %496, %497 : vector<1x128xi32>
    %c1_i32_172 = arith.constant 1 : i32
    %499 = vector.broadcast %c1_i32_172 : i32 to vector<1x128xi32>
    %500 = arith.muli %498, %499 : vector<1x128xi32>
    %c0_i32_173 = arith.constant 0 : i32
    %501 = vector.broadcast %c0_i32_173 : i32 to vector<1x128xi32>
    %502 = arith.addi %312, %501 : vector<1x128xi32>
    %c7_i32_174 = arith.constant 7 : i32
    %503 = vector.broadcast %c7_i32_174 : i32 to vector<1x128xi32>
    %504 = arith.minsi %502, %503 : vector<1x128xi32>
    %cst_175 = arith.constant 1.000000e+00 : f32
    %505 = vector.broadcast %cst_175 : f32 to vector<1x128xf32>
    %506 = arith.subf %505, %311 : vector<1x128xf32>
    %507 = arith.mulf %305, %506 : vector<1x128xf32>
    %c-1640531535_i32_176 = arith.constant -1640531535 : i32
    %508 = vector.broadcast %c-1640531535_i32_176 : i32 to vector<1x128xi32>
    %509 = arith.muli %504, %508 : vector<1x128xi32>
    %510 = arith.xori %500, %509 : vector<1x128xi32>
    %c1_i32_177 = arith.constant 1 : i32
    %511 = vector.broadcast %c1_i32_177 : i32 to vector<1x128xi32>
    %512 = arith.addi %318, %511 : vector<1x128xi32>
    %c7_i32_178 = arith.constant 7 : i32
    %513 = vector.broadcast %c7_i32_178 : i32 to vector<1x128xi32>
    %514 = arith.minsi %512, %513 : vector<1x128xi32>
    %515 = arith.mulf %507, %317 : vector<1x128xf32>
    %c805459861_i32_179 = arith.constant 805459861 : i32
    %516 = vector.broadcast %c805459861_i32_179 : i32 to vector<1x128xi32>
    %517 = arith.muli %514, %516 : vector<1x128xi32>
    %518 = arith.xori %510, %517 : vector<1x128xi32>
    %c255_i32_180 = arith.constant 255 : i32
    %519 = vector.broadcast %c255_i32_180 : i32 to vector<1x128xi32>
    %520 = arith.andi %518, %519 : vector<1x128xi32>
    %521 = vector.broadcast %520 : vector<1x128xi32> to vector<256x128xi32>
    %522 = arith.cmpi eq, %521, %5 : vector<256x128xi32>
    %cst_181 = arith.constant 0.000000e+00 : f32
    %523 = vector.shape_cast %515 : vector<1x128xf32> to vector<1x128xf32>
    %524 = vector.broadcast %523 : vector<1x128xf32> to vector<256x128xf32>
    %525 = vector.broadcast %cst_181 : f32 to vector<256x128xf32>
    %526 = arith.select %522, %524, %525 : vector<256x128xi1>, vector<256x128xf32>
    %527 = arith.addf %494, %526 : vector<256x128xf32>
    %c0_i32_182 = arith.constant 0 : i32
    %528 = vector.broadcast %c0_i32_182 : i32 to vector<1x128xi32>
    %529 = arith.addi %306, %528 : vector<1x128xi32>
    %c7_i32_183 = arith.constant 7 : i32
    %530 = vector.broadcast %c7_i32_183 : i32 to vector<1x128xi32>
    %531 = arith.minsi %529, %530 : vector<1x128xi32>
    %cst_184 = arith.constant 1.000000e+00 : f32
    %532 = vector.broadcast %cst_184 : f32 to vector<1x128xf32>
    %533 = arith.subf %532, %305 : vector<1x128xf32>
    %c1_i32_185 = arith.constant 1 : i32
    %534 = vector.broadcast %c1_i32_185 : i32 to vector<1x128xi32>
    %535 = arith.muli %531, %534 : vector<1x128xi32>
    %c1_i32_186 = arith.constant 1 : i32
    %536 = vector.broadcast %c1_i32_186 : i32 to vector<1x128xi32>
    %537 = arith.addi %312, %536 : vector<1x128xi32>
    %c7_i32_187 = arith.constant 7 : i32
    %538 = vector.broadcast %c7_i32_187 : i32 to vector<1x128xi32>
    %539 = arith.minsi %537, %538 : vector<1x128xi32>
    %540 = arith.mulf %533, %311 : vector<1x128xf32>
    %c-1640531535_i32_188 = arith.constant -1640531535 : i32
    %541 = vector.broadcast %c-1640531535_i32_188 : i32 to vector<1x128xi32>
    %542 = arith.muli %539, %541 : vector<1x128xi32>
    %543 = arith.xori %535, %542 : vector<1x128xi32>
    %c1_i32_189 = arith.constant 1 : i32
    %544 = vector.broadcast %c1_i32_189 : i32 to vector<1x128xi32>
    %545 = arith.addi %318, %544 : vector<1x128xi32>
    %c7_i32_190 = arith.constant 7 : i32
    %546 = vector.broadcast %c7_i32_190 : i32 to vector<1x128xi32>
    %547 = arith.minsi %545, %546 : vector<1x128xi32>
    %548 = arith.mulf %540, %317 : vector<1x128xf32>
    %c805459861_i32_191 = arith.constant 805459861 : i32
    %549 = vector.broadcast %c805459861_i32_191 : i32 to vector<1x128xi32>
    %550 = arith.muli %547, %549 : vector<1x128xi32>
    %551 = arith.xori %543, %550 : vector<1x128xi32>
    %c255_i32_192 = arith.constant 255 : i32
    %552 = vector.broadcast %c255_i32_192 : i32 to vector<1x128xi32>
    %553 = arith.andi %551, %552 : vector<1x128xi32>
    %554 = vector.broadcast %553 : vector<1x128xi32> to vector<256x128xi32>
    %555 = arith.cmpi eq, %554, %5 : vector<256x128xi32>
    %cst_193 = arith.constant 0.000000e+00 : f32
    %556 = vector.shape_cast %548 : vector<1x128xf32> to vector<1x128xf32>
    %557 = vector.broadcast %556 : vector<1x128xf32> to vector<256x128xf32>
    %558 = vector.broadcast %cst_193 : f32 to vector<256x128xf32>
    %559 = arith.select %555, %557, %558 : vector<256x128xi1>, vector<256x128xf32>
    %560 = arith.addf %527, %559 : vector<256x128xf32>
    %c1_i32_194 = arith.constant 1 : i32
    %561 = vector.broadcast %c1_i32_194 : i32 to vector<1x128xi32>
    %562 = arith.addi %306, %561 : vector<1x128xi32>
    %c7_i32_195 = arith.constant 7 : i32
    %563 = vector.broadcast %c7_i32_195 : i32 to vector<1x128xi32>
    %564 = arith.minsi %562, %563 : vector<1x128xi32>
    %c1_i32_196 = arith.constant 1 : i32
    %565 = vector.broadcast %c1_i32_196 : i32 to vector<1x128xi32>
    %566 = arith.muli %564, %565 : vector<1x128xi32>
    %c1_i32_197 = arith.constant 1 : i32
    %567 = vector.broadcast %c1_i32_197 : i32 to vector<1x128xi32>
    %568 = arith.addi %312, %567 : vector<1x128xi32>
    %c7_i32_198 = arith.constant 7 : i32
    %569 = vector.broadcast %c7_i32_198 : i32 to vector<1x128xi32>
    %570 = arith.minsi %568, %569 : vector<1x128xi32>
    %571 = arith.mulf %305, %311 : vector<1x128xf32>
    %c-1640531535_i32_199 = arith.constant -1640531535 : i32
    %572 = vector.broadcast %c-1640531535_i32_199 : i32 to vector<1x128xi32>
    %573 = arith.muli %570, %572 : vector<1x128xi32>
    %574 = arith.xori %566, %573 : vector<1x128xi32>
    %c1_i32_200 = arith.constant 1 : i32
    %575 = vector.broadcast %c1_i32_200 : i32 to vector<1x128xi32>
    %576 = arith.addi %318, %575 : vector<1x128xi32>
    %c7_i32_201 = arith.constant 7 : i32
    %577 = vector.broadcast %c7_i32_201 : i32 to vector<1x128xi32>
    %578 = arith.minsi %576, %577 : vector<1x128xi32>
    %579 = arith.mulf %571, %317 : vector<1x128xf32>
    %c805459861_i32_202 = arith.constant 805459861 : i32
    %580 = vector.broadcast %c805459861_i32_202 : i32 to vector<1x128xi32>
    %581 = arith.muli %578, %580 : vector<1x128xi32>
    %582 = arith.xori %574, %581 : vector<1x128xi32>
    %c255_i32_203 = arith.constant 255 : i32
    %583 = vector.broadcast %c255_i32_203 : i32 to vector<1x128xi32>
    %584 = arith.andi %582, %583 : vector<1x128xi32>
    %585 = vector.broadcast %584 : vector<1x128xi32> to vector<256x128xi32>
    %586 = arith.cmpi eq, %585, %5 : vector<256x128xi32>
    %cst_204 = arith.constant 0.000000e+00 : f32
    %587 = vector.shape_cast %579 : vector<1x128xf32> to vector<1x128xf32>
    %588 = vector.broadcast %587 : vector<1x128xf32> to vector<256x128xf32>
    %589 = vector.broadcast %cst_204 : f32 to vector<256x128xf32>
    %590 = arith.select %586, %588, %589 : vector<256x128xi1>, vector<256x128xf32>
    %591 = arith.addf %560, %590 : vector<256x128xf32>
    %c1 = arith.constant 1 : index
    %c0_205 = arith.constant 0 : index
    %c0_206 = arith.constant 0 : index
    %592 = vector.load %arg2[%c1, %c0_205, %c0_206] : memref<2x4x256xbf16, #tpu.memory_space<vmem>>, vector<1x4x256xbf16>
    %593 = vector.shape_cast %592 : vector<1x4x256xbf16> to vector<4x256xbf16>
    %594 = arith.truncf %591 : vector<256x128xf32> to vector<256x128xbf16>
    %cst_207 = arith.constant dense<0.000000e+00> : vector<4x128xf32>
    %595 = tpu.matmul %593, %594, %cst_207 {dimension_numbers = #tpu.dot_dimension_numbers<[1], [0], [0], [1], [0, 0, 1, 1], [], []>} : vector<4x256xbf16>, vector<256x128xbf16>, vector<4x128xf32> -> vector<4x128xf32>
    %596 = vector.extract_strided_slice %4 {offsets = [0, 0], sizes = [1, 128], strides = [1, 1]} : vector<3x128xf32> to vector<1x128xf32>
    %cst_208 = arith.constant 7.000000e+00 : f32
    %597 = vector.broadcast %cst_208 : f32 to vector<1x128xf32>
    %598 = arith.mulf %596, %597 : vector<1x128xf32>
    %599 = math.floor %598 : vector<1x128xf32>
    %600 = arith.subf %598, %599 : vector<1x128xf32>
    %601 = arith.fptosi %599 : vector<1x128xf32> to vector<1x128xi32>
    %602 = vector.extract_strided_slice %4 {offsets = [1, 0], sizes = [1, 128], strides = [1, 1]} : vector<3x128xf32> to vector<1x128xf32>
    %cst_209 = arith.constant 7.000000e+00 : f32
    %603 = vector.broadcast %cst_209 : f32 to vector<1x128xf32>
    %604 = arith.mulf %602, %603 : vector<1x128xf32>
    %605 = math.floor %604 : vector<1x128xf32>
    %606 = arith.subf %604, %605 : vector<1x128xf32>
    %607 = arith.fptosi %605 : vector<1x128xf32> to vector<1x128xi32>
    %cst_210 = arith.constant 0.000000e+00 : f32
    %608 = vector.broadcast %cst_210 : f32 to vector<256x128xf32>
    %c0_i32_211 = arith.constant 0 : i32
    %609 = vector.broadcast %c0_i32_211 : i32 to vector<1x128xi32>
    %610 = arith.addi %601, %609 : vector<1x128xi32>
    %c7_i32_212 = arith.constant 7 : i32
    %611 = vector.broadcast %c7_i32_212 : i32 to vector<1x128xi32>
    %612 = arith.minsi %610, %611 : vector<1x128xi32>
    %cst_213 = arith.constant 1.000000e+00 : f32
    %613 = vector.broadcast %cst_213 : f32 to vector<1x128xf32>
    %614 = arith.subf %613, %600 : vector<1x128xf32>
    %c1_i32_214 = arith.constant 1 : i32
    %615 = vector.broadcast %c1_i32_214 : i32 to vector<1x128xi32>
    %616 = arith.muli %612, %615 : vector<1x128xi32>
    %c0_i32_215 = arith.constant 0 : i32
    %617 = vector.broadcast %c0_i32_215 : i32 to vector<1x128xi32>
    %618 = arith.addi %607, %617 : vector<1x128xi32>
    %c7_i32_216 = arith.constant 7 : i32
    %619 = vector.broadcast %c7_i32_216 : i32 to vector<1x128xi32>
    %620 = arith.minsi %618, %619 : vector<1x128xi32>
    %cst_217 = arith.constant 1.000000e+00 : f32
    %621 = vector.broadcast %cst_217 : f32 to vector<1x128xf32>
    %622 = arith.subf %621, %606 : vector<1x128xf32>
    %623 = arith.mulf %614, %622 : vector<1x128xf32>
    %c8_i32 = arith.constant 8 : i32
    %624 = vector.broadcast %c8_i32 : i32 to vector<1x128xi32>
    %625 = arith.muli %620, %624 : vector<1x128xi32>
    %626 = arith.addi %616, %625 : vector<1x128xi32>
    %c255_i32_218 = arith.constant 255 : i32
    %627 = vector.broadcast %c255_i32_218 : i32 to vector<1x128xi32>
    %628 = arith.andi %626, %627 : vector<1x128xi32>
    %629 = vector.broadcast %628 : vector<1x128xi32> to vector<256x128xi32>
    %630 = arith.cmpi eq, %629, %5 : vector<256x128xi32>
    %cst_219 = arith.constant 0.000000e+00 : f32
    %631 = vector.shape_cast %623 : vector<1x128xf32> to vector<1x128xf32>
    %632 = vector.broadcast %631 : vector<1x128xf32> to vector<256x128xf32>
    %633 = vector.broadcast %cst_219 : f32 to vector<256x128xf32>
    %634 = arith.select %630, %632, %633 : vector<256x128xi1>, vector<256x128xf32>
    %635 = arith.addf %608, %634 : vector<256x128xf32>
    %c1_i32_220 = arith.constant 1 : i32
    %636 = vector.broadcast %c1_i32_220 : i32 to vector<1x128xi32>
    %637 = arith.addi %601, %636 : vector<1x128xi32>
    %c7_i32_221 = arith.constant 7 : i32
    %638 = vector.broadcast %c7_i32_221 : i32 to vector<1x128xi32>
    %639 = arith.minsi %637, %638 : vector<1x128xi32>
    %c1_i32_222 = arith.constant 1 : i32
    %640 = vector.broadcast %c1_i32_222 : i32 to vector<1x128xi32>
    %641 = arith.muli %639, %640 : vector<1x128xi32>
    %c0_i32_223 = arith.constant 0 : i32
    %642 = vector.broadcast %c0_i32_223 : i32 to vector<1x128xi32>
    %643 = arith.addi %607, %642 : vector<1x128xi32>
    %c7_i32_224 = arith.constant 7 : i32
    %644 = vector.broadcast %c7_i32_224 : i32 to vector<1x128xi32>
    %645 = arith.minsi %643, %644 : vector<1x128xi32>
    %cst_225 = arith.constant 1.000000e+00 : f32
    %646 = vector.broadcast %cst_225 : f32 to vector<1x128xf32>
    %647 = arith.subf %646, %606 : vector<1x128xf32>
    %648 = arith.mulf %600, %647 : vector<1x128xf32>
    %c8_i32_226 = arith.constant 8 : i32
    %649 = vector.broadcast %c8_i32_226 : i32 to vector<1x128xi32>
    %650 = arith.muli %645, %649 : vector<1x128xi32>
    %651 = arith.addi %641, %650 : vector<1x128xi32>
    %c255_i32_227 = arith.constant 255 : i32
    %652 = vector.broadcast %c255_i32_227 : i32 to vector<1x128xi32>
    %653 = arith.andi %651, %652 : vector<1x128xi32>
    %654 = vector.broadcast %653 : vector<1x128xi32> to vector<256x128xi32>
    %655 = arith.cmpi eq, %654, %5 : vector<256x128xi32>
    %cst_228 = arith.constant 0.000000e+00 : f32
    %656 = vector.shape_cast %648 : vector<1x128xf32> to vector<1x128xf32>
    %657 = vector.broadcast %656 : vector<1x128xf32> to vector<256x128xf32>
    %658 = vector.broadcast %cst_228 : f32 to vector<256x128xf32>
    %659 = arith.select %655, %657, %658 : vector<256x128xi1>, vector<256x128xf32>
    %660 = arith.addf %635, %659 : vector<256x128xf32>
    %c0_i32_229 = arith.constant 0 : i32
    %661 = vector.broadcast %c0_i32_229 : i32 to vector<1x128xi32>
    %662 = arith.addi %601, %661 : vector<1x128xi32>
    %c7_i32_230 = arith.constant 7 : i32
    %663 = vector.broadcast %c7_i32_230 : i32 to vector<1x128xi32>
    %664 = arith.minsi %662, %663 : vector<1x128xi32>
    %cst_231 = arith.constant 1.000000e+00 : f32
    %665 = vector.broadcast %cst_231 : f32 to vector<1x128xf32>
    %666 = arith.subf %665, %600 : vector<1x128xf32>
    %c1_i32_232 = arith.constant 1 : i32
    %667 = vector.broadcast %c1_i32_232 : i32 to vector<1x128xi32>
    %668 = arith.muli %664, %667 : vector<1x128xi32>
    %c1_i32_233 = arith.constant 1 : i32
    %669 = vector.broadcast %c1_i32_233 : i32 to vector<1x128xi32>
    %670 = arith.addi %607, %669 : vector<1x128xi32>
    %c7_i32_234 = arith.constant 7 : i32
    %671 = vector.broadcast %c7_i32_234 : i32 to vector<1x128xi32>
    %672 = arith.minsi %670, %671 : vector<1x128xi32>
    %673 = arith.mulf %666, %606 : vector<1x128xf32>
    %c8_i32_235 = arith.constant 8 : i32
    %674 = vector.broadcast %c8_i32_235 : i32 to vector<1x128xi32>
    %675 = arith.muli %672, %674 : vector<1x128xi32>
    %676 = arith.addi %668, %675 : vector<1x128xi32>
    %c255_i32_236 = arith.constant 255 : i32
    %677 = vector.broadcast %c255_i32_236 : i32 to vector<1x128xi32>
    %678 = arith.andi %676, %677 : vector<1x128xi32>
    %679 = vector.broadcast %678 : vector<1x128xi32> to vector<256x128xi32>
    %680 = arith.cmpi eq, %679, %5 : vector<256x128xi32>
    %cst_237 = arith.constant 0.000000e+00 : f32
    %681 = vector.shape_cast %673 : vector<1x128xf32> to vector<1x128xf32>
    %682 = vector.broadcast %681 : vector<1x128xf32> to vector<256x128xf32>
    %683 = vector.broadcast %cst_237 : f32 to vector<256x128xf32>
    %684 = arith.select %680, %682, %683 : vector<256x128xi1>, vector<256x128xf32>
    %685 = arith.addf %660, %684 : vector<256x128xf32>
    %c1_i32_238 = arith.constant 1 : i32
    %686 = vector.broadcast %c1_i32_238 : i32 to vector<1x128xi32>
    %687 = arith.addi %601, %686 : vector<1x128xi32>
    %c7_i32_239 = arith.constant 7 : i32
    %688 = vector.broadcast %c7_i32_239 : i32 to vector<1x128xi32>
    %689 = arith.minsi %687, %688 : vector<1x128xi32>
    %c1_i32_240 = arith.constant 1 : i32
    %690 = vector.broadcast %c1_i32_240 : i32 to vector<1x128xi32>
    %691 = arith.muli %689, %690 : vector<1x128xi32>
    %c1_i32_241 = arith.constant 1 : i32
    %692 = vector.broadcast %c1_i32_241 : i32 to vector<1x128xi32>
    %693 = arith.addi %607, %692 : vector<1x128xi32>
    %c7_i32_242 = arith.constant 7 : i32
    %694 = vector.broadcast %c7_i32_242 : i32 to vector<1x128xi32>
    %695 = arith.minsi %693, %694 : vector<1x128xi32>
    %696 = arith.mulf %600, %606 : vector<1x128xf32>
    %c8_i32_243 = arith.constant 8 : i32
    %697 = vector.broadcast %c8_i32_243 : i32 to vector<1x128xi32>
    %698 = arith.muli %695, %697 : vector<1x128xi32>
    %699 = arith.addi %691, %698 : vector<1x128xi32>
    %c255_i32_244 = arith.constant 255 : i32
    %700 = vector.broadcast %c255_i32_244 : i32 to vector<1x128xi32>
    %701 = arith.andi %699, %700 : vector<1x128xi32>
    %702 = vector.broadcast %701 : vector<1x128xi32> to vector<256x128xi32>
    %703 = arith.cmpi eq, %702, %5 : vector<256x128xi32>
    %cst_245 = arith.constant 0.000000e+00 : f32
    %704 = vector.shape_cast %696 : vector<1x128xf32> to vector<1x128xf32>
    %705 = vector.broadcast %704 : vector<1x128xf32> to vector<256x128xf32>
    %706 = vector.broadcast %cst_245 : f32 to vector<256x128xf32>
    %707 = arith.select %703, %705, %706 : vector<256x128xi1>, vector<256x128xf32>
    %708 = arith.addf %685, %707 : vector<256x128xf32>
    %c0_246 = arith.constant 0 : index
    %c0_247 = arith.constant 0 : index
    %c0_248 = arith.constant 0 : index
    %709 = vector.load %arg3[%c0_246, %c0_247, %c0_248] : memref<2x4x256xbf16, #tpu.memory_space<vmem>>, vector<1x4x256xbf16>
    %710 = vector.shape_cast %709 : vector<1x4x256xbf16> to vector<4x256xbf16>
    %711 = arith.truncf %708 : vector<256x128xf32> to vector<256x128xbf16>
    %cst_249 = arith.constant dense<0.000000e+00> : vector<4x128xf32>
    %712 = tpu.matmul %710, %711, %cst_249 {dimension_numbers = #tpu.dot_dimension_numbers<[1], [0], [0], [1], [0, 0, 1, 1], [], []>} : vector<4x256xbf16>, vector<256x128xbf16>, vector<4x128xf32> -> vector<4x128xf32>
    %713 = vector.extract_strided_slice %4 {offsets = [0, 0], sizes = [1, 128], strides = [1, 1]} : vector<3x128xf32> to vector<1x128xf32>
    %cst_250 = arith.constant 1.500000e+01 : f32
    %714 = vector.broadcast %cst_250 : f32 to vector<1x128xf32>
    %715 = arith.mulf %713, %714 : vector<1x128xf32>
    %716 = math.floor %715 : vector<1x128xf32>
    %717 = arith.subf %715, %716 : vector<1x128xf32>
    %718 = arith.fptosi %716 : vector<1x128xf32> to vector<1x128xi32>
    %719 = vector.extract_strided_slice %4 {offsets = [1, 0], sizes = [1, 128], strides = [1, 1]} : vector<3x128xf32> to vector<1x128xf32>
    %cst_251 = arith.constant 1.500000e+01 : f32
    %720 = vector.broadcast %cst_251 : f32 to vector<1x128xf32>
    %721 = arith.mulf %719, %720 : vector<1x128xf32>
    %722 = math.floor %721 : vector<1x128xf32>
    %723 = arith.subf %721, %722 : vector<1x128xf32>
    %724 = arith.fptosi %722 : vector<1x128xf32> to vector<1x128xi32>
    %cst_252 = arith.constant 0.000000e+00 : f32
    %725 = vector.broadcast %cst_252 : f32 to vector<256x128xf32>
    %c0_i32_253 = arith.constant 0 : i32
    %726 = vector.broadcast %c0_i32_253 : i32 to vector<1x128xi32>
    %727 = arith.addi %718, %726 : vector<1x128xi32>
    %c15_i32 = arith.constant 15 : i32
    %728 = vector.broadcast %c15_i32 : i32 to vector<1x128xi32>
    %729 = arith.minsi %727, %728 : vector<1x128xi32>
    %cst_254 = arith.constant 1.000000e+00 : f32
    %730 = vector.broadcast %cst_254 : f32 to vector<1x128xf32>
    %731 = arith.subf %730, %717 : vector<1x128xf32>
    %c1_i32_255 = arith.constant 1 : i32
    %732 = vector.broadcast %c1_i32_255 : i32 to vector<1x128xi32>
    %733 = arith.muli %729, %732 : vector<1x128xi32>
    %c0_i32_256 = arith.constant 0 : i32
    %734 = vector.broadcast %c0_i32_256 : i32 to vector<1x128xi32>
    %735 = arith.addi %724, %734 : vector<1x128xi32>
    %c15_i32_257 = arith.constant 15 : i32
    %736 = vector.broadcast %c15_i32_257 : i32 to vector<1x128xi32>
    %737 = arith.minsi %735, %736 : vector<1x128xi32>
    %cst_258 = arith.constant 1.000000e+00 : f32
    %738 = vector.broadcast %cst_258 : f32 to vector<1x128xf32>
    %739 = arith.subf %738, %723 : vector<1x128xf32>
    %740 = arith.mulf %731, %739 : vector<1x128xf32>
    %c16_i32_259 = arith.constant 16 : i32
    %741 = vector.broadcast %c16_i32_259 : i32 to vector<1x128xi32>
    %742 = arith.muli %737, %741 : vector<1x128xi32>
    %743 = arith.addi %733, %742 : vector<1x128xi32>
    %c255_i32_260 = arith.constant 255 : i32
    %744 = vector.broadcast %c255_i32_260 : i32 to vector<1x128xi32>
    %745 = arith.andi %743, %744 : vector<1x128xi32>
    %746 = vector.broadcast %745 : vector<1x128xi32> to vector<256x128xi32>
    %747 = arith.cmpi eq, %746, %5 : vector<256x128xi32>
    %cst_261 = arith.constant 0.000000e+00 : f32
    %748 = vector.shape_cast %740 : vector<1x128xf32> to vector<1x128xf32>
    %749 = vector.broadcast %748 : vector<1x128xf32> to vector<256x128xf32>
    %750 = vector.broadcast %cst_261 : f32 to vector<256x128xf32>
    %751 = arith.select %747, %749, %750 : vector<256x128xi1>, vector<256x128xf32>
    %752 = arith.addf %725, %751 : vector<256x128xf32>
    %c1_i32_262 = arith.constant 1 : i32
    %753 = vector.broadcast %c1_i32_262 : i32 to vector<1x128xi32>
    %754 = arith.addi %718, %753 : vector<1x128xi32>
    %c15_i32_263 = arith.constant 15 : i32
    %755 = vector.broadcast %c15_i32_263 : i32 to vector<1x128xi32>
    %756 = arith.minsi %754, %755 : vector<1x128xi32>
    %c1_i32_264 = arith.constant 1 : i32
    %757 = vector.broadcast %c1_i32_264 : i32 to vector<1x128xi32>
    %758 = arith.muli %756, %757 : vector<1x128xi32>
    %c0_i32_265 = arith.constant 0 : i32
    %759 = vector.broadcast %c0_i32_265 : i32 to vector<1x128xi32>
    %760 = arith.addi %724, %759 : vector<1x128xi32>
    %c15_i32_266 = arith.constant 15 : i32
    %761 = vector.broadcast %c15_i32_266 : i32 to vector<1x128xi32>
    %762 = arith.minsi %760, %761 : vector<1x128xi32>
    %cst_267 = arith.constant 1.000000e+00 : f32
    %763 = vector.broadcast %cst_267 : f32 to vector<1x128xf32>
    %764 = arith.subf %763, %723 : vector<1x128xf32>
    %765 = arith.mulf %717, %764 : vector<1x128xf32>
    %c16_i32_268 = arith.constant 16 : i32
    %766 = vector.broadcast %c16_i32_268 : i32 to vector<1x128xi32>
    %767 = arith.muli %762, %766 : vector<1x128xi32>
    %768 = arith.addi %758, %767 : vector<1x128xi32>
    %c255_i32_269 = arith.constant 255 : i32
    %769 = vector.broadcast %c255_i32_269 : i32 to vector<1x128xi32>
    %770 = arith.andi %768, %769 : vector<1x128xi32>
    %771 = vector.broadcast %770 : vector<1x128xi32> to vector<256x128xi32>
    %772 = arith.cmpi eq, %771, %5 : vector<256x128xi32>
    %cst_270 = arith.constant 0.000000e+00 : f32
    %773 = vector.shape_cast %765 : vector<1x128xf32> to vector<1x128xf32>
    %774 = vector.broadcast %773 : vector<1x128xf32> to vector<256x128xf32>
    %775 = vector.broadcast %cst_270 : f32 to vector<256x128xf32>
    %776 = arith.select %772, %774, %775 : vector<256x128xi1>, vector<256x128xf32>
    %777 = arith.addf %752, %776 : vector<256x128xf32>
    %c0_i32_271 = arith.constant 0 : i32
    %778 = vector.broadcast %c0_i32_271 : i32 to vector<1x128xi32>
    %779 = arith.addi %718, %778 : vector<1x128xi32>
    %c15_i32_272 = arith.constant 15 : i32
    %780 = vector.broadcast %c15_i32_272 : i32 to vector<1x128xi32>
    %781 = arith.minsi %779, %780 : vector<1x128xi32>
    %cst_273 = arith.constant 1.000000e+00 : f32
    %782 = vector.broadcast %cst_273 : f32 to vector<1x128xf32>
    %783 = arith.subf %782, %717 : vector<1x128xf32>
    %c1_i32_274 = arith.constant 1 : i32
    %784 = vector.broadcast %c1_i32_274 : i32 to vector<1x128xi32>
    %785 = arith.muli %781, %784 : vector<1x128xi32>
    %c1_i32_275 = arith.constant 1 : i32
    %786 = vector.broadcast %c1_i32_275 : i32 to vector<1x128xi32>
    %787 = arith.addi %724, %786 : vector<1x128xi32>
    %c15_i32_276 = arith.constant 15 : i32
    %788 = vector.broadcast %c15_i32_276 : i32 to vector<1x128xi32>
    %789 = arith.minsi %787, %788 : vector<1x128xi32>
    %790 = arith.mulf %783, %723 : vector<1x128xf32>
    %c16_i32_277 = arith.constant 16 : i32
    %791 = vector.broadcast %c16_i32_277 : i32 to vector<1x128xi32>
    %792 = arith.muli %789, %791 : vector<1x128xi32>
    %793 = arith.addi %785, %792 : vector<1x128xi32>
    %c255_i32_278 = arith.constant 255 : i32
    %794 = vector.broadcast %c255_i32_278 : i32 to vector<1x128xi32>
    %795 = arith.andi %793, %794 : vector<1x128xi32>
    %796 = vector.broadcast %795 : vector<1x128xi32> to vector<256x128xi32>
    %797 = arith.cmpi eq, %796, %5 : vector<256x128xi32>
    %cst_279 = arith.constant 0.000000e+00 : f32
    %798 = vector.shape_cast %790 : vector<1x128xf32> to vector<1x128xf32>
    %799 = vector.broadcast %798 : vector<1x128xf32> to vector<256x128xf32>
    %800 = vector.broadcast %cst_279 : f32 to vector<256x128xf32>
    %801 = arith.select %797, %799, %800 : vector<256x128xi1>, vector<256x128xf32>
    %802 = arith.addf %777, %801 : vector<256x128xf32>
    %c1_i32_280 = arith.constant 1 : i32
    %803 = vector.broadcast %c1_i32_280 : i32 to vector<1x128xi32>
    %804 = arith.addi %718, %803 : vector<1x128xi32>
    %c15_i32_281 = arith.constant 15 : i32
    %805 = vector.broadcast %c15_i32_281 : i32 to vector<1x128xi32>
    %806 = arith.minsi %804, %805 : vector<1x128xi32>
    %c1_i32_282 = arith.constant 1 : i32
    %807 = vector.broadcast %c1_i32_282 : i32 to vector<1x128xi32>
    %808 = arith.muli %806, %807 : vector<1x128xi32>
    %c1_i32_283 = arith.constant 1 : i32
    %809 = vector.broadcast %c1_i32_283 : i32 to vector<1x128xi32>
    %810 = arith.addi %724, %809 : vector<1x128xi32>
    %c15_i32_284 = arith.constant 15 : i32
    %811 = vector.broadcast %c15_i32_284 : i32 to vector<1x128xi32>
    %812 = arith.minsi %810, %811 : vector<1x128xi32>
    %813 = arith.mulf %717, %723 : vector<1x128xf32>
    %c16_i32_285 = arith.constant 16 : i32
    %814 = vector.broadcast %c16_i32_285 : i32 to vector<1x128xi32>
    %815 = arith.muli %812, %814 : vector<1x128xi32>
    %816 = arith.addi %808, %815 : vector<1x128xi32>
    %c255_i32_286 = arith.constant 255 : i32
    %817 = vector.broadcast %c255_i32_286 : i32 to vector<1x128xi32>
    %818 = arith.andi %816, %817 : vector<1x128xi32>
    %819 = vector.broadcast %818 : vector<1x128xi32> to vector<256x128xi32>
    %820 = arith.cmpi eq, %819, %5 : vector<256x128xi32>
    %cst_287 = arith.constant 0.000000e+00 : f32
    %821 = vector.shape_cast %813 : vector<1x128xf32> to vector<1x128xf32>
    %822 = vector.broadcast %821 : vector<1x128xf32> to vector<256x128xf32>
    %823 = vector.broadcast %cst_287 : f32 to vector<256x128xf32>
    %824 = arith.select %820, %822, %823 : vector<256x128xi1>, vector<256x128xf32>
    %825 = arith.addf %802, %824 : vector<256x128xf32>
    %c1_288 = arith.constant 1 : index
    %c0_289 = arith.constant 0 : index
    %c0_290 = arith.constant 0 : index
    %826 = vector.load %arg3[%c1_288, %c0_289, %c0_290] : memref<2x4x256xbf16, #tpu.memory_space<vmem>>, vector<1x4x256xbf16>
    %827 = vector.shape_cast %826 : vector<1x4x256xbf16> to vector<4x256xbf16>
    %828 = arith.truncf %825 : vector<256x128xf32> to vector<256x128xbf16>
    %cst_291 = arith.constant dense<0.000000e+00> : vector<4x128xf32>
    %829 = tpu.matmul %827, %828, %cst_291 {dimension_numbers = #tpu.dot_dimension_numbers<[1], [0], [0], [1], [0, 0, 1, 1], [], []>} : vector<4x256xbf16>, vector<256x128xbf16>, vector<4x128xf32> -> vector<4x128xf32>
    %830 = vector.extract_strided_slice %4 {offsets = [0, 0], sizes = [1, 128], strides = [1, 1]} : vector<3x128xf32> to vector<1x128xf32>
    %cst_292 = arith.constant 7.000000e+00 : f32
    %831 = vector.broadcast %cst_292 : f32 to vector<1x128xf32>
    %832 = arith.mulf %830, %831 : vector<1x128xf32>
    %833 = math.floor %832 : vector<1x128xf32>
    %834 = arith.subf %832, %833 : vector<1x128xf32>
    %835 = arith.fptosi %833 : vector<1x128xf32> to vector<1x128xi32>
    %836 = vector.extract_strided_slice %4 {offsets = [2, 0], sizes = [1, 128], strides = [1, 1]} : vector<3x128xf32> to vector<1x128xf32>
    %cst_293 = arith.constant 7.000000e+00 : f32
    %837 = vector.broadcast %cst_293 : f32 to vector<1x128xf32>
    %838 = arith.mulf %836, %837 : vector<1x128xf32>
    %839 = math.floor %838 : vector<1x128xf32>
    %840 = arith.subf %838, %839 : vector<1x128xf32>
    %841 = arith.fptosi %839 : vector<1x128xf32> to vector<1x128xi32>
    %cst_294 = arith.constant 0.000000e+00 : f32
    %842 = vector.broadcast %cst_294 : f32 to vector<256x128xf32>
    %c0_i32_295 = arith.constant 0 : i32
    %843 = vector.broadcast %c0_i32_295 : i32 to vector<1x128xi32>
    %844 = arith.addi %835, %843 : vector<1x128xi32>
    %c7_i32_296 = arith.constant 7 : i32
    %845 = vector.broadcast %c7_i32_296 : i32 to vector<1x128xi32>
    %846 = arith.minsi %844, %845 : vector<1x128xi32>
    %cst_297 = arith.constant 1.000000e+00 : f32
    %847 = vector.broadcast %cst_297 : f32 to vector<1x128xf32>
    %848 = arith.subf %847, %834 : vector<1x128xf32>
    %c1_i32_298 = arith.constant 1 : i32
    %849 = vector.broadcast %c1_i32_298 : i32 to vector<1x128xi32>
    %850 = arith.muli %846, %849 : vector<1x128xi32>
    %c0_i32_299 = arith.constant 0 : i32
    %851 = vector.broadcast %c0_i32_299 : i32 to vector<1x128xi32>
    %852 = arith.addi %841, %851 : vector<1x128xi32>
    %c7_i32_300 = arith.constant 7 : i32
    %853 = vector.broadcast %c7_i32_300 : i32 to vector<1x128xi32>
    %854 = arith.minsi %852, %853 : vector<1x128xi32>
    %cst_301 = arith.constant 1.000000e+00 : f32
    %855 = vector.broadcast %cst_301 : f32 to vector<1x128xf32>
    %856 = arith.subf %855, %840 : vector<1x128xf32>
    %857 = arith.mulf %848, %856 : vector<1x128xf32>
    %c8_i32_302 = arith.constant 8 : i32
    %858 = vector.broadcast %c8_i32_302 : i32 to vector<1x128xi32>
    %859 = arith.muli %854, %858 : vector<1x128xi32>
    %860 = arith.addi %850, %859 : vector<1x128xi32>
    %c255_i32_303 = arith.constant 255 : i32
    %861 = vector.broadcast %c255_i32_303 : i32 to vector<1x128xi32>
    %862 = arith.andi %860, %861 : vector<1x128xi32>
    %863 = vector.broadcast %862 : vector<1x128xi32> to vector<256x128xi32>
    %864 = arith.cmpi eq, %863, %5 : vector<256x128xi32>
    %cst_304 = arith.constant 0.000000e+00 : f32
    %865 = vector.shape_cast %857 : vector<1x128xf32> to vector<1x128xf32>
    %866 = vector.broadcast %865 : vector<1x128xf32> to vector<256x128xf32>
    %867 = vector.broadcast %cst_304 : f32 to vector<256x128xf32>
    %868 = arith.select %864, %866, %867 : vector<256x128xi1>, vector<256x128xf32>
    %869 = arith.addf %842, %868 : vector<256x128xf32>
    %c1_i32_305 = arith.constant 1 : i32
    %870 = vector.broadcast %c1_i32_305 : i32 to vector<1x128xi32>
    %871 = arith.addi %835, %870 : vector<1x128xi32>
    %c7_i32_306 = arith.constant 7 : i32
    %872 = vector.broadcast %c7_i32_306 : i32 to vector<1x128xi32>
    %873 = arith.minsi %871, %872 : vector<1x128xi32>
    %c1_i32_307 = arith.constant 1 : i32
    %874 = vector.broadcast %c1_i32_307 : i32 to vector<1x128xi32>
    %875 = arith.muli %873, %874 : vector<1x128xi32>
    %c0_i32_308 = arith.constant 0 : i32
    %876 = vector.broadcast %c0_i32_308 : i32 to vector<1x128xi32>
    %877 = arith.addi %841, %876 : vector<1x128xi32>
    %c7_i32_309 = arith.constant 7 : i32
    %878 = vector.broadcast %c7_i32_309 : i32 to vector<1x128xi32>
    %879 = arith.minsi %877, %878 : vector<1x128xi32>
    %cst_310 = arith.constant 1.000000e+00 : f32
    %880 = vector.broadcast %cst_310 : f32 to vector<1x128xf32>
    %881 = arith.subf %880, %840 : vector<1x128xf32>
    %882 = arith.mulf %834, %881 : vector<1x128xf32>
    %c8_i32_311 = arith.constant 8 : i32
    %883 = vector.broadcast %c8_i32_311 : i32 to vector<1x128xi32>
    %884 = arith.muli %879, %883 : vector<1x128xi32>
    %885 = arith.addi %875, %884 : vector<1x128xi32>
    %c255_i32_312 = arith.constant 255 : i32
    %886 = vector.broadcast %c255_i32_312 : i32 to vector<1x128xi32>
    %887 = arith.andi %885, %886 : vector<1x128xi32>
    %888 = vector.broadcast %887 : vector<1x128xi32> to vector<256x128xi32>
    %889 = arith.cmpi eq, %888, %5 : vector<256x128xi32>
    %cst_313 = arith.constant 0.000000e+00 : f32
    %890 = vector.shape_cast %882 : vector<1x128xf32> to vector<1x128xf32>
    %891 = vector.broadcast %890 : vector<1x128xf32> to vector<256x128xf32>
    %892 = vector.broadcast %cst_313 : f32 to vector<256x128xf32>
    %893 = arith.select %889, %891, %892 : vector<256x128xi1>, vector<256x128xf32>
    %894 = arith.addf %869, %893 : vector<256x128xf32>
    %c0_i32_314 = arith.constant 0 : i32
    %895 = vector.broadcast %c0_i32_314 : i32 to vector<1x128xi32>
    %896 = arith.addi %835, %895 : vector<1x128xi32>
    %c7_i32_315 = arith.constant 7 : i32
    %897 = vector.broadcast %c7_i32_315 : i32 to vector<1x128xi32>
    %898 = arith.minsi %896, %897 : vector<1x128xi32>
    %cst_316 = arith.constant 1.000000e+00 : f32
    %899 = vector.broadcast %cst_316 : f32 to vector<1x128xf32>
    %900 = arith.subf %899, %834 : vector<1x128xf32>
    %c1_i32_317 = arith.constant 1 : i32
    %901 = vector.broadcast %c1_i32_317 : i32 to vector<1x128xi32>
    %902 = arith.muli %898, %901 : vector<1x128xi32>
    %c1_i32_318 = arith.constant 1 : i32
    %903 = vector.broadcast %c1_i32_318 : i32 to vector<1x128xi32>
    %904 = arith.addi %841, %903 : vector<1x128xi32>
    %c7_i32_319 = arith.constant 7 : i32
    %905 = vector.broadcast %c7_i32_319 : i32 to vector<1x128xi32>
    %906 = arith.minsi %904, %905 : vector<1x128xi32>
    %907 = arith.mulf %900, %840 : vector<1x128xf32>
    %c8_i32_320 = arith.constant 8 : i32
    %908 = vector.broadcast %c8_i32_320 : i32 to vector<1x128xi32>
    %909 = arith.muli %906, %908 : vector<1x128xi32>
    %910 = arith.addi %902, %909 : vector<1x128xi32>
    %c255_i32_321 = arith.constant 255 : i32
    %911 = vector.broadcast %c255_i32_321 : i32 to vector<1x128xi32>
    %912 = arith.andi %910, %911 : vector<1x128xi32>
    %913 = vector.broadcast %912 : vector<1x128xi32> to vector<256x128xi32>
    %914 = arith.cmpi eq, %913, %5 : vector<256x128xi32>
    %cst_322 = arith.constant 0.000000e+00 : f32
    %915 = vector.shape_cast %907 : vector<1x128xf32> to vector<1x128xf32>
    %916 = vector.broadcast %915 : vector<1x128xf32> to vector<256x128xf32>
    %917 = vector.broadcast %cst_322 : f32 to vector<256x128xf32>
    %918 = arith.select %914, %916, %917 : vector<256x128xi1>, vector<256x128xf32>
    %919 = arith.addf %894, %918 : vector<256x128xf32>
    %c1_i32_323 = arith.constant 1 : i32
    %920 = vector.broadcast %c1_i32_323 : i32 to vector<1x128xi32>
    %921 = arith.addi %835, %920 : vector<1x128xi32>
    %c7_i32_324 = arith.constant 7 : i32
    %922 = vector.broadcast %c7_i32_324 : i32 to vector<1x128xi32>
    %923 = arith.minsi %921, %922 : vector<1x128xi32>
    %c1_i32_325 = arith.constant 1 : i32
    %924 = vector.broadcast %c1_i32_325 : i32 to vector<1x128xi32>
    %925 = arith.muli %923, %924 : vector<1x128xi32>
    %c1_i32_326 = arith.constant 1 : i32
    %926 = vector.broadcast %c1_i32_326 : i32 to vector<1x128xi32>
    %927 = arith.addi %841, %926 : vector<1x128xi32>
    %c7_i32_327 = arith.constant 7 : i32
    %928 = vector.broadcast %c7_i32_327 : i32 to vector<1x128xi32>
    %929 = arith.minsi %927, %928 : vector<1x128xi32>
    %930 = arith.mulf %834, %840 : vector<1x128xf32>
    %c8_i32_328 = arith.constant 8 : i32
    %931 = vector.broadcast %c8_i32_328 : i32 to vector<1x128xi32>
    %932 = arith.muli %929, %931 : vector<1x128xi32>
    %933 = arith.addi %925, %932 : vector<1x128xi32>
    %c255_i32_329 = arith.constant 255 : i32
    %934 = vector.broadcast %c255_i32_329 : i32 to vector<1x128xi32>
    %935 = arith.andi %933, %934 : vector<1x128xi32>
    %936 = vector.broadcast %935 : vector<1x128xi32> to vector<256x128xi32>
    %937 = arith.cmpi eq, %936, %5 : vector<256x128xi32>
    %cst_330 = arith.constant 0.000000e+00 : f32
    %938 = vector.shape_cast %930 : vector<1x128xf32> to vector<1x128xf32>
    %939 = vector.broadcast %938 : vector<1x128xf32> to vector<256x128xf32>
    %940 = vector.broadcast %cst_330 : f32 to vector<256x128xf32>
    %941 = arith.select %937, %939, %940 : vector<256x128xi1>, vector<256x128xf32>
    %942 = arith.addf %919, %941 : vector<256x128xf32>
    %c0_331 = arith.constant 0 : index
    %c0_332 = arith.constant 0 : index
    %c0_333 = arith.constant 0 : index
    %943 = vector.load %arg4[%c0_331, %c0_332, %c0_333] : memref<2x4x256xbf16, #tpu.memory_space<vmem>>, vector<1x4x256xbf16>
    %944 = vector.shape_cast %943 : vector<1x4x256xbf16> to vector<4x256xbf16>
    %945 = arith.truncf %942 : vector<256x128xf32> to vector<256x128xbf16>
    %cst_334 = arith.constant dense<0.000000e+00> : vector<4x128xf32>
    %946 = tpu.matmul %944, %945, %cst_334 {dimension_numbers = #tpu.dot_dimension_numbers<[1], [0], [0], [1], [0, 0, 1, 1], [], []>} : vector<4x256xbf16>, vector<256x128xbf16>, vector<4x128xf32> -> vector<4x128xf32>
    %947 = vector.extract_strided_slice %4 {offsets = [0, 0], sizes = [1, 128], strides = [1, 1]} : vector<3x128xf32> to vector<1x128xf32>
    %cst_335 = arith.constant 1.500000e+01 : f32
    %948 = vector.broadcast %cst_335 : f32 to vector<1x128xf32>
    %949 = arith.mulf %947, %948 : vector<1x128xf32>
    %950 = math.floor %949 : vector<1x128xf32>
    %951 = arith.subf %949, %950 : vector<1x128xf32>
    %952 = arith.fptosi %950 : vector<1x128xf32> to vector<1x128xi32>
    %953 = vector.extract_strided_slice %4 {offsets = [2, 0], sizes = [1, 128], strides = [1, 1]} : vector<3x128xf32> to vector<1x128xf32>
    %cst_336 = arith.constant 1.500000e+01 : f32
    %954 = vector.broadcast %cst_336 : f32 to vector<1x128xf32>
    %955 = arith.mulf %953, %954 : vector<1x128xf32>
    %956 = math.floor %955 : vector<1x128xf32>
    %957 = arith.subf %955, %956 : vector<1x128xf32>
    %958 = arith.fptosi %956 : vector<1x128xf32> to vector<1x128xi32>
    %cst_337 = arith.constant 0.000000e+00 : f32
    %959 = vector.broadcast %cst_337 : f32 to vector<256x128xf32>
    %c0_i32_338 = arith.constant 0 : i32
    %960 = vector.broadcast %c0_i32_338 : i32 to vector<1x128xi32>
    %961 = arith.addi %952, %960 : vector<1x128xi32>
    %c15_i32_339 = arith.constant 15 : i32
    %962 = vector.broadcast %c15_i32_339 : i32 to vector<1x128xi32>
    %963 = arith.minsi %961, %962 : vector<1x128xi32>
    %cst_340 = arith.constant 1.000000e+00 : f32
    %964 = vector.broadcast %cst_340 : f32 to vector<1x128xf32>
    %965 = arith.subf %964, %951 : vector<1x128xf32>
    %c1_i32_341 = arith.constant 1 : i32
    %966 = vector.broadcast %c1_i32_341 : i32 to vector<1x128xi32>
    %967 = arith.muli %963, %966 : vector<1x128xi32>
    %c0_i32_342 = arith.constant 0 : i32
    %968 = vector.broadcast %c0_i32_342 : i32 to vector<1x128xi32>
    %969 = arith.addi %958, %968 : vector<1x128xi32>
    %c15_i32_343 = arith.constant 15 : i32
    %970 = vector.broadcast %c15_i32_343 : i32 to vector<1x128xi32>
    %971 = arith.minsi %969, %970 : vector<1x128xi32>
    %cst_344 = arith.constant 1.000000e+00 : f32
    %972 = vector.broadcast %cst_344 : f32 to vector<1x128xf32>
    %973 = arith.subf %972, %957 : vector<1x128xf32>
    %974 = arith.mulf %965, %973 : vector<1x128xf32>
    %c16_i32_345 = arith.constant 16 : i32
    %975 = vector.broadcast %c16_i32_345 : i32 to vector<1x128xi32>
    %976 = arith.muli %971, %975 : vector<1x128xi32>
    %977 = arith.addi %967, %976 : vector<1x128xi32>
    %c255_i32_346 = arith.constant 255 : i32
    %978 = vector.broadcast %c255_i32_346 : i32 to vector<1x128xi32>
    %979 = arith.andi %977, %978 : vector<1x128xi32>
    %980 = vector.broadcast %979 : vector<1x128xi32> to vector<256x128xi32>
    %981 = arith.cmpi eq, %980, %5 : vector<256x128xi32>
    %cst_347 = arith.constant 0.000000e+00 : f32
    %982 = vector.shape_cast %974 : vector<1x128xf32> to vector<1x128xf32>
    %983 = vector.broadcast %982 : vector<1x128xf32> to vector<256x128xf32>
    %984 = vector.broadcast %cst_347 : f32 to vector<256x128xf32>
    %985 = arith.select %981, %983, %984 : vector<256x128xi1>, vector<256x128xf32>
    %986 = arith.addf %959, %985 : vector<256x128xf32>
    %c1_i32_348 = arith.constant 1 : i32
    %987 = vector.broadcast %c1_i32_348 : i32 to vector<1x128xi32>
    %988 = arith.addi %952, %987 : vector<1x128xi32>
    %c15_i32_349 = arith.constant 15 : i32
    %989 = vector.broadcast %c15_i32_349 : i32 to vector<1x128xi32>
    %990 = arith.minsi %988, %989 : vector<1x128xi32>
    %c1_i32_350 = arith.constant 1 : i32
    %991 = vector.broadcast %c1_i32_350 : i32 to vector<1x128xi32>
    %992 = arith.muli %990, %991 : vector<1x128xi32>
    %c0_i32_351 = arith.constant 0 : i32
    %993 = vector.broadcast %c0_i32_351 : i32 to vector<1x128xi32>
    %994 = arith.addi %958, %993 : vector<1x128xi32>
    %c15_i32_352 = arith.constant 15 : i32
    %995 = vector.broadcast %c15_i32_352 : i32 to vector<1x128xi32>
    %996 = arith.minsi %994, %995 : vector<1x128xi32>
    %cst_353 = arith.constant 1.000000e+00 : f32
    %997 = vector.broadcast %cst_353 : f32 to vector<1x128xf32>
    %998 = arith.subf %997, %957 : vector<1x128xf32>
    %999 = arith.mulf %951, %998 : vector<1x128xf32>
    %c16_i32_354 = arith.constant 16 : i32
    %1000 = vector.broadcast %c16_i32_354 : i32 to vector<1x128xi32>
    %1001 = arith.muli %996, %1000 : vector<1x128xi32>
    %1002 = arith.addi %992, %1001 : vector<1x128xi32>
    %c255_i32_355 = arith.constant 255 : i32
    %1003 = vector.broadcast %c255_i32_355 : i32 to vector<1x128xi32>
    %1004 = arith.andi %1002, %1003 : vector<1x128xi32>
    %1005 = vector.broadcast %1004 : vector<1x128xi32> to vector<256x128xi32>
    %1006 = arith.cmpi eq, %1005, %5 : vector<256x128xi32>
    %cst_356 = arith.constant 0.000000e+00 : f32
    %1007 = vector.shape_cast %999 : vector<1x128xf32> to vector<1x128xf32>
    %1008 = vector.broadcast %1007 : vector<1x128xf32> to vector<256x128xf32>
    %1009 = vector.broadcast %cst_356 : f32 to vector<256x128xf32>
    %1010 = arith.select %1006, %1008, %1009 : vector<256x128xi1>, vector<256x128xf32>
    %1011 = arith.addf %986, %1010 : vector<256x128xf32>
    %c0_i32_357 = arith.constant 0 : i32
    %1012 = vector.broadcast %c0_i32_357 : i32 to vector<1x128xi32>
    %1013 = arith.addi %952, %1012 : vector<1x128xi32>
    %c15_i32_358 = arith.constant 15 : i32
    %1014 = vector.broadcast %c15_i32_358 : i32 to vector<1x128xi32>
    %1015 = arith.minsi %1013, %1014 : vector<1x128xi32>
    %cst_359 = arith.constant 1.000000e+00 : f32
    %1016 = vector.broadcast %cst_359 : f32 to vector<1x128xf32>
    %1017 = arith.subf %1016, %951 : vector<1x128xf32>
    %c1_i32_360 = arith.constant 1 : i32
    %1018 = vector.broadcast %c1_i32_360 : i32 to vector<1x128xi32>
    %1019 = arith.muli %1015, %1018 : vector<1x128xi32>
    %c1_i32_361 = arith.constant 1 : i32
    %1020 = vector.broadcast %c1_i32_361 : i32 to vector<1x128xi32>
    %1021 = arith.addi %958, %1020 : vector<1x128xi32>
    %c15_i32_362 = arith.constant 15 : i32
    %1022 = vector.broadcast %c15_i32_362 : i32 to vector<1x128xi32>
    %1023 = arith.minsi %1021, %1022 : vector<1x128xi32>
    %1024 = arith.mulf %1017, %957 : vector<1x128xf32>
    %c16_i32_363 = arith.constant 16 : i32
    %1025 = vector.broadcast %c16_i32_363 : i32 to vector<1x128xi32>
    %1026 = arith.muli %1023, %1025 : vector<1x128xi32>
    %1027 = arith.addi %1019, %1026 : vector<1x128xi32>
    %c255_i32_364 = arith.constant 255 : i32
    %1028 = vector.broadcast %c255_i32_364 : i32 to vector<1x128xi32>
    %1029 = arith.andi %1027, %1028 : vector<1x128xi32>
    %1030 = vector.broadcast %1029 : vector<1x128xi32> to vector<256x128xi32>
    %1031 = arith.cmpi eq, %1030, %5 : vector<256x128xi32>
    %cst_365 = arith.constant 0.000000e+00 : f32
    %1032 = vector.shape_cast %1024 : vector<1x128xf32> to vector<1x128xf32>
    %1033 = vector.broadcast %1032 : vector<1x128xf32> to vector<256x128xf32>
    %1034 = vector.broadcast %cst_365 : f32 to vector<256x128xf32>
    %1035 = arith.select %1031, %1033, %1034 : vector<256x128xi1>, vector<256x128xf32>
    %1036 = arith.addf %1011, %1035 : vector<256x128xf32>
    %c1_i32_366 = arith.constant 1 : i32
    %1037 = vector.broadcast %c1_i32_366 : i32 to vector<1x128xi32>
    %1038 = arith.addi %952, %1037 : vector<1x128xi32>
    %c15_i32_367 = arith.constant 15 : i32
    %1039 = vector.broadcast %c15_i32_367 : i32 to vector<1x128xi32>
    %1040 = arith.minsi %1038, %1039 : vector<1x128xi32>
    %c1_i32_368 = arith.constant 1 : i32
    %1041 = vector.broadcast %c1_i32_368 : i32 to vector<1x128xi32>
    %1042 = arith.muli %1040, %1041 : vector<1x128xi32>
    %c1_i32_369 = arith.constant 1 : i32
    %1043 = vector.broadcast %c1_i32_369 : i32 to vector<1x128xi32>
    %1044 = arith.addi %958, %1043 : vector<1x128xi32>
    %c15_i32_370 = arith.constant 15 : i32
    %1045 = vector.broadcast %c15_i32_370 : i32 to vector<1x128xi32>
    %1046 = arith.minsi %1044, %1045 : vector<1x128xi32>
    %1047 = arith.mulf %951, %957 : vector<1x128xf32>
    %c16_i32_371 = arith.constant 16 : i32
    %1048 = vector.broadcast %c16_i32_371 : i32 to vector<1x128xi32>
    %1049 = arith.muli %1046, %1048 : vector<1x128xi32>
    %1050 = arith.addi %1042, %1049 : vector<1x128xi32>
    %c255_i32_372 = arith.constant 255 : i32
    %1051 = vector.broadcast %c255_i32_372 : i32 to vector<1x128xi32>
    %1052 = arith.andi %1050, %1051 : vector<1x128xi32>
    %1053 = vector.broadcast %1052 : vector<1x128xi32> to vector<256x128xi32>
    %1054 = arith.cmpi eq, %1053, %5 : vector<256x128xi32>
    %cst_373 = arith.constant 0.000000e+00 : f32
    %1055 = vector.shape_cast %1047 : vector<1x128xf32> to vector<1x128xf32>
    %1056 = vector.broadcast %1055 : vector<1x128xf32> to vector<256x128xf32>
    %1057 = vector.broadcast %cst_373 : f32 to vector<256x128xf32>
    %1058 = arith.select %1054, %1056, %1057 : vector<256x128xi1>, vector<256x128xf32>
    %1059 = arith.addf %1036, %1058 : vector<256x128xf32>
    %c1_374 = arith.constant 1 : index
    %c0_375 = arith.constant 0 : index
    %c0_376 = arith.constant 0 : index
    %1060 = vector.load %arg4[%c1_374, %c0_375, %c0_376] : memref<2x4x256xbf16, #tpu.memory_space<vmem>>, vector<1x4x256xbf16>
    %1061 = vector.shape_cast %1060 : vector<1x4x256xbf16> to vector<4x256xbf16>
    %1062 = arith.truncf %1059 : vector<256x128xf32> to vector<256x128xbf16>
    %cst_377 = arith.constant dense<0.000000e+00> : vector<4x128xf32>
    %1063 = tpu.matmul %1061, %1062, %cst_377 {dimension_numbers = #tpu.dot_dimension_numbers<[1], [0], [0], [1], [0, 0, 1, 1], [], []>} : vector<4x256xbf16>, vector<256x128xbf16>, vector<4x128xf32> -> vector<4x128xf32>
    %1064 = vector.extract_strided_slice %4 {offsets = [1, 0], sizes = [1, 128], strides = [1, 1]} : vector<3x128xf32> to vector<1x128xf32>
    %cst_378 = arith.constant 7.000000e+00 : f32
    %1065 = vector.broadcast %cst_378 : f32 to vector<1x128xf32>
    %1066 = arith.mulf %1064, %1065 : vector<1x128xf32>
    %1067 = math.floor %1066 : vector<1x128xf32>
    %1068 = arith.subf %1066, %1067 : vector<1x128xf32>
    %1069 = arith.fptosi %1067 : vector<1x128xf32> to vector<1x128xi32>
    %1070 = vector.extract_strided_slice %4 {offsets = [2, 0], sizes = [1, 128], strides = [1, 1]} : vector<3x128xf32> to vector<1x128xf32>
    %cst_379 = arith.constant 7.000000e+00 : f32
    %1071 = vector.broadcast %cst_379 : f32 to vector<1x128xf32>
    %1072 = arith.mulf %1070, %1071 : vector<1x128xf32>
    %1073 = math.floor %1072 : vector<1x128xf32>
    %1074 = arith.subf %1072, %1073 : vector<1x128xf32>
    %1075 = arith.fptosi %1073 : vector<1x128xf32> to vector<1x128xi32>
    %cst_380 = arith.constant 0.000000e+00 : f32
    %1076 = vector.broadcast %cst_380 : f32 to vector<256x128xf32>
    %c0_i32_381 = arith.constant 0 : i32
    %1077 = vector.broadcast %c0_i32_381 : i32 to vector<1x128xi32>
    %1078 = arith.addi %1069, %1077 : vector<1x128xi32>
    %c7_i32_382 = arith.constant 7 : i32
    %1079 = vector.broadcast %c7_i32_382 : i32 to vector<1x128xi32>
    %1080 = arith.minsi %1078, %1079 : vector<1x128xi32>
    %cst_383 = arith.constant 1.000000e+00 : f32
    %1081 = vector.broadcast %cst_383 : f32 to vector<1x128xf32>
    %1082 = arith.subf %1081, %1068 : vector<1x128xf32>
    %c1_i32_384 = arith.constant 1 : i32
    %1083 = vector.broadcast %c1_i32_384 : i32 to vector<1x128xi32>
    %1084 = arith.muli %1080, %1083 : vector<1x128xi32>
    %c0_i32_385 = arith.constant 0 : i32
    %1085 = vector.broadcast %c0_i32_385 : i32 to vector<1x128xi32>
    %1086 = arith.addi %1075, %1085 : vector<1x128xi32>
    %c7_i32_386 = arith.constant 7 : i32
    %1087 = vector.broadcast %c7_i32_386 : i32 to vector<1x128xi32>
    %1088 = arith.minsi %1086, %1087 : vector<1x128xi32>
    %cst_387 = arith.constant 1.000000e+00 : f32
    %1089 = vector.broadcast %cst_387 : f32 to vector<1x128xf32>
    %1090 = arith.subf %1089, %1074 : vector<1x128xf32>
    %1091 = arith.mulf %1082, %1090 : vector<1x128xf32>
    %c8_i32_388 = arith.constant 8 : i32
    %1092 = vector.broadcast %c8_i32_388 : i32 to vector<1x128xi32>
    %1093 = arith.muli %1088, %1092 : vector<1x128xi32>
    %1094 = arith.addi %1084, %1093 : vector<1x128xi32>
    %c255_i32_389 = arith.constant 255 : i32
    %1095 = vector.broadcast %c255_i32_389 : i32 to vector<1x128xi32>
    %1096 = arith.andi %1094, %1095 : vector<1x128xi32>
    %1097 = vector.broadcast %1096 : vector<1x128xi32> to vector<256x128xi32>
    %1098 = arith.cmpi eq, %1097, %5 : vector<256x128xi32>
    %cst_390 = arith.constant 0.000000e+00 : f32
    %1099 = vector.shape_cast %1091 : vector<1x128xf32> to vector<1x128xf32>
    %1100 = vector.broadcast %1099 : vector<1x128xf32> to vector<256x128xf32>
    %1101 = vector.broadcast %cst_390 : f32 to vector<256x128xf32>
    %1102 = arith.select %1098, %1100, %1101 : vector<256x128xi1>, vector<256x128xf32>
    %1103 = arith.addf %1076, %1102 : vector<256x128xf32>
    %c1_i32_391 = arith.constant 1 : i32
    %1104 = vector.broadcast %c1_i32_391 : i32 to vector<1x128xi32>
    %1105 = arith.addi %1069, %1104 : vector<1x128xi32>
    %c7_i32_392 = arith.constant 7 : i32
    %1106 = vector.broadcast %c7_i32_392 : i32 to vector<1x128xi32>
    %1107 = arith.minsi %1105, %1106 : vector<1x128xi32>
    %c1_i32_393 = arith.constant 1 : i32
    %1108 = vector.broadcast %c1_i32_393 : i32 to vector<1x128xi32>
    %1109 = arith.muli %1107, %1108 : vector<1x128xi32>
    %c0_i32_394 = arith.constant 0 : i32
    %1110 = vector.broadcast %c0_i32_394 : i32 to vector<1x128xi32>
    %1111 = arith.addi %1075, %1110 : vector<1x128xi32>
    %c7_i32_395 = arith.constant 7 : i32
    %1112 = vector.broadcast %c7_i32_395 : i32 to vector<1x128xi32>
    %1113 = arith.minsi %1111, %1112 : vector<1x128xi32>
    %cst_396 = arith.constant 1.000000e+00 : f32
    %1114 = vector.broadcast %cst_396 : f32 to vector<1x128xf32>
    %1115 = arith.subf %1114, %1074 : vector<1x128xf32>
    %1116 = arith.mulf %1068, %1115 : vector<1x128xf32>
    %c8_i32_397 = arith.constant 8 : i32
    %1117 = vector.broadcast %c8_i32_397 : i32 to vector<1x128xi32>
    %1118 = arith.muli %1113, %1117 : vector<1x128xi32>
    %1119 = arith.addi %1109, %1118 : vector<1x128xi32>
    %c255_i32_398 = arith.constant 255 : i32
    %1120 = vector.broadcast %c255_i32_398 : i32 to vector<1x128xi32>
    %1121 = arith.andi %1119, %1120 : vector<1x128xi32>
    %1122 = vector.broadcast %1121 : vector<1x128xi32> to vector<256x128xi32>
    %1123 = arith.cmpi eq, %1122, %5 : vector<256x128xi32>
    %cst_399 = arith.constant 0.000000e+00 : f32
    %1124 = vector.shape_cast %1116 : vector<1x128xf32> to vector<1x128xf32>
    %1125 = vector.broadcast %1124 : vector<1x128xf32> to vector<256x128xf32>
    %1126 = vector.broadcast %cst_399 : f32 to vector<256x128xf32>
    %1127 = arith.select %1123, %1125, %1126 : vector<256x128xi1>, vector<256x128xf32>
    %1128 = arith.addf %1103, %1127 : vector<256x128xf32>
    %c0_i32_400 = arith.constant 0 : i32
    %1129 = vector.broadcast %c0_i32_400 : i32 to vector<1x128xi32>
    %1130 = arith.addi %1069, %1129 : vector<1x128xi32>
    %c7_i32_401 = arith.constant 7 : i32
    %1131 = vector.broadcast %c7_i32_401 : i32 to vector<1x128xi32>
    %1132 = arith.minsi %1130, %1131 : vector<1x128xi32>
    %cst_402 = arith.constant 1.000000e+00 : f32
    %1133 = vector.broadcast %cst_402 : f32 to vector<1x128xf32>
    %1134 = arith.subf %1133, %1068 : vector<1x128xf32>
    %c1_i32_403 = arith.constant 1 : i32
    %1135 = vector.broadcast %c1_i32_403 : i32 to vector<1x128xi32>
    %1136 = arith.muli %1132, %1135 : vector<1x128xi32>
    %c1_i32_404 = arith.constant 1 : i32
    %1137 = vector.broadcast %c1_i32_404 : i32 to vector<1x128xi32>
    %1138 = arith.addi %1075, %1137 : vector<1x128xi32>
    %c7_i32_405 = arith.constant 7 : i32
    %1139 = vector.broadcast %c7_i32_405 : i32 to vector<1x128xi32>
    %1140 = arith.minsi %1138, %1139 : vector<1x128xi32>
    %1141 = arith.mulf %1134, %1074 : vector<1x128xf32>
    %c8_i32_406 = arith.constant 8 : i32
    %1142 = vector.broadcast %c8_i32_406 : i32 to vector<1x128xi32>
    %1143 = arith.muli %1140, %1142 : vector<1x128xi32>
    %1144 = arith.addi %1136, %1143 : vector<1x128xi32>
    %c255_i32_407 = arith.constant 255 : i32
    %1145 = vector.broadcast %c255_i32_407 : i32 to vector<1x128xi32>
    %1146 = arith.andi %1144, %1145 : vector<1x128xi32>
    %1147 = vector.broadcast %1146 : vector<1x128xi32> to vector<256x128xi32>
    %1148 = arith.cmpi eq, %1147, %5 : vector<256x128xi32>
    %cst_408 = arith.constant 0.000000e+00 : f32
    %1149 = vector.shape_cast %1141 : vector<1x128xf32> to vector<1x128xf32>
    %1150 = vector.broadcast %1149 : vector<1x128xf32> to vector<256x128xf32>
    %1151 = vector.broadcast %cst_408 : f32 to vector<256x128xf32>
    %1152 = arith.select %1148, %1150, %1151 : vector<256x128xi1>, vector<256x128xf32>
    %1153 = arith.addf %1128, %1152 : vector<256x128xf32>
    %c1_i32_409 = arith.constant 1 : i32
    %1154 = vector.broadcast %c1_i32_409 : i32 to vector<1x128xi32>
    %1155 = arith.addi %1069, %1154 : vector<1x128xi32>
    %c7_i32_410 = arith.constant 7 : i32
    %1156 = vector.broadcast %c7_i32_410 : i32 to vector<1x128xi32>
    %1157 = arith.minsi %1155, %1156 : vector<1x128xi32>
    %c1_i32_411 = arith.constant 1 : i32
    %1158 = vector.broadcast %c1_i32_411 : i32 to vector<1x128xi32>
    %1159 = arith.muli %1157, %1158 : vector<1x128xi32>
    %c1_i32_412 = arith.constant 1 : i32
    %1160 = vector.broadcast %c1_i32_412 : i32 to vector<1x128xi32>
    %1161 = arith.addi %1075, %1160 : vector<1x128xi32>
    %c7_i32_413 = arith.constant 7 : i32
    %1162 = vector.broadcast %c7_i32_413 : i32 to vector<1x128xi32>
    %1163 = arith.minsi %1161, %1162 : vector<1x128xi32>
    %1164 = arith.mulf %1068, %1074 : vector<1x128xf32>
    %c8_i32_414 = arith.constant 8 : i32
    %1165 = vector.broadcast %c8_i32_414 : i32 to vector<1x128xi32>
    %1166 = arith.muli %1163, %1165 : vector<1x128xi32>
    %1167 = arith.addi %1159, %1166 : vector<1x128xi32>
    %c255_i32_415 = arith.constant 255 : i32
    %1168 = vector.broadcast %c255_i32_415 : i32 to vector<1x128xi32>
    %1169 = arith.andi %1167, %1168 : vector<1x128xi32>
    %1170 = vector.broadcast %1169 : vector<1x128xi32> to vector<256x128xi32>
    %1171 = arith.cmpi eq, %1170, %5 : vector<256x128xi32>
    %cst_416 = arith.constant 0.000000e+00 : f32
    %1172 = vector.shape_cast %1164 : vector<1x128xf32> to vector<1x128xf32>
    %1173 = vector.broadcast %1172 : vector<1x128xf32> to vector<256x128xf32>
    %1174 = vector.broadcast %cst_416 : f32 to vector<256x128xf32>
    %1175 = arith.select %1171, %1173, %1174 : vector<256x128xi1>, vector<256x128xf32>
    %1176 = arith.addf %1153, %1175 : vector<256x128xf32>
    %c0_417 = arith.constant 0 : index
    %c0_418 = arith.constant 0 : index
    %c0_419 = arith.constant 0 : index
    %1177 = vector.load %arg5[%c0_417, %c0_418, %c0_419] : memref<2x4x256xbf16, #tpu.memory_space<vmem>>, vector<1x4x256xbf16>
    %1178 = vector.shape_cast %1177 : vector<1x4x256xbf16> to vector<4x256xbf16>
    %1179 = arith.truncf %1176 : vector<256x128xf32> to vector<256x128xbf16>
    %cst_420 = arith.constant dense<0.000000e+00> : vector<4x128xf32>
    %1180 = tpu.matmul %1178, %1179, %cst_420 {dimension_numbers = #tpu.dot_dimension_numbers<[1], [0], [0], [1], [0, 0, 1, 1], [], []>} : vector<4x256xbf16>, vector<256x128xbf16>, vector<4x128xf32> -> vector<4x128xf32>
    %1181 = vector.extract_strided_slice %4 {offsets = [1, 0], sizes = [1, 128], strides = [1, 1]} : vector<3x128xf32> to vector<1x128xf32>
    %cst_421 = arith.constant 1.500000e+01 : f32
    %1182 = vector.broadcast %cst_421 : f32 to vector<1x128xf32>
    %1183 = arith.mulf %1181, %1182 : vector<1x128xf32>
    %1184 = math.floor %1183 : vector<1x128xf32>
    %1185 = arith.subf %1183, %1184 : vector<1x128xf32>
    %1186 = arith.fptosi %1184 : vector<1x128xf32> to vector<1x128xi32>
    %1187 = vector.extract_strided_slice %4 {offsets = [2, 0], sizes = [1, 128], strides = [1, 1]} : vector<3x128xf32> to vector<1x128xf32>
    %cst_422 = arith.constant 1.500000e+01 : f32
    %1188 = vector.broadcast %cst_422 : f32 to vector<1x128xf32>
    %1189 = arith.mulf %1187, %1188 : vector<1x128xf32>
    %1190 = math.floor %1189 : vector<1x128xf32>
    %1191 = arith.subf %1189, %1190 : vector<1x128xf32>
    %1192 = arith.fptosi %1190 : vector<1x128xf32> to vector<1x128xi32>
    %cst_423 = arith.constant 0.000000e+00 : f32
    %1193 = vector.broadcast %cst_423 : f32 to vector<256x128xf32>
    %c0_i32_424 = arith.constant 0 : i32
    %1194 = vector.broadcast %c0_i32_424 : i32 to vector<1x128xi32>
    %1195 = arith.addi %1186, %1194 : vector<1x128xi32>
    %c15_i32_425 = arith.constant 15 : i32
    %1196 = vector.broadcast %c15_i32_425 : i32 to vector<1x128xi32>
    %1197 = arith.minsi %1195, %1196 : vector<1x128xi32>
    %cst_426 = arith.constant 1.000000e+00 : f32
    %1198 = vector.broadcast %cst_426 : f32 to vector<1x128xf32>
    %1199 = arith.subf %1198, %1185 : vector<1x128xf32>
    %c1_i32_427 = arith.constant 1 : i32
    %1200 = vector.broadcast %c1_i32_427 : i32 to vector<1x128xi32>
    %1201 = arith.muli %1197, %1200 : vector<1x128xi32>
    %c0_i32_428 = arith.constant 0 : i32
    %1202 = vector.broadcast %c0_i32_428 : i32 to vector<1x128xi32>
    %1203 = arith.addi %1192, %1202 : vector<1x128xi32>
    %c15_i32_429 = arith.constant 15 : i32
    %1204 = vector.broadcast %c15_i32_429 : i32 to vector<1x128xi32>
    %1205 = arith.minsi %1203, %1204 : vector<1x128xi32>
    %cst_430 = arith.constant 1.000000e+00 : f32
    %1206 = vector.broadcast %cst_430 : f32 to vector<1x128xf32>
    %1207 = arith.subf %1206, %1191 : vector<1x128xf32>
    %1208 = arith.mulf %1199, %1207 : vector<1x128xf32>
    %c16_i32_431 = arith.constant 16 : i32
    %1209 = vector.broadcast %c16_i32_431 : i32 to vector<1x128xi32>
    %1210 = arith.muli %1205, %1209 : vector<1x128xi32>
    %1211 = arith.addi %1201, %1210 : vector<1x128xi32>
    %c255_i32_432 = arith.constant 255 : i32
    %1212 = vector.broadcast %c255_i32_432 : i32 to vector<1x128xi32>
    %1213 = arith.andi %1211, %1212 : vector<1x128xi32>
    %1214 = vector.broadcast %1213 : vector<1x128xi32> to vector<256x128xi32>
    %1215 = arith.cmpi eq, %1214, %5 : vector<256x128xi32>
    %cst_433 = arith.constant 0.000000e+00 : f32
    %1216 = vector.shape_cast %1208 : vector<1x128xf32> to vector<1x128xf32>
    %1217 = vector.broadcast %1216 : vector<1x128xf32> to vector<256x128xf32>
    %1218 = vector.broadcast %cst_433 : f32 to vector<256x128xf32>
    %1219 = arith.select %1215, %1217, %1218 : vector<256x128xi1>, vector<256x128xf32>
    %1220 = arith.addf %1193, %1219 : vector<256x128xf32>
    %c1_i32_434 = arith.constant 1 : i32
    %1221 = vector.broadcast %c1_i32_434 : i32 to vector<1x128xi32>
    %1222 = arith.addi %1186, %1221 : vector<1x128xi32>
    %c15_i32_435 = arith.constant 15 : i32
    %1223 = vector.broadcast %c15_i32_435 : i32 to vector<1x128xi32>
    %1224 = arith.minsi %1222, %1223 : vector<1x128xi32>
    %c1_i32_436 = arith.constant 1 : i32
    %1225 = vector.broadcast %c1_i32_436 : i32 to vector<1x128xi32>
    %1226 = arith.muli %1224, %1225 : vector<1x128xi32>
    %c0_i32_437 = arith.constant 0 : i32
    %1227 = vector.broadcast %c0_i32_437 : i32 to vector<1x128xi32>
    %1228 = arith.addi %1192, %1227 : vector<1x128xi32>
    %c15_i32_438 = arith.constant 15 : i32
    %1229 = vector.broadcast %c15_i32_438 : i32 to vector<1x128xi32>
    %1230 = arith.minsi %1228, %1229 : vector<1x128xi32>
    %cst_439 = arith.constant 1.000000e+00 : f32
    %1231 = vector.broadcast %cst_439 : f32 to vector<1x128xf32>
    %1232 = arith.subf %1231, %1191 : vector<1x128xf32>
    %1233 = arith.mulf %1185, %1232 : vector<1x128xf32>
    %c16_i32_440 = arith.constant 16 : i32
    %1234 = vector.broadcast %c16_i32_440 : i32 to vector<1x128xi32>
    %1235 = arith.muli %1230, %1234 : vector<1x128xi32>
    %1236 = arith.addi %1226, %1235 : vector<1x128xi32>
    %c255_i32_441 = arith.constant 255 : i32
    %1237 = vector.broadcast %c255_i32_441 : i32 to vector<1x128xi32>
    %1238 = arith.andi %1236, %1237 : vector<1x128xi32>
    %1239 = vector.broadcast %1238 : vector<1x128xi32> to vector<256x128xi32>
    %1240 = arith.cmpi eq, %1239, %5 : vector<256x128xi32>
    %cst_442 = arith.constant 0.000000e+00 : f32
    %1241 = vector.shape_cast %1233 : vector<1x128xf32> to vector<1x128xf32>
    %1242 = vector.broadcast %1241 : vector<1x128xf32> to vector<256x128xf32>
    %1243 = vector.broadcast %cst_442 : f32 to vector<256x128xf32>
    %1244 = arith.select %1240, %1242, %1243 : vector<256x128xi1>, vector<256x128xf32>
    %1245 = arith.addf %1220, %1244 : vector<256x128xf32>
    %c0_i32_443 = arith.constant 0 : i32
    %1246 = vector.broadcast %c0_i32_443 : i32 to vector<1x128xi32>
    %1247 = arith.addi %1186, %1246 : vector<1x128xi32>
    %c15_i32_444 = arith.constant 15 : i32
    %1248 = vector.broadcast %c15_i32_444 : i32 to vector<1x128xi32>
    %1249 = arith.minsi %1247, %1248 : vector<1x128xi32>
    %cst_445 = arith.constant 1.000000e+00 : f32
    %1250 = vector.broadcast %cst_445 : f32 to vector<1x128xf32>
    %1251 = arith.subf %1250, %1185 : vector<1x128xf32>
    %c1_i32_446 = arith.constant 1 : i32
    %1252 = vector.broadcast %c1_i32_446 : i32 to vector<1x128xi32>
    %1253 = arith.muli %1249, %1252 : vector<1x128xi32>
    %c1_i32_447 = arith.constant 1 : i32
    %1254 = vector.broadcast %c1_i32_447 : i32 to vector<1x128xi32>
    %1255 = arith.addi %1192, %1254 : vector<1x128xi32>
    %c15_i32_448 = arith.constant 15 : i32
    %1256 = vector.broadcast %c15_i32_448 : i32 to vector<1x128xi32>
    %1257 = arith.minsi %1255, %1256 : vector<1x128xi32>
    %1258 = arith.mulf %1251, %1191 : vector<1x128xf32>
    %c16_i32_449 = arith.constant 16 : i32
    %1259 = vector.broadcast %c16_i32_449 : i32 to vector<1x128xi32>
    %1260 = arith.muli %1257, %1259 : vector<1x128xi32>
    %1261 = arith.addi %1253, %1260 : vector<1x128xi32>
    %c255_i32_450 = arith.constant 255 : i32
    %1262 = vector.broadcast %c255_i32_450 : i32 to vector<1x128xi32>
    %1263 = arith.andi %1261, %1262 : vector<1x128xi32>
    %1264 = vector.broadcast %1263 : vector<1x128xi32> to vector<256x128xi32>
    %1265 = arith.cmpi eq, %1264, %5 : vector<256x128xi32>
    %cst_451 = arith.constant 0.000000e+00 : f32
    %1266 = vector.shape_cast %1258 : vector<1x128xf32> to vector<1x128xf32>
    %1267 = vector.broadcast %1266 : vector<1x128xf32> to vector<256x128xf32>
    %1268 = vector.broadcast %cst_451 : f32 to vector<256x128xf32>
    %1269 = arith.select %1265, %1267, %1268 : vector<256x128xi1>, vector<256x128xf32>
    %1270 = arith.addf %1245, %1269 : vector<256x128xf32>
    %c1_i32_452 = arith.constant 1 : i32
    %1271 = vector.broadcast %c1_i32_452 : i32 to vector<1x128xi32>
    %1272 = arith.addi %1186, %1271 : vector<1x128xi32>
    %c15_i32_453 = arith.constant 15 : i32
    %1273 = vector.broadcast %c15_i32_453 : i32 to vector<1x128xi32>
    %1274 = arith.minsi %1272, %1273 : vector<1x128xi32>
    %c1_i32_454 = arith.constant 1 : i32
    %1275 = vector.broadcast %c1_i32_454 : i32 to vector<1x128xi32>
    %1276 = arith.muli %1274, %1275 : vector<1x128xi32>
    %c1_i32_455 = arith.constant 1 : i32
    %1277 = vector.broadcast %c1_i32_455 : i32 to vector<1x128xi32>
    %1278 = arith.addi %1192, %1277 : vector<1x128xi32>
    %c15_i32_456 = arith.constant 15 : i32
    %1279 = vector.broadcast %c15_i32_456 : i32 to vector<1x128xi32>
    %1280 = arith.minsi %1278, %1279 : vector<1x128xi32>
    %1281 = arith.mulf %1185, %1191 : vector<1x128xf32>
    %c16_i32_457 = arith.constant 16 : i32
    %1282 = vector.broadcast %c16_i32_457 : i32 to vector<1x128xi32>
    %1283 = arith.muli %1280, %1282 : vector<1x128xi32>
    %1284 = arith.addi %1276, %1283 : vector<1x128xi32>
    %c255_i32_458 = arith.constant 255 : i32
    %1285 = vector.broadcast %c255_i32_458 : i32 to vector<1x128xi32>
    %1286 = arith.andi %1284, %1285 : vector<1x128xi32>
    %1287 = vector.broadcast %1286 : vector<1x128xi32> to vector<256x128xi32>
    %1288 = arith.cmpi eq, %1287, %5 : vector<256x128xi32>
    %cst_459 = arith.constant 0.000000e+00 : f32
    %1289 = vector.shape_cast %1281 : vector<1x128xf32> to vector<1x128xf32>
    %1290 = vector.broadcast %1289 : vector<1x128xf32> to vector<256x128xf32>
    %1291 = vector.broadcast %cst_459 : f32 to vector<256x128xf32>
    %1292 = arith.select %1288, %1290, %1291 : vector<256x128xi1>, vector<256x128xf32>
    %1293 = arith.addf %1270, %1292 : vector<256x128xf32>
    %c1_460 = arith.constant 1 : index
    %c0_461 = arith.constant 0 : index
    %c0_462 = arith.constant 0 : index
    %1294 = vector.load %arg5[%c1_460, %c0_461, %c0_462] : memref<2x4x256xbf16, #tpu.memory_space<vmem>>, vector<1x4x256xbf16>
    %1295 = vector.shape_cast %1294 : vector<1x4x256xbf16> to vector<4x256xbf16>
    %1296 = arith.truncf %1293 : vector<256x128xf32> to vector<256x128xbf16>
    %cst_463 = arith.constant dense<0.000000e+00> : vector<4x128xf32>
    %1297 = tpu.matmul %1295, %1296, %cst_463 {dimension_numbers = #tpu.dot_dimension_numbers<[1], [0], [0], [1], [0, 0, 1, 1], [], []>} : vector<4x256xbf16>, vector<256x128xbf16>, vector<4x128xf32> -> vector<4x128xf32>
    %1298 = tpu.concatenate %300, %595, %712, %829, %946, %1063, %1180, %1297 in 0 : vector<4x128xf32>, vector<4x128xf32>, vector<4x128xf32>, vector<4x128xf32>, vector<4x128xf32>, vector<4x128xf32>, vector<4x128xf32>, vector<4x128xf32> -> vector<32x128xf32>
    %c0_464 = arith.constant 0 : index
    %c0_465 = arith.constant 0 : index
    %1299 = vector.load %arg6[%c0_464, %c0_465] : memref<32x128xf32, #tpu.memory_space<vmem>>, vector<32x128xf32>
    tpu.vector_store %arg6[%c0_464, %c0_465], %1298 {strides = array<i32>} : memref<32x128xf32, #tpu.memory_space<vmem>>, vector<32x128xf32>,
    return
  }
  func.func @transform_0(%arg0: i32) -> (i32, i32) {
    %c0_i32 = arith.constant 0 : i32
    %c0_i32_0 = arith.constant 0 : i32
    return %c0_i32, %arg0 : i32, i32
  }
  func.func @transform_1(%arg0: i32) -> (i32, i32, i32) {
    %c0_i32 = arith.constant 0 : i32
    %c0_i32_0 = arith.constant 0 : i32
    %c0_i32_1 = arith.constant 0 : i32
    %c0_i32_2 = arith.constant 0 : i32
    return %c0_i32, %c0_i32_0, %c0_i32_1 : i32, i32, i32
  }
  func.func @transform_2(%arg0: i32) -> (i32, i32, i32) {
    %c0_i32 = arith.constant 0 : i32
    %c0_i32_0 = arith.constant 0 : i32
    %c0_i32_1 = arith.constant 0 : i32
    %c0_i32_2 = arith.constant 0 : i32
    return %c0_i32, %c0_i32_0, %c0_i32_1 : i32, i32, i32
  }
  func.func @transform_3(%arg0: i32) -> (i32, i32, i32) {
    %c0_i32 = arith.constant 0 : i32
    %c0_i32_0 = arith.constant 0 : i32
    %c0_i32_1 = arith.constant 0 : i32
    %c0_i32_2 = arith.constant 0 : i32
    return %c0_i32, %c0_i32_0, %c0_i32_1 : i32, i32, i32
  }
  func.func @transform_4(%arg0: i32) -> (i32, i32, i32) {
    %c0_i32 = arith.constant 0 : i32
    %c0_i32_0 = arith.constant 0 : i32
    %c0_i32_1 = arith.constant 0 : i32
    %c0_i32_2 = arith.constant 0 : i32
    return %c0_i32, %c0_i32_0, %c0_i32_1 : i32, i32, i32
  }
  func.func @transform_5(%arg0: i32) -> (i32, i32) {
    %c0_i32 = arith.constant 0 : i32
    %c0_i32_0 = arith.constant 0 : i32
    return %c0_i32, %arg0 : i32, i32
  }
}

</mosaic_0001>

<llo_original>
// kernel: tpu_custom_call.1
$region0: #{tpu_custom_call.1}
  #allocation0 [shape = 'u32[]', space=smem, size = 0x4, offset = 0x4, fixed_abs, tag = 'smem constant byte address 0x4 - core index']
  #allocation1 [shape = 'u32[144,128]{1,0:T(1,128)}', space=vmem, size = 0x12000, scoped, tag = 'internal scratch']
  %s0 = inlined_call_operand.hbm [shape: f32[3,256], index: 0, kind: input, shape index: {}]
  %s1 = inlined_call_operand.hbm [shape: bf16[2,4,256], index: 1, kind: input, shape index: {}]
  %s2 = inlined_call_operand.hbm [shape: bf16[2,4,256], index: 2, kind: input, shape index: {}]
  %s3 = inlined_call_operand.vmem [shape: bf16[2,4,256], index: 3, kind: input, shape index: {}]
  %s4 = inlined_call_operand.hbm [shape: bf16[2,4,256], index: 4, kind: input, shape index: {}]
  %s5 = inlined_call_operand.hbm [shape: f32[32,256], index: 5, kind: output, shape index: {}]
  %s6 = sld [smem:[#allocation0]]
  $region69: #{tpu_custom_call.1} parent=0
    _
  %s8 = ssub.s32 1, %s6
  %s9 = scalar_select 0, %s8, %s6
  $region1: #{tpu_custom_call.1} parent=0
    #allocation2 [shape = 'u8[4096]{0}', space=vmem, size = 0x1000, scoped, tag = 'input window, operand 0']
    #allocation3 [shape = 's32[2]{0}', space=sflag, size = 0x8, scoped, tag = 'scoped memory for tpu_custom_call.1']
    #allocation4 [shape = 's32[2]{0}', space=sflag, size = 0x8, scoped, tag = 'scoped memory for tpu_custom_call.1']
    #allocation5 [shape = 'u8[4096]{0}', space=vmem, size = 0x1000, scoped, tag = 'input window, operand 1, single buffered']
    #allocation6 [shape = 's32[1]{0}', space=sflag, size = 0x4, scoped, tag = 'scoped memory for tpu_custom_call.1']
    #allocation7 [shape = 'u8[4096]{0}', space=vmem, size = 0x1000, scoped, tag = 'input window, operand 2, single buffered']
    #allocation8 [shape = 'u8[4096]{0}', space=vmem, size = 0x1000, scoped, tag = 'input window, operand 4, single buffered']
    #allocation9 [shape = 's32[1]{0}', space=sflag, size = 0x4, scoped, tag = 'scoped memory for tpu_custom_call.1']
    #allocation10 [shape = 'u8[32768]{0}', space=vmem, size = 0x8000, scoped, tag = 'output window, operand 0']
    %10 = vsyncpa [#allocation3], 0
    %s11 = scalar_lea.sflag [#allocation3], 1
    %12 = vsyncpa %s11, 0
    %13 = vsyncpa [#allocation6], 0
    %14 = vsyncpa [#allocation9], 0
    %15 = vsyncpa [#allocation4], 0
    %s16 = scalar_lea.sflag [#allocation4], 1
    %17 = vsyncpa %s16, 0
    loop: start=0, step=1, limit=4
    $region2: #{tpu_custom_call.1} parent=1 // loop_pre_header
      _
    $region3: #{tpu_custom_call.1} parent=1 // loop_header
      %s19 = sphi 0, %s23
      %p20 = scmp.ge.s32.totalorder %s19, 4
      %s29 = sphi 0, %s31
      %s32 = sphi 0, %s29
      %s33 = sphi 0, %s32
      %s49 = sphi 0, %s33
      %s53 = sphi 0, %s53
      %s55 = sphi 0, %s53
      %s56 = sphi 0, %s55
      %s70 = sphi 0, %s56
      %s74 = sphi 0, %s74
      %s76 = sphi 0, %s74
      %s77 = sphi 0, %s76
      %s91 = sphi 0, %s77
      %s95 = sphi 0, %s95
      %s97 = sphi 0, %s95
      %s98 = sphi 0, %s97
      %s112 = sphi 0, %s98
      %s116 = sphi 0, %s116
      %s118 = sphi 0, %s116
      %s119 = sphi 0, %s118
      %s133 = sphi 0, %s119
      %s139 = sphi 0, %s141
      %s142 = sphi 0, %s139
      %s143 = sphi 0, %s142
      %s159 = sphi 0, %s143
    $region4: #{tpu_custom_call.1} parent=1 // loop_header_branch
      %22 = sbr.rel (%p20) target = $region8
    $region5: #{tpu_custom_call.1} parent=1 // loop_body
      %s24 = ssub.s32 %s19, 1
      %s25 = ssub.s32 %s19, 2
      %s26 = sadd.s32 %s19, 1
      %s27 = ssub.s32 %s19, %s26
      %p28 = scmp.eq.s32.totalorder %s27, 0
      %s30 = sadd.s32 %s29, 1
      %s31 = scalar_select %p28, %s29, %s30
      %p34 = pneg %p28
      %p35 = scmp.eq.s32.totalorder %s19, 1
      %p36 = por %p34, %p35
      %p37 = scmp.ne.s32.totalorder %s29, %s32
      %p38 = scmp.eq.s32.totalorder %s19, 0
      %p39 = por %p37, %p38
      %p40 = scmp.ne.s32.totalorder %s29, %s32
      %p41 = scmp.eq.s32.totalorder %s24, 1
      %p42 = por %p40, %p41
      %p43 = scmp.ne.s32.totalorder %s32, %s33
      %p44 = scmp.eq.s32.totalorder %s24, 0
      %p45 = por %p43, %p44
      %p46 = scmp.ne.s32.totalorder %s32, %s33
      %p47 = scmp.eq.s32.totalorder %s25, 1
      %p48 = por %p46, %p47
      %p50 = scmp.ne.s32.totalorder %s33, %s49
      %p51 = scmp.eq.s32.totalorder %s25, 0
      %p52 = por %p50, %p51
      %s54 = sadd.s32 %s53, 1
      %p57 = scmp.eq.s32.totalorder %s19, 1
      %p58 = scmp.ne.s32.totalorder %s53, %s55
      %p59 = scmp.eq.s32.totalorder %s19, 0
      %p60 = por %p58, %p59
      %p61 = scmp.ne.s32.totalorder %s53, %s55
      %p62 = scmp.eq.s32.totalorder %s24, 1
      %p63 = por %p61, %p62
      %p64 = scmp.ne.s32.totalorder %s55, %s56
      %p65 = scmp.eq.s32.totalorder %s24, 0
      %p66 = por %p64, %p65
      %p67 = scmp.ne.s32.totalorder %s55, %s56
      %p68 = scmp.eq.s32.totalorder %s25, 1
      %p69 = por %p67, %p68
      %p71 = scmp.ne.s32.totalorder %s56, %s70
      %p72 = scmp.eq.s32.totalorder %s25, 0
      %p73 = por %p71, %p72
      %s75 = sadd.s32 %s74, 1
      %p78 = scmp.eq.s32.totalorder %s19, 1
      %p79 = scmp.ne.s32.totalorder %s74, %s76
      %p80 = scmp.eq.s32.totalorder %s19, 0
      %p81 = por %p79, %p80
      %p82 = scmp.ne.s32.totalorder %s74, %s76
      %p83 = scmp.eq.s32.totalorder %s24, 1
      %p84 = por %p82, %p83
      %p85 = scmp.ne.s32.totalorder %s76, %s77
      %p86 = scmp.eq.s32.totalorder %s24, 0
      %p87 = por %p85, %p86
      %p88 = scmp.ne.s32.totalorder %s76, %s77
      %p89 = scmp.eq.s32.totalorder %s25, 1
      %p90 = por %p88, %p89
      %p92 = scmp.ne.s32.totalorder %s77, %s91
      %p93 = scmp.eq.s32.totalorder %s25, 0
      %p94 = por %p92, %p93
      %s96 = sadd.s32 %s95, 1
      %p99 = scmp.eq.s32.totalorder %s19, 1
      %p100 = scmp.ne.s32.totalorder %s95, %s97
      %p101 = scmp.eq.s32.totalorder %s19, 0
      %p102 = por %p100, %p101
      %p103 = scmp.ne.s32.totalorder %s95, %s97
      %p104 = scmp.eq.s32.totalorder %s24, 1
      %p105 = por %p103, %p104
      %p106 = scmp.ne.s32.totalorder %s97, %s98
      %p107 = scmp.eq.s32.totalorder %s24, 0
      %p108 = por %p106, %p107
      %p109 = scmp.ne.s32.totalorder %s97, %s98
      %p110 = scmp.eq.s32.totalorder %s25, 1
      %p111 = por %p109, %p110
      %p113 = scmp.ne.s32.totalorder %s98, %s112
      %p114 = scmp.eq.s32.totalorder %s25, 0
      %p115 = por %p113, %p114
      %s117 = sadd.s32 %s116, 1
      %p120 = scmp.eq.s32.totalorder %s19, 1
      %p121 = scmp.ne.s32.totalorder %s116, %s118
      %p122 = scmp.eq.s32.totalorder %s19, 0
      %p123 = por %p121, %p122
      %p124 = scmp.ne.s32.totalorder %s116, %s118
      %p125 = scmp.eq.s32.totalorder %s24, 1
      %p126 = por %p124, %p125
      %p127 = scmp.ne.s32.totalorder %s118, %s119
      %p128 = scmp.eq.s32.totalorder %s24, 0
      %p129 = por %p127, %p128
      %p130 = scmp.ne.s32.totalorder %s118, %s119
      %p131 = scmp.eq.s32.totalorder %s25, 1
      %p132 = por %p130, %p131
      %p134 = scmp.ne.s32.totalorder %s119, %s133
      %p135 = scmp.eq.s32.totalorder %s25, 0
      %p136 = por %p134, %p135
      %s137 = ssub.s32 %s19, %s26
      %p138 = scmp.eq.s32.totalorder %s137, 0
      %s140 = sadd.s32 %s139, 1
      %s141 = scalar_select %p138, %s139, %s140
      %p144 = pneg %p138
      %p145 = scmp.eq.s32.totalorder %s19, 1
      %p146 = por %p144, %p145
      %p147 = scmp.ne.s32.totalorder %s139, %s142
      %p148 = scmp.eq.s32.totalorder %s19, 0
      %p149 = por %p147, %p148
      %p150 = scmp.ne.s32.totalorder %s139, %s142
      %p151 = scmp.eq.s32.totalorder %s24, 1
      %p152 = por %p150, %p151
      %p153 = scmp.ne.s32.totalorder %s142, %s143
      %p154 = scmp.eq.s32.totalorder %s24, 0
      %p155 = por %p153, %p154
      %p156 = scmp.ne.s32.totalorder %s142, %s143
      %p157 = scmp.eq.s32.totalorder %s25, 1
      %p158 = por %p156, %p157
      %p160 = scmp.ne.s32.totalorder %s143, %s159
      %p161 = scmp.eq.s32.totalorder %s25, 0
      %p162 = por %p160, %p161
      %p163 = scmp.le.s32.totalorder 1, %s19
      %p164 = scmp.lt.s32.totalorder %s19, 3
      %p165 = pnand %p163, %p164
      %p166 = pneg %p165
      // Predicated region
      $region9: #{tpu_custom_call.1} parent=5 // pred_check
        _
      $region10: #{tpu_custom_call.1} parent=5 // pred_check_branch
        %168 = sbr.rel (%p165) target = $region12
      $region11: #{tpu_custom_call.1} parent=5 // pred_region
        %s169 = ssub.s32 %s19, 1
        // Predicated region
        $region13: #{tpu_custom_call.1} parent=11 // pred_check
          %p170 = pneg %p66
        $region14: #{tpu_custom_call.1} parent=11 // pred_check_branch
          %172 = sbr.rel (%p170) target = $region16
        $region15: #{tpu_custom_call.1} parent=11 // pred_region
          %s174 = ssub.s32 128, 128
          %175 = vsyncadd [#allocation6], %s174
          %s176 = sshll.u32 [#allocation5], 4
          %s177 = int_to_ptr.vmem [resolvable:$true] %s176
          %182 = dma.hbm_to_vmem [thread:$0]  %s1, 128, %s177, [#allocation6], 64, 64, 4
        $region16: #{tpu_custom_call.1} parent=11 // pred_fallthru
          _
        // Predicated region
        $region17: #{tpu_custom_call.1} parent=11 // pred_check
          %p183 = pneg %p87
        $region18: #{tpu_custom_call.1} parent=11 // pred_check_branch
          %185 = sbr.rel (%p183) target = $region20
        $region19: #{tpu_custom_call.1} parent=11 // pred_region
          %s187 = ssub.s32 128, 128
          %188 = vsyncadd [#allocation6], %s187
          %s189 = sshll.u32 [#allocation7], 4
          %s190 = int_to_ptr.vmem [resolvable:$true] %s189
          %195 = dma.hbm_to_vmem [thread:$0]  %s2, 128, %s190, [#allocation6], 64, 64, 4
        $region20: #{tpu_custom_call.1} parent=11 // pred_fallthru
          _
        // Predicated region
        $region21: #{tpu_custom_call.1} parent=11 // pred_check
          %p196 = pneg %p108
        $region22: #{tpu_custom_call.1} parent=11 // pred_check_branch
          %198 = sbr.rel (%p196) target = $region24
        $region23: #{tpu_custom_call.1} parent=11 // pred_region
          _
        $region24: #{tpu_custom_call.1} parent=11 // pred_fallthru
          _
        // Predicated region
        $region25: #{tpu_custom_call.1} parent=11 // pred_check
          %p199 = pneg %p129
        $region26: #{tpu_custom_call.1} parent=11 // pred_check_branch
          %201 = sbr.rel (%p199) target = $region28
        $region27: #{tpu_custom_call.1} parent=11 // pred_region
          %s203 = ssub.s32 128, 128
          %204 = vsyncadd [#allocation9], %s203
          %s205 = sshll.u32 [#allocation8], 4
          %s206 = int_to_ptr.vmem [resolvable:$true] %s205
          %211 = dma.hbm_to_vmem [thread:$0]  %s4, 128, %s206, [#allocation9], 64, 64, 4
        $region28: #{tpu_custom_call.1} parent=11 // pred_fallthru
          _
      $region12: #{tpu_custom_call.1} parent=5 // pred_fallthru
        _
      %p212 = scmp.lt.s32.totalorder %s19, 2
      // Predicated region
      $region29: #{tpu_custom_call.1} parent=5 // pred_check
        %p213 = pneg %p212
      $region30: #{tpu_custom_call.1} parent=5 // pred_check_branch
        %215 = sbr.rel (%p213) target = $region32
      $region31: #{tpu_custom_call.1} parent=5 // pred_region
        // Predicated region
        $region33: #{tpu_custom_call.1} parent=31 // pred_check
          %p216 = pneg %p39
        $region34: #{tpu_custom_call.1} parent=31 // pred_check_branch
          %218 = sbr.rel (%p216) target = $region36
        $region35: #{tpu_custom_call.1} parent=31 // pred_region
          %s219 = sand.u32 %s29, 1
          %s220 = scalar_lea.sflag [#allocation3], %s219
          %s221 = sand.u32 %s29, 1
          %s222 = smul.addr %s221, 4
          %s223 = scalar_lea.vmem [#allocation2], %s222
          %s225 = ssub.s32 64, 64
          %226 = vsyncadd %s220, %s225
          %s227 = smul.addr %s19, 64
          %s228 = scalar_lea.hbm %s0, %s227
          %s230 = sshll.u32 %s223, 4
          %s231 = int_to_ptr.vmem [resolvable:$true] %s230
          %233 = dma.hbm_to_vmem [thread:$0]  %s228, 64, %s231, %s220
        $region36: #{tpu_custom_call.1} parent=31 // pred_fallthru
          _
      $region32: #{tpu_custom_call.1} parent=5 // pred_fallthru
        _
      %p234 = scmp.le.s32.totalorder 1, %s19
      %p235 = scmp.lt.s32.totalorder %s19, 3
      %p236 = pnand %p234, %p235
      %p237 = pneg %p236
      // Predicated region
      $region37: #{tpu_custom_call.1} parent=5 // pred_check
        _
      $region38: #{tpu_custom_call.1} parent=5 // pred_check_branch
        %239 = sbr.rel (%p236) target = $region40
      $region39: #{tpu_custom_call.1} parent=5 // pred_region
        %s240 = ssub.s32 %s19, 1
        %s241 = sand.u32 %s32, 1
        %s242 = scalar_lea.sflag [#allocation3], %s241
        %s243 = sand.u32 %s32, 1
        %s244 = smul.addr %s243, 4
        %s245 = scalar_lea.vmem [#allocation2], %s244
        // Predicated region
        $region41: #{tpu_custom_call.1} parent=39 // pred_check
          %p246 = pneg %p45
        $region42: #{tpu_custom_call.1} parent=39 // pred_check_branch
          %248 = sbr.rel (%p246) target = $region44
        $region43: #{tpu_custom_call.1} parent=39 // pred_region
          %249 = dma.done %s242, 64
        $region44: #{tpu_custom_call.1} parent=39 // pred_fallthru
          _
        // Predicated region
        $region45: #{tpu_custom_call.1} parent=39 // pred_check
          %p250 = pneg %p66
        $region46: #{tpu_custom_call.1} parent=39 // pred_check_branch
          %252 = sbr.rel (%p250) target = $region48
        $region47: #{tpu_custom_call.1} parent=39 // pred_region
          %253 = dma.done [#allocation6], 128
        $region48: #{tpu_custom_call.1} parent=39 // pred_fallthru
          _
        // Predicated region
        $region49: #{tpu_custom_call.1} parent=39 // pred_check
          %p254 = pneg %p87
        $region50: #{tpu_custom_call.1} parent=39 // pred_check_branch
          %256 = sbr.rel (%p254) target = $region52
        $region51: #{tpu_custom_call.1} parent=39 // pred_region
          %257 = dma.done [#allocation6], 128
        $region52: #{tpu_custom_call.1} parent=39 // pred_fallthru
          _
        // Predicated region
        $region53: #{tpu_custom_call.1} parent=39 // pred_check
          %p258 = pneg %p129
        $region54: #{tpu_custom_call.1} parent=39 // pred_check_branch
          %260 = sbr.rel (%p258) target = $region56
        $region55: #{tpu_custom_call.1} parent=39 // pred_region
          %261 = dma.done [#allocation9], 128
        $region56: #{tpu_custom_call.1} parent=39 // pred_fallthru
          _
        %s262 = sand.u32 %s32, 1
        %s263 = scalar_lea.sflag [#allocation3], %s262
        %s264 = sand.u32 %s32, 1
        %s265 = smul.addr %s264, 4
        %s266 = scalar_lea.vmem [#allocation2], %s265
        %p267 = pneg %p45
        %p268 = pneg %p42
        %p269 = pneg %p66
        %p270 = pneg %p63
        %p271 = pneg %p87
        %p272 = pneg %p84
        %p273 = pneg %p108
        %p274 = pneg %p105
        %p275 = pneg %p129
        %p276 = pneg %p126
        %p277 = pneg %p155
        %p278 = pneg %p152
        %s279 = sand.u32 %s142, 1
        %s280 = scalar_lea.sflag [#allocation4], %s279
        %s281 = sand.u32 %s142, 1
        %s282 = smul.addr %s281, 32
        %s283 = scalar_lea.vmem [#allocation10], %s282
        %v285 = vld [vmem:[%s245] sm:$0x7]
        %v286 = vmax.f32 %v285, 0.0
        %v287 = vmin.f32 %v286, 1.0
        %v288 = vlaneseq
        %v289 = vshrl.u32 %v288, 7
        %v290 = vadd.s32 %v289, 8
        %v291 = vadd.s32 %v289, 16
        %v292 = vadd.s32 %v289, 24
        %v293 = vadd.s32 %v289, 32
        %v294 = vadd.s32 %v289, 40
        %v295 = vadd.s32 %v289, 48
        %v296 = vadd.s32 %v289, 56
        %v297 = vadd.s32 %v289, 64
        %v298 = vadd.s32 %v289, 72
        %v299 = vadd.s32 %v289, 80
        %v300 = vadd.s32 %v289, 88
        %v301 = vadd.s32 %v289, 96
        %v302 = vadd.s32 %v289, 104
        %v303 = vadd.s32 %v289, 112
        %v304 = vadd.s32 %v289, 120
        %v305 = vadd.s32 %v289, 128
        %v306 = vadd.s32 %v289, 136
        %v307 = vadd.s32 %v289, 144
        %v308 = vadd.s32 %v289, 152
        %v309 = vadd.s32 %v289, 160
        %v310 = vadd.s32 %v289, 168
        %v311 = vadd.s32 %v289, 176
        %v312 = vadd.s32 %v289, 184
        %v313 = vadd.s32 %v289, 192
        %v314 = vadd.s32 %v289, 200
        %v315 = vadd.s32 %v289, 208
        %v316 = vadd.s32 %v289, 216
        %v317 = vadd.s32 %v289, 224
        %v318 = vadd.s32 %v289, 232
        %v319 = vadd.s32 %v289, 240
        %v320 = vadd.s32 %v289, 248
        %v321 = vmul.f32 %v287, 3.0
        %v322 = vfloor.f32 %v321
        %v323 = vsub.f32 %v321, %v322
        %v324 = vcvt.f32.s32.to.zero.pseudo %v322
        %vm325 = vcmp.lt.s32.totalorder %v324, 3
        %v326 = vsel %vm325, %v324, 3
        %v327 = vsub.f32 1.0, %v323
        %v329 = vrot.slane %v327, 1
        %v331 = vmul.f32 %v327, %v329
        %v332 = vmul.u32 %v326, 4
        %v333 = vrot.slane %v332, 1
        %v334 = vadd.s32 %v326, %v333
        %v335 = vrot.slane %v327, 2
        %v337 = vmul.f32 %v331, %v335
        %v338 = vmul.u32 %v326, 16
        %v339 = vrot.slane %v338, 2
        %v340 = vadd.s32 %v334, %v339
        %v341 = vand.u32 %v340, 255
        %v342 = vlaneseq
        %v343 = vshrl.u32 %v342, 7
        %v344 = vsub.s32 0, %v343
        %v345 = vrot.slane %v341, %v344
        %vm346 = vcmp.eq.s32.totalorder %v345, %v289
        %vm347 = vcmp.eq.s32.totalorder %v345, %v290
        %vm348 = vcmp.eq.s32.totalorder %v345, %v291
        %vm349 = vcmp.eq.s32.totalorder %v345, %v292
        %vm350 = vcmp.eq.s32.totalorder %v345, %v293
        %vm351 = vcmp.eq.s32.totalorder %v345, %v294
        %vm352 = vcmp.eq.s32.totalorder %v345, %v295
        %vm353 = vcmp.eq.s32.totalorder %v345, %v296
        %vm354 = vcmp.eq.s32.totalorder %v345, %v297
        %vm355 = vcmp.eq.s32.totalorder %v345, %v298
        %vm356 = vcmp.eq.s32.totalorder %v345, %v299
        %vm357 = vcmp.eq.s32.totalorder %v345, %v300
        %vm358 = vcmp.eq.s32.totalorder %v345, %v301
        %vm359 = vcmp.eq.s32.totalorder %v345, %v302
        %vm360 = vcmp.eq.s32.totalorder %v345, %v303
        %vm361 = vcmp.eq.s32.totalorder %v345, %v304
        %vm362 = vcmp.eq.s32.totalorder %v345, %v305
        %vm363 = vcmp.eq.s32.totalorder %v345, %v306
        %vm364 = vcmp.eq.s32.totalorder %v345, %v307
        %vm365 = vcmp.eq.s32.totalorder %v345, %v308
        %vm366 = vcmp.eq.s32.totalorder %v345, %v309
        %vm367 = vcmp.eq.s32.totalorder %v345, %v310
        %vm368 = vcmp.eq.s32.totalorder %v345, %v311
        %vm369 = vcmp.eq.s32.totalorder %v345, %v312
        %vm370 = vcmp.eq.s32.totalorder %v345, %v313
        %vm371 = vcmp.eq.s32.totalorder %v345, %v314
        %vm372 = vcmp.eq.s32.totalorder %v345, %v315
        %vm373 = vcmp.eq.s32.totalorder %v345, %v316
        %vm374 = vcmp.eq.s32.totalorder %v345, %v317
        %vm375 = vcmp.eq.s32.totalorder %v345, %v318
        %vm376 = vcmp.eq.s32.totalorder %v345, %v319
        %vm377 = vcmp.eq.s32.totalorder %v345, %v320
        %v378 = vlaneseq
        %v379 = vshrl.u32 %v378, 7
        %v380 = vsub.s32 0, %v379
        %v381 = vrot.slane %v337, %v380
        %v382 = vsel %vm346, %v381, 0.0
        %v383 = vsel %vm347, %v381, 0.0
        %v384 = vsel %vm348, %v381, 0.0
        %v385 = vsel %vm349, %v381, 0.0
        %v386 = vsel %vm350, %v381, 0.0
        %v387 = vsel %vm351, %v381, 0.0
        %v388 = vsel %vm352, %v381, 0.0
        %v389 = vsel %vm353, %v381, 0.0
        %v390 = vsel %vm354, %v381, 0.0
        %v391 = vsel %vm355, %v381, 0.0
        %v392 = vsel %vm356, %v381, 0.0
        %v393 = vsel %vm357, %v381, 0.0
        %v394 = vsel %vm358, %v381, 0.0
        %v395 = vsel %vm359, %v381, 0.0
        %v396 = vsel %vm360, %v381, 0.0
        %v397 = vsel %vm361, %v381, 0.0
        %v398 = vsel %vm362, %v381, 0.0
        %v399 = vsel %vm363, %v381, 0.0
        %v400 = vsel %vm364, %v381, 0.0
        %v401 = vsel %vm365, %v381, 0.0
        %v402 = vsel %vm366, %v381, 0.0
        %v403 = vsel %vm367, %v381, 0.0
        %v404 = vsel %vm368, %v381, 0.0
        %v405 = vsel %vm369, %v381, 0.0
        %v406 = vsel %vm370, %v381, 0.0
        %v407 = vsel %vm371, %v381, 0.0
        %v408 = vsel %vm372, %v381, 0.0
        %v409 = vsel %vm373, %v381, 0.0
        %v410 = vsel %vm374, %v381, 0.0
        %v411 = vsel %vm375, %v381, 0.0
        %v412 = vsel %vm376, %v381, 0.0
        %v413 = vsel %vm377, %v381, 0.0
        %v414 = vadd.f32 %v382, 0.0
        %v415 = vadd.f32 %v383, 0.0
        %v416 = vadd.f32 %v384, 0.0
        %v417 = vadd.f32 %v385, 0.0
        %v418 = vadd.f32 %v386, 0.0
        %v419 = vadd.f32 %v387, 0.0
        %v420 = vadd.f32 %v388, 0.0
        %v421 = vadd.f32 %v389, 0.0
        %v422 = vadd.f32 %v390, 0.0
        %v423 = vadd.f32 %v391, 0.0
        %v424 = vadd.f32 %v392, 0.0
        %v425 = vadd.f32 %v393, 0.0
        %v426 = vadd.f32 %v394, 0.0
        %v427 = vadd.f32 %v395, 0.0
        %v428 = vadd.f32 %v396, 0.0
        %v429 = vadd.f32 %v397, 0.0
        %v430 = vadd.f32 %v398, 0.0
        %v431 = vadd.f32 %v399, 0.0
        %v432 = vadd.f32 %v400, 0.0
        %v433 = vadd.f32 %v401, 0.0
        %v434 = vadd.f32 %v402, 0.0
        %v435 = vadd.f32 %v403, 0.0
        %v436 = vadd.f32 %v404, 0.0
        %v437 = vadd.f32 %v405, 0.0
        %v438 = vadd.f32 %v406, 0.0
        %v439 = vadd.f32 %v407, 0.0
        %v440 = vadd.f32 %v408, 0.0
        %v441 = vadd.f32 %v409, 0.0
        %v442 = vadd.f32 %v410, 0.0
        %v443 = vadd.f32 %v411, 0.0
        %v444 = vadd.f32 %v412, 0.0
        %v445 = vadd.f32 %v413, 0.0
        %v446 = vadd.s32 %v324, 1
        %vm447 = vcmp.lt.s32.totalorder %v446, 3
        %v448 = vsel %vm447, %v446, 3
        %v449 = vmul.f32 %v323, %v329
        %v450 = vadd.s32 %v448, %v333
        %v451 = vmul.f32 %v449, %v335
        %v452 = vadd.s32 %v450, %v339
        %v453 = vand.u32 %v452, 255
        %v454 = vlaneseq
        %v455 = vshrl.u32 %v454, 7
        %v456 = vsub.s32 0, %v455
        %v457 = vrot.slane %v453, %v456
        %vm458 = vcmp.eq.s32.totalorder %v457, %v289
        %vm459 = vcmp.eq.s32.totalorder %v457, %v290
        %vm460 = vcmp.eq.s32.totalorder %v457, %v291
        %vm461 = vcmp.eq.s32.totalorder %v457, %v292
        %vm462 = vcmp.eq.s32.totalorder %v457, %v293
        %vm463 = vcmp.eq.s32.totalorder %v457, %v294
        %vm464 = vcmp.eq.s32.totalorder %v457, %v295
        %vm465 = vcmp.eq.s32.totalorder %v457, %v296
        %vm466 = vcmp.eq.s32.totalorder %v457, %v297
        %vm467 = vcmp.eq.s32.totalorder %v457, %v298
        %vm468 = vcmp.eq.s32.totalorder %v457, %v299
        %vm469 = vcmp.eq.s32.totalorder %v457, %v300
        %vm470 = vcmp.eq.s32.totalorder %v457, %v301
        %vm471 = vcmp.eq.s32.totalorder %v457, %v302
        %vm472 = vcmp.eq.s32.totalorder %v457, %v303
        %vm473 = vcmp.eq.s32.totalorder %v457, %v304
        %vm474 = vcmp.eq.s32.totalorder %v457, %v305
        %vm475 = vcmp.eq.s32.totalorder %v457, %v306
        %vm476 = vcmp.eq.s32.totalorder %v457, %v307
        %vm477 = vcmp.eq.s32.totalorder %v457, %v308
        %vm478 = vcmp.eq.s32.totalorder %v457, %v309
        %vm479 = vcmp.eq.s32.totalorder %v457, %v310
        %vm480 = vcmp.eq.s32.totalorder %v457, %v311
        %vm481 = vcmp.eq.s32.totalorder %v457, %v312
        %vm482 = vcmp.eq.s32.totalorder %v457, %v313
        %vm483 = vcmp.eq.s32.totalorder %v457, %v314
        %vm484 = vcmp.eq.s32.totalorder %v457, %v315
        %vm485 = vcmp.eq.s32.totalorder %v457, %v316
        %vm486 = vcmp.eq.s32.totalorder %v457, %v317
        %vm487 = vcmp.eq.s32.totalorder %v457, %v318
        %vm488 = vcmp.eq.s32.totalorder %v457, %v319
        %vm489 = vcmp.eq.s32.totalorder %v457, %v320
        %v490 = vlaneseq
        %v491 = vshrl.u32 %v490, 7
        %v492 = vsub.s32 0, %v491
        %v493 = vrot.slane %v451, %v492
        %v494 = vsel %vm458, %v493, 0.0
        %v495 = vsel %vm459, %v493, 0.0
        %v496 = vsel %vm460, %v493, 0.0
        %v497 = vsel %vm461, %v493, 0.0
        %v498 = vsel %vm462, %v493, 0.0
        %v499 = vsel %vm463, %v493, 0.0
        %v500 = vsel %vm464, %v493, 0.0
        %v501 = vsel %vm465, %v493, 0.0
        %v502 = vsel %vm466, %v493, 0.0
        %v503 = vsel %vm467, %v493, 0.0
        %v504 = vsel %vm468, %v493, 0.0
        %v505 = vsel %vm469, %v493, 0.0
        %v506 = vsel %vm470, %v493, 0.0
        %v507 = vsel %vm471, %v493, 0.0
        %v508 = vsel %vm472, %v493, 0.0
        %v509 = vsel %vm473, %v493, 0.0
        %v510 = vsel %vm474, %v493, 0.0
        %v511 = vsel %vm475, %v493, 0.0
        %v512 = vsel %vm476, %v493, 0.0
        %v513 = vsel %vm477, %v493, 0.0
        %v514 = vsel %vm478, %v493, 0.0
        %v515 = vsel %vm479, %v493, 0.0
        %v516 = vsel %vm480, %v493, 0.0
        %v517 = vsel %vm481, %v493, 0.0
        %v518 = vsel %vm482, %v493, 0.0
        %v519 = vsel %vm483, %v493, 0.0
        %v520 = vsel %vm484, %v493, 0.0
        %v521 = vsel %vm485, %v493, 0.0
        %v522 = vsel %vm486, %v493, 0.0
        %v523 = vsel %vm487, %v493, 0.0
        %v524 = vsel %vm488, %v493, 0.0
        %v525 = vsel %vm489, %v493, 0.0
        %v526 = vadd.f32 %v414, %v494
        %v527 = vadd.f32 %v415, %v495
        %v528 = vadd.f32 %v416, %v496
        %v529 = vadd.f32 %v417, %v497
        %v530 = vadd.f32 %v418, %v498
        %v531 = vadd.f32 %v419, %v499
        %v532 = vadd.f32 %v420, %v500
        %v533 = vadd.f32 %v421, %v501
        %v534 = vadd.f32 %v422, %v502
        %v535 = vadd.f32 %v423, %v503
        %v536 = vadd.f32 %v424, %v504
        %v537 = vadd.f32 %v425, %v505
        %v538 = vadd.f32 %v426, %v506
        %v539 = vadd.f32 %v427, %v507
        %v540 = vadd.f32 %v428, %v508
        %v541 = vadd.f32 %v429, %v509
        %v542 = vadd.f32 %v430, %v510
        %v543 = vadd.f32 %v431, %v511
        %v544 = vadd.f32 %v432, %v512
        %v545 = vadd.f32 %v433, %v513
        %v546 = vadd.f32 %v434, %v514
        %v547 = vadd.f32 %v435, %v515
        %v548 = vadd.f32 %v436, %v516
        %v549 = vadd.f32 %v437, %v517
        %v550 = vadd.f32 %v438, %v518
        %v551 = vadd.f32 %v439, %v519
        %v552 = vadd.f32 %v440, %v520
        %v553 = vadd.f32 %v441, %v521
        %v554 = vadd.f32 %v442, %v522
        %v555 = vadd.f32 %v443, %v523
        %v556 = vadd.f32 %v444, %v524
        %v557 = vadd.f32 %v445, %v525
        %v559 = vrot.slane %v323, 1
        %v561 = vmul.f32 %v327, %v559
        %v562 = vmul.u32 %v448, 4
        %v563 = vrot.slane %v562, 1
        %v564 = vadd.s32 %v326, %v563
        %v565 = vmul.f32 %v561, %v335
        %v566 = vadd.s32 %v564, %v339
        %v567 = vand.u32 %v566, 255
        %v568 = vlaneseq
        %v569 = vshrl.u32 %v568, 7
        %v570 = vsub.s32 0, %v569
        %v571 = vrot.slane %v567, %v570
        %vm572 = vcmp.eq.s32.totalorder %v571, %v289
        %vm573 = vcmp.eq.s32.totalorder %v571, %v290
        %vm574 = vcmp.eq.s32.totalorder %v571, %v291
        %vm575 = vcmp.eq.s32.totalorder %v571, %v292
        %vm576 = vcmp.eq.s32.totalorder %v571, %v293
        %vm577 = vcmp.eq.s32.totalorder %v571, %v294
        %vm578 = vcmp.eq.s32.totalorder %v571, %v295
        %vm579 = vcmp.eq.s32.totalorder %v571, %v296
        %vm580 = vcmp.eq.s32.totalorder %v571, %v297
        %vm581 = vcmp.eq.s32.totalorder %v571, %v298
        %vm582 = vcmp.eq.s32.totalorder %v571, %v299
        %vm583 = vcmp.eq.s32.totalorder %v571, %v300
        %vm584 = vcmp.eq.s32.totalorder %v571, %v301
        %vm585 = vcmp.eq.s32.totalorder %v571, %v302
        %vm586 = vcmp.eq.s32.totalorder %v571, %v303
        %vm587 = vcmp.eq.s32.totalorder %v571, %v304
        %vm588 = vcmp.eq.s32.totalorder %v571, %v305
        %vm589 = vcmp.eq.s32.totalorder %v571, %v306
        %vm590 = vcmp.eq.s32.totalorder %v571, %v307
        %vm591 = vcmp.eq.s32.totalorder %v571, %v308
        %vm592 = vcmp.eq.s32.totalorder %v571, %v309
        %vm593 = vcmp.eq.s32.totalorder %v571, %v310
        %vm594 = vcmp.eq.s32.totalorder %v571, %v311
        %vm595 = vcmp.eq.s32.totalorder %v571, %v312
        %vm596 = vcmp.eq.s32.totalorder %v571, %v313
        %vm597 = vcmp.eq.s32.totalorder %v571, %v314
        %vm598 = vcmp.eq.s32.totalorder %v571, %v315
        %vm599 = vcmp.eq.s32.totalorder %v571, %v316
        %vm600 = vcmp.eq.s32.totalorder %v571, %v317
        %vm601 = vcmp.eq.s32.totalorder %v571, %v318
        %vm602 = vcmp.eq.s32.totalorder %v571, %v319
        %vm603 = vcmp.eq.s32.totalorder %v571, %v320
        %v604 = vlaneseq
        %v605 = vshrl.u32 %v604, 7
        %v606 = vsub.s32 0, %v605
        %v607 = vrot.slane %v565, %v606
        %v608 = vsel %vm572, %v607, 0.0
        %v609 = vsel %vm573, %v607, 0.0
        %v610 = vsel %vm574, %v607, 0.0
        %v611 = vsel %vm575, %v607, 0.0
        %v612 = vsel %vm576, %v607, 0.0
        %v613 = vsel %vm577, %v607, 0.0
        %v614 = vsel %vm578, %v607, 0.0
        %v615 = vsel %vm579, %v607, 0.0
        %v616 = vsel %vm580, %v607, 0.0
        %v617 = vsel %vm581, %v607, 0.0
        %v618 = vsel %vm582, %v607, 0.0
        %v619 = vsel %vm583, %v607, 0.0
        %v620 = vsel %vm584, %v607, 0.0
        %v621 = vsel %vm585, %v607, 0.0
        %v622 = vsel %vm586, %v607, 0.0
        %v623 = vsel %vm587, %v607, 0.0
        %v624 = vsel %vm588, %v607, 0.0
        %v625 = vsel %vm589, %v607, 0.0
        %v626 = vsel %vm590, %v607, 0.0
        %v627 = vsel %vm591, %v607, 0.0
        %v628 = vsel %vm592, %v607, 0.0
        %v629 = vsel %vm593, %v607, 0.0
        %v630 = vsel %vm594, %v607, 0.0
        %v631 = vsel %vm595, %v607, 0.0
        %v632 = vsel %vm596, %v607, 0.0
        %v633 = vsel %vm597, %v607, 0.0
        %v634 = vsel %vm598, %v607, 0.0
        %v635 = vsel %vm599, %v607, 0.0
        %v636 = vsel %vm600, %v607, 0.0
        %v637 = vsel %vm601, %v607, 0.0
        %v638 = vsel %vm602, %v607, 0.0
        %v639 = vsel %vm603, %v607, 0.0
        %v640 = vadd.f32 %v526, %v608
        %v641 = vadd.f32 %v527, %v609
        %v642 = vadd.f32 %v528, %v610
        %v643 = vadd.f32 %v529, %v611
        %v644 = vadd.f32 %v530, %v612
        %v645 = vadd.f32 %v531, %v613
        %v646 = vadd.f32 %v532, %v614
        %v647 = vadd.f32 %v533, %v615
        %v648 = vadd.f32 %v534, %v616
        %v649 = vadd.f32 %v535, %v617
        %v650 = vadd.f32 %v536, %v618
        %v651 = vadd.f32 %v537, %v619
        %v652 = vadd.f32 %v538, %v620
        %v653 = vadd.f32 %v539, %v621
        %v654 = vadd.f32 %v540, %v622
        %v655 = vadd.f32 %v541, %v623
        %v656 = vadd.f32 %v542, %v624
        %v657 = vadd.f32 %v543, %v625
        %v658 = vadd.f32 %v544, %v626
        %v659 = vadd.f32 %v545, %v627
        %v660 = vadd.f32 %v546, %v628
        %v661 = vadd.f32 %v547, %v629
        %v662 = vadd.f32 %v548, %v630
        %v663 = vadd.f32 %v549, %v631
        %v664 = vadd.f32 %v550, %v632
        %v665 = vadd.f32 %v551, %v633
        %v666 = vadd.f32 %v552, %v634
        %v667 = vadd.f32 %v553, %v635
        %v668 = vadd.f32 %v554, %v636
        %v669 = vadd.f32 %v555, %v637
        %v670 = vadd.f32 %v556, %v638
        %v671 = vadd.f32 %v557, %v639
        %v672 = vmul.f32 %v323, %v559
        %v673 = vadd.s32 %v448, %v563
        %v674 = vmul.f32 %v672, %v335
        %v675 = vadd.s32 %v673, %v339
        %v676 = vand.u32 %v675, 255
        %v677 = vlaneseq
        %v678 = vshrl.u32 %v677, 7
        %v679 = vsub.s32 0, %v678
        %v680 = vrot.slane %v676, %v679
        %vm681 = vcmp.eq.s32.totalorder %v680, %v289
        %vm682 = vcmp.eq.s32.totalorder %v680, %v290
        %vm683 = vcmp.eq.s32.totalorder %v680, %v291
        %vm684 = vcmp.eq.s32.totalorder %v680, %v292
        %vm685 = vcmp.eq.s32.totalorder %v680, %v293
        %vm686 = vcmp.eq.s32.totalorder %v680, %v294
        %vm687 = vcmp.eq.s32.totalorder %v680, %v295
        %vm688 = vcmp.eq.s32.totalorder %v680, %v296
        %vm689 = vcmp.eq.s32.totalorder %v680, %v297
        %vm690 = vcmp.eq.s32.totalorder %v680, %v298
        %vm691 = vcmp.eq.s32.totalorder %v680, %v299
        %vm692 = vcmp.eq.s32.totalorder %v680, %v300
        %vm693 = vcmp.eq.s32.totalorder %v680, %v301
        %vm694 = vcmp.eq.s32.totalorder %v680, %v302
        %vm695 = vcmp.eq.s32.totalorder %v680, %v303
        %vm696 = vcmp.eq.s32.totalorder %v680, %v304
        %vm697 = vcmp.eq.s32.totalorder %v680, %v305
        %vm698 = vcmp.eq.s32.totalorder %v680, %v306
        %vm699 = vcmp.eq.s32.totalorder %v680, %v307
        %vm700 = vcmp.eq.s32.totalorder %v680, %v308
        %vm701 = vcmp.eq.s32.totalorder %v680, %v309
        %vm702 = vcmp.eq.s32.totalorder %v680, %v310
        %vm703 = vcmp.eq.s32.totalorder %v680, %v311
        %vm704 = vcmp.eq.s32.totalorder %v680, %v312
        %vm705 = vcmp.eq.s32.totalorder %v680, %v313
        %vm706 = vcmp.eq.s32.totalorder %v680, %v314
        %vm707 = vcmp.eq.s32.totalorder %v680, %v315
        %vm708 = vcmp.eq.s32.totalorder %v680, %v316
        %vm709 = vcmp.eq.s32.totalorder %v680, %v317
        %vm710 = vcmp.eq.s32.totalorder %v680, %v318
        %vm711 = vcmp.eq.s32.totalorder %v680, %v319
        %vm712 = vcmp.eq.s32.totalorder %v680, %v320
        %v713 = vlaneseq
        %v714 = vshrl.u32 %v713, 7
        %v715 = vsub.s32 0, %v714
        %v716 = vrot.slane %v674, %v715
        %v717 = vsel %vm681, %v716, 0.0
        %v718 = vsel %vm682, %v716, 0.0
        %v719 = vsel %vm683, %v716, 0.0
        %v720 = vsel %vm684, %v716, 0.0
        %v721 = vsel %vm685, %v716, 0.0
        %v722 = vsel %vm686, %v716, 0.0
        %v723 = vsel %vm687, %v716, 0.0
        %v724 = vsel %vm688, %v716, 0.0
        %v725 = vsel %vm689, %v716, 0.0
        %v726 = vsel %vm690, %v716, 0.0
        %v727 = vsel %vm691, %v716, 0.0
        %v728 = vsel %vm692, %v716, 0.0
        %v729 = vsel %vm693, %v716, 0.0
        %v730 = vsel %vm694, %v716, 0.0
        %v731 = vsel %vm695, %v716, 0.0
        %v732 = vsel %vm696, %v716, 0.0
        %v733 = vsel %vm697, %v716, 0.0
        %v734 = vsel %vm698, %v716, 0.0
        %v735 = vsel %vm699, %v716, 0.0
        %v736 = vsel %vm700, %v716, 0.0
        %v737 = vsel %vm701, %v716, 0.0
        %v738 = vsel %vm702, %v716, 0.0
        %v739 = vsel %vm703, %v716, 0.0
        %v740 = vsel %vm704, %v716, 0.0
        %v741 = vsel %vm705, %v716, 0.0
        %v742 = vsel %vm706, %v716, 0.0
        %v743 = vsel %vm707, %v716, 0.0
        %v744 = vsel %vm708, %v716, 0.0
        %v745 = vsel %vm709, %v716, 0.0
        %v746 = vsel %vm710, %v716, 0.0
        %v747 = vsel %vm711, %v716, 0.0
        %v748 = vsel %vm712, %v716, 0.0
        %v749 = vadd.f32 %v640, %v717
        %v750 = vadd.f32 %v641, %v718
        %v751 = vadd.f32 %v642, %v719
        %v752 = vadd.f32 %v643, %v720
        %v753 = vadd.f32 %v644, %v721
        %v754 = vadd.f32 %v645, %v722
        %v755 = vadd.f32 %v646, %v723
        %v756 = vadd.f32 %v647, %v724
        %v757 = vadd.f32 %v648, %v725
        %v758 = vadd.f32 %v649, %v726
        %v759 = vadd.f32 %v650, %v727
        %v760 = vadd.f32 %v651, %v728
        %v761 = vadd.f32 %v652, %v729
        %v762 = vadd.f32 %v653, %v730
        %v763 = vadd.f32 %v654, %v731
        %v764 = vadd.f32 %v655, %v732
        %v765 = vadd.f32 %v656, %v733
        %v766 = vadd.f32 %v657, %v734
        %v767 = vadd.f32 %v658, %v735
        %v768 = vadd.f32 %v659, %v736
        %v769 = vadd.f32 %v660, %v737
        %v770 = vadd.f32 %v661, %v738
        %v771 = vadd.f32 %v662, %v739
        %v772 = vadd.f32 %v663, %v740
        %v773 = vadd.f32 %v664, %v741
        %v774 = vadd.f32 %v665, %v742
        %v775 = vadd.f32 %v666, %v743
        %v776 = vadd.f32 %v667, %v744
        %v777 = vadd.f32 %v668, %v745
        %v778 = vadd.f32 %v669, %v746
        %v779 = vadd.f32 %v670, %v747
        %v780 = vadd.f32 %v671, %v748
        %v781 = vrot.slane %v323, 2
        %v783 = vmul.f32 %v331, %v781
        %v784 = vmul.u32 %v448, 16
        %v785 = vrot.slane %v784, 2
        %v786 = vadd.s32 %v334, %v785
        %v787 = vand.u32 %v786, 255
        %v788 = vlaneseq
        %v789 = vshrl.u32 %v788, 7
        %v790 = vsub.s32 0, %v789
        %v791 = vrot.slane %v787, %v790
        %vm792 = vcmp.eq.s32.totalorder %v791, %v289
        %vm793 = vcmp.eq.s32.totalorder %v791, %v290
        %vm794 = vcmp.eq.s32.totalorder %v791, %v291
        %vm795 = vcmp.eq.s32.totalorder %v791, %v292
        %vm796 = vcmp.eq.s32.totalorder %v791, %v293
        %vm797 = vcmp.eq.s32.totalorder %v791, %v294
        %vm798 = vcmp.eq.s32.totalorder %v791, %v295
        %vm799 = vcmp.eq.s32.totalorder %v791, %v296
        %vm800 = vcmp.eq.s32.totalorder %v791, %v297
        %vm801 = vcmp.eq.s32.totalorder %v791, %v298
        %vm802 = vcmp.eq.s32.totalorder %v791, %v299
        %vm803 = vcmp.eq.s32.totalorder %v791, %v300
        %vm804 = vcmp.eq.s32.totalorder %v791, %v301
        %vm805 = vcmp.eq.s32.totalorder %v791, %v302
        %vm806 = vcmp.eq.s32.totalorder %v791, %v303
        %vm807 = vcmp.eq.s32.totalorder %v791, %v304
        %vm808 = vcmp.eq.s32.totalorder %v791, %v305
        %vm809 = vcmp.eq.s32.totalorder %v791, %v306
        %vm810 = vcmp.eq.s32.totalorder %v791, %v307
        %vm811 = vcmp.eq.s32.totalorder %v791, %v308
        %vm812 = vcmp.eq.s32.totalorder %v791, %v309
        %vm813 = vcmp.eq.s32.totalorder %v791, %v310
        %vm814 = vcmp.eq.s32.totalorder %v791, %v311
        %vm815 = vcmp.eq.s32.totalorder %v791, %v312
        %vm816 = vcmp.eq.s32.totalorder %v791, %v313
        %vm817 = vcmp.eq.s32.totalorder %v791, %v314
        %vm818 = vcmp.eq.s32.totalorder %v791, %v315
        %vm819 = vcmp.eq.s32.totalorder %v791, %v316
        %vm820 = vcmp.eq.s32.totalorder %v791, %v317
        %vm821 = vcmp.eq.s32.totalorder %v791, %v318
        %vm822 = vcmp.eq.s32.totalorder %v791, %v319
        %vm823 = vcmp.eq.s32.totalorder %v791, %v320
        %v824 = vlaneseq
        %v825 = vshrl.u32 %v824, 7
        %v826 = vsub.s32 0, %v825
        %v827 = vrot.slane %v783, %v826
        %v828 = vsel %vm792, %v827, 0.0
        %v829 = vsel %vm793, %v827, 0.0
        %v830 = vsel %vm794, %v827, 0.0
        %v831 = vsel %vm795, %v827, 0.0
        %v832 = vsel %vm796, %v827, 0.0
        %v833 = vsel %vm797, %v827, 0.0
        %v834 = vsel %vm798, %v827, 0.0
        %v835 = vsel %vm799, %v827, 0.0
        %v836 = vsel %vm800, %v827, 0.0
        %v837 = vsel %vm801, %v827, 0.0
        %v838 = vsel %vm802, %v827, 0.0
        %v839 = vsel %vm803, %v827, 0.0
        %v840 = vsel %vm804, %v827, 0.0
        %v841 = vsel %vm805, %v827, 0.0
        %v842 = vsel %vm806, %v827, 0.0
        %v843 = vsel %vm807, %v827, 0.0
        %v844 = vsel %vm808, %v827, 0.0
        %v845 = vsel %vm809, %v827, 0.0
        %v846 = vsel %vm810, %v827, 0.0
        %v847 = vsel %vm811, %v827, 0.0
        %v848 = vsel %vm812, %v827, 0.0
        %v849 = vsel %vm813, %v827, 0.0
        %v850 = vsel %vm814, %v827, 0.0
        %v851 = vsel %vm815, %v827, 0.0
        %v852 = vsel %vm816, %v827, 0.0
        %v853 = vsel %vm817, %v827, 0.0
        %v854 = vsel %vm818, %v827, 0.0
        %v855 = vsel %vm819, %v827, 0.0
        %v856 = vsel %vm820, %v827, 0.0
        %v857 = vsel %vm821, %v827, 0.0
        %v858 = vsel %vm822, %v827, 0.0
        %v859 = vsel %vm823, %v827, 0.0
        %v860 = vadd.f32 %v749, %v828
        %v861 = vadd.f32 %v750, %v829
        %v862 = vadd.f32 %v751, %v830
        %v863 = vadd.f32 %v752, %v831
        %v864 = vadd.f32 %v753, %v832
        %v865 = vadd.f32 %v754, %v833
        %v866 = vadd.f32 %v755, %v834
        %v867 = vadd.f32 %v756, %v835
        %v868 = vadd.f32 %v757, %v836
        %v869 = vadd.f32 %v758, %v837
        %v870 = vadd.f32 %v759, %v838
        %v871 = vadd.f32 %v760, %v839
        %v872 = vadd.f32 %v761, %v840
        %v873 = vadd.f32 %v762, %v841
        %v874 = vadd.f32 %v763, %v842
        %v875 = vadd.f32 %v764, %v843
        %v876 = vadd.f32 %v765, %v844
        %v877 = vadd.f32 %v766, %v845
        %v878 = vadd.f32 %v767, %v846
        %v879 = vadd.f32 %v768, %v847
        %v880 = vadd.f32 %v769, %v848
        %v881 = vadd.f32 %v770, %v849
        %v882 = vadd.f32 %v771, %v850
        %v883 = vadd.f32 %v772, %v851
        %v884 = vadd.f32 %v773, %v852
        %v885 = vadd.f32 %v774, %v853
        %v886 = vadd.f32 %v775, %v854
        %v887 = vadd.f32 %v776, %v855
        %v888 = vadd.f32 %v777, %v856
        %v889 = vadd.f32 %v778, %v857
        %v890 = vadd.f32 %v779, %v858
        %v891 = vadd.f32 %v780, %v859
        %v892 = vmul.f32 %v449, %v781
        %v893 = vadd.s32 %v450, %v785
        %v894 = vand.u32 %v893, 255
        %v895 = vlaneseq
        %v896 = vshrl.u32 %v895, 7
        %v897 = vsub.s32 0, %v896
        %v898 = vrot.slane %v894, %v897
        %vm899 = vcmp.eq.s32.totalorder %v898, %v289
        %vm900 = vcmp.eq.s32.totalorder %v898, %v290
        %vm901 = vcmp.eq.s32.totalorder %v898, %v291
        %vm902 = vcmp.eq.s32.totalorder %v898, %v292
        %vm903 = vcmp.eq.s32.totalorder %v898, %v293
        %vm904 = vcmp.eq.s32.totalorder %v898, %v294
        %vm905 = vcmp.eq.s32.totalorder %v898, %v295
        %vm906 = vcmp.eq.s32.totalorder %v898, %v296
        %vm907 = vcmp.eq.s32.totalorder %v898, %v297
        %vm908 = vcmp.eq.s32.totalorder %v898, %v298
        %vm909 = vcmp.eq.s32.totalorder %v898, %v299
        %vm910 = vcmp.eq.s32.totalorder %v898, %v300
        %vm911 = vcmp.eq.s32.totalorder %v898, %v301
        %vm912 = vcmp.eq.s32.totalorder %v898, %v302
        %vm913 = vcmp.eq.s32.totalorder %v898, %v303
        %vm914 = vcmp.eq.s32.totalorder %v898, %v304
        %vm915 = vcmp.eq.s32.totalorder %v898, %v305
        %vm916 = vcmp.eq.s32.totalorder %v898, %v306
        %vm917 = vcmp.eq.s32.totalorder %v898, %v307
        %vm918 = vcmp.eq.s32.totalorder %v898, %v308
        %vm919 = vcmp.eq.s32.totalorder %v898, %v309
        %vm920 = vcmp.eq.s32.totalorder %v898, %v310
        %vm921 = vcmp.eq.s32.totalorder %v898, %v311
        %vm922 = vcmp.eq.s32.totalorder %v898, %v312
        %vm923 = vcmp.eq.s32.totalorder %v898, %v313
        %vm924 = vcmp.eq.s32.totalorder %v898, %v314
        %vm925 = vcmp.eq.s32.totalorder %v898, %v315
        %vm926 = vcmp.eq.s32.totalorder %v898, %v316
        %vm927 = vcmp.eq.s32.totalorder %v898, %v317
        %vm928 = vcmp.eq.s32.totalorder %v898, %v318
        %vm929 = vcmp.eq.s32.totalorder %v898, %v319
        %vm930 = vcmp.eq.s32.totalorder %v898, %v320
        %v931 = vlaneseq
        %v932 = vshrl.u32 %v931, 7
        %v933 = vsub.s32 0, %v932
        %v934 = vrot.slane %v892, %v933
        %v935 = vsel %vm899, %v934, 0.0
        %v936 = vsel %vm900, %v934, 0.0
        %v937 = vsel %vm901, %v934, 0.0
        %v938 = vsel %vm902, %v934, 0.0
        %v939 = vsel %vm903, %v934, 0.0
        %v940 = vsel %vm904, %v934, 0.0
        %v941 = vsel %vm905, %v934, 0.0
        %v942 = vsel %vm906, %v934, 0.0
        %v943 = vsel %vm907, %v934, 0.0
        %v944 = vsel %vm908, %v934, 0.0
        %v945 = vsel %vm909, %v934, 0.0
        %v946 = vsel %vm910, %v934, 0.0
        %v947 = vsel %vm911, %v934, 0.0
        %v948 = vsel %vm912, %v934, 0.0
        %v949 = vsel %vm913, %v934, 0.0
        %v950 = vsel %vm914, %v934, 0.0
        %v951 = vsel %vm915, %v934, 0.0
        %v952 = vsel %vm916, %v934, 0.0
        %v953 = vsel %vm917, %v934, 0.0
        %v954 = vsel %vm918, %v934, 0.0
        %v955 = vsel %vm919, %v934, 0.0
        %v956 = vsel %vm920, %v934, 0.0
        %v957 = vsel %vm921, %v934, 0.0
        %v958 = vsel %vm922, %v934, 0.0
        %v959 = vsel %vm923, %v934, 0.0
        %v960 = vsel %vm924, %v934, 0.0
        %v961 = vsel %vm925, %v934, 0.0
        %v962 = vsel %vm926, %v934, 0.0
        %v963 = vsel %vm927, %v934, 0.0
        %v964 = vsel %vm928, %v934, 0.0
        %v965 = vsel %vm929, %v934, 0.0
        %v966 = vsel %vm930, %v934, 0.0
        %v967 = vadd.f32 %v860, %v935
        %v968 = vadd.f32 %v861, %v936
        %v969 = vadd.f32 %v862, %v937
        %v970 = vadd.f32 %v863, %v938
        %v971 = vadd.f32 %v864, %v939
        %v972 = vadd.f32 %v865, %v940
        %v973 = vadd.f32 %v866, %v941
        %v974 = vadd.f32 %v867, %v942
        %v975 = vadd.f32 %v868, %v943
        %v976 = vadd.f32 %v869, %v944
        %v977 = vadd.f32 %v870, %v945
        %v978 = vadd.f32 %v871, %v946
        %v979 = vadd.f32 %v872, %v947
        %v980 = vadd.f32 %v873, %v948
        %v981 = vadd.f32 %v874, %v949
        %v982 = vadd.f32 %v875, %v950
        %v983 = vadd.f32 %v876, %v951
        %v984 = vadd.f32 %v877, %v952
        %v985 = vadd.f32 %v878, %v953
        %v986 = vadd.f32 %v879, %v954
        %v987 = vadd.f32 %v880, %v955
        %v988 = vadd.f32 %v881, %v956
        %v989 = vadd.f32 %v882, %v957
        %v990 = vadd.f32 %v883, %v958
        %v991 = vadd.f32 %v884, %v959
        %v992 = vadd.f32 %v885, %v960
        %v993 = vadd.f32 %v886, %v961
        %v994 = vadd.f32 %v887, %v962
        %v995 = vadd.f32 %v888, %v963
        %v996 = vadd.f32 %v889, %v964
        %v997 = vadd.f32 %v890, %v965
        %v998 = vadd.f32 %v891, %v966
        %v999 = vmul.f32 %v561, %v781
        %v1000 = vadd.s32 %v564, %v785
        %v1001 = vand.u32 %v1000, 255
        %v1002 = vlaneseq
        %v1003 = vshrl.u32 %v1002, 7
        %v1004 = vsub.s32 0, %v1003
        %v1005 = vrot.slane %v1001, %v1004
        %vm1006 = vcmp.eq.s32.totalorder %v1005, %v289
        %vm1007 = vcmp.eq.s32.totalorder %v1005, %v290
        %vm1008 = vcmp.eq.s32.totalorder %v1005, %v291
        %vm1009 = vcmp.eq.s32.totalorder %v1005, %v292
        %vm1010 = vcmp.eq.s32.totalorder %v1005, %v293
        %vm1011 = vcmp.eq.s32.totalorder %v1005, %v294
        %vm1012 = vcmp.eq.s32.totalorder %v1005, %v295
        %vm1013 = vcmp.eq.s32.totalorder %v1005, %v296
        %vm1014 = vcmp.eq.s32.totalorder %v1005, %v297
        %vm1015 = vcmp.eq.s32.totalorder %v1005, %v298
        %vm1016 = vcmp.eq.s32.totalorder %v1005, %v299
        %vm1017 = vcmp.eq.s32.totalorder %v1005, %v300
        %vm1018 = vcmp.eq.s32.totalorder %v1005, %v301
        %vm1019 = vcmp.eq.s32.totalorder %v1005, %v302
        %vm1020 = vcmp.eq.s32.totalorder %v1005, %v303
        %vm1021 = vcmp.eq.s32.totalorder %v1005, %v304
        %vm1022 = vcmp.eq.s32.totalorder %v1005, %v305
        %vm1023 = vcmp.eq.s32.totalorder %v1005, %v306
        %vm1024 = vcmp.eq.s32.totalorder %v1005, %v307
        %vm1025 = vcmp.eq.s32.totalorder %v1005, %v308
        %vm1026 = vcmp.eq.s32.totalorder %v1005, %v309
        %vm1027 = vcmp.eq.s32.totalorder %v1005, %v310
        %vm1028 = vcmp.eq.s32.totalorder %v1005, %v311
        %vm1029 = vcmp.eq.s32.totalorder %v1005, %v312
        %vm1030 = vcmp.eq.s32.totalorder %v1005, %v313
        %vm1031 = vcmp.eq.s32.totalorder %v1005, %v314
        %vm1032 = vcmp.eq.s32.totalorder %v1005, %v315
        %vm1033 = vcmp.eq.s32.totalorder %v1005, %v316
        %vm1034 = vcmp.eq.s32.totalorder %v1005, %v317
        %vm1035 = vcmp.eq.s32.totalorder %v1005, %v318
        %vm1036 = vcmp.eq.s32.totalorder %v1005, %v319
        %vm1037 = vcmp.eq.s32.totalorder %v1005, %v320
        %v1038 = vlaneseq
        %v1039 = vshrl.u32 %v1038, 7
        %v1040 = vsub.s32 0, %v1039
        %v1041 = vrot.slane %v999, %v1040
        %v1042 = vsel %vm1006, %v1041, 0.0
        %v1043 = vsel %vm1007, %v1041, 0.0
        %v1044 = vsel %vm1008, %v1041, 0.0
        %v1045 = vsel %vm1009, %v1041, 0.0
        %v1046 = vsel %vm1010, %v1041, 0.0
        %v1047 = vsel %vm1011, %v1041, 0.0
        %v1048 = vsel %vm1012, %v1041, 0.0
        %v1049 = vsel %vm1013, %v1041, 0.0
        %v1050 = vsel %vm1014, %v1041, 0.0
        %v1051 = vsel %vm1015, %v1041, 0.0
        %v1052 = vsel %vm1016, %v1041, 0.0
        %v1053 = vsel %vm1017, %v1041, 0.0
        %v1054 = vsel %vm1018, %v1041, 0.0
        %v1055 = vsel %vm1019, %v1041, 0.0
        %v1056 = vsel %vm1020, %v1041, 0.0
        %v1057 = vsel %vm1021, %v1041, 0.0
        %v1058 = vsel %vm1022, %v1041, 0.0
        %v1059 = vsel %vm1023, %v1041, 0.0
        %v1060 = vsel %vm1024, %v1041, 0.0
        %v1061 = vsel %vm1025, %v1041, 0.0
        %v1062 = vsel %vm1026, %v1041, 0.0
        %v1063 = vsel %vm1027, %v1041, 0.0
        %v1064 = vsel %vm1028, %v1041, 0.0
        %v1065 = vsel %vm1029, %v1041, 0.0
        %v1066 = vsel %vm1030, %v1041, 0.0
        %v1067 = vsel %vm1031, %v1041, 0.0
        %v1068 = vsel %vm1032, %v1041, 0.0
        %v1069 = vsel %vm1033, %v1041, 0.0
        %v1070 = vsel %vm1034, %v1041, 0.0
        %v1071 = vsel %vm1035, %v1041, 0.0
        %v1072 = vsel %vm1036, %v1041, 0.0
        %v1073 = vsel %vm1037, %v1041, 0.0
        %v1074 = vadd.f32 %v967, %v1042
        %v1075 = vadd.f32 %v968, %v1043
        %v1076 = vadd.f32 %v969, %v1044
        %v1077 = vadd.f32 %v970, %v1045
        %v1078 = vadd.f32 %v971, %v1046
        %v1079 = vadd.f32 %v972, %v1047
        %v1080 = vadd.f32 %v973, %v1048
        %v1081 = vadd.f32 %v974, %v1049
        %v1082 = vadd.f32 %v975, %v1050
        %v1083 = vadd.f32 %v976, %v1051
        %v1084 = vadd.f32 %v977, %v1052
        %v1085 = vadd.f32 %v978, %v1053
        %v1086 = vadd.f32 %v979, %v1054
        %v1087 = vadd.f32 %v980, %v1055
        %v1088 = vadd.f32 %v981, %v1056
        %v1089 = vadd.f32 %v982, %v1057
        %v1090 = vadd.f32 %v983, %v1058
        %v1091 = vadd.f32 %v984, %v1059
        %v1092 = vadd.f32 %v985, %v1060
        %v1093 = vadd.f32 %v986, %v1061
        %v1094 = vadd.f32 %v987, %v1062
        %v1095 = vadd.f32 %v988, %v1063
        %v1096 = vadd.f32 %v989, %v1064
        %v1097 = vadd.f32 %v990, %v1065
        %v1098 = vadd.f32 %v991, %v1066
        %v1099 = vadd.f32 %v992, %v1067
        %v1100 = vadd.f32 %v993, %v1068
        %v1101 = vadd.f32 %v994, %v1069
        %v1102 = vadd.f32 %v995, %v1070
        %v1103 = vadd.f32 %v996, %v1071
        %v1104 = vadd.f32 %v997, %v1072
        %v1105 = vadd.f32 %v998, %v1073
        %v1106 = vmul.f32 %v672, %v781
        %v1107 = vadd.s32 %v673, %v785
        %v1108 = vand.u32 %v1107, 255
        %v1109 = vlaneseq
        %v1110 = vshrl.u32 %v1109, 7
        %v1111 = vsub.s32 0, %v1110
        %v1112 = vrot.slane %v1108, %v1111
        %vm1113 = vcmp.eq.s32.totalorder %v1112, %v289
        %vm1114 = vcmp.eq.s32.totalorder %v1112, %v290
        %vm1115 = vcmp.eq.s32.totalorder %v1112, %v291
        %vm1116 = vcmp.eq.s32.totalorder %v1112, %v292
        %vm1117 = vcmp.eq.s32.totalorder %v1112, %v293
        %vm1118 = vcmp.eq.s32.totalorder %v1112, %v294
        %vm1119 = vcmp.eq.s32.totalorder %v1112, %v295
        %vm1120 = vcmp.eq.s32.totalorder %v1112, %v296
        %vm1121 = vcmp.eq.s32.totalorder %v1112, %v297
        %vm1122 = vcmp.eq.s32.totalorder %v1112, %v298
        %vm1123 = vcmp.eq.s32.totalorder %v1112, %v299
        %vm1124 = vcmp.eq.s32.totalorder %v1112, %v300
        %vm1125 = vcmp.eq.s32.totalorder %v1112, %v301
        %vm1126 = vcmp.eq.s32.totalorder %v1112, %v302
        %vm1127 = vcmp.eq.s32.totalorder %v1112, %v303
        %vm1128 = vcmp.eq.s32.totalorder %v1112, %v304
        %vm1129 = vcmp.eq.s32.totalorder %v1112, %v305
        %vm1130 = vcmp.eq.s32.totalorder %v1112, %v306
        %vm1131 = vcmp.eq.s32.totalorder %v1112, %v307
        %vm1132 = vcmp.eq.s32.totalorder %v1112, %v308
        %vm1133 = vcmp.eq.s32.totalorder %v1112, %v309
        %vm1134 = vcmp.eq.s32.totalorder %v1112, %v310
        %vm1135 = vcmp.eq.s32.totalorder %v1112, %v311
        %vm1136 = vcmp.eq.s32.totalorder %v1112, %v312
        %vm1137 = vcmp.eq.s32.totalorder %v1112, %v313
        %vm1138 = vcmp.eq.s32.totalorder %v1112, %v314
        %vm1139 = vcmp.eq.s32.totalorder %v1112, %v315
        %vm1140 = vcmp.eq.s32.totalorder %v1112, %v316
        %vm1141 = vcmp.eq.s32.totalorder %v1112, %v317
        %vm1142 = vcmp.eq.s32.totalorder %v1112, %v318
        %vm1143 = vcmp.eq.s32.totalorder %v1112, %v319
        %vm1144 = vcmp.eq.s32.totalorder %v1112, %v320
        %v1145 = vlaneseq
        %v1146 = vshrl.u32 %v1145, 7
        %v1147 = vsub.s32 0, %v1146
        %v1148 = vrot.slane %v1106, %v1147
        %v1149 = vsel %vm1113, %v1148, 0.0
        %v1150 = vsel %vm1114, %v1148, 0.0
        %v1151 = vsel %vm1115, %v1148, 0.0
        %v1152 = vsel %vm1116, %v1148, 0.0
        %v1153 = vsel %vm1117, %v1148, 0.0
        %v1154 = vsel %vm1118, %v1148, 0.0
        %v1155 = vsel %vm1119, %v1148, 0.0
        %v1156 = vsel %vm1120, %v1148, 0.0
        %v1157 = vsel %vm1121, %v1148, 0.0
        %v1158 = vsel %vm1122, %v1148, 0.0
        %v1159 = vsel %vm1123, %v1148, 0.0
        %v1160 = vsel %vm1124, %v1148, 0.0
        %v1161 = vsel %vm1125, %v1148, 0.0
        %v1162 = vsel %vm1126, %v1148, 0.0
        %v1163 = vsel %vm1127, %v1148, 0.0
        %v1164 = vsel %vm1128, %v1148, 0.0
        %v1165 = vsel %vm1129, %v1148, 0.0
        %v1166 = vsel %vm1130, %v1148, 0.0
        %v1167 = vsel %vm1131, %v1148, 0.0
        %v1168 = vsel %vm1132, %v1148, 0.0
        %v1169 = vsel %vm1133, %v1148, 0.0
        %v1170 = vsel %vm1134, %v1148, 0.0
        %v1171 = vsel %vm1135, %v1148, 0.0
        %v1172 = vsel %vm1136, %v1148, 0.0
        %v1173 = vsel %vm1137, %v1148, 0.0
        %v1174 = vsel %vm1138, %v1148, 0.0
        %v1175 = vsel %vm1139, %v1148, 0.0
        %v1176 = vsel %vm1140, %v1148, 0.0
        %v1177 = vsel %vm1141, %v1148, 0.0
        %v1178 = vsel %vm1142, %v1148, 0.0
        %v1179 = vsel %vm1143, %v1148, 0.0
        %v1180 = vsel %vm1144, %v1148, 0.0
        %v1181 = vadd.f32 %v1074, %v1149
        %v1182 = vadd.f32 %v1075, %v1150
        %v1183 = vadd.f32 %v1076, %v1151
        %v1184 = vadd.f32 %v1077, %v1152
        %v1185 = vadd.f32 %v1078, %v1153
        %v1186 = vadd.f32 %v1079, %v1154
        %v1187 = vadd.f32 %v1080, %v1155
        %v1188 = vadd.f32 %v1081, %v1156
        %v1189 = vadd.f32 %v1082, %v1157
        %v1190 = vadd.f32 %v1083, %v1158
        %v1191 = vadd.f32 %v1084, %v1159
        %v1192 = vadd.f32 %v1085, %v1160
        %v1193 = vadd.f32 %v1086, %v1161
        %v1194 = vadd.f32 %v1087, %v1162
        %v1195 = vadd.f32 %v1088, %v1163
        %v1196 = vadd.f32 %v1089, %v1164
        %v1197 = vadd.f32 %v1090, %v1165
        %v1198 = vadd.f32 %v1091, %v1166
        %v1199 = vadd.f32 %v1092, %v1167
        %v1200 = vadd.f32 %v1093, %v1168
        %v1201 = vadd.f32 %v1094, %v1169
        %v1202 = vadd.f32 %v1095, %v1170
        %v1203 = vadd.f32 %v1096, %v1171
        %v1204 = vadd.f32 %v1097, %v1172
        %v1205 = vadd.f32 %v1098, %v1173
        %v1206 = vadd.f32 %v1099, %v1174
        %v1207 = vadd.f32 %v1100, %v1175
        %v1208 = vadd.f32 %v1101, %v1176
        %v1209 = vadd.f32 %v1102, %v1177
        %v1210 = vadd.f32 %v1103, %v1178
        %v1211 = vadd.f32 %v1104, %v1179
        %v1212 = vadd.f32 %v1105, %v1180
        %v1213 = vld [vmem:[#allocation5] sm:$0xf]
        %v1214 = vpack.c.bf16 %v1182, %v1181
        %v1215 = vpack.c.bf16 %v1184, %v1183
        %v1216 = vpack.c.bf16 %v1186, %v1185
        %v1217 = vpack.c.bf16 %v1188, %v1187
        %v1218 = vpack.c.bf16 %v1190, %v1189
        %v1219 = vpack.c.bf16 %v1192, %v1191
        %v1220 = vpack.c.bf16 %v1194, %v1193
        %v1221 = vpack.c.bf16 %v1196, %v1195
        %v1222 = vpack.c.bf16 %v1198, %v1197
        %v1223 = vpack.c.bf16 %v1200, %v1199
        %v1224 = vpack.c.bf16 %v1202, %v1201
        %v1225 = vpack.c.bf16 %v1204, %v1203
        %v1226 = vpack.c.bf16 %v1206, %v1205
        %v1227 = vpack.c.bf16 %v1208, %v1207
        %v1228 = vpack.c.bf16 %v1210, %v1209
        %v1229 = vpack.c.bf16 %v1212, %v1211
        %v1232 = vunpack.c.l.s4 1983009808
        %v1233 = vunpack.c.0.s8 %v1232
        %v1234 = vlaneseq
        %v1235 = vshrl.u32 %v1234, 7
        %v1236 = vsub.s32 %v1233, %v1235
        %v1237 = vrot.slane %v1213, %v1236
        %v1238 = vcombine.high %v1237, %v1237
        %1241 = vmatprep.subr.bf16.mxu0 0
        %1242 = vmatpush1.bf16.msra.mxu0 %v1214
        %1243 = vmatprep.subr.bf16.mxu0 0
        %1244 = vmatpush1.bf16.msra.mxu0 %v1215
        %1245 = vmatprep.subr.bf16.mxu0 0
        %1246 = vmatpush1.bf16.msra.mxu0 %v1216
        %1247 = vmatprep.subr.bf16.mxu0 0
        %1248 = vmatpush1.bf16.msra.mxu0 %v1217
        %1249 = vmatprep.subr.bf16.mxu0 0
        %1250 = vmatpush1.bf16.msra.mxu0 %v1218
        %1251 = vmatprep.subr.bf16.mxu0 0
        %1252 = vmatpush1.bf16.msra.mxu0 %v1219
        %1253 = vmatprep.subr.bf16.mxu0 0
        %1254 = vmatpush1.bf16.msra.mxu0 %v1220
        %1255 = vmatprep.subr.bf16.mxu0 0
        %1256 = vmatpush1.bf16.msra.mxu0 %v1221
        %1257 = vmatprep.subr.bf16.mxu0 0
        %1258 = vmatpush1.bf16.msra.mxu0 %v1222
        %1259 = vmatprep.subr.bf16.mxu0 0
        %1260 = vmatpush1.bf16.msra.mxu0 %v1223
        %1261 = vmatprep.subr.bf16.mxu0 0
        %1262 = vmatpush1.bf16.msra.mxu0 %v1224
        %1263 = vmatprep.subr.bf16.mxu0 0
        %1264 = vmatpush1.bf16.msra.mxu0 %v1225
        %1265 = vmatprep.subr.bf16.mxu0 0
        %1266 = vmatpush1.bf16.msra.mxu0 %v1226
        %1267 = vmatprep.subr.bf16.mxu0 0
        %1268 = vmatpush1.bf16.msra.mxu0 %v1227
        %1269 = vmatprep.subr.bf16.mxu0 0
        %1270 = vmatpush1.bf16.msra.mxu0 %v1228
        %1271 = vmatprep.subr.bf16.mxu0 0
        %1272 = vmatpush1.bf16.msra.mxu0 %v1229
        %1273 = vmatprep.mubr.bf16.mxu0 %v1238
        %1274 = vmatmul.mubr.bf16.gmra.mrb[0].mxu0 %v1237
        %v1275 = vpop.f32.mrb[0].mxu0
        %v1276 = vadd.f32 0.0, %v1275
        %v1277 = vpop.f32.mrb[0].mxu0
        %v1278 = vpop.f32.mrb[0].mxu0
        %v1279 = vpop.f32.mrb[0].mxu0
        %1280 = vdwg.mxu0
        %v1281 = vmul.f32 %v287, 7.0
        %v1282 = vfloor.f32 %v1281
        %v1283 = vsub.f32 %v1281, %v1282
        %v1284 = vcvt.f32.s32.to.zero.pseudo %v1282
        %vm1285 = vcmp.lt.s32.totalorder %v1284, 7
        %v1286 = vsel %vm1285, %v1284, 7
        %v1287 = vsub.f32 1.0, %v1283
        %v1289 = vrot.slane %v1287, 1
        %v1291 = vmul.f32 %v1287, %v1289
        %v1292 = vmul.u32 %v1286, 2654435761
        %v1293 = vrot.slane %v1292, 1
        %v1294 = vxor.u32 %v1286, %v1293
        %v1295 = vrot.slane %v1287, 2
        %v1297 = vmul.f32 %v1291, %v1295
        %v1298 = vmul.u32 %v1286, 805459861
        %v1299 = vrot.slane %v1298, 2
        %v1300 = vxor.u32 %v1294, %v1299
        %v1301 = vand.u32 %v1300, 255
        %v1302 = vlaneseq
        %v1303 = vshrl.u32 %v1302, 7
        %v1304 = vsub.s32 0, %v1303
        %v1305 = vrot.slane %v1301, %v1304
        %vm1306 = vcmp.eq.s32.totalorder %v1305, %v289
        %vm1307 = vcmp.eq.s32.totalorder %v1305, %v290
        %vm1308 = vcmp.eq.s32.totalorder %v1305, %v291
        %vm1309 = vcmp.eq.s32.totalorder %v1305, %v292
        %vm1310 = vcmp.eq.s32.totalorder %v1305, %v293
        %vm1311 = vcmp.eq.s32.totalorder %v1305, %v294
        %vm1312 = vcmp.eq.s32.totalorder %v1305, %v295
        %vm1313 = vcmp.eq.s32.totalorder %v1305, %v296
        %vm1314 = vcmp.eq.s32.totalorder %v1305, %v297
        %vm1315 = vcmp.eq.s32.totalorder %v1305, %v298
        %vm1316 = vcmp.eq.s32.totalorder %v1305, %v299
        %vm1317 = vcmp.eq.s32.totalorder %v1305, %v300
        %vm1318 = vcmp.eq.s32.totalorder %v1305, %v301
        %vm1319 = vcmp.eq.s32.totalorder %v1305, %v302
        %vm1320 = vcmp.eq.s32.totalorder %v1305, %v303
        %vm1321 = vcmp.eq.s32.totalorder %v1305, %v304
        %vm1322 = vcmp.eq.s32.totalorder %v1305, %v305
        %vm1323 = vcmp.eq.s32.totalorder %v1305, %v306
        %vm1324 = vcmp.eq.s32.totalorder %v1305, %v307
        %vm1325 = vcmp.eq.s32.totalorder %v1305, %v308
        %vm1326 = vcmp.eq.s32.totalorder %v1305, %v309
        %vm1327 = vcmp.eq.s32.totalorder %v1305, %v310
        %vm1328 = vcmp.eq.s32.totalorder %v1305, %v311
        %vm1329 = vcmp.eq.s32.totalorder %v1305, %v312
        %vm1330 = vcmp.eq.s32.totalorder %v1305, %v313
        %vm1331 = vcmp.eq.s32.totalorder %v1305, %v314
        %vm1332 = vcmp.eq.s32.totalorder %v1305, %v315
        %vm1333 = vcmp.eq.s32.totalorder %v1305, %v316
        %vm1334 = vcmp.eq.s32.totalorder %v1305, %v317
        %vm1335 = vcmp.eq.s32.totalorder %v1305, %v318
        %vm1336 = vcmp.eq.s32.totalorder %v1305, %v319
        %vm1337 = vcmp.eq.s32.totalorder %v1305, %v320
        %v1338 = vlaneseq
        %v1339 = vshrl.u32 %v1338, 7
        %v1340 = vsub.s32 0, %v1339
        %v1341 = vrot.slane %v1297, %v1340
        %v1342 = vsel %vm1306, %v1341, 0.0
        %v1343 = vsel %vm1307, %v1341, 0.0
        %v1344 = vsel %vm1308, %v1341, 0.0
        %v1345 = vsel %vm1309, %v1341, 0.0
        %v1346 = vsel %vm1310, %v1341, 0.0
        %v1347 = vsel %vm1311, %v1341, 0.0
        %v1348 = vsel %vm1312, %v1341, 0.0
        %v1349 = vsel %vm1313, %v1341, 0.0
        %v1350 = vsel %vm1314, %v1341, 0.0
        %v1351 = vsel %vm1315, %v1341, 0.0
        %v1352 = vsel %vm1316, %v1341, 0.0
        %v1353 = vsel %vm1317, %v1341, 0.0
        %v1354 = vsel %vm1318, %v1341, 0.0
        %v1355 = vsel %vm1319, %v1341, 0.0
        %v1356 = vsel %vm1320, %v1341, 0.0
        %v1357 = vsel %vm1321, %v1341, 0.0
        %v1358 = vsel %vm1322, %v1341, 0.0
        %v1359 = vsel %vm1323, %v1341, 0.0
        %v1360 = vsel %vm1324, %v1341, 0.0
        %v1361 = vsel %vm1325, %v1341, 0.0
        %v1362 = vsel %vm1326, %v1341, 0.0
        %v1363 = vsel %vm1327, %v1341, 0.0
        %v1364 = vsel %vm1328, %v1341, 0.0
        %v1365 = vsel %vm1329, %v1341, 0.0
        %v1366 = vsel %vm1330, %v1341, 0.0
        %v1367 = vsel %vm1331, %v1341, 0.0
        %v1368 = vsel %vm1332, %v1341, 0.0
        %v1369 = vsel %vm1333, %v1341, 0.0
        %v1370 = vsel %vm1334, %v1341, 0.0
        %v1371 = vsel %vm1335, %v1341, 0.0
        %v1372 = vsel %vm1336, %v1341, 0.0
        %v1373 = vsel %vm1337, %v1341, 0.0
        %v1374 = vadd.f32 %v1342, 0.0
        %v1375 = vadd.f32 %v1343, 0.0
        %v1376 = vadd.f32 %v1344, 0.0
        %v1377 = vadd.f32 %v1345, 0.0
        %v1378 = vadd.f32 %v1346, 0.0
        %v1379 = vadd.f32 %v1347, 0.0
        %v1380 = vadd.f32 %v1348, 0.0
        %v1381 = vadd.f32 %v1349, 0.0
        %v1382 = vadd.f32 %v1350, 0.0
        %v1383 = vadd.f32 %v1351, 0.0
        %v1384 = vadd.f32 %v1352, 0.0
        %v1385 = vadd.f32 %v1353, 0.0
        %v1386 = vadd.f32 %v1354, 0.0
        %v1387 = vadd.f32 %v1355, 0.0
        %v1388 = vadd.f32 %v1356, 0.0
        %v1389 = vadd.f32 %v1357, 0.0
        %v1390 = vadd.f32 %v1358, 0.0
        %v1391 = vadd.f32 %v1359, 0.0
        %v1392 = vadd.f32 %v1360, 0.0
        %v1393 = vadd.f32 %v1361, 0.0
        %v1394 = vadd.f32 %v1362, 0.0
        %v1395 = vadd.f32 %v1363, 0.0
        %v1396 = vadd.f32 %v1364, 0.0
        %v1397 = vadd.f32 %v1365, 0.0
        %v1398 = vadd.f32 %v1366, 0.0
        %v1399 = vadd.f32 %v1367, 0.0
        %v1400 = vadd.f32 %v1368, 0.0
        %v1401 = vadd.f32 %v1369, 0.0
        %v1402 = vadd.f32 %v1370, 0.0
        %v1403 = vadd.f32 %v1371, 0.0
        %v1404 = vadd.f32 %v1372, 0.0
        %v1405 = vadd.f32 %v1373, 0.0
        %v1406 = vadd.s32 %v1284, 1
        %vm1407 = vcmp.lt.s32.totalorder %v1406, 7
        %v1408 = vsel %vm1407, %v1406, 7
        %v1409 = vmul.f32 %v1283, %v1289
        %v1410 = vxor.u32 %v1408, %v1293
        %v1411 = vmul.f32 %v1409, %v1295
        %v1412 = vxor.u32 %v1410, %v1299
        %v1413 = vand.u32 %v1412, 255
        %v1414 = vlaneseq
        %v1415 = vshrl.u32 %v1414, 7
        %v1416 = vsub.s32 0, %v1415
        %v1417 = vrot.slane %v1413, %v1416
        %vm1418 = vcmp.eq.s32.totalorder %v1417, %v289
        %vm1419 = vcmp.eq.s32.totalorder %v1417, %v290
        %vm1420 = vcmp.eq.s32.totalorder %v1417, %v291
        %vm1421 = vcmp.eq.s32.totalorder %v1417, %v292
        %vm1422 = vcmp.eq.s32.totalorder %v1417, %v293
        %vm1423 = vcmp.eq.s32.totalorder %v1417, %v294
        %vm1424 = vcmp.eq.s32.totalorder %v1417, %v295
        %vm1425 = vcmp.eq.s32.totalorder %v1417, %v296
        %vm1426 = vcmp.eq.s32.totalorder %v1417, %v297
        %vm1427 = vcmp.eq.s32.totalorder %v1417, %v298
        %vm1428 = vcmp.eq.s32.totalorder %v1417, %v299
        %vm1429 = vcmp.eq.s32.totalorder %v1417, %v300
        %vm1430 = vcmp.eq.s32.totalorder %v1417, %v301
        %vm1431 = vcmp.eq.s32.totalorder %v1417, %v302
        %vm1432 = vcmp.eq.s32.totalorder %v1417, %v303
        %vm1433 = vcmp.eq.s32.totalorder %v1417, %v304
        %vm1434 = vcmp.eq.s32.totalorder %v1417, %v305
        %vm1435 = vcmp.eq.s32.totalorder %v1417, %v306
        %vm1436 = vcmp.eq.s32.totalorder %v1417, %v307
        %vm1437 = vcmp.eq.s32.totalorder %v1417, %v308
        %vm1438 = vcmp.eq.s32.totalorder %v1417, %v309
        %vm1439 = vcmp.eq.s32.totalorder %v1417, %v310
        %vm1440 = vcmp.eq.s32.totalorder %v1417, %v311
        %vm1441 = vcmp.eq.s32.totalorder %v1417, %v312
        %vm1442 = vcmp.eq.s32.totalorder %v1417, %v313
        %vm1443 = vcmp.eq.s32.totalorder %v1417, %v314
        %vm1444 = vcmp.eq.s32.totalorder %v1417, %v315
        %vm1445 = vcmp.eq.s32.totalorder %v1417, %v316
        %vm1446 = vcmp.eq.s32.totalorder %v1417, %v317
        %vm1447 = vcmp.eq.s32.totalorder %v1417, %v318
        %vm1448 = vcmp.eq.s32.totalorder %v1417, %v319
        %vm1449 = vcmp.eq.s32.totalorder %v1417, %v320
        %v1450 = vlaneseq
        %v1451 = vshrl.u32 %v1450, 7
        %v1452 = vsub.s32 0, %v1451
        %v1453 = vrot.slane %v1411, %v1452
        %v1454 = vsel %vm1418, %v1453, 0.0
        %v1455 = vsel %vm1419, %v1453, 0.0
        %v1456 = vsel %vm1420, %v1453, 0.0
        %v1457 = vsel %vm1421, %v1453, 0.0
        %v1458 = vsel %vm1422, %v1453, 0.0
        %v1459 = vsel %vm1423, %v1453, 0.0
        %v1460 = vsel %vm1424, %v1453, 0.0
        %v1461 = vsel %vm1425, %v1453, 0.0
        %v1462 = vsel %vm1426, %v1453, 0.0
        %v1463 = vsel %vm1427, %v1453, 0.0
        %v1464 = vsel %vm1428, %v1453, 0.0
        %v1465 = vsel %vm1429, %v1453, 0.0
        %v1466 = vsel %vm1430, %v1453, 0.0
        %v1467 = vsel %vm1431, %v1453, 0.0
        %v1468 = vsel %vm1432, %v1453, 0.0
        %v1469 = vsel %vm1433, %v1453, 0.0
        %v1470 = vsel %vm1434, %v1453, 0.0
        %v1471 = vsel %vm1435, %v1453, 0.0
        %v1472 = vsel %vm1436, %v1453, 0.0
        %v1473 = vsel %vm1437, %v1453, 0.0
        %v1474 = vsel %vm1438, %v1453, 0.0
        %v1475 = vsel %vm1439, %v1453, 0.0
        %v1476 = vsel %vm1440, %v1453, 0.0
        %v1477 = vsel %vm1441, %v1453, 0.0
        %v1478 = vsel %vm1442, %v1453, 0.0
        %v1479 = vsel %vm1443, %v1453, 0.0
        %v1480 = vsel %vm1444, %v1453, 0.0
        %v1481 = vsel %vm1445, %v1453, 0.0
        %v1482 = vsel %vm1446, %v1453, 0.0
        %v1483 = vsel %vm1447, %v1453, 0.0
        %v1484 = vsel %vm1448, %v1453, 0.0
        %v1485 = vsel %vm1449, %v1453, 0.0
        %v1486 = vadd.f32 %v1374, %v1454
        %v1487 = vadd.f32 %v1375, %v1455
        %v1488 = vadd.f32 %v1376, %v1456
        %v1489 = vadd.f32 %v1377, %v1457
        %v1490 = vadd.f32 %v1378, %v1458
        %v1491 = vadd.f32 %v1379, %v1459
        %v1492 = vadd.f32 %v1380, %v1460
        %v1493 = vadd.f32 %v1381, %v1461
        %v1494 = vadd.f32 %v1382, %v1462
        %v1495 = vadd.f32 %v1383, %v1463
        %v1496 = vadd.f32 %v1384, %v1464
        %v1497 = vadd.f32 %v1385, %v1465
        %v1498 = vadd.f32 %v1386, %v1466
        %v1499 = vadd.f32 %v1387, %v1467
        %v1500 = vadd.f32 %v1388, %v1468
        %v1501 = vadd.f32 %v1389, %v1469
        %v1502 = vadd.f32 %v1390, %v1470
        %v1503 = vadd.f32 %v1391, %v1471
        %v1504 = vadd.f32 %v1392, %v1472
        %v1505 = vadd.f32 %v1393, %v1473
        %v1506 = vadd.f32 %v1394, %v1474
        %v1507 = vadd.f32 %v1395, %v1475
        %v1508 = vadd.f32 %v1396, %v1476
        %v1509 = vadd.f32 %v1397, %v1477
        %v1510 = vadd.f32 %v1398, %v1478
        %v1511 = vadd.f32 %v1399, %v1479
        %v1512 = vadd.f32 %v1400, %v1480
        %v1513 = vadd.f32 %v1401, %v1481
        %v1514 = vadd.f32 %v1402, %v1482
        %v1515 = vadd.f32 %v1403, %v1483
        %v1516 = vadd.f32 %v1404, %v1484
        %v1517 = vadd.f32 %v1405, %v1485
        %v1519 = vrot.slane %v1283, 1
        %v1521 = vmul.f32 %v1287, %v1519
        %v1522 = vmul.u32 %v1408, 2654435761
        %v1523 = vrot.slane %v1522, 1
        %v1524 = vxor.u32 %v1286, %v1523
        %v1525 = vmul.f32 %v1521, %v1295
        %v1526 = vxor.u32 %v1524, %v1299
        %v1527 = vand.u32 %v1526, 255
        %v1528 = vlaneseq
        %v1529 = vshrl.u32 %v1528, 7
        %v1530 = vsub.s32 0, %v1529
        %v1531 = vrot.slane %v1527, %v1530
        %vm1532 = vcmp.eq.s32.totalorder %v1531, %v289
        %vm1533 = vcmp.eq.s32.totalorder %v1531, %v290
        %vm1534 = vcmp.eq.s32.totalorder %v1531, %v291
        %vm1535 = vcmp.eq.s32.totalorder %v1531, %v292
        %vm1536 = vcmp.eq.s32.totalorder %v1531, %v293
        %vm1537 = vcmp.eq.s32.totalorder %v1531, %v294
        %vm1538 = vcmp.eq.s32.totalorder %v1531, %v295
        %vm1539 = vcmp.eq.s32.totalorder %v1531, %v296
        %vm1540 = vcmp.eq.s32.totalorder %v1531, %v297
        %vm1541 = vcmp.eq.s32.totalorder %v1531, %v298
        %vm1542 = vcmp.eq.s32.totalorder %v1531, %v299
        %vm1543 = vcmp.eq.s32.totalorder %v1531, %v300
        %vm1544 = vcmp.eq.s32.totalorder %v1531, %v301
        %vm1545 = vcmp.eq.s32.totalorder %v1531, %v302
        %vm1546 = vcmp.eq.s32.totalorder %v1531, %v303
        %vm1547 = vcmp.eq.s32.totalorder %v1531, %v304
        %vm1548 = vcmp.eq.s32.totalorder %v1531, %v305
        %vm1549 = vcmp.eq.s32.totalorder %v1531, %v306
        %vm1550 = vcmp.eq.s32.totalorder %v1531, %v307
        %vm1551 = vcmp.eq.s32.totalorder %v1531, %v308
        %vm1552 = vcmp.eq.s32.totalorder %v1531, %v309
        %vm1553 = vcmp.eq.s32.totalorder %v1531, %v310
        %vm1554 = vcmp.eq.s32.totalorder %v1531, %v311
        %vm1555 = vcmp.eq.s32.totalorder %v1531, %v312
        %vm1556 = vcmp.eq.s32.totalorder %v1531, %v313
        %vm1557 = vcmp.eq.s32.totalorder %v1531, %v314
        %vm1558 = vcmp.eq.s32.totalorder %v1531, %v315
        %vm1559 = vcmp.eq.s32.totalorder %v1531, %v316
        %vm1560 = vcmp.eq.s32.totalorder %v1531, %v317
        %vm1561 = vcmp.eq.s32.totalorder %v1531, %v318
        %vm1562 = vcmp.eq.s32.totalorder %v1531, %v319
        %vm1563 = vcmp.eq.s32.totalorder %v1531, %v320
        %v1564 = vlaneseq
        %v1565 = vshrl.u32 %v1564, 7
        %v1566 = vsub.s32 0, %v1565
        %v1567 = vrot.slane %v1525, %v1566
        %v1568 = vsel %vm1532, %v1567, 0.0
        %v1569 = vsel %vm1533, %v1567, 0.0
        %v1570 = vsel %vm1534, %v1567, 0.0
        %v1571 = vsel %vm1535, %v1567, 0.0
        %v1572 = vsel %vm1536, %v1567, 0.0
        %v1573 = vsel %vm1537, %v1567, 0.0
        %v1574 = vsel %vm1538, %v1567, 0.0
        %v1575 = vsel %vm1539, %v1567, 0.0
        %v1576 = vsel %vm1540, %v1567, 0.0
        %v1577 = vsel %vm1541, %v1567, 0.0
        %v1578 = vsel %vm1542, %v1567, 0.0
        %v1579 = vsel %vm1543, %v1567, 0.0
        %v1580 = vsel %vm1544, %v1567, 0.0
        %v1581 = vsel %vm1545, %v1567, 0.0
        %v1582 = vsel %vm1546, %v1567, 0.0
        %v1583 = vsel %vm1547, %v1567, 0.0
        %v1584 = vsel %vm1548, %v1567, 0.0
        %v1585 = vsel %vm1549, %v1567, 0.0
        %v1586 = vsel %vm1550, %v1567, 0.0
        %v1587 = vsel %vm1551, %v1567, 0.0
        %v1588 = vsel %vm1552, %v1567, 0.0
        %v1589 = vsel %vm1553, %v1567, 0.0
        %v1590 = vsel %vm1554, %v1567, 0.0
        %v1591 = vsel %vm1555, %v1567, 0.0
        %v1592 = vsel %vm1556, %v1567, 0.0
        %v1593 = vsel %vm1557, %v1567, 0.0
        %v1594 = vsel %vm1558, %v1567, 0.0
        %v1595 = vsel %vm1559, %v1567, 0.0
        %v1596 = vsel %vm1560, %v1567, 0.0
        %v1597 = vsel %vm1561, %v1567, 0.0
        %v1598 = vsel %vm1562, %v1567, 0.0
        %v1599 = vsel %vm1563, %v1567, 0.0
        %v1600 = vadd.f32 %v1486, %v1568
        %v1601 = vadd.f32 %v1487, %v1569
        %v1602 = vadd.f32 %v1488, %v1570
        %v1603 = vadd.f32 %v1489, %v1571
        %v1604 = vadd.f32 %v1490, %v1572
        %v1605 = vadd.f32 %v1491, %v1573
        %v1606 = vadd.f32 %v1492, %v1574
        %v1607 = vadd.f32 %v1493, %v1575
        %v1608 = vadd.f32 %v1494, %v1576
        %v1609 = vadd.f32 %v1495, %v1577
        %v1610 = vadd.f32 %v1496, %v1578
        %v1611 = vadd.f32 %v1497, %v1579
        %v1612 = vadd.f32 %v1498, %v1580
        %v1613 = vadd.f32 %v1499, %v1581
        %v1614 = vadd.f32 %v1500, %v1582
        %v1615 = vadd.f32 %v1501, %v1583
        %v1616 = vadd.f32 %v1502, %v1584
        %v1617 = vadd.f32 %v1503, %v1585
        %v1618 = vadd.f32 %v1504, %v1586
        %v1619 = vadd.f32 %v1505, %v1587
        %v1620 = vadd.f32 %v1506, %v1588
        %v1621 = vadd.f32 %v1507, %v1589
        %v1622 = vadd.f32 %v1508, %v1590
        %v1623 = vadd.f32 %v1509, %v1591
        %v1624 = vadd.f32 %v1510, %v1592
        %v1625 = vadd.f32 %v1511, %v1593
        %v1626 = vadd.f32 %v1512, %v1594
        %v1627 = vadd.f32 %v1513, %v1595
        %v1628 = vadd.f32 %v1514, %v1596
        %v1629 = vadd.f32 %v1515, %v1597
        %v1630 = vadd.f32 %v1516, %v1598
        %v1631 = vadd.f32 %v1517, %v1599
        %v1632 = vmul.f32 %v1283, %v1519
        %v1633 = vxor.u32 %v1408, %v1523
        %v1634 = vmul.f32 %v1632, %v1295
        %v1635 = vxor.u32 %v1633, %v1299
        %v1636 = vand.u32 %v1635, 255
        %v1637 = vlaneseq
        %v1638 = vshrl.u32 %v1637, 7
        %v1639 = vsub.s32 0, %v1638
        %v1640 = vrot.slane %v1636, %v1639
        %vm1641 = vcmp.eq.s32.totalorder %v1640, %v289
        %vm1642 = vcmp.eq.s32.totalorder %v1640, %v290
        %vm1643 = vcmp.eq.s32.totalorder %v1640, %v291
        %vm1644 = vcmp.eq.s32.totalorder %v1640, %v292
        %vm1645 = vcmp.eq.s32.totalorder %v1640, %v293
        %vm1646 = vcmp.eq.s32.totalorder %v1640, %v294
        %vm1647 = vcmp.eq.s32.totalorder %v1640, %v295
        %vm1648 = vcmp.eq.s32.totalorder %v1640, %v296
        %vm1649 = vcmp.eq.s32.totalorder %v1640, %v297
        %vm1650 = vcmp.eq.s32.totalorder %v1640, %v298
        %vm1651 = vcmp.eq.s32.totalorder %v1640, %v299
        %vm1652 = vcmp.eq.s32.totalorder %v1640, %v300
        %vm1653 = vcmp.eq.s32.totalorder %v1640, %v301
        %vm1654 = vcmp.eq.s32.totalorder %v1640, %v302
        %vm1655 = vcmp.eq.s32.totalorder %v1640, %v303
        %vm1656 = vcmp.eq.s32.totalorder %v1640, %v304
        %vm1657 = vcmp.eq.s32.totalorder %v1640, %v305
        %vm1658 = vcmp.eq.s32.totalorder %v1640, %v306
        %vm1659 = vcmp.eq.s32.totalorder %v1640, %v307
        %vm1660 = vcmp.eq.s32.totalorder %v1640, %v308
        %vm1661 = vcmp.eq.s32.totalorder %v1640, %v309
        %vm1662 = vcmp.eq.s32.totalorder %v1640, %v310
        %vm1663 = vcmp.eq.s32.totalorder %v1640, %v311
        %vm1664 = vcmp.eq.s32.totalorder %v1640, %v312
        %vm1665 = vcmp.eq.s32.totalorder %v1640, %v313
        %vm1666 = vcmp.eq.s32.totalorder %v1640, %v314
        %vm1667 = vcmp.eq.s32.totalorder %v1640, %v315
        %vm1668 = vcmp.eq.s32.totalorder %v1640, %v316
        %vm1669 = vcmp.eq.s32.totalorder %v1640, %v317
        %vm1670 = vcmp.eq.s32.totalorder %v1640, %v318
        %vm1671 = vcmp.eq.s32.totalorder %v1640, %v319
        %vm1672 = vcmp.eq.s32.totalorder %v1640, %v320
        %v1673 = vlaneseq
        %v1674 = vshrl.u32 %v1673, 7
        %v1675 = vsub.s32 0, %v1674
        %v1676 = vrot.slane %v1634, %v1675
        %v1677 = vsel %vm1641, %v1676, 0.0
        %v1678 = vsel %vm1642, %v1676, 0.0
        %v1679 = vsel %vm1643, %v1676, 0.0
        %v1680 = vsel %vm1644, %v1676, 0.0
        %v1681 = vsel %vm1645, %v1676, 0.0
        %v1682 = vsel %vm1646, %v1676, 0.0
        %v1683 = vsel %vm1647, %v1676, 0.0
        %v1684 = vsel %vm1648, %v1676, 0.0
        %v1685 = vsel %vm1649, %v1676, 0.0
        %v1686 = vsel %vm1650, %v1676, 0.0
        %v1687 = vsel %vm1651, %v1676, 0.0
        %v1688 = vsel %vm1652, %v1676, 0.0
        %v1689 = vsel %vm1653, %v1676, 0.0
        %v1690 = vsel %vm1654, %v1676, 0.0
        %v1691 = vsel %vm1655, %v1676, 0.0
        %v1692 = vsel %vm1656, %v1676, 0.0
        %v1693 = vsel %vm1657, %v1676, 0.0
        %v1694 = vsel %vm1658, %v1676, 0.0
        %v1695 = vsel %vm1659, %v1676, 0.0
        %v1696 = vsel %vm1660, %v1676, 0.0
        %v1697 = vsel %vm1661, %v1676, 0.0
        %v1698 = vsel %vm1662, %v1676, 0.0
        %v1699 = vsel %vm1663, %v1676, 0.0
        %v1700 = vsel %vm1664, %v1676, 0.0
        %v1701 = vsel %vm1665, %v1676, 0.0
        %v1702 = vsel %vm1666, %v1676, 0.0
        %v1703 = vsel %vm1667, %v1676, 0.0
        %v1704 = vsel %vm1668, %v1676, 0.0
        %v1705 = vsel %vm1669, %v1676, 0.0
        %v1706 = vsel %vm1670, %v1676, 0.0
        %v1707 = vsel %vm1671, %v1676, 0.0
        %v1708 = vsel %vm1672, %v1676, 0.0
        %v1709 = vadd.f32 %v1600, %v1677
        %v1710 = vadd.f32 %v1601, %v1678
        %v1711 = vadd.f32 %v1602, %v1679
        %v1712 = vadd.f32 %v1603, %v1680
        %v1713 = vadd.f32 %v1604, %v1681
        %v1714 = vadd.f32 %v1605, %v1682
        %v1715 = vadd.f32 %v1606, %v1683
        %v1716 = vadd.f32 %v1607, %v1684
        %v1717 = vadd.f32 %v1608, %v1685
        %v1718 = vadd.f32 %v1609, %v1686
        %v1719 = vadd.f32 %v1610, %v1687
        %v1720 = vadd.f32 %v1611, %v1688
        %v1721 = vadd.f32 %v1612, %v1689
        %v1722 = vadd.f32 %v1613, %v1690
        %v1723 = vadd.f32 %v1614, %v1691
        %v1724 = vadd.f32 %v1615, %v1692
        %v1725 = vadd.f32 %v1616, %v1693
        %v1726 = vadd.f32 %v1617, %v1694
        %v1727 = vadd.f32 %v1618, %v1695
        %v1728 = vadd.f32 %v1619, %v1696
        %v1729 = vadd.f32 %v1620, %v1697
        %v1730 = vadd.f32 %v1621, %v1698
        %v1731 = vadd.f32 %v1622, %v1699
        %v1732 = vadd.f32 %v1623, %v1700
        %v1733 = vadd.f32 %v1624, %v1701
        %v1734 = vadd.f32 %v1625, %v1702
        %v1735 = vadd.f32 %v1626, %v1703
        %v1736 = vadd.f32 %v1627, %v1704
        %v1737 = vadd.f32 %v1628, %v1705
        %v1738 = vadd.f32 %v1629, %v1706
        %v1739 = vadd.f32 %v1630, %v1707
        %v1740 = vadd.f32 %v1631, %v1708
        %v1741 = vrot.slane %v1283, 2
        %v1743 = vmul.f32 %v1291, %v1741
        %v1744 = vmul.u32 %v1408, 805459861
        %v1745 = vrot.slane %v1744, 2
        %v1746 = vxor.u32 %v1294, %v1745
        %v1747 = vand.u32 %v1746, 255
        %v1748 = vlaneseq
        %v1749 = vshrl.u32 %v1748, 7
        %v1750 = vsub.s32 0, %v1749
        %v1751 = vrot.slane %v1747, %v1750
        %vm1752 = vcmp.eq.s32.totalorder %v1751, %v289
        %vm1753 = vcmp.eq.s32.totalorder %v1751, %v290
        %vm1754 = vcmp.eq.s32.totalorder %v1751, %v291
        %vm1755 = vcmp.eq.s32.totalorder %v1751, %v292
        %vm1756 = vcmp.eq.s32.totalorder %v1751, %v293
        %vm1757 = vcmp.eq.s32.totalorder %v1751, %v294
        %vm1758 = vcmp.eq.s32.totalorder %v1751, %v295
        %vm1759 = vcmp.eq.s32.totalorder %v1751, %v296
        %vm1760 = vcmp.eq.s32.totalorder %v1751, %v297
        %vm1761 = vcmp.eq.s32.totalorder %v1751, %v298
        %vm1762 = vcmp.eq.s32.totalorder %v1751, %v299
        %vm1763 = vcmp.eq.s32.totalorder %v1751, %v300
        %vm1764 = vcmp.eq.s32.totalorder %v1751, %v301
        %vm1765 = vcmp.eq.s32.totalorder %v1751, %v302
        %vm1766 = vcmp.eq.s32.totalorder %v1751, %v303
        %vm1767 = vcmp.eq.s32.totalorder %v1751, %v304
        %vm1768 = vcmp.eq.s32.totalorder %v1751, %v305
        %vm1769 = vcmp.eq.s32.totalorder %v1751, %v306
        %vm1770 = vcmp.eq.s32.totalorder %v1751, %v307
        %vm1771 = vcmp.eq.s32.totalorder %v1751, %v308
        %vm1772 = vcmp.eq.s32.totalorder %v1751, %v309
        %vm1773 = vcmp.eq.s32.totalorder %v1751, %v310
        %vm1774 = vcmp.eq.s32.totalorder %v1751, %v311
        %vm1775 = vcmp.eq.s32.totalorder %v1751, %v312
        %vm1776 = vcmp.eq.s32.totalorder %v1751, %v313
        %vm1777 = vcmp.eq.s32.totalorder %v1751, %v314
        %vm1778 = vcmp.eq.s32.totalorder %v1751, %v315
        %vm1779 = vcmp.eq.s32.totalorder %v1751, %v316
        %vm1780 = vcmp.eq.s32.totalorder %v1751, %v317
        %vm1781 = vcmp.eq.s32.totalorder %v1751, %v318
        %vm1782 = vcmp.eq.s32.totalorder %v1751, %v319
        %vm1783 = vcmp.eq.s32.totalorder %v1751, %v320
        %v1784 = vlaneseq
        %v1785 = vshrl.u32 %v1784, 7
        %v1786 = vsub.s32 0, %v1785
        %v1787 = vrot.slane %v1743, %v1786
        %v1788 = vsel %vm1752, %v1787, 0.0
        %v1789 = vsel %vm1753, %v1787, 0.0
        %v1790 = vsel %vm1754, %v1787, 0.0
        %v1791 = vsel %vm1755, %v1787, 0.0
        %v1792 = vsel %vm1756, %v1787, 0.0
        %v1793 = vsel %vm1757, %v1787, 0.0
        %v1794 = vsel %vm1758, %v1787, 0.0
        %v1795 = vsel %vm1759, %v1787, 0.0
        %v1796 = vsel %vm1760, %v1787, 0.0
        %v1797 = vsel %vm1761, %v1787, 0.0
        %v1798 = vsel %vm1762, %v1787, 0.0
        %v1799 = vsel %vm1763, %v1787, 0.0
        %v1800 = vsel %vm1764, %v1787, 0.0
        %v1801 = vsel %vm1765, %v1787, 0.0
        %v1802 = vsel %vm1766, %v1787, 0.0
        %v1803 = vsel %vm1767, %v1787, 0.0
        %v1804 = vsel %vm1768, %v1787, 0.0
        %v1805 = vsel %vm1769, %v1787, 0.0
        %v1806 = vsel %vm1770, %v1787, 0.0
        %v1807 = vsel %vm1771, %v1787, 0.0
        %v1808 = vsel %vm1772, %v1787, 0.0
        %v1809 = vsel %vm1773, %v1787, 0.0
        %v1810 = vsel %vm1774, %v1787, 0.0
        %v1811 = vsel %vm1775, %v1787, 0.0
        %v1812 = vsel %vm1776, %v1787, 0.0
        %v1813 = vsel %vm1777, %v1787, 0.0
        %v1814 = vsel %vm1778, %v1787, 0.0
        %v1815 = vsel %vm1779, %v1787, 0.0
        %v1816 = vsel %vm1780, %v1787, 0.0
        %v1817 = vsel %vm1781, %v1787, 0.0
        %v1818 = vsel %vm1782, %v1787, 0.0
        %v1819 = vsel %vm1783, %v1787, 0.0
        %v1820 = vadd.f32 %v1709, %v1788
        %v1821 = vadd.f32 %v1710, %v1789
        %v1822 = vadd.f32 %v1711, %v1790
        %v1823 = vadd.f32 %v1712, %v1791
        %v1824 = vadd.f32 %v1713, %v1792
        %v1825 = vadd.f32 %v1714, %v1793
        %v1826 = vadd.f32 %v1715, %v1794
        %v1827 = vadd.f32 %v1716, %v1795
        %v1828 = vadd.f32 %v1717, %v1796
        %v1829 = vadd.f32 %v1718, %v1797
        %v1830 = vadd.f32 %v1719, %v1798
        %v1831 = vadd.f32 %v1720, %v1799
        %v1832 = vadd.f32 %v1721, %v1800
        %v1833 = vadd.f32 %v1722, %v1801
        %v1834 = vadd.f32 %v1723, %v1802
        %v1835 = vadd.f32 %v1724, %v1803
        %v1836 = vadd.f32 %v1725, %v1804
        %v1837 = vadd.f32 %v1726, %v1805
        %v1838 = vadd.f32 %v1727, %v1806
        %v1839 = vadd.f32 %v1728, %v1807
        %v1840 = vadd.f32 %v1729, %v1808
        %v1841 = vadd.f32 %v1730, %v1809
        %v1842 = vadd.f32 %v1731, %v1810
        %v1843 = vadd.f32 %v1732, %v1811
        %v1844 = vadd.f32 %v1733, %v1812
        %v1845 = vadd.f32 %v1734, %v1813
        %v1846 = vadd.f32 %v1735, %v1814
        %v1847 = vadd.f32 %v1736, %v1815
        %v1848 = vadd.f32 %v1737, %v1816
        %v1849 = vadd.f32 %v1738, %v1817
        %v1850 = vadd.f32 %v1739, %v1818
        %v1851 = vadd.f32 %v1740, %v1819
        %v1852 = vmul.f32 %v1409, %v1741
        %v1853 = vxor.u32 %v1410, %v1745
        %v1854 = vand.u32 %v1853, 255
        %v1855 = vlaneseq
        %v1856 = vshrl.u32 %v1855, 7
        %v1857 = vsub.s32 0, %v1856
        %v1858 = vrot.slane %v1854, %v1857
        %vm1859 = vcmp.eq.s32.totalorder %v1858, %v289
        %vm1860 = vcmp.eq.s32.totalorder %v1858, %v290
        %vm1861 = vcmp.eq.s32.totalorder %v1858, %v291
        %vm1862 = vcmp.eq.s32.totalorder %v1858, %v292
        %vm1863 = vcmp.eq.s32.totalorder %v1858, %v293
        %vm1864 = vcmp.eq.s32.totalorder %v1858, %v294
        %vm1865 = vcmp.eq.s32.totalorder %v1858, %v295
        %vm1866 = vcmp.eq.s32.totalorder %v1858, %v296
        %vm1867 = vcmp.eq.s32.totalorder %v1858, %v297
        %vm1868 = vcmp.eq.s32.totalorder %v1858, %v298
        %vm1869 = vcmp.eq.s32.totalorder %v1858, %v299
        %vm1870 = vcmp.eq.s32.totalorder %v1858, %v300
        %vm1871 = vcmp.eq.s32.totalorder %v1858, %v301
        %vm1872 = vcmp.eq.s32.totalorder %v1858, %v302
        %vm1873 = vcmp.eq.s32.totalorder %v1858, %v303
        %vm1874 = vcmp.eq.s32.totalorder %v1858, %v304
        %vm1875 = vcmp.eq.s32.totalorder %v1858, %v305
        %vm1876 = vcmp.eq.s32.totalorder %v1858, %v306
        %vm1877 = vcmp.eq.s32.totalorder %v1858, %v307
        %vm1878 = vcmp.eq.s32.totalorder %v1858, %v308
        %vm1879 = vcmp.eq.s32.totalorder %v1858, %v309
        %vm1880 = vcmp.eq.s32.totalorder %v1858, %v310
        %vm1881 = vcmp.eq.s32.totalorder %v1858, %v311
        %vm1882 = vcmp.eq.s32.totalorder %v1858, %v312
        %vm1883 = vcmp.eq.s32.totalorder %v1858, %v313
        %vm1884 = vcmp.eq.s32.totalorder %v1858, %v314
        %vm1885 = vcmp.eq.s32.totalorder %v1858, %v315
        %vm1886 = vcmp.eq.s32.totalorder %v1858, %v316
        %vm1887 = vcmp.eq.s32.totalorder %v1858, %v317
        %vm1888 = vcmp.eq.s32.totalorder %v1858, %v318
        %vm1889 = vcmp.eq.s32.totalorder %v1858, %v319
        %vm1890 = vcmp.eq.s32.totalorder %v1858, %v320
        %v1891 = vlaneseq
        %v1892 = vshrl.u32 %v1891, 7
        %v1893 = vsub.s32 0, %v1892
        %v1894 = vrot.slane %v1852, %v1893
        %v1895 = vsel %vm1859, %v1894, 0.0
        %v1896 = vsel %vm1860, %v1894, 0.0
        %v1897 = vsel %vm1861, %v1894, 0.0
        %v1898 = vsel %vm1862, %v1894, 0.0
        %v1899 = vsel %vm1863, %v1894, 0.0
        %v1900 = vsel %vm1864, %v1894, 0.0
        %v1901 = vsel %vm1865, %v1894, 0.0
        %v1902 = vsel %vm1866, %v1894, 0.0
        %v1903 = vsel %vm1867, %v1894, 0.0
        %v1904 = vsel %vm1868, %v1894, 0.0
        %v1905 = vsel %vm1869, %v1894, 0.0
        %v1906 = vsel %vm1870, %v1894, 0.0
        %v1907 = vsel %vm1871, %v1894, 0.0
        %v1908 = vsel %vm1872, %v1894, 0.0
        %v1909 = vsel %vm1873, %v1894, 0.0
        %v1910 = vsel %vm1874, %v1894, 0.0
        %v1911 = vsel %vm1875, %v1894, 0.0
        %v1912 = vsel %vm1876, %v1894, 0.0
        %v1913 = vsel %vm1877, %v1894, 0.0
        %v1914 = vsel %vm1878, %v1894, 0.0
        %v1915 = vsel %vm1879, %v1894, 0.0
        %v1916 = vsel %vm1880, %v1894, 0.0
        %v1917 = vsel %vm1881, %v1894, 0.0
        %v1918 = vsel %vm1882, %v1894, 0.0
        %v1919 = vsel %vm1883, %v1894, 0.0
        %v1920 = vsel %vm1884, %v1894, 0.0
        %v1921 = vsel %vm1885, %v1894, 0.0
        %v1922 = vsel %vm1886, %v1894, 0.0
        %v1923 = vsel %vm1887, %v1894, 0.0
        %v1924 = vsel %vm1888, %v1894, 0.0
        %v1925 = vsel %vm1889, %v1894, 0.0
        %v1926 = vsel %vm1890, %v1894, 0.0
        %v1927 = vadd.f32 %v1820, %v1895
        %v1928 = vadd.f32 %v1821, %v1896
        %v1929 = vadd.f32 %v1822, %v1897
        %v1930 = vadd.f32 %v1823, %v1898
        %v1931 = vadd.f32 %v1824, %v1899
        %v1932 = vadd.f32 %v1825, %v1900
        %v1933 = vadd.f32 %v1826, %v1901
        %v1934 = vadd.f32 %v1827, %v1902
        %v1935 = vadd.f32 %v1828, %v1903
        %v1936 = vadd.f32 %v1829, %v1904
        %v1937 = vadd.f32 %v1830, %v1905
        %v1938 = vadd.f32 %v1831, %v1906
        %v1939 = vadd.f32 %v1832, %v1907
        %v1940 = vadd.f32 %v1833, %v1908
        %v1941 = vadd.f32 %v1834, %v1909
        %v1942 = vadd.f32 %v1835, %v1910
        %v1943 = vadd.f32 %v1836, %v1911
        %v1944 = vadd.f32 %v1837, %v1912
        %v1945 = vadd.f32 %v1838, %v1913
        %v1946 = vadd.f32 %v1839, %v1914
        %v1947 = vadd.f32 %v1840, %v1915
        %v1948 = vadd.f32 %v1841, %v1916
        %v1949 = vadd.f32 %v1842, %v1917
        %v1950 = vadd.f32 %v1843, %v1918
        %v1951 = vadd.f32 %v1844, %v1919
        %v1952 = vadd.f32 %v1845, %v1920
        %v1953 = vadd.f32 %v1846, %v1921
        %v1954 = vadd.f32 %v1847, %v1922
        %v1955 = vadd.f32 %v1848, %v1923
        %v1956 = vadd.f32 %v1849, %v1924
        %v1957 = vadd.f32 %v1850, %v1925
        %v1958 = vadd.f32 %v1851, %v1926
        %v1959 = vmul.f32 %v1521, %v1741
        %v1960 = vxor.u32 %v1524, %v1745
        %v1961 = vand.u32 %v1960, 255
        %v1962 = vlaneseq
        %v1963 = vshrl.u32 %v1962, 7
        %v1964 = vsub.s32 0, %v1963
        %v1965 = vrot.slane %v1961, %v1964
        %vm1966 = vcmp.eq.s32.totalorder %v1965, %v289
        %vm1967 = vcmp.eq.s32.totalorder %v1965, %v290
        %vm1968 = vcmp.eq.s32.totalorder %v1965, %v291
        %vm1969 = vcmp.eq.s32.totalorder %v1965, %v292
        %vm1970 = vcmp.eq.s32.totalorder %v1965, %v293
        %vm1971 = vcmp.eq.s32.totalorder %v1965, %v294
        %vm1972 = vcmp.eq.s32.totalorder %v1965, %v295
        %vm1973 = vcmp.eq.s32.totalorder %v1965, %v296
        %vm1974 = vcmp.eq.s32.totalorder %v1965, %v297
        %vm1975 = vcmp.eq.s32.totalorder %v1965, %v298
        %vm1976 = vcmp.eq.s32.totalorder %v1965, %v299
        %vm1977 = vcmp.eq.s32.totalorder %v1965, %v300
        %vm1978 = vcmp.eq.s32.totalorder %v1965, %v301
        %vm1979 = vcmp.eq.s32.totalorder %v1965, %v302
        %vm1980 = vcmp.eq.s32.totalorder %v1965, %v303
        %vm1981 = vcmp.eq.s32.totalorder %v1965, %v304
        %vm1982 = vcmp.eq.s32.totalorder %v1965, %v305
        %vm1983 = vcmp.eq.s32.totalorder %v1965, %v306
        %vm1984 = vcmp.eq.s32.totalorder %v1965, %v307
        %vm1985 = vcmp.eq.s32.totalorder %v1965, %v308
        %vm1986 = vcmp.eq.s32.totalorder %v1965, %v309
        %vm1987 = vcmp.eq.s32.totalorder %v1965, %v310
        %vm1988 = vcmp.eq.s32.totalorder %v1965, %v311
        %vm1989 = vcmp.eq.s32.totalorder %v1965, %v312
        %vm1990 = vcmp.eq.s32.totalorder %v1965, %v313
        %vm1991 = vcmp.eq.s32.totalorder %v1965, %v314
        %vm1992 = vcmp.eq.s32.totalorder %v1965, %v315
        %vm1993 = vcmp.eq.s32.totalorder %v1965, %v316
        %vm1994 = vcmp.eq.s32.totalorder %v1965, %v317
        %vm1995 = vcmp.eq.s32.totalorder %v1965, %v318
        %vm1996 = vcmp.eq.s32.totalorder %v1965, %v319
        %vm1997 = vcmp.eq.s32.totalorder %v1965, %v320
        %v1998 = vlaneseq
        %v1999 = vshrl.u32 %v1998, 7
        %v2000 = vsub.s32 0, %v1999
        %v2001 = vrot.slane %v1959, %v2000
        %v2002 = vsel %vm1966, %v2001, 0.0
        %v2003 = vsel %vm1967, %v2001, 0.0
        %v2004 = vsel %vm1968, %v2001, 0.0
        %v2005 = vsel %vm1969, %v2001, 0.0
        %v2006 = vsel %vm1970, %v2001, 0.0
        %v2007 = vsel %vm1971, %v2001, 0.0
        %v2008 = vsel %vm1972, %v2001, 0.0
        %v2009 = vsel %vm1973, %v2001, 0.0
        %v2010 = vsel %vm1974, %v2001, 0.0
        %v2011 = vsel %vm1975, %v2001, 0.0
        %v2012 = vsel %vm1976, %v2001, 0.0
        %v2013 = vsel %vm1977, %v2001, 0.0
        %v2014 = vsel %vm1978, %v2001, 0.0
        %v2015 = vsel %vm1979, %v2001, 0.0
        %v2016 = vsel %vm1980, %v2001, 0.0
        %v2017 = vsel %vm1981, %v2001, 0.0
        %v2018 = vsel %vm1982, %v2001, 0.0
        %v2019 = vsel %vm1983, %v2001, 0.0
        %v2020 = vsel %vm1984, %v2001, 0.0
        %v2021 = vsel %vm1985, %v2001, 0.0
        %v2022 = vsel %vm1986, %v2001, 0.0
        %v2023 = vsel %vm1987, %v2001, 0.0
        %v2024 = vsel %vm1988, %v2001, 0.0
        %v2025 = vsel %vm1989, %v2001, 0.0
        %v2026 = vsel %vm1990, %v2001, 0.0
        %v2027 = vsel %vm1991, %v2001, 0.0
        %v2028 = vsel %vm1992, %v2001, 0.0
        %v2029 = vsel %vm1993, %v2001, 0.0
        %v2030 = vsel %vm1994, %v2001, 0.0
        %v2031 = vsel %vm1995, %v2001, 0.0
        %v2032 = vsel %vm1996, %v2001, 0.0
        %v2033 = vsel %vm1997, %v2001, 0.0
        %v2034 = vadd.f32 %v1927, %v2002
        %v2035 = vadd.f32 %v1928, %v2003
        %v2036 = vadd.f32 %v1929, %v2004
        %v2037 = vadd.f32 %v1930, %v2005
        %v2038 = vadd.f32 %v1931, %v2006
        %v2039 = vadd.f32 %v1932, %v2007
        %v2040 = vadd.f32 %v1933, %v2008
        %v2041 = vadd.f32 %v1934, %v2009
        %v2042 = vadd.f32 %v1935, %v2010
        %v2043 = vadd.f32 %v1936, %v2011
        %v2044 = vadd.f32 %v1937, %v2012
        %v2045 = vadd.f32 %v1938, %v2013
        %v2046 = vadd.f32 %v1939, %v2014
        %v2047 = vadd.f32 %v1940, %v2015
        %v2048 = vadd.f32 %v1941, %v2016
        %v2049 = vadd.f32 %v1942, %v2017
        %v2050 = vadd.f32 %v1943, %v2018
        %v2051 = vadd.f32 %v1944, %v2019
        %v2052 = vadd.f32 %v1945, %v2020
        %v2053 = vadd.f32 %v1946, %v2021
        %v2054 = vadd.f32 %v1947, %v2022
        %v2055 = vadd.f32 %v1948, %v2023
        %v2056 = vadd.f32 %v1949, %v2024
        %v2057 = vadd.f32 %v1950, %v2025
        %v2058 = vadd.f32 %v1951, %v2026
        %v2059 = vadd.f32 %v1952, %v2027
        %v2060 = vadd.f32 %v1953, %v2028
        %v2061 = vadd.f32 %v1954, %v2029
        %v2062 = vadd.f32 %v1955, %v2030
        %v2063 = vadd.f32 %v1956, %v2031
        %v2064 = vadd.f32 %v1957, %v2032
        %v2065 = vadd.f32 %v1958, %v2033
        %v2066 = vmul.f32 %v1632, %v1741
        %v2067 = vxor.u32 %v1633, %v1745
        %v2068 = vand.u32 %v2067, 255
        %v2069 = vlaneseq
        %v2070 = vshrl.u32 %v2069, 7
        %v2071 = vsub.s32 0, %v2070
        %v2072 = vrot.slane %v2068, %v2071
        %vm2073 = vcmp.eq.s32.totalorder %v2072, %v289
        %vm2074 = vcmp.eq.s32.totalorder %v2072, %v290
        %vm2075 = vcmp.eq.s32.totalorder %v2072, %v291
        %vm2076 = vcmp.eq.s32.totalorder %v2072, %v292
        %vm2077 = vcmp.eq.s32.totalorder %v2072, %v293
        %vm2078 = vcmp.eq.s32.totalorder %v2072, %v294
        %vm2079 = vcmp.eq.s32.totalorder %v2072, %v295
        %vm2080 = vcmp.eq.s32.totalorder %v2072, %v296
        %vm2081 = vcmp.eq.s32.totalorder %v2072, %v297
        %vm2082 = vcmp.eq.s32.totalorder %v2072, %v298
        %vm2083 = vcmp.eq.s32.totalorder %v2072, %v299
        %vm2084 = vcmp.eq.s32.totalorder %v2072, %v300
        %vm2085 = vcmp.eq.s32.totalorder %v2072, %v301
        %vm2086 = vcmp.eq.s32.totalorder %v2072, %v302
        %vm2087 = vcmp.eq.s32.totalorder %v2072, %v303
        %vm2088 = vcmp.eq.s32.totalorder %v2072, %v304
        %vm2089 = vcmp.eq.s32.totalorder %v2072, %v305
        %vm2090 = vcmp.eq.s32.totalorder %v2072, %v306
        %vm2091 = vcmp.eq.s32.totalorder %v2072, %v307
        %vm2092 = vcmp.eq.s32.totalorder %v2072, %v308
        %vm2093 = vcmp.eq.s32.totalorder %v2072, %v309
        %vm2094 = vcmp.eq.s32.totalorder %v2072, %v310
        %vm2095 = vcmp.eq.s32.totalorder %v2072, %v311
        %vm2096 = vcmp.eq.s32.totalorder %v2072, %v312
        %vm2097 = vcmp.eq.s32.totalorder %v2072, %v313
        %vm2098 = vcmp.eq.s32.totalorder %v2072, %v314
        %vm2099 = vcmp.eq.s32.totalorder %v2072, %v315
        %vm2100 = vcmp.eq.s32.totalorder %v2072, %v316
        %vm2101 = vcmp.eq.s32.totalorder %v2072, %v317
        %vm2102 = vcmp.eq.s32.totalorder %v2072, %v318
        %vm2103 = vcmp.eq.s32.totalorder %v2072, %v319
        %vm2104 = vcmp.eq.s32.totalorder %v2072, %v320
        %v2105 = vlaneseq
        %v2106 = vshrl.u32 %v2105, 7
        %v2107 = vsub.s32 0, %v2106
        %v2108 = vrot.slane %v2066, %v2107
        %v2109 = vsel %vm2073, %v2108, 0.0
        %v2110 = vsel %vm2074, %v2108, 0.0
        %v2111 = vsel %vm2075, %v2108, 0.0
        %v2112 = vsel %vm2076, %v2108, 0.0
        %v2113 = vsel %vm2077, %v2108, 0.0
        %v2114 = vsel %vm2078, %v2108, 0.0
        %v2115 = vsel %vm2079, %v2108, 0.0
        %v2116 = vsel %vm2080, %v2108, 0.0
        %v2117 = vsel %vm2081, %v2108, 0.0
        %v2118 = vsel %vm2082, %v2108, 0.0
        %v2119 = vsel %vm2083, %v2108, 0.0
        %v2120 = vsel %vm2084, %v2108, 0.0
        %v2121 = vsel %vm2085, %v2108, 0.0
        %v2122 = vsel %vm2086, %v2108, 0.0
        %v2123 = vsel %vm2087, %v2108, 0.0
        %v2124 = vsel %vm2088, %v2108, 0.0
        %v2125 = vsel %vm2089, %v2108, 0.0
        %v2126 = vsel %vm2090, %v2108, 0.0
        %v2127 = vsel %vm2091, %v2108, 0.0
        %v2128 = vsel %vm2092, %v2108, 0.0
        %v2129 = vsel %vm2093, %v2108, 0.0
        %v2130 = vsel %vm2094, %v2108, 0.0
        %v2131 = vsel %vm2095, %v2108, 0.0
        %v2132 = vsel %vm2096, %v2108, 0.0
        %v2133 = vsel %vm2097, %v2108, 0.0
        %v2134 = vsel %vm2098, %v2108, 0.0
        %v2135 = vsel %vm2099, %v2108, 0.0
        %v2136 = vsel %vm2100, %v2108, 0.0
        %v2137 = vsel %vm2101, %v2108, 0.0
        %v2138 = vsel %vm2102, %v2108, 0.0
        %v2139 = vsel %vm2103, %v2108, 0.0
        %v2140 = vsel %vm2104, %v2108, 0.0
        %v2141 = vadd.f32 %v2034, %v2109
        %v2142 = vadd.f32 %v2035, %v2110
        %v2143 = vadd.f32 %v2036, %v2111
        %v2144 = vadd.f32 %v2037, %v2112
        %v2145 = vadd.f32 %v2038, %v2113
        %v2146 = vadd.f32 %v2039, %v2114
        %v2147 = vadd.f32 %v2040, %v2115
        %v2148 = vadd.f32 %v2041, %v2116
        %v2149 = vadd.f32 %v2042, %v2117
        %v2150 = vadd.f32 %v2043, %v2118
        %v2151 = vadd.f32 %v2044, %v2119
        %v2152 = vadd.f32 %v2045, %v2120
        %v2153 = vadd.f32 %v2046, %v2121
        %v2154 = vadd.f32 %v2047, %v2122
        %v2155 = vadd.f32 %v2048, %v2123
        %v2156 = vadd.f32 %v2049, %v2124
        %v2157 = vadd.f32 %v2050, %v2125
        %v2158 = vadd.f32 %v2051, %v2126
        %v2159 = vadd.f32 %v2052, %v2127
        %v2160 = vadd.f32 %v2053, %v2128
        %v2161 = vadd.f32 %v2054, %v2129
        %v2162 = vadd.f32 %v2055, %v2130
        %v2163 = vadd.f32 %v2056, %v2131
        %v2164 = vadd.f32 %v2057, %v2132
        %v2165 = vadd.f32 %v2058, %v2133
        %v2166 = vadd.f32 %v2059, %v2134
        %v2167 = vadd.f32 %v2060, %v2135
        %v2168 = vadd.f32 %v2061, %v2136
        %v2169 = vadd.f32 %v2062, %v2137
        %v2170 = vadd.f32 %v2063, %v2138
        %v2171 = vadd.f32 %v2064, %v2139
        %v2172 = vadd.f32 %v2065, %v2140
        %s2173 = scalar_lea.vmem [#allocation5], 4
        %v2174 = vld [vmem:[%s2173] sm:$0xf]
        %v2175 = vpack.c.bf16 %v2142, %v2141
        %v2176 = vpack.c.bf16 %v2144, %v2143
        %v2177 = vpack.c.bf16 %v2146, %v2145
        %v2178 = vpack.c.bf16 %v2148, %v2147
        %v2179 = vpack.c.bf16 %v2150, %v2149
        %v2180 = vpack.c.bf16 %v2152, %v2151
        %v2181 = vpack.c.bf16 %v2154, %v2153
        %v2182 = vpack.c.bf16 %v2156, %v2155
        %v2183 = vpack.c.bf16 %v2158, %v2157
        %v2184 = vpack.c.bf16 %v2160, %v2159
        %v2185 = vpack.c.bf16 %v2162, %v2161
        %v2186 = vpack.c.bf16 %v2164, %v2163
        %v2187 = vpack.c.bf16 %v2166, %v2165
        %v2188 = vpack.c.bf16 %v2168, %v2167
        %v2189 = vpack.c.bf16 %v2170, %v2169
        %v2190 = vpack.c.bf16 %v2172, %v2171
        %v2193 = vunpack.c.l.s4 1983009808
        %v2194 = vunpack.c.0.s8 %v2193
        %v2195 = vlaneseq
        %v2196 = vshrl.u32 %v2195, 7
        %v2197 = vsub.s32 %v2194, %v2196
        %v2198 = vrot.slane %v2174, %v2197
        %v2199 = vcombine.high %v2198, %v2198
        %2202 = vmatprep.subr.bf16.mxu0 0
        %2203 = vmatpush1.bf16.msra.mxu0 %v2175
        %2204 = vmatprep.subr.bf16.mxu0 0
        %2205 = vmatpush1.bf16.msra.mxu0 %v2176
        %2206 = vmatprep.subr.bf16.mxu0 0
        %2207 = vmatpush1.bf16.msra.mxu0 %v2177
        %2208 = vmatprep.subr.bf16.mxu0 0
        %2209 = vmatpush1.bf16.msra.mxu0 %v2178
        %2210 = vmatprep.subr.bf16.mxu0 0
        %2211 = vmatpush1.bf16.msra.mxu0 %v2179
        %2212 = vmatprep.subr.bf16.mxu0 0
        %2213 = vmatpush1.bf16.msra.mxu0 %v2180
        %2214 = vmatprep.subr.bf16.mxu0 0
        %2215 = vmatpush1.bf16.msra.mxu0 %v2181
        %2216 = vmatprep.subr.bf16.mxu0 0
        %2217 = vmatpush1.bf16.msra.mxu0 %v2182
        %2218 = vmatprep.subr.bf16.mxu0 0
        %2219 = vmatpush1.bf16.msra.mxu0 %v2183
        %2220 = vmatprep.subr.bf16.mxu0 0
        %2221 = vmatpush1.bf16.msra.mxu0 %v2184
        %2222 = vmatprep.subr.bf16.mxu0 0
        %2223 = vmatpush1.bf16.msra.mxu0 %v2185
        %2224 = vmatprep.subr.bf16.mxu0 0
        %2225 = vmatpush1.bf16.msra.mxu0 %v2186
        %2226 = vmatprep.subr.bf16.mxu0 0
        %2227 = vmatpush1.bf16.msra.mxu0 %v2187
        %2228 = vmatprep.subr.bf16.mxu0 0
        %2229 = vmatpush1.bf16.msra.mxu0 %v2188
        %2230 = vmatprep.subr.bf16.mxu0 0
        %2231 = vmatpush1.bf16.msra.mxu0 %v2189
        %2232 = vmatprep.subr.bf16.mxu0 0
        %2233 = vmatpush1.bf16.msra.mxu0 %v2190
        %2234 = vmatprep.mubr.bf16.mxu0 %v2199
        %2235 = vmatmul.mubr.bf16.gmra.mrb[0].mxu0 %v2198
        %v2236 = vpop.f32.mrb[0].mxu0
        %v2237 = vadd.f32 0.0, %v2236
        %v2238 = vpop.f32.mrb[0].mxu0
        %v2239 = vpop.f32.mrb[0].mxu0
        %v2240 = vpop.f32.mrb[0].mxu0
        %2241 = vdwg.mxu0
        %v2242 = vmul.u32 %v1286, 8
        %v2243 = vrot.slane %v2242, 1
        %v2244 = vadd.s32 %v1286, %v2243
        %v2245 = vand.u32 %v2244, 255
        %v2246 = vlaneseq
        %v2247 = vshrl.u32 %v2246, 7
        %v2248 = vsub.s32 0, %v2247
        %v2249 = vrot.slane %v2245, %v2248
        %vm2250 = vcmp.eq.s32.totalorder %v2249, %v289
        %vm2251 = vcmp.eq.s32.totalorder %v2249, %v290
        %vm2252 = vcmp.eq.s32.totalorder %v2249, %v291
        %vm2253 = vcmp.eq.s32.totalorder %v2249, %v292
        %vm2254 = vcmp.eq.s32.totalorder %v2249, %v293
        %vm2255 = vcmp.eq.s32.totalorder %v2249, %v294
        %vm2256 = vcmp.eq.s32.totalorder %v2249, %v295
        %vm2257 = vcmp.eq.s32.totalorder %v2249, %v296
        %vm2258 = vcmp.eq.s32.totalorder %v2249, %v297
        %vm2259 = vcmp.eq.s32.totalorder %v2249, %v298
        %vm2260 = vcmp.eq.s32.totalorder %v2249, %v299
        %vm2261 = vcmp.eq.s32.totalorder %v2249, %v300
        %vm2262 = vcmp.eq.s32.totalorder %v2249, %v301
        %vm2263 = vcmp.eq.s32.totalorder %v2249, %v302
        %vm2264 = vcmp.eq.s32.totalorder %v2249, %v303
        %vm2265 = vcmp.eq.s32.totalorder %v2249, %v304
        %vm2266 = vcmp.eq.s32.totalorder %v2249, %v305
        %vm2267 = vcmp.eq.s32.totalorder %v2249, %v306
        %vm2268 = vcmp.eq.s32.totalorder %v2249, %v307
        %vm2269 = vcmp.eq.s32.totalorder %v2249, %v308
        %vm2270 = vcmp.eq.s32.totalorder %v2249, %v309
        %vm2271 = vcmp.eq.s32.totalorder %v2249, %v310
        %vm2272 = vcmp.eq.s32.totalorder %v2249, %v311
        %vm2273 = vcmp.eq.s32.totalorder %v2249, %v312
        %vm2274 = vcmp.eq.s32.totalorder %v2249, %v313
        %vm2275 = vcmp.eq.s32.totalorder %v2249, %v314
        %vm2276 = vcmp.eq.s32.totalorder %v2249, %v315
        %vm2277 = vcmp.eq.s32.totalorder %v2249, %v316
        %vm2278 = vcmp.eq.s32.totalorder %v2249, %v317
        %vm2279 = vcmp.eq.s32.totalorder %v2249, %v318
        %vm2280 = vcmp.eq.s32.totalorder %v2249, %v319
        %vm2281 = vcmp.eq.s32.totalorder %v2249, %v320
        %v2282 = vlaneseq
        %v2283 = vshrl.u32 %v2282, 7
        %v2284 = vsub.s32 0, %v2283
        %v2285 = vrot.slane %v1291, %v2284
        %v2286 = vsel %vm2250, %v2285, 0.0
        %v2287 = vsel %vm2251, %v2285, 0.0
        %v2288 = vsel %vm2252, %v2285, 0.0
        %v2289 = vsel %vm2253, %v2285, 0.0
        %v2290 = vsel %vm2254, %v2285, 0.0
        %v2291 = vsel %vm2255, %v2285, 0.0
        %v2292 = vsel %vm2256, %v2285, 0.0
        %v2293 = vsel %vm2257, %v2285, 0.0
        %v2294 = vsel %vm2258, %v2285, 0.0
        %v2295 = vsel %vm2259, %v2285, 0.0
        %v2296 = vsel %vm2260, %v2285, 0.0
        %v2297 = vsel %vm2261, %v2285, 0.0
        %v2298 = vsel %vm2262, %v2285, 0.0
        %v2299 = vsel %vm2263, %v2285, 0.0
        %v2300 = vsel %vm2264, %v2285, 0.0
        %v2301 = vsel %vm2265, %v2285, 0.0
        %v2302 = vsel %vm2266, %v2285, 0.0
        %v2303 = vsel %vm2267, %v2285, 0.0
        %v2304 = vsel %vm2268, %v2285, 0.0
        %v2305 = vsel %vm2269, %v2285, 0.0
        %v2306 = vsel %vm2270, %v2285, 0.0
        %v2307 = vsel %vm2271, %v2285, 0.0
        %v2308 = vsel %vm2272, %v2285, 0.0
        %v2309 = vsel %vm2273, %v2285, 0.0
        %v2310 = vsel %vm2274, %v2285, 0.0
        %v2311 = vsel %vm2275, %v2285, 0.0
        %v2312 = vsel %vm2276, %v2285, 0.0
        %v2313 = vsel %vm2277, %v2285, 0.0
        %v2314 = vsel %vm2278, %v2285, 0.0
        %v2315 = vsel %vm2279, %v2285, 0.0
        %v2316 = vsel %vm2280, %v2285, 0.0
        %v2317 = vsel %vm2281, %v2285, 0.0
        %v2318 = vadd.f32 %v2286, 0.0
        %v2319 = vadd.f32 %v2287, 0.0
        %v2320 = vadd.f32 %v2288, 0.0
        %v2321 = vadd.f32 %v2289, 0.0
        %v2322 = vadd.f32 %v2290, 0.0
        %v2323 = vadd.f32 %v2291, 0.0
        %v2324 = vadd.f32 %v2292, 0.0
        %v2325 = vadd.f32 %v2293, 0.0
        %v2326 = vadd.f32 %v2294, 0.0
        %v2327 = vadd.f32 %v2295, 0.0
        %v2328 = vadd.f32 %v2296, 0.0
        %v2329 = vadd.f32 %v2297, 0.0
        %v2330 = vadd.f32 %v2298, 0.0
        %v2331 = vadd.f32 %v2299, 0.0
        %v2332 = vadd.f32 %v2300, 0.0
        %v2333 = vadd.f32 %v2301, 0.0
        %v2334 = vadd.f32 %v2302, 0.0
        %v2335 = vadd.f32 %v2303, 0.0
        %v2336 = vadd.f32 %v2304, 0.0
        %v2337 = vadd.f32 %v2305, 0.0
        %v2338 = vadd.f32 %v2306, 0.0
        %v2339 = vadd.f32 %v2307, 0.0
        %v2340 = vadd.f32 %v2308, 0.0
        %v2341 = vadd.f32 %v2309, 0.0
        %v2342 = vadd.f32 %v2310, 0.0
        %v2343 = vadd.f32 %v2311, 0.0
        %v2344 = vadd.f32 %v2312, 0.0
        %v2345 = vadd.f32 %v2313, 0.0
        %v2346 = vadd.f32 %v2314, 0.0
        %v2347 = vadd.f32 %v2315, 0.0
        %v2348 = vadd.f32 %v2316, 0.0
        %v2349 = vadd.f32 %v2317, 0.0
        %v2350 = vadd.s32 %v1408, %v2243
        %v2351 = vand.u32 %v2350, 255
        %v2352 = vlaneseq
        %v2353 = vshrl.u32 %v2352, 7
        %v2354 = vsub.s32 0, %v2353
        %v2355 = vrot.slane %v2351, %v2354
        %vm2356 = vcmp.eq.s32.totalorder %v2355, %v289
        %vm2357 = vcmp.eq.s32.totalorder %v2355, %v290
        %vm2358 = vcmp.eq.s32.totalorder %v2355, %v291
        %vm2359 = vcmp.eq.s32.totalorder %v2355, %v292
        %vm2360 = vcmp.eq.s32.totalorder %v2355, %v293
        %vm2361 = vcmp.eq.s32.totalorder %v2355, %v294
        %vm2362 = vcmp.eq.s32.totalorder %v2355, %v295
        %vm2363 = vcmp.eq.s32.totalorder %v2355, %v296
        %vm2364 = vcmp.eq.s32.totalorder %v2355, %v297
        %vm2365 = vcmp.eq.s32.totalorder %v2355, %v298
        %vm2366 = vcmp.eq.s32.totalorder %v2355, %v299
        %vm2367 = vcmp.eq.s32.totalorder %v2355, %v300
        %vm2368 = vcmp.eq.s32.totalorder %v2355, %v301
        %vm2369 = vcmp.eq.s32.totalorder %v2355, %v302
        %vm2370 = vcmp.eq.s32.totalorder %v2355, %v303
        %vm2371 = vcmp.eq.s32.totalorder %v2355, %v304
        %vm2372 = vcmp.eq.s32.totalorder %v2355, %v305
        %vm2373 = vcmp.eq.s32.totalorder %v2355, %v306
        %vm2374 = vcmp.eq.s32.totalorder %v2355, %v307
        %vm2375 = vcmp.eq.s32.totalorder %v2355, %v308
        %vm2376 = vcmp.eq.s32.totalorder %v2355, %v309
        %vm2377 = vcmp.eq.s32.totalorder %v2355, %v310
        %vm2378 = vcmp.eq.s32.totalorder %v2355, %v311
        %vm2379 = vcmp.eq.s32.totalorder %v2355, %v312
        %vm2380 = vcmp.eq.s32.totalorder %v2355, %v313
        %vm2381 = vcmp.eq.s32.totalorder %v2355, %v314
        %vm2382 = vcmp.eq.s32.totalorder %v2355, %v315
        %vm2383 = vcmp.eq.s32.totalorder %v2355, %v316
        %vm2384 = vcmp.eq.s32.totalorder %v2355, %v317
        %vm2385 = vcmp.eq.s32.totalorder %v2355, %v318
        %vm2386 = vcmp.eq.s32.totalorder %v2355, %v319
        %vm2387 = vcmp.eq.s32.totalorder %v2355, %v320
        %v2388 = vlaneseq
        %v2389 = vshrl.u32 %v2388, 7
        %v2390 = vsub.s32 0, %v2389
        %v2391 = vrot.slane %v1409, %v2390
        %v2392 = vsel %vm2356, %v2391, 0.0
        %v2393 = vsel %vm2357, %v2391, 0.0
        %v2394 = vsel %vm2358, %v2391, 0.0
        %v2395 = vsel %vm2359, %v2391, 0.0
        %v2396 = vsel %vm2360, %v2391, 0.0
        %v2397 = vsel %vm2361, %v2391, 0.0
        %v2398 = vsel %vm2362, %v2391, 0.0
        %v2399 = vsel %vm2363, %v2391, 0.0
        %v2400 = vsel %vm2364, %v2391, 0.0
        %v2401 = vsel %vm2365, %v2391, 0.0
        %v2402 = vsel %vm2366, %v2391, 0.0
        %v2403 = vsel %vm2367, %v2391, 0.0
        %v2404 = vsel %vm2368, %v2391, 0.0
        %v2405 = vsel %vm2369, %v2391, 0.0
        %v2406 = vsel %vm2370, %v2391, 0.0
        %v2407 = vsel %vm2371, %v2391, 0.0
        %v2408 = vsel %vm2372, %v2391, 0.0
        %v2409 = vsel %vm2373, %v2391, 0.0
        %v2410 = vsel %vm2374, %v2391, 0.0
        %v2411 = vsel %vm2375, %v2391, 0.0
        %v2412 = vsel %vm2376, %v2391, 0.0
        %v2413 = vsel %vm2377, %v2391, 0.0
        %v2414 = vsel %vm2378, %v2391, 0.0
        %v2415 = vsel %vm2379, %v2391, 0.0
        %v2416 = vsel %vm2380, %v2391, 0.0
        %v2417 = vsel %vm2381, %v2391, 0.0
        %v2418 = vsel %vm2382, %v2391, 0.0
        %v2419 = vsel %vm2383, %v2391, 0.0
        %v2420 = vsel %vm2384, %v2391, 0.0
        %v2421 = vsel %vm2385, %v2391, 0.0
        %v2422 = vsel %vm2386, %v2391, 0.0
        %v2423 = vsel %vm2387, %v2391, 0.0
        %v2424 = vadd.f32 %v2318, %v2392
        %v2425 = vadd.f32 %v2319, %v2393
        %v2426 = vadd.f32 %v2320, %v2394
        %v2427 = vadd.f32 %v2321, %v2395
        %v2428 = vadd.f32 %v2322, %v2396
        %v2429 = vadd.f32 %v2323, %v2397
        %v2430 = vadd.f32 %v2324, %v2398
        %v2431 = vadd.f32 %v2325, %v2399
        %v2432 = vadd.f32 %v2326, %v2400
        %v2433 = vadd.f32 %v2327, %v2401
        %v2434 = vadd.f32 %v2328, %v2402
        %v2435 = vadd.f32 %v2329, %v2403
        %v2436 = vadd.f32 %v2330, %v2404
        %v2437 = vadd.f32 %v2331, %v2405
        %v2438 = vadd.f32 %v2332, %v2406
        %v2439 = vadd.f32 %v2333, %v2407
        %v2440 = vadd.f32 %v2334, %v2408
        %v2441 = vadd.f32 %v2335, %v2409
        %v2442 = vadd.f32 %v2336, %v2410
        %v2443 = vadd.f32 %v2337, %v2411
        %v2444 = vadd.f32 %v2338, %v2412
        %v2445 = vadd.f32 %v2339, %v2413
        %v2446 = vadd.f32 %v2340, %v2414
        %v2447 = vadd.f32 %v2341, %v2415
        %v2448 = vadd.f32 %v2342, %v2416
        %v2449 = vadd.f32 %v2343, %v2417
        %v2450 = vadd.f32 %v2344, %v2418
        %v2451 = vadd.f32 %v2345, %v2419
        %v2452 = vadd.f32 %v2346, %v2420
        %v2453 = vadd.f32 %v2347, %v2421
        %v2454 = vadd.f32 %v2348, %v2422
        %v2455 = vadd.f32 %v2349, %v2423
        %v2456 = vmul.u32 %v1408, 8
        %v2457 = vrot.slane %v2456, 1
        %v2458 = vadd.s32 %v1286, %v2457
        %v2459 = vand.u32 %v2458, 255
        %v2460 = vlaneseq
        %v2461 = vshrl.u32 %v2460, 7
        %v2462 = vsub.s32 0, %v2461
        %v2463 = vrot.slane %v2459, %v2462
        %vm2464 = vcmp.eq.s32.totalorder %v2463, %v289
        %vm2465 = vcmp.eq.s32.totalorder %v2463, %v290
        %vm2466 = vcmp.eq.s32.totalorder %v2463, %v291
        %vm2467 = vcmp.eq.s32.totalorder %v2463, %v292
        %vm2468 = vcmp.eq.s32.totalorder %v2463, %v293
        %vm2469 = vcmp.eq.s32.totalorder %v2463, %v294
        %vm2470 = vcmp.eq.s32.totalorder %v2463, %v295
        %vm2471 = vcmp.eq.s32.totalorder %v2463, %v296
        %vm2472 = vcmp.eq.s32.totalorder %v2463, %v297
        %vm2473 = vcmp.eq.s32.totalorder %v2463, %v298
        %vm2474 = vcmp.eq.s32.totalorder %v2463, %v299
        %vm2475 = vcmp.eq.s32.totalorder %v2463, %v300
        %vm2476 = vcmp.eq.s32.totalorder %v2463, %v301
        %vm2477 = vcmp.eq.s32.totalorder %v2463, %v302
        %vm2478 = vcmp.eq.s32.totalorder %v2463, %v303
        %vm2479 = vcmp.eq.s32.totalorder %v2463, %v304
        %vm2480 = vcmp.eq.s32.totalorder %v2463, %v305
        %vm2481 = vcmp.eq.s32.totalorder %v2463, %v306
        %vm2482 = vcmp.eq.s32.totalorder %v2463, %v307
        %vm2483 = vcmp.eq.s32.totalorder %v2463, %v308
        %vm2484 = vcmp.eq.s32.totalorder %v2463, %v309
        %vm2485 = vcmp.eq.s32.totalorder %v2463, %v310
        %vm2486 = vcmp.eq.s32.totalorder %v2463, %v311
        %vm2487 = vcmp.eq.s32.totalorder %v2463, %v312
        %vm2488 = vcmp.eq.s32.totalorder %v2463, %v313
        %vm2489 = vcmp.eq.s32.totalorder %v2463, %v314
        %vm2490 = vcmp.eq.s32.totalorder %v2463, %v315
        %vm2491 = vcmp.eq.s32.totalorder %v2463, %v316
        %vm2492 = vcmp.eq.s32.totalorder %v2463, %v317
        %vm2493 = vcmp.eq.s32.totalorder %v2463, %v318
        %vm2494 = vcmp.eq.s32.totalorder %v2463, %v319
        %vm2495 = vcmp.eq.s32.totalorder %v2463, %v320
        %v2496 = vlaneseq
        %v2497 = vshrl.u32 %v2496, 7
        %v2498 = vsub.s32 0, %v2497
        %v2499 = vrot.slane %v1521, %v2498
        %v2500 = vsel %vm2464, %v2499, 0.0
        %v2501 = vsel %vm2465, %v2499, 0.0
        %v2502 = vsel %vm2466, %v2499, 0.0
        %v2503 = vsel %vm2467, %v2499, 0.0
        %v2504 = vsel %vm2468, %v2499, 0.0
        %v2505 = vsel %vm2469, %v2499, 0.0
        %v2506 = vsel %vm2470, %v2499, 0.0
        %v2507 = vsel %vm2471, %v2499, 0.0
        %v2508 = vsel %vm2472, %v2499, 0.0
        %v2509 = vsel %vm2473, %v2499, 0.0
        %v2510 = vsel %vm2474, %v2499, 0.0
        %v2511 = vsel %vm2475, %v2499, 0.0
        %v2512 = vsel %vm2476, %v2499, 0.0
        %v2513 = vsel %vm2477, %v2499, 0.0
        %v2514 = vsel %vm2478, %v2499, 0.0
        %v2515 = vsel %vm2479, %v2499, 0.0
        %v2516 = vsel %vm2480, %v2499, 0.0
        %v2517 = vsel %vm2481, %v2499, 0.0
        %v2518 = vsel %vm2482, %v2499, 0.0
        %v2519 = vsel %vm2483, %v2499, 0.0
        %v2520 = vsel %vm2484, %v2499, 0.0
        %v2521 = vsel %vm2485, %v2499, 0.0
        %v2522 = vsel %vm2486, %v2499, 0.0
        %v2523 = vsel %vm2487, %v2499, 0.0
        %v2524 = vsel %vm2488, %v2499, 0.0
        %v2525 = vsel %vm2489, %v2499, 0.0
        %v2526 = vsel %vm2490, %v2499, 0.0
        %v2527 = vsel %vm2491, %v2499, 0.0
        %v2528 = vsel %vm2492, %v2499, 0.0
        %v2529 = vsel %vm2493, %v2499, 0.0
        %v2530 = vsel %vm2494, %v2499, 0.0
        %v2531 = vsel %vm2495, %v2499, 0.0
        %v2532 = vadd.f32 %v2424, %v2500
        %v2533 = vadd.f32 %v2425, %v2501
        %v2534 = vadd.f32 %v2426, %v2502
        %v2535 = vadd.f32 %v2427, %v2503
        %v2536 = vadd.f32 %v2428, %v2504
        %v2537 = vadd.f32 %v2429, %v2505
        %v2538 = vadd.f32 %v2430, %v2506
        %v2539 = vadd.f32 %v2431, %v2507
        %v2540 = vadd.f32 %v2432, %v2508
        %v2541 = vadd.f32 %v2433, %v2509
        %v2542 = vadd.f32 %v2434, %v2510
        %v2543 = vadd.f32 %v2435, %v2511
        %v2544 = vadd.f32 %v2436, %v2512
        %v2545 = vadd.f32 %v2437, %v2513
        %v2546 = vadd.f32 %v2438, %v2514
        %v2547 = vadd.f32 %v2439, %v2515
        %v2548 = vadd.f32 %v2440, %v2516
        %v2549 = vadd.f32 %v2441, %v2517
        %v2550 = vadd.f32 %v2442, %v2518
        %v2551 = vadd.f32 %v2443, %v2519
        %v2552 = vadd.f32 %v2444, %v2520
        %v2553 = vadd.f32 %v2445, %v2521
        %v2554 = vadd.f32 %v2446, %v2522
        %v2555 = vadd.f32 %v2447, %v2523
        %v2556 = vadd.f32 %v2448, %v2524
        %v2557 = vadd.f32 %v2449, %v2525
        %v2558 = vadd.f32 %v2450, %v2526
        %v2559 = vadd.f32 %v2451, %v2527
        %v2560 = vadd.f32 %v2452, %v2528
        %v2561 = vadd.f32 %v2453, %v2529
        %v2562 = vadd.f32 %v2454, %v2530
        %v2563 = vadd.f32 %v2455, %v2531
        %v2564 = vadd.s32 %v1408, %v2457
        %v2565 = vand.u32 %v2564, 255
        %v2566 = vlaneseq
        %v2567 = vshrl.u32 %v2566, 7
        %v2568 = vsub.s32 0, %v2567
        %v2569 = vrot.slane %v2565, %v2568
        %vm2570 = vcmp.eq.s32.totalorder %v2569, %v289
        %vm2571 = vcmp.eq.s32.totalorder %v2569, %v290
        %vm2572 = vcmp.eq.s32.totalorder %v2569, %v291
        %vm2573 = vcmp.eq.s32.totalorder %v2569, %v292
        %vm2574 = vcmp.eq.s32.totalorder %v2569, %v293
        %vm2575 = vcmp.eq.s32.totalorder %v2569, %v294
        %vm2576 = vcmp.eq.s32.totalorder %v2569, %v295
        %vm2577 = vcmp.eq.s32.totalorder %v2569, %v296
        %vm2578 = vcmp.eq.s32.totalorder %v2569, %v297
        %vm2579 = vcmp.eq.s32.totalorder %v2569, %v298
        %vm2580 = vcmp.eq.s32.totalorder %v2569, %v299
        %vm2581 = vcmp.eq.s32.totalorder %v2569, %v300
        %vm2582 = vcmp.eq.s32.totalorder %v2569, %v301
        %vm2583 = vcmp.eq.s32.totalorder %v2569, %v302
        %vm2584 = vcmp.eq.s32.totalorder %v2569, %v303
        %vm2585 = vcmp.eq.s32.totalorder %v2569, %v304
        %vm2586 = vcmp.eq.s32.totalorder %v2569, %v305
        %vm2587 = vcmp.eq.s32.totalorder %v2569, %v306
        %vm2588 = vcmp.eq.s32.totalorder %v2569, %v307
        %vm2589 = vcmp.eq.s32.totalorder %v2569, %v308
        %vm2590 = vcmp.eq.s32.totalorder %v2569, %v309
        %vm2591 = vcmp.eq.s32.totalorder %v2569, %v310
        %vm2592 = vcmp.eq.s32.totalorder %v2569, %v311
        %vm2593 = vcmp.eq.s32.totalorder %v2569, %v312
        %vm2594 = vcmp.eq.s32.totalorder %v2569, %v313
        %vm2595 = vcmp.eq.s32.totalorder %v2569, %v314
        %vm2596 = vcmp.eq.s32.totalorder %v2569, %v315
        %vm2597 = vcmp.eq.s32.totalorder %v2569, %v316
        %vm2598 = vcmp.eq.s32.totalorder %v2569, %v317
        %vm2599 = vcmp.eq.s32.totalorder %v2569, %v318
        %vm2600 = vcmp.eq.s32.totalorder %v2569, %v319
        %vm2601 = vcmp.eq.s32.totalorder %v2569, %v320
        %v2602 = vlaneseq
        %v2603 = vshrl.u32 %v2602, 7
        %v2604 = vsub.s32 0, %v2603
        %v2605 = vrot.slane %v1632, %v2604
        %v2606 = vsel %vm2570, %v2605, 0.0
        %v2607 = vsel %vm2571, %v2605, 0.0
        %v2608 = vsel %vm2572, %v2605, 0.0
        %v2609 = vsel %vm2573, %v2605, 0.0
        %v2610 = vsel %vm2574, %v2605, 0.0
        %v2611 = vsel %vm2575, %v2605, 0.0
        %v2612 = vsel %vm2576, %v2605, 0.0
        %v2613 = vsel %vm2577, %v2605, 0.0
        %v2614 = vsel %vm2578, %v2605, 0.0
        %v2615 = vsel %vm2579, %v2605, 0.0
        %v2616 = vsel %vm2580, %v2605, 0.0
        %v2617 = vsel %vm2581, %v2605, 0.0
        %v2618 = vsel %vm2582, %v2605, 0.0
        %v2619 = vsel %vm2583, %v2605, 0.0
        %v2620 = vsel %vm2584, %v2605, 0.0
        %v2621 = vsel %vm2585, %v2605, 0.0
        %v2622 = vsel %vm2586, %v2605, 0.0
        %v2623 = vsel %vm2587, %v2605, 0.0
        %v2624 = vsel %vm2588, %v2605, 0.0
        %v2625 = vsel %vm2589, %v2605, 0.0
        %v2626 = vsel %vm2590, %v2605, 0.0
        %v2627 = vsel %vm2591, %v2605, 0.0
        %v2628 = vsel %vm2592, %v2605, 0.0
        %v2629 = vsel %vm2593, %v2605, 0.0
        %v2630 = vsel %vm2594, %v2605, 0.0
        %v2631 = vsel %vm2595, %v2605, 0.0
        %v2632 = vsel %vm2596, %v2605, 0.0
        %v2633 = vsel %vm2597, %v2605, 0.0
        %v2634 = vsel %vm2598, %v2605, 0.0
        %v2635 = vsel %vm2599, %v2605, 0.0
        %v2636 = vsel %vm2600, %v2605, 0.0
        %v2637 = vsel %vm2601, %v2605, 0.0
        %v2638 = vadd.f32 %v2532, %v2606
        %v2639 = vadd.f32 %v2533, %v2607
        %v2640 = vadd.f32 %v2534, %v2608
        %v2641 = vadd.f32 %v2535, %v2609
        %v2642 = vadd.f32 %v2536, %v2610
        %v2643 = vadd.f32 %v2537, %v2611
        %v2644 = vadd.f32 %v2538, %v2612
        %v2645 = vadd.f32 %v2539, %v2613
        %v2646 = vadd.f32 %v2540, %v2614
        %v2647 = vadd.f32 %v2541, %v2615
        %v2648 = vadd.f32 %v2542, %v2616
        %v2649 = vadd.f32 %v2543, %v2617
        %v2650 = vadd.f32 %v2544, %v2618
        %v2651 = vadd.f32 %v2545, %v2619
        %v2652 = vadd.f32 %v2546, %v2620
        %v2653 = vadd.f32 %v2547, %v2621
        %v2654 = vadd.f32 %v2548, %v2622
        %v2655 = vadd.f32 %v2549, %v2623
        %v2656 = vadd.f32 %v2550, %v2624
        %v2657 = vadd.f32 %v2551, %v2625
        %v2658 = vadd.f32 %v2552, %v2626
        %v2659 = vadd.f32 %v2553, %v2627
        %v2660 = vadd.f32 %v2554, %v2628
        %v2661 = vadd.f32 %v2555, %v2629
        %v2662 = vadd.f32 %v2556, %v2630
        %v2663 = vadd.f32 %v2557, %v2631
        %v2664 = vadd.f32 %v2558, %v2632
        %v2665 = vadd.f32 %v2559, %v2633
        %v2666 = vadd.f32 %v2560, %v2634
        %v2667 = vadd.f32 %v2561, %v2635
        %v2668 = vadd.f32 %v2562, %v2636
        %v2669 = vadd.f32 %v2563, %v2637
        %v2670 = vld [vmem:[#allocation7] sm:$0xf]
        %v2671 = vpack.c.bf16 %v2639, %v2638
        %v2672 = vpack.c.bf16 %v2641, %v2640
        %v2673 = vpack.c.bf16 %v2643, %v2642
        %v2674 = vpack.c.bf16 %v2645, %v2644
        %v2675 = vpack.c.bf16 %v2647, %v2646
        %v2676 = vpack.c.bf16 %v2649, %v2648
        %v2677 = vpack.c.bf16 %v2651, %v2650
        %v2678 = vpack.c.bf16 %v2653, %v2652
        %v2679 = vpack.c.bf16 %v2655, %v2654
        %v2680 = vpack.c.bf16 %v2657, %v2656
        %v2681 = vpack.c.bf16 %v2659, %v2658
        %v2682 = vpack.c.bf16 %v2661, %v2660
        %v2683 = vpack.c.bf16 %v2663, %v2662
        %v2684 = vpack.c.bf16 %v2665, %v2664
        %v2685 = vpack.c.bf16 %v2667, %v2666
        %v2686 = vpack.c.bf16 %v2669, %v2668
        %v2689 = vunpack.c.l.s4 1983009808
        %v2690 = vunpack.c.0.s8 %v2689
        %v2691 = vlaneseq
        %v2692 = vshrl.u32 %v2691, 7
        %v2693 = vsub.s32 %v2690, %v2692
        %v2694 = vrot.slane %v2670, %v2693
        %v2695 = vcombine.high %v2694, %v2694
        %2698 = vmatprep.subr.bf16.mxu0 0
        %2699 = vmatpush1.bf16.msra.mxu0 %v2671
        %2700 = vmatprep.subr.bf16.mxu0 0
        %2701 = vmatpush1.bf16.msra.mxu0 %v2672
        %2702 = vmatprep.subr.bf16.mxu0 0
        %2703 = vmatpush1.bf16.msra.mxu0 %v2673
        %2704 = vmatprep.subr.bf16.mxu0 0
        %2705 = vmatpush1.bf16.msra.mxu0 %v2674
        %2706 = vmatprep.subr.bf16.mxu0 0
        %2707 = vmatpush1.bf16.msra.mxu0 %v2675
        %2708 = vmatprep.subr.bf16.mxu0 0
        %2709 = vmatpush1.bf16.msra.mxu0 %v2676
        %2710 = vmatprep.subr.bf16.mxu0 0
        %2711 = vmatpush1.bf16.msra.mxu0 %v2677
        %2712 = vmatprep.subr.bf16.mxu0 0
        %2713 = vmatpush1.bf16.msra.mxu0 %v2678
        %2714 = vmatprep.subr.bf16.mxu0 0
        %2715 = vmatpush1.bf16.msra.mxu0 %v2679
        %2716 = vmatprep.subr.bf16.mxu0 0
        %2717 = vmatpush1.bf16.msra.mxu0 %v2680
        %2718 = vmatprep.subr.bf16.mxu0 0
        %2719 = vmatpush1.bf16.msra.mxu0 %v2681
        %2720 = vmatprep.subr.bf16.mxu0 0
        %2721 = vmatpush1.bf16.msra.mxu0 %v2682
        %2722 = vmatprep.subr.bf16.mxu0 0
        %2723 = vmatpush1.bf16.msra.mxu0 %v2683
        %2724 = vmatprep.subr.bf16.mxu0 0
        %2725 = vmatpush1.bf16.msra.mxu0 %v2684
        %2726 = vmatprep.subr.bf16.mxu0 0
        %2727 = vmatpush1.bf16.msra.mxu0 %v2685
        %2728 = vmatprep.subr.bf16.mxu0 0
        %2729 = vmatpush1.bf16.msra.mxu0 %v2686
        %2730 = vmatprep.mubr.bf16.mxu0 %v2695
        %2731 = vmatmul.mubr.bf16.gmra.mrb[0].mxu0 %v2694
        %v2732 = vpop.f32.mrb[0].mxu0
        %v2733 = vadd.f32 0.0, %v2732
        %v2734 = vpop.f32.mrb[0].mxu0
        %v2735 = vpop.f32.mrb[0].mxu0
        %v2736 = vpop.f32.mrb[0].mxu0
        %2737 = vdwg.mxu0
        %v2738 = vmul.f32 %v287, 15.0
        %v2739 = vfloor.f32 %v2738
        %v2740 = vsub.f32 %v2738, %v2739
        %v2741 = vcvt.f32.s32.to.zero.pseudo %v2739
        %vm2742 = vcmp.lt.s32.totalorder %v2741, 15
        %v2743 = vsel %vm2742, %v2741, 15
        %v2744 = vsub.f32 1.0, %v2740
        %v2746 = vrot.slane %v2744, 1
        %v2748 = vmul.f32 %v2744, %v2746
        %v2749 = vmul.u32 %v2743, 16
        %v2750 = vrot.slane %v2749, 1
        %v2751 = vadd.s32 %v2743, %v2750
        %v2752 = vand.u32 %v2751, 255
        %v2753 = vlaneseq
        %v2754 = vshrl.u32 %v2753, 7
        %v2755 = vsub.s32 0, %v2754
        %v2756 = vrot.slane %v2752, %v2755
        %vm2757 = vcmp.eq.s32.totalorder %v2756, %v289
        %vm2758 = vcmp.eq.s32.totalorder %v2756, %v290
        %vm2759 = vcmp.eq.s32.totalorder %v2756, %v291
        %vm2760 = vcmp.eq.s32.totalorder %v2756, %v292
        %vm2761 = vcmp.eq.s32.totalorder %v2756, %v293
        %vm2762 = vcmp.eq.s32.totalorder %v2756, %v294
        %vm2763 = vcmp.eq.s32.totalorder %v2756, %v295
        %vm2764 = vcmp.eq.s32.totalorder %v2756, %v296
        %vm2765 = vcmp.eq.s32.totalorder %v2756, %v297
        %vm2766 = vcmp.eq.s32.totalorder %v2756, %v298
        %vm2767 = vcmp.eq.s32.totalorder %v2756, %v299
        %vm2768 = vcmp.eq.s32.totalorder %v2756, %v300
        %vm2769 = vcmp.eq.s32.totalorder %v2756, %v301
        %vm2770 = vcmp.eq.s32.totalorder %v2756, %v302
        %vm2771 = vcmp.eq.s32.totalorder %v2756, %v303
        %vm2772 = vcmp.eq.s32.totalorder %v2756, %v304
        %vm2773 = vcmp.eq.s32.totalorder %v2756, %v305
        %vm2774 = vcmp.eq.s32.totalorder %v2756, %v306
        %vm2775 = vcmp.eq.s32.totalorder %v2756, %v307
        %vm2776 = vcmp.eq.s32.totalorder %v2756, %v308
        %vm2777 = vcmp.eq.s32.totalorder %v2756, %v309
        %vm2778 = vcmp.eq.s32.totalorder %v2756, %v310
        %vm2779 = vcmp.eq.s32.totalorder %v2756, %v311
        %vm2780 = vcmp.eq.s32.totalorder %v2756, %v312
        %vm2781 = vcmp.eq.s32.totalorder %v2756, %v313
        %vm2782 = vcmp.eq.s32.totalorder %v2756, %v314
        %vm2783 = vcmp.eq.s32.totalorder %v2756, %v315
        %vm2784 = vcmp.eq.s32.totalorder %v2756, %v316
        %vm2785 = vcmp.eq.s32.totalorder %v2756, %v317
        %vm2786 = vcmp.eq.s32.totalorder %v2756, %v318
        %vm2787 = vcmp.eq.s32.totalorder %v2756, %v319
        %vm2788 = vcmp.eq.s32.totalorder %v2756, %v320
        %v2789 = vlaneseq
        %v2790 = vshrl.u32 %v2789, 7
        %v2791 = vsub.s32 0, %v2790
        %v2792 = vrot.slane %v2748, %v2791
        %v2793 = vsel %vm2757, %v2792, 0.0
        %v2794 = vsel %vm2758, %v2792, 0.0
        %v2795 = vsel %vm2759, %v2792, 0.0
        %v2796 = vsel %vm2760, %v2792, 0.0
        %v2797 = vsel %vm2761, %v2792, 0.0
        %v2798 = vsel %vm2762, %v2792, 0.0
        %v2799 = vsel %vm2763, %v2792, 0.0
        %v2800 = vsel %vm2764, %v2792, 0.0
        %v2801 = vsel %vm2765, %v2792, 0.0
        %v2802 = vsel %vm2766, %v2792, 0.0
        %v2803 = vsel %vm2767, %v2792, 0.0
        %v2804 = vsel %vm2768, %v2792, 0.0
        %v2805 = vsel %vm2769, %v2792, 0.0
        %v2806 = vsel %vm2770, %v2792, 0.0
        %v2807 = vsel %vm2771, %v2792, 0.0
        %v2808 = vsel %vm2772, %v2792, 0.0
        %v2809 = vsel %vm2773, %v2792, 0.0
        %v2810 = vsel %vm2774, %v2792, 0.0
        %v2811 = vsel %vm2775, %v2792, 0.0
        %v2812 = vsel %vm2776, %v2792, 0.0
        %v2813 = vsel %vm2777, %v2792, 0.0
        %v2814 = vsel %vm2778, %v2792, 0.0
        %v2815 = vsel %vm2779, %v2792, 0.0
        %v2816 = vsel %vm2780, %v2792, 0.0
        %v2817 = vsel %vm2781, %v2792, 0.0
        %v2818 = vsel %vm2782, %v2792, 0.0
        %v2819 = vsel %vm2783, %v2792, 0.0
        %v2820 = vsel %vm2784, %v2792, 0.0
        %v2821 = vsel %vm2785, %v2792, 0.0
        %v2822 = vsel %vm2786, %v2792, 0.0
        %v2823 = vsel %vm2787, %v2792, 0.0
        %v2824 = vsel %vm2788, %v2792, 0.0
        %v2825 = vadd.f32 %v2793, 0.0
        %v2826 = vadd.f32 %v2794, 0.0
        %v2827 = vadd.f32 %v2795, 0.0
        %v2828 = vadd.f32 %v2796, 0.0
        %v2829 = vadd.f32 %v2797, 0.0
        %v2830 = vadd.f32 %v2798, 0.0
        %v2831 = vadd.f32 %v2799, 0.0
        %v2832 = vadd.f32 %v2800, 0.0
        %v2833 = vadd.f32 %v2801, 0.0
        %v2834 = vadd.f32 %v2802, 0.0
        %v2835 = vadd.f32 %v2803, 0.0
        %v2836 = vadd.f32 %v2804, 0.0
        %v2837 = vadd.f32 %v2805, 0.0
        %v2838 = vadd.f32 %v2806, 0.0
        %v2839 = vadd.f32 %v2807, 0.0
        %v2840 = vadd.f32 %v2808, 0.0
        %v2841 = vadd.f32 %v2809, 0.0
        %v2842 = vadd.f32 %v2810, 0.0
        %v2843 = vadd.f32 %v2811, 0.0
        %v2844 = vadd.f32 %v2812, 0.0
        %v2845 = vadd.f32 %v2813, 0.0
        %v2846 = vadd.f32 %v2814, 0.0
        %v2847 = vadd.f32 %v2815, 0.0
        %v2848 = vadd.f32 %v2816, 0.0
        %v2849 = vadd.f32 %v2817, 0.0
        %v2850 = vadd.f32 %v2818, 0.0
        %v2851 = vadd.f32 %v2819, 0.0
        %v2852 = vadd.f32 %v2820, 0.0
        %v2853 = vadd.f32 %v2821, 0.0
        %v2854 = vadd.f32 %v2822, 0.0
        %v2855 = vadd.f32 %v2823, 0.0
        %v2856 = vadd.f32 %v2824, 0.0
        %v2857 = vadd.s32 %v2741, 1
        %vm2858 = vcmp.lt.s32.totalorder %v2857, 15
        %v2859 = vsel %vm2858, %v2857, 15
        %v2860 = vmul.f32 %v2740, %v2746
        %v2861 = vadd.s32 %v2859, %v2750
        %v2862 = vand.u32 %v2861, 255
        %v2863 = vlaneseq
        %v2864 = vshrl.u32 %v2863, 7
        %v2865 = vsub.s32 0, %v2864
        %v2866 = vrot.slane %v2862, %v2865
        %vm2867 = vcmp.eq.s32.totalorder %v2866, %v289
        %vm2868 = vcmp.eq.s32.totalorder %v2866, %v290
        %vm2869 = vcmp.eq.s32.totalorder %v2866, %v291
        %vm2870 = vcmp.eq.s32.totalorder %v2866, %v292
        %vm2871 = vcmp.eq.s32.totalorder %v2866, %v293
        %vm2872 = vcmp.eq.s32.totalorder %v2866, %v294
        %vm2873 = vcmp.eq.s32.totalorder %v2866, %v295
        %vm2874 = vcmp.eq.s32.totalorder %v2866, %v296
        %vm2875 = vcmp.eq.s32.totalorder %v2866, %v297
        %vm2876 = vcmp.eq.s32.totalorder %v2866, %v298
        %vm2877 = vcmp.eq.s32.totalorder %v2866, %v299
        %vm2878 = vcmp.eq.s32.totalorder %v2866, %v300
        %vm2879 = vcmp.eq.s32.totalorder %v2866, %v301
        %vm2880 = vcmp.eq.s32.totalorder %v2866, %v302
        %vm2881 = vcmp.eq.s32.totalorder %v2866, %v303
        %vm2882 = vcmp.eq.s32.totalorder %v2866, %v304
        %vm2883 = vcmp.eq.s32.totalorder %v2866, %v305
        %vm2884 = vcmp.eq.s32.totalorder %v2866, %v306
        %vm2885 = vcmp.eq.s32.totalorder %v2866, %v307
        %vm2886 = vcmp.eq.s32.totalorder %v2866, %v308
        %vm2887 = vcmp.eq.s32.totalorder %v2866, %v309
        %vm2888 = vcmp.eq.s32.totalorder %v2866, %v310
        %vm2889 = vcmp.eq.s32.totalorder %v2866, %v311
        %vm2890 = vcmp.eq.s32.totalorder %v2866, %v312
        %vm2891 = vcmp.eq.s32.totalorder %v2866, %v313
        %vm2892 = vcmp.eq.s32.totalorder %v2866, %v314
        %vm2893 = vcmp.eq.s32.totalorder %v2866, %v315
        %vm2894 = vcmp.eq.s32.totalorder %v2866, %v316
        %vm2895 = vcmp.eq.s32.totalorder %v2866, %v317
        %vm2896 = vcmp.eq.s32.totalorder %v2866, %v318
        %vm2897 = vcmp.eq.s32.totalorder %v2866, %v319
        %vm2898 = vcmp.eq.s32.totalorder %v2866, %v320
        %v2899 = vlaneseq
        %v2900 = vshrl.u32 %v2899, 7
        %v2901 = vsub.s32 0, %v2900
        %v2902 = vrot.slane %v2860, %v2901
        %v2903 = vsel %vm2867, %v2902, 0.0
        %v2904 = vsel %vm2868, %v2902, 0.0
        %v2905 = vsel %vm2869, %v2902, 0.0
        %v2906 = vsel %vm2870, %v2902, 0.0
        %v2907 = vsel %vm2871, %v2902, 0.0
        %v2908 = vsel %vm2872, %v2902, 0.0
        %v2909 = vsel %vm2873, %v2902, 0.0
        %v2910 = vsel %vm2874, %v2902, 0.0
        %v2911 = vsel %vm2875, %v2902, 0.0
        %v2912 = vsel %vm2876, %v2902, 0.0
        %v2913 = vsel %vm2877, %v2902, 0.0
        %v2914 = vsel %vm2878, %v2902, 0.0
        %v2915 = vsel %vm2879, %v2902, 0.0
        %v2916 = vsel %vm2880, %v2902, 0.0
        %v2917 = vsel %vm2881, %v2902, 0.0
        %v2918 = vsel %vm2882, %v2902, 0.0
        %v2919 = vsel %vm2883, %v2902, 0.0
        %v2920 = vsel %vm2884, %v2902, 0.0
        %v2921 = vsel %vm2885, %v2902, 0.0
        %v2922 = vsel %vm2886, %v2902, 0.0
        %v2923 = vsel %vm2887, %v2902, 0.0
        %v2924 = vsel %vm2888, %v2902, 0.0
        %v2925 = vsel %vm2889, %v2902, 0.0
        %v2926 = vsel %vm2890, %v2902, 0.0
        %v2927 = vsel %vm2891, %v2902, 0.0
        %v2928 = vsel %vm2892, %v2902, 0.0
        %v2929 = vsel %vm2893, %v2902, 0.0
        %v2930 = vsel %vm2894, %v2902, 0.0
        %v2931 = vsel %vm2895, %v2902, 0.0
        %v2932 = vsel %vm2896, %v2902, 0.0
        %v2933 = vsel %vm2897, %v2902, 0.0
        %v2934 = vsel %vm2898, %v2902, 0.0
        %v2935 = vadd.f32 %v2825, %v2903
        %v2936 = vadd.f32 %v2826, %v2904
        %v2937 = vadd.f32 %v2827, %v2905
        %v2938 = vadd.f32 %v2828, %v2906
        %v2939 = vadd.f32 %v2829, %v2907
        %v2940 = vadd.f32 %v2830, %v2908
        %v2941 = vadd.f32 %v2831, %v2909
        %v2942 = vadd.f32 %v2832, %v2910
        %v2943 = vadd.f32 %v2833, %v2911
        %v2944 = vadd.f32 %v2834, %v2912
        %v2945 = vadd.f32 %v2835, %v2913
        %v2946 = vadd.f32 %v2836, %v2914
        %v2947 = vadd.f32 %v2837, %v2915
        %v2948 = vadd.f32 %v2838, %v2916
        %v2949 = vadd.f32 %v2839, %v2917
        %v2950 = vadd.f32 %v2840, %v2918
        %v2951 = vadd.f32 %v2841, %v2919
        %v2952 = vadd.f32 %v2842, %v2920
        %v2953 = vadd.f32 %v2843, %v2921
        %v2954 = vadd.f32 %v2844, %v2922
        %v2955 = vadd.f32 %v2845, %v2923
        %v2956 = vadd.f32 %v2846, %v2924
        %v2957 = vadd.f32 %v2847, %v2925
        %v2958 = vadd.f32 %v2848, %v2926
        %v2959 = vadd.f32 %v2849, %v2927
        %v2960 = vadd.f32 %v2850, %v2928
        %v2961 = vadd.f32 %v2851, %v2929
        %v2962 = vadd.f32 %v2852, %v2930
        %v2963 = vadd.f32 %v2853, %v2931
        %v2964 = vadd.f32 %v2854, %v2932
        %v2965 = vadd.f32 %v2855, %v2933
        %v2966 = vadd.f32 %v2856, %v2934
        %v2968 = vrot.slane %v2740, 1
        %v2970 = vmul.f32 %v2744, %v2968
        %v2971 = vmul.u32 %v2859, 16
        %v2972 = vrot.slane %v2971, 1
        %v2973 = vadd.s32 %v2743, %v2972
        %v2974 = vand.u32 %v2973, 255
        %v2975 = vlaneseq
        %v2976 = vshrl.u32 %v2975, 7
        %v2977 = vsub.s32 0, %v2976
        %v2978 = vrot.slane %v2974, %v2977
        %vm2979 = vcmp.eq.s32.totalorder %v2978, %v289
        %vm2980 = vcmp.eq.s32.totalorder %v2978, %v290
        %vm2981 = vcmp.eq.s32.totalorder %v2978, %v291
        %vm2982 = vcmp.eq.s32.totalorder %v2978, %v292
        %vm2983 = vcmp.eq.s32.totalorder %v2978, %v293
        %vm2984 = vcmp.eq.s32.totalorder %v2978, %v294
        %vm2985 = vcmp.eq.s32.totalorder %v2978, %v295
        %vm2986 = vcmp.eq.s32.totalorder %v2978, %v296
        %vm2987 = vcmp.eq.s32.totalorder %v2978, %v297
        %vm2988 = vcmp.eq.s32.totalorder %v2978, %v298
        %vm2989 = vcmp.eq.s32.totalorder %v2978, %v299
        %vm2990 = vcmp.eq.s32.totalorder %v2978, %v300
        %vm2991 = vcmp.eq.s32.totalorder %v2978, %v301
        %vm2992 = vcmp.eq.s32.totalorder %v2978, %v302
        %vm2993 = vcmp.eq.s32.totalorder %v2978, %v303
        %vm2994 = vcmp.eq.s32.totalorder %v2978, %v304
        %vm2995 = vcmp.eq.s32.totalorder %v2978, %v305
        %vm2996 = vcmp.eq.s32.totalorder %v2978, %v306
        %vm2997 = vcmp.eq.s32.totalorder %v2978, %v307
        %vm2998 = vcmp.eq.s32.totalorder %v2978, %v308
        %vm2999 = vcmp.eq.s32.totalorder %v2978, %v309
        %vm3000 = vcmp.eq.s32.totalorder %v2978, %v310
        %vm3001 = vcmp.eq.s32.totalorder %v2978, %v311
        %vm3002 = vcmp.eq.s32.totalorder %v2978, %v312
        %vm3003 = vcmp.eq.s32.totalorder %v2978, %v313
        %vm3004 = vcmp.eq.s32.totalorder %v2978, %v314
        %vm3005 = vcmp.eq.s32.totalorder %v2978, %v315
        %vm3006 = vcmp.eq.s32.totalorder %v2978, %v316
        %vm3007 = vcmp.eq.s32.totalorder %v2978, %v317
        %vm3008 = vcmp.eq.s32.totalorder %v2978, %v318
        %vm3009 = vcmp.eq.s32.totalorder %v2978, %v319
        %vm3010 = vcmp.eq.s32.totalorder %v2978, %v320
        %v3011 = vlaneseq
        %v3012 = vshrl.u32 %v3011, 7
        %v3013 = vsub.s32 0, %v3012
        %v3014 = vrot.slane %v2970, %v3013
        %v3015 = vsel %vm2979, %v3014, 0.0
        %v3016 = vsel %vm2980, %v3014, 0.0
        %v3017 = vsel %vm2981, %v3014, 0.0
        %v3018 = vsel %vm2982, %v3014, 0.0
        %v3019 = vsel %vm2983, %v3014, 0.0
        %v3020 = vsel %vm2984, %v3014, 0.0
        %v3021 = vsel %vm2985, %v3014, 0.0
        %v3022 = vsel %vm2986, %v3014, 0.0
        %v3023 = vsel %vm2987, %v3014, 0.0
        %v3024 = vsel %vm2988, %v3014, 0.0
        %v3025 = vsel %vm2989, %v3014, 0.0
        %v3026 = vsel %vm2990, %v3014, 0.0
        %v3027 = vsel %vm2991, %v3014, 0.0
        %v3028 = vsel %vm2992, %v3014, 0.0
        %v3029 = vsel %vm2993, %v3014, 0.0
        %v3030 = vsel %vm2994, %v3014, 0.0
        %v3031 = vsel %vm2995, %v3014, 0.0
        %v3032 = vsel %vm2996, %v3014, 0.0
        %v3033 = vsel %vm2997, %v3014, 0.0
        %v3034 = vsel %vm2998, %v3014, 0.0
        %v3035 = vsel %vm2999, %v3014, 0.0
        %v3036 = vsel %vm3000, %v3014, 0.0
        %v3037 = vsel %vm3001, %v3014, 0.0
        %v3038 = vsel %vm3002, %v3014, 0.0
        %v3039 = vsel %vm3003, %v3014, 0.0
        %v3040 = vsel %vm3004, %v3014, 0.0
        %v3041 = vsel %vm3005, %v3014, 0.0
        %v3042 = vsel %vm3006, %v3014, 0.0
        %v3043 = vsel %vm3007, %v3014, 0.0
        %v3044 = vsel %vm3008, %v3014, 0.0
        %v3045 = vsel %vm3009, %v3014, 0.0
        %v3046 = vsel %vm3010, %v3014, 0.0
        %v3047 = vadd.f32 %v2935, %v3015
        %v3048 = vadd.f32 %v2936, %v3016
        %v3049 = vadd.f32 %v2937, %v3017
        %v3050 = vadd.f32 %v2938, %v3018
        %v3051 = vadd.f32 %v2939, %v3019
        %v3052 = vadd.f32 %v2940, %v3020
        %v3053 = vadd.f32 %v2941, %v3021
        %v3054 = vadd.f32 %v2942, %v3022
        %v3055 = vadd.f32 %v2943, %v3023
        %v3056 = vadd.f32 %v2944, %v3024
        %v3057 = vadd.f32 %v2945, %v3025
        %v3058 = vadd.f32 %v2946, %v3026
        %v3059 = vadd.f32 %v2947, %v3027
        %v3060 = vadd.f32 %v2948, %v3028
        %v3061 = vadd.f32 %v2949, %v3029
        %v3062 = vadd.f32 %v2950, %v3030
        %v3063 = vadd.f32 %v2951, %v3031
        %v3064 = vadd.f32 %v2952, %v3032
        %v3065 = vadd.f32 %v2953, %v3033
        %v3066 = vadd.f32 %v2954, %v3034
        %v3067 = vadd.f32 %v2955, %v3035
        %v3068 = vadd.f32 %v2956, %v3036
        %v3069 = vadd.f32 %v2957, %v3037
        %v3070 = vadd.f32 %v2958, %v3038
        %v3071 = vadd.f32 %v2959, %v3039
        %v3072 = vadd.f32 %v2960, %v3040
        %v3073 = vadd.f32 %v2961, %v3041
        %v3074 = vadd.f32 %v2962, %v3042
        %v3075 = vadd.f32 %v2963, %v3043
        %v3076 = vadd.f32 %v2964, %v3044
        %v3077 = vadd.f32 %v2965, %v3045
        %v3078 = vadd.f32 %v2966, %v3046
        %v3079 = vmul.f32 %v2740, %v2968
        %v3080 = vadd.s32 %v2859, %v2972
        %v3081 = vand.u32 %v3080, 255
        %v3082 = vlaneseq
        %v3083 = vshrl.u32 %v3082, 7
        %v3084 = vsub.s32 0, %v3083
        %v3085 = vrot.slane %v3081, %v3084
        %vm3086 = vcmp.eq.s32.totalorder %v3085, %v289
        %vm3087 = vcmp.eq.s32.totalorder %v3085, %v290
        %vm3088 = vcmp.eq.s32.totalorder %v3085, %v291
        %vm3089 = vcmp.eq.s32.totalorder %v3085, %v292
        %vm3090 = vcmp.eq.s32.totalorder %v3085, %v293
        %vm3091 = vcmp.eq.s32.totalorder %v3085, %v294
        %vm3092 = vcmp.eq.s32.totalorder %v3085, %v295
        %vm3093 = vcmp.eq.s32.totalorder %v3085, %v296
        %vm3094 = vcmp.eq.s32.totalorder %v3085, %v297
        %vm3095 = vcmp.eq.s32.totalorder %v3085, %v298
        %vm3096 = vcmp.eq.s32.totalorder %v3085, %v299
        %vm3097 = vcmp.eq.s32.totalorder %v3085, %v300
        %vm3098 = vcmp.eq.s32.totalorder %v3085, %v301
        %vm3099 = vcmp.eq.s32.totalorder %v3085, %v302
        %vm3100 = vcmp.eq.s32.totalorder %v3085, %v303
        %vm3101 = vcmp.eq.s32.totalorder %v3085, %v304
        %vm3102 = vcmp.eq.s32.totalorder %v3085, %v305
        %vm3103 = vcmp.eq.s32.totalorder %v3085, %v306
        %vm3104 = vcmp.eq.s32.totalorder %v3085, %v307
        %vm3105 = vcmp.eq.s32.totalorder %v3085, %v308
        %vm3106 = vcmp.eq.s32.totalorder %v3085, %v309
        %vm3107 = vcmp.eq.s32.totalorder %v3085, %v310
        %vm3108 = vcmp.eq.s32.totalorder %v3085, %v311
        %vm3109 = vcmp.eq.s32.totalorder %v3085, %v312
        %vm3110 = vcmp.eq.s32.totalorder %v3085, %v313
        %vm3111 = vcmp.eq.s32.totalorder %v3085, %v314
        %vm3112 = vcmp.eq.s32.totalorder %v3085, %v315
        %vm3113 = vcmp.eq.s32.totalorder %v3085, %v316
        %vm3114 = vcmp.eq.s32.totalorder %v3085, %v317
        %vm3115 = vcmp.eq.s32.totalorder %v3085, %v318
        %vm3116 = vcmp.eq.s32.totalorder %v3085, %v319
        %vm3117 = vcmp.eq.s32.totalorder %v3085, %v320
        %v3118 = vlaneseq
        %v3119 = vshrl.u32 %v3118, 7
        %v3120 = vsub.s32 0, %v3119
        %v3121 = vrot.slane %v3079, %v3120
        %v3122 = vsel %vm3086, %v3121, 0.0
        %v3123 = vsel %vm3087, %v3121, 0.0
        %v3124 = vsel %vm3088, %v3121, 0.0
        %v3125 = vsel %vm3089, %v3121, 0.0
        %v3126 = vsel %vm3090, %v3121, 0.0
        %v3127 = vsel %vm3091, %v3121, 0.0
        %v3128 = vsel %vm3092, %v3121, 0.0
        %v3129 = vsel %vm3093, %v3121, 0.0
        %v3130 = vsel %vm3094, %v3121, 0.0
        %v3131 = vsel %vm3095, %v3121, 0.0
        %v3132 = vsel %vm3096, %v3121, 0.0
        %v3133 = vsel %vm3097, %v3121, 0.0
        %v3134 = vsel %vm3098, %v3121, 0.0
        %v3135 = vsel %vm3099, %v3121, 0.0
        %v3136 = vsel %vm3100, %v3121, 0.0
        %v3137 = vsel %vm3101, %v3121, 0.0
        %v3138 = vsel %vm3102, %v3121, 0.0
        %v3139 = vsel %vm3103, %v3121, 0.0
        %v3140 = vsel %vm3104, %v3121, 0.0
        %v3141 = vsel %vm3105, %v3121, 0.0
        %v3142 = vsel %vm3106, %v3121, 0.0
        %v3143 = vsel %vm3107, %v3121, 0.0
        %v3144 = vsel %vm3108, %v3121, 0.0
        %v3145 = vsel %vm3109, %v3121, 0.0
        %v3146 = vsel %vm3110, %v3121, 0.0
        %v3147 = vsel %vm3111, %v3121, 0.0
        %v3148 = vsel %vm3112, %v3121, 0.0
        %v3149 = vsel %vm3113, %v3121, 0.0
        %v3150 = vsel %vm3114, %v3121, 0.0
        %v3151 = vsel %vm3115, %v3121, 0.0
        %v3152 = vsel %vm3116, %v3121, 0.0
        %v3153 = vsel %vm3117, %v3121, 0.0
        %v3154 = vadd.f32 %v3047, %v3122
        %v3155 = vadd.f32 %v3048, %v3123
        %v3156 = vadd.f32 %v3049, %v3124
        %v3157 = vadd.f32 %v3050, %v3125
        %v3158 = vadd.f32 %v3051, %v3126
        %v3159 = vadd.f32 %v3052, %v3127
        %v3160 = vadd.f32 %v3053, %v3128
        %v3161 = vadd.f32 %v3054, %v3129
        %v3162 = vadd.f32 %v3055, %v3130
        %v3163 = vadd.f32 %v3056, %v3131
        %v3164 = vadd.f32 %v3057, %v3132
        %v3165 = vadd.f32 %v3058, %v3133
        %v3166 = vadd.f32 %v3059, %v3134
        %v3167 = vadd.f32 %v3060, %v3135
        %v3168 = vadd.f32 %v3061, %v3136
        %v3169 = vadd.f32 %v3062, %v3137
        %v3170 = vadd.f32 %v3063, %v3138
        %v3171 = vadd.f32 %v3064, %v3139
        %v3172 = vadd.f32 %v3065, %v3140
        %v3173 = vadd.f32 %v3066, %v3141
        %v3174 = vadd.f32 %v3067, %v3142
        %v3175 = vadd.f32 %v3068, %v3143
        %v3176 = vadd.f32 %v3069, %v3144
        %v3177 = vadd.f32 %v3070, %v3145
        %v3178 = vadd.f32 %v3071, %v3146
        %v3179 = vadd.f32 %v3072, %v3147
        %v3180 = vadd.f32 %v3073, %v3148
        %v3181 = vadd.f32 %v3074, %v3149
        %v3182 = vadd.f32 %v3075, %v3150
        %v3183 = vadd.f32 %v3076, %v3151
        %v3184 = vadd.f32 %v3077, %v3152
        %v3185 = vadd.f32 %v3078, %v3153
        %s3186 = scalar_lea.vmem [#allocation7], 4
        %v3187 = vld [vmem:[%s3186] sm:$0xf]
        %v3188 = vpack.c.bf16 %v3155, %v3154
        %v3189 = vpack.c.bf16 %v3157, %v3156
        %v3190 = vpack.c.bf16 %v3159, %v3158
        %v3191 = vpack.c.bf16 %v3161, %v3160
        %v3192 = vpack.c.bf16 %v3163, %v3162
        %v3193 = vpack.c.bf16 %v3165, %v3164
        %v3194 = vpack.c.bf16 %v3167, %v3166
        %v3195 = vpack.c.bf16 %v3169, %v3168
        %v3196 = vpack.c.bf16 %v3171, %v3170
        %v3197 = vpack.c.bf16 %v3173, %v3172
        %v3198 = vpack.c.bf16 %v3175, %v3174
        %v3199 = vpack.c.bf16 %v3177, %v3176
        %v3200 = vpack.c.bf16 %v3179, %v3178
        %v3201 = vpack.c.bf16 %v3181, %v3180
        %v3202 = vpack.c.bf16 %v3183, %v3182
        %v3203 = vpack.c.bf16 %v3185, %v3184
        %v3206 = vunpack.c.l.s4 1983009808
        %v3207 = vunpack.c.0.s8 %v3206
        %v3208 = vlaneseq
        %v3209 = vshrl.u32 %v3208, 7
        %v3210 = vsub.s32 %v3207, %v3209
        %v3211 = vrot.slane %v3187, %v3210
        %v3212 = vcombine.high %v3211, %v3211
        %3215 = vmatprep.subr.bf16.mxu0 0
        %3216 = vmatpush1.bf16.msra.mxu0 %v3188
        %3217 = vmatprep.subr.bf16.mxu0 0
        %3218 = vmatpush1.bf16.msra.mxu0 %v3189
        %3219 = vmatprep.subr.bf16.mxu0 0
        %3220 = vmatpush1.bf16.msra.mxu0 %v3190
        %3221 = vmatprep.subr.bf16.mxu0 0
        %3222 = vmatpush1.bf16.msra.mxu0 %v3191
        %3223 = vmatprep.subr.bf16.mxu0 0
        %3224 = vmatpush1.bf16.msra.mxu0 %v3192
        %3225 = vmatprep.subr.bf16.mxu0 0
        %3226 = vmatpush1.bf16.msra.mxu0 %v3193
        %3227 = vmatprep.subr.bf16.mxu0 0
        %3228 = vmatpush1.bf16.msra.mxu0 %v3194
        %3229 = vmatprep.subr.bf16.mxu0 0
        %3230 = vmatpush1.bf16.msra.mxu0 %v3195
        %3231 = vmatprep.subr.bf16.mxu0 0
        %3232 = vmatpush1.bf16.msra.mxu0 %v3196
        %3233 = vmatprep.subr.bf16.mxu0 0
        %3234 = vmatpush1.bf16.msra.mxu0 %v3197
        %3235 = vmatprep.subr.bf16.mxu0 0
        %3236 = vmatpush1.bf16.msra.mxu0 %v3198
        %3237 = vmatprep.subr.bf16.mxu0 0
        %3238 = vmatpush1.bf16.msra.mxu0 %v3199
        %3239 = vmatprep.subr.bf16.mxu0 0
        %3240 = vmatpush1.bf16.msra.mxu0 %v3200
        %3241 = vmatprep.subr.bf16.mxu0 0
        %3242 = vmatpush1.bf16.msra.mxu0 %v3201
        %3243 = vmatprep.subr.bf16.mxu0 0
        %3244 = vmatpush1.bf16.msra.mxu0 %v3202
        %3245 = vmatprep.subr.bf16.mxu0 0
        %3246 = vmatpush1.bf16.msra.mxu0 %v3203
        %3247 = vmatprep.mubr.bf16.mxu0 %v3212
        %3248 = vmatmul.mubr.bf16.gmra.mrb[0].mxu0 %v3211
        %v3249 = vpop.f32.mrb[0].mxu0
        %v3250 = vadd.f32 0.0, %v3249
        %v3251 = vpop.f32.mrb[0].mxu0
        %v3252 = vpop.f32.mrb[0].mxu0
        %v3253 = vpop.f32.mrb[0].mxu0
        %3254 = vdwg.mxu0
        %v3255 = vmul.f32 %v1287, %v1295
        %v3256 = vrot.slane %v2242, 2
        %v3257 = vadd.s32 %v1286, %v3256
        %v3258 = vand.u32 %v3257, 255
        %v3259 = vlaneseq
        %v3260 = vshrl.u32 %v3259, 7
        %v3261 = vsub.s32 0, %v3260
        %v3262 = vrot.slane %v3258, %v3261
        %vm3263 = vcmp.eq.s32.totalorder %v3262, %v289
        %vm3264 = vcmp.eq.s32.totalorder %v3262, %v290
        %vm3265 = vcmp.eq.s32.totalorder %v3262, %v291
        %vm3266 = vcmp.eq.s32.totalorder %v3262, %v292
        %vm3267 = vcmp.eq.s32.totalorder %v3262, %v293
        %vm3268 = vcmp.eq.s32.totalorder %v3262, %v294
        %vm3269 = vcmp.eq.s32.totalorder %v3262, %v295
        %vm3270 = vcmp.eq.s32.totalorder %v3262, %v296
        %vm3271 = vcmp.eq.s32.totalorder %v3262, %v297
        %vm3272 = vcmp.eq.s32.totalorder %v3262, %v298
        %vm3273 = vcmp.eq.s32.totalorder %v3262, %v299
        %vm3274 = vcmp.eq.s32.totalorder %v3262, %v300
        %vm3275 = vcmp.eq.s32.totalorder %v3262, %v301
        %vm3276 = vcmp.eq.s32.totalorder %v3262, %v302
        %vm3277 = vcmp.eq.s32.totalorder %v3262, %v303
        %vm3278 = vcmp.eq.s32.totalorder %v3262, %v304
        %vm3279 = vcmp.eq.s32.totalorder %v3262, %v305
        %vm3280 = vcmp.eq.s32.totalorder %v3262, %v306
        %vm3281 = vcmp.eq.s32.totalorder %v3262, %v307
        %vm3282 = vcmp.eq.s32.totalorder %v3262, %v308
        %vm3283 = vcmp.eq.s32.totalorder %v3262, %v309
        %vm3284 = vcmp.eq.s32.totalorder %v3262, %v310
        %vm3285 = vcmp.eq.s32.totalorder %v3262, %v311
        %vm3286 = vcmp.eq.s32.totalorder %v3262, %v312
        %vm3287 = vcmp.eq.s32.totalorder %v3262, %v313
        %vm3288 = vcmp.eq.s32.totalorder %v3262, %v314
        %vm3289 = vcmp.eq.s32.totalorder %v3262, %v315
        %vm3290 = vcmp.eq.s32.totalorder %v3262, %v316
        %vm3291 = vcmp.eq.s32.totalorder %v3262, %v317
        %vm3292 = vcmp.eq.s32.totalorder %v3262, %v318
        %vm3293 = vcmp.eq.s32.totalorder %v3262, %v319
        %vm3294 = vcmp.eq.s32.totalorder %v3262, %v320
        %v3295 = vlaneseq
        %v3296 = vshrl.u32 %v3295, 7
        %v3297 = vsub.s32 0, %v3296
        %v3298 = vrot.slane %v3255, %v3297
        %v3299 = vsel %vm3263, %v3298, 0.0
        %v3300 = vsel %vm3264, %v3298, 0.0
        %v3301 = vsel %vm3265, %v3298, 0.0
        %v3302 = vsel %vm3266, %v3298, 0.0
        %v3303 = vsel %vm3267, %v3298, 0.0
        %v3304 = vsel %vm3268, %v3298, 0.0
        %v3305 = vsel %vm3269, %v3298, 0.0
        %v3306 = vsel %vm3270, %v3298, 0.0
        %v3307 = vsel %vm3271, %v3298, 0.0
        %v3308 = vsel %vm3272, %v3298, 0.0
        %v3309 = vsel %vm3273, %v3298, 0.0
        %v3310 = vsel %vm3274, %v3298, 0.0
        %v3311 = vsel %vm3275, %v3298, 0.0
        %v3312 = vsel %vm3276, %v3298, 0.0
        %v3313 = vsel %vm3277, %v3298, 0.0
        %v3314 = vsel %vm3278, %v3298, 0.0
        %v3315 = vsel %vm3279, %v3298, 0.0
        %v3316 = vsel %vm3280, %v3298, 0.0
        %v3317 = vsel %vm3281, %v3298, 0.0
        %v3318 = vsel %vm3282, %v3298, 0.0
        %v3319 = vsel %vm3283, %v3298, 0.0
        %v3320 = vsel %vm3284, %v3298, 0.0
        %v3321 = vsel %vm3285, %v3298, 0.0
        %v3322 = vsel %vm3286, %v3298, 0.0
        %v3323 = vsel %vm3287, %v3298, 0.0
        %v3324 = vsel %vm3288, %v3298, 0.0
        %v3325 = vsel %vm3289, %v3298, 0.0
        %v3326 = vsel %vm3290, %v3298, 0.0
        %v3327 = vsel %vm3291, %v3298, 0.0
        %v3328 = vsel %vm3292, %v3298, 0.0
        %v3329 = vsel %vm3293, %v3298, 0.0
        %v3330 = vsel %vm3294, %v3298, 0.0
        %v3331 = vadd.f32 %v3299, 0.0
        %v3332 = vadd.f32 %v3300, 0.0
        %v3333 = vadd.f32 %v3301, 0.0
        %v3334 = vadd.f32 %v3302, 0.0
        %v3335 = vadd.f32 %v3303, 0.0
        %v3336 = vadd.f32 %v3304, 0.0
        %v3337 = vadd.f32 %v3305, 0.0
        %v3338 = vadd.f32 %v3306, 0.0
        %v3339 = vadd.f32 %v3307, 0.0
        %v3340 = vadd.f32 %v3308, 0.0
        %v3341 = vadd.f32 %v3309, 0.0
        %v3342 = vadd.f32 %v3310, 0.0
        %v3343 = vadd.f32 %v3311, 0.0
        %v3344 = vadd.f32 %v3312, 0.0
        %v3345 = vadd.f32 %v3313, 0.0
        %v3346 = vadd.f32 %v3314, 0.0
        %v3347 = vadd.f32 %v3315, 0.0
        %v3348 = vadd.f32 %v3316, 0.0
        %v3349 = vadd.f32 %v3317, 0.0
        %v3350 = vadd.f32 %v3318, 0.0
        %v3351 = vadd.f32 %v3319, 0.0
        %v3352 = vadd.f32 %v3320, 0.0
        %v3353 = vadd.f32 %v3321, 0.0
        %v3354 = vadd.f32 %v3322, 0.0
        %v3355 = vadd.f32 %v3323, 0.0
        %v3356 = vadd.f32 %v3324, 0.0
        %v3357 = vadd.f32 %v3325, 0.0
        %v3358 = vadd.f32 %v3326, 0.0
        %v3359 = vadd.f32 %v3327, 0.0
        %v3360 = vadd.f32 %v3328, 0.0
        %v3361 = vadd.f32 %v3329, 0.0
        %v3362 = vadd.f32 %v3330, 0.0
        %v3363 = vmul.f32 %v1283, %v1295
        %v3364 = vadd.s32 %v1408, %v3256
        %v3365 = vand.u32 %v3364, 255
        %v3366 = vlaneseq
        %v3367 = vshrl.u32 %v3366, 7
        %v3368 = vsub.s32 0, %v3367
        %v3369 = vrot.slane %v3365, %v3368
        %vm3370 = vcmp.eq.s32.totalorder %v3369, %v289
        %vm3371 = vcmp.eq.s32.totalorder %v3369, %v290
        %vm3372 = vcmp.eq.s32.totalorder %v3369, %v291
        %vm3373 = vcmp.eq.s32.totalorder %v3369, %v292
        %vm3374 = vcmp.eq.s32.totalorder %v3369, %v293
        %vm3375 = vcmp.eq.s32.totalorder %v3369, %v294
        %vm3376 = vcmp.eq.s32.totalorder %v3369, %v295
        %vm3377 = vcmp.eq.s32.totalorder %v3369, %v296
        %vm3378 = vcmp.eq.s32.totalorder %v3369, %v297
        %vm3379 = vcmp.eq.s32.totalorder %v3369, %v298
        %vm3380 = vcmp.eq.s32.totalorder %v3369, %v299
        %vm3381 = vcmp.eq.s32.totalorder %v3369, %v300
        %vm3382 = vcmp.eq.s32.totalorder %v3369, %v301
        %vm3383 = vcmp.eq.s32.totalorder %v3369, %v302
        %vm3384 = vcmp.eq.s32.totalorder %v3369, %v303
        %vm3385 = vcmp.eq.s32.totalorder %v3369, %v304
        %vm3386 = vcmp.eq.s32.totalorder %v3369, %v305
        %vm3387 = vcmp.eq.s32.totalorder %v3369, %v306
        %vm3388 = vcmp.eq.s32.totalorder %v3369, %v307
        %vm3389 = vcmp.eq.s32.totalorder %v3369, %v308
        %vm3390 = vcmp.eq.s32.totalorder %v3369, %v309
        %vm3391 = vcmp.eq.s32.totalorder %v3369, %v310
        %vm3392 = vcmp.eq.s32.totalorder %v3369, %v311
        %vm3393 = vcmp.eq.s32.totalorder %v3369, %v312
        %vm3394 = vcmp.eq.s32.totalorder %v3369, %v313
        %vm3395 = vcmp.eq.s32.totalorder %v3369, %v314
        %vm3396 = vcmp.eq.s32.totalorder %v3369, %v315
        %vm3397 = vcmp.eq.s32.totalorder %v3369, %v316
        %vm3398 = vcmp.eq.s32.totalorder %v3369, %v317
        %vm3399 = vcmp.eq.s32.totalorder %v3369, %v318
        %vm3400 = vcmp.eq.s32.totalorder %v3369, %v319
        %vm3401 = vcmp.eq.s32.totalorder %v3369, %v320
        %v3402 = vlaneseq
        %v3403 = vshrl.u32 %v3402, 7
        %v3404 = vsub.s32 0, %v3403
        %v3405 = vrot.slane %v3363, %v3404
        %v3406 = vsel %vm3370, %v3405, 0.0
        %v3407 = vsel %vm3371, %v3405, 0.0
        %v3408 = vsel %vm3372, %v3405, 0.0
        %v3409 = vsel %vm3373, %v3405, 0.0
        %v3410 = vsel %vm3374, %v3405, 0.0
        %v3411 = vsel %vm3375, %v3405, 0.0
        %v3412 = vsel %vm3376, %v3405, 0.0
        %v3413 = vsel %vm3377, %v3405, 0.0
        %v3414 = vsel %vm3378, %v3405, 0.0
        %v3415 = vsel %vm3379, %v3405, 0.0
        %v3416 = vsel %vm3380, %v3405, 0.0
        %v3417 = vsel %vm3381, %v3405, 0.0
        %v3418 = vsel %vm3382, %v3405, 0.0
        %v3419 = vsel %vm3383, %v3405, 0.0
        %v3420 = vsel %vm3384, %v3405, 0.0
        %v3421 = vsel %vm3385, %v3405, 0.0
        %v3422 = vsel %vm3386, %v3405, 0.0
        %v3423 = vsel %vm3387, %v3405, 0.0
        %v3424 = vsel %vm3388, %v3405, 0.0
        %v3425 = vsel %vm3389, %v3405, 0.0
        %v3426 = vsel %vm3390, %v3405, 0.0
        %v3427 = vsel %vm3391, %v3405, 0.0
        %v3428 = vsel %vm3392, %v3405, 0.0
        %v3429 = vsel %vm3393, %v3405, 0.0
        %v3430 = vsel %vm3394, %v3405, 0.0
        %v3431 = vsel %vm3395, %v3405, 0.0
        %v3432 = vsel %vm3396, %v3405, 0.0
        %v3433 = vsel %vm3397, %v3405, 0.0
        %v3434 = vsel %vm3398, %v3405, 0.0
        %v3435 = vsel %vm3399, %v3405, 0.0
        %v3436 = vsel %vm3400, %v3405, 0.0
        %v3437 = vsel %vm3401, %v3405, 0.0
        %v3438 = vadd.f32 %v3331, %v3406
        %v3439 = vadd.f32 %v3332, %v3407
        %v3440 = vadd.f32 %v3333, %v3408
        %v3441 = vadd.f32 %v3334, %v3409
        %v3442 = vadd.f32 %v3335, %v3410
        %v3443 = vadd.f32 %v3336, %v3411
        %v3444 = vadd.f32 %v3337, %v3412
        %v3445 = vadd.f32 %v3338, %v3413
        %v3446 = vadd.f32 %v3339, %v3414
        %v3447 = vadd.f32 %v3340, %v3415
        %v3448 = vadd.f32 %v3341, %v3416
        %v3449 = vadd.f32 %v3342, %v3417
        %v3450 = vadd.f32 %v3343, %v3418
        %v3451 = vadd.f32 %v3344, %v3419
        %v3452 = vadd.f32 %v3345, %v3420
        %v3453 = vadd.f32 %v3346, %v3421
        %v3454 = vadd.f32 %v3347, %v3422
        %v3455 = vadd.f32 %v3348, %v3423
        %v3456 = vadd.f32 %v3349, %v3424
        %v3457 = vadd.f32 %v3350, %v3425
        %v3458 = vadd.f32 %v3351, %v3426
        %v3459 = vadd.f32 %v3352, %v3427
        %v3460 = vadd.f32 %v3353, %v3428
        %v3461 = vadd.f32 %v3354, %v3429
        %v3462 = vadd.f32 %v3355, %v3430
        %v3463 = vadd.f32 %v3356, %v3431
        %v3464 = vadd.f32 %v3357, %v3432
        %v3465 = vadd.f32 %v3358, %v3433
        %v3466 = vadd.f32 %v3359, %v3434
        %v3467 = vadd.f32 %v3360, %v3435
        %v3468 = vadd.f32 %v3361, %v3436
        %v3469 = vadd.f32 %v3362, %v3437
        %v3470 = vmul.f32 %v1287, %v1741
        %v3471 = vrot.slane %v2456, 2
        %v3472 = vadd.s32 %v1286, %v3471
        %v3473 = vand.u32 %v3472, 255
        %v3474 = vlaneseq
        %v3475 = vshrl.u32 %v3474, 7
        %v3476 = vsub.s32 0, %v3475
        %v3477 = vrot.slane %v3473, %v3476
        %vm3478 = vcmp.eq.s32.totalorder %v3477, %v289
        %vm3479 = vcmp.eq.s32.totalorder %v3477, %v290
        %vm3480 = vcmp.eq.s32.totalorder %v3477, %v291
        %vm3481 = vcmp.eq.s32.totalorder %v3477, %v292
        %vm3482 = vcmp.eq.s32.totalorder %v3477, %v293
        %vm3483 = vcmp.eq.s32.totalorder %v3477, %v294
        %vm3484 = vcmp.eq.s32.totalorder %v3477, %v295
        %vm3485 = vcmp.eq.s32.totalorder %v3477, %v296
        %vm3486 = vcmp.eq.s32.totalorder %v3477, %v297
        %vm3487 = vcmp.eq.s32.totalorder %v3477, %v298
        %vm3488 = vcmp.eq.s32.totalorder %v3477, %v299
        %vm3489 = vcmp.eq.s32.totalorder %v3477, %v300
        %vm3490 = vcmp.eq.s32.totalorder %v3477, %v301
        %vm3491 = vcmp.eq.s32.totalorder %v3477, %v302
        %vm3492 = vcmp.eq.s32.totalorder %v3477, %v303
        %vm3493 = vcmp.eq.s32.totalorder %v3477, %v304
        %vm3494 = vcmp.eq.s32.totalorder %v3477, %v305
        %vm3495 = vcmp.eq.s32.totalorder %v3477, %v306
        %vm3496 = vcmp.eq.s32.totalorder %v3477, %v307
        %vm3497 = vcmp.eq.s32.totalorder %v3477, %v308
        %vm3498 = vcmp.eq.s32.totalorder %v3477, %v309
        %vm3499 = vcmp.eq.s32.totalorder %v3477, %v310
        %vm3500 = vcmp.eq.s32.totalorder %v3477, %v311
        %vm3501 = vcmp.eq.s32.totalorder %v3477, %v312
        %vm3502 = vcmp.eq.s32.totalorder %v3477, %v313
        %vm3503 = vcmp.eq.s32.totalorder %v3477, %v314
        %vm3504 = vcmp.eq.s32.totalorder %v3477, %v315
        %vm3505 = vcmp.eq.s32.totalorder %v3477, %v316
        %vm3506 = vcmp.eq.s32.totalorder %v3477, %v317
        %vm3507 = vcmp.eq.s32.totalorder %v3477, %v318
        %vm3508 = vcmp.eq.s32.totalorder %v3477, %v319
        %vm3509 = vcmp.eq.s32.totalorder %v3477, %v320
        %v3510 = vlaneseq
        %v3511 = vshrl.u32 %v3510, 7
        %v3512 = vsub.s32 0, %v3511
        %v3513 = vrot.slane %v3470, %v3512
        %v3514 = vsel %vm3478, %v3513, 0.0
        %v3515 = vsel %vm3479, %v3513, 0.0
        %v3516 = vsel %vm3480, %v3513, 0.0
        %v3517 = vsel %vm3481, %v3513, 0.0
        %v3518 = vsel %vm3482, %v3513, 0.0
        %v3519 = vsel %vm3483, %v3513, 0.0
        %v3520 = vsel %vm3484, %v3513, 0.0
        %v3521 = vsel %vm3485, %v3513, 0.0
        %v3522 = vsel %vm3486, %v3513, 0.0
        %v3523 = vsel %vm3487, %v3513, 0.0
        %v3524 = vsel %vm3488, %v3513, 0.0
        %v3525 = vsel %vm3489, %v3513, 0.0
        %v3526 = vsel %vm3490, %v3513, 0.0
        %v3527 = vsel %vm3491, %v3513, 0.0
        %v3528 = vsel %vm3492, %v3513, 0.0
        %v3529 = vsel %vm3493, %v3513, 0.0
        %v3530 = vsel %vm3494, %v3513, 0.0
        %v3531 = vsel %vm3495, %v3513, 0.0
        %v3532 = vsel %vm3496, %v3513, 0.0
        %v3533 = vsel %vm3497, %v3513, 0.0
        %v3534 = vsel %vm3498, %v3513, 0.0
        %v3535 = vsel %vm3499, %v3513, 0.0
        %v3536 = vsel %vm3500, %v3513, 0.0
        %v3537 = vsel %vm3501, %v3513, 0.0
        %v3538 = vsel %vm3502, %v3513, 0.0
        %v3539 = vsel %vm3503, %v3513, 0.0
        %v3540 = vsel %vm3504, %v3513, 0.0
        %v3541 = vsel %vm3505, %v3513, 0.0
        %v3542 = vsel %vm3506, %v3513, 0.0
        %v3543 = vsel %vm3507, %v3513, 0.0
        %v3544 = vsel %vm3508, %v3513, 0.0
        %v3545 = vsel %vm3509, %v3513, 0.0
        %v3546 = vadd.f32 %v3438, %v3514
        %v3547 = vadd.f32 %v3439, %v3515
        %v3548 = vadd.f32 %v3440, %v3516
        %v3549 = vadd.f32 %v3441, %v3517
        %v3550 = vadd.f32 %v3442, %v3518
        %v3551 = vadd.f32 %v3443, %v3519
        %v3552 = vadd.f32 %v3444, %v3520
        %v3553 = vadd.f32 %v3445, %v3521
        %v3554 = vadd.f32 %v3446, %v3522
        %v3555 = vadd.f32 %v3447, %v3523
        %v3556 = vadd.f32 %v3448, %v3524
        %v3557 = vadd.f32 %v3449, %v3525
        %v3558 = vadd.f32 %v3450, %v3526
        %v3559 = vadd.f32 %v3451, %v3527
        %v3560 = vadd.f32 %v3452, %v3528
        %v3561 = vadd.f32 %v3453, %v3529
        %v3562 = vadd.f32 %v3454, %v3530
        %v3563 = vadd.f32 %v3455, %v3531
        %v3564 = vadd.f32 %v3456, %v3532
        %v3565 = vadd.f32 %v3457, %v3533
        %v3566 = vadd.f32 %v3458, %v3534
        %v3567 = vadd.f32 %v3459, %v3535
        %v3568 = vadd.f32 %v3460, %v3536
        %v3569 = vadd.f32 %v3461, %v3537
        %v3570 = vadd.f32 %v3462, %v3538
        %v3571 = vadd.f32 %v3463, %v3539
        %v3572 = vadd.f32 %v3464, %v3540
        %v3573 = vadd.f32 %v3465, %v3541
        %v3574 = vadd.f32 %v3466, %v3542
        %v3575 = vadd.f32 %v3467, %v3543
        %v3576 = vadd.f32 %v3468, %v3544
        %v3577 = vadd.f32 %v3469, %v3545
        %v3578 = vmul.f32 %v1283, %v1741
        %v3579 = vadd.s32 %v1408, %v3471
        %v3580 = vand.u32 %v3579, 255
        %v3581 = vlaneseq
        %v3582 = vshrl.u32 %v3581, 7
        %v3583 = vsub.s32 0, %v3582
        %v3584 = vrot.slane %v3580, %v3583
        %vm3585 = vcmp.eq.s32.totalorder %v3584, %v289
        %vm3586 = vcmp.eq.s32.totalorder %v3584, %v290
        %vm3587 = vcmp.eq.s32.totalorder %v3584, %v291
        %vm3588 = vcmp.eq.s32.totalorder %v3584, %v292
        %vm3589 = vcmp.eq.s32.totalorder %v3584, %v293
        %vm3590 = vcmp.eq.s32.totalorder %v3584, %v294
        %vm3591 = vcmp.eq.s32.totalorder %v3584, %v295
        %vm3592 = vcmp.eq.s32.totalorder %v3584, %v296
        %vm3593 = vcmp.eq.s32.totalorder %v3584, %v297
        %vm3594 = vcmp.eq.s32.totalorder %v3584, %v298
        %vm3595 = vcmp.eq.s32.totalorder %v3584, %v299
        %vm3596 = vcmp.eq.s32.totalorder %v3584, %v300
        %vm3597 = vcmp.eq.s32.totalorder %v3584, %v301
        %vm3598 = vcmp.eq.s32.totalorder %v3584, %v302
        %vm3599 = vcmp.eq.s32.totalorder %v3584, %v303
        %vm3600 = vcmp.eq.s32.totalorder %v3584, %v304
        %vm3601 = vcmp.eq.s32.totalorder %v3584, %v305
        %vm3602 = vcmp.eq.s32.totalorder %v3584, %v306
        %vm3603 = vcmp.eq.s32.totalorder %v3584, %v307
        %vm3604 = vcmp.eq.s32.totalorder %v3584, %v308
        %vm3605 = vcmp.eq.s32.totalorder %v3584, %v309
        %vm3606 = vcmp.eq.s32.totalorder %v3584, %v310
        %vm3607 = vcmp.eq.s32.totalorder %v3584, %v311
        %vm3608 = vcmp.eq.s32.totalorder %v3584, %v312
        %vm3609 = vcmp.eq.s32.totalorder %v3584, %v313
        %vm3610 = vcmp.eq.s32.totalorder %v3584, %v314
        %vm3611 = vcmp.eq.s32.totalorder %v3584, %v315
        %vm3612 = vcmp.eq.s32.totalorder %v3584, %v316
        %vm3613 = vcmp.eq.s32.totalorder %v3584, %v317
        %vm3614 = vcmp.eq.s32.totalorder %v3584, %v318
        %vm3615 = vcmp.eq.s32.totalorder %v3584, %v319
        %vm3616 = vcmp.eq.s32.totalorder %v3584, %v320
        %v3617 = vlaneseq
        %v3618 = vshrl.u32 %v3617, 7
        %v3619 = vsub.s32 0, %v3618
        %v3620 = vrot.slane %v3578, %v3619
        %v3621 = vsel %vm3585, %v3620, 0.0
        %v3622 = vsel %vm3586, %v3620, 0.0
        %v3623 = vsel %vm3587, %v3620, 0.0
        %v3624 = vsel %vm3588, %v3620, 0.0
        %v3625 = vsel %vm3589, %v3620, 0.0
        %v3626 = vsel %vm3590, %v3620, 0.0
        %v3627 = vsel %vm3591, %v3620, 0.0
        %v3628 = vsel %vm3592, %v3620, 0.0
        %v3629 = vsel %vm3593, %v3620, 0.0
        %v3630 = vsel %vm3594, %v3620, 0.0
        %v3631 = vsel %vm3595, %v3620, 0.0
        %v3632 = vsel %vm3596, %v3620, 0.0
        %v3633 = vsel %vm3597, %v3620, 0.0
        %v3634 = vsel %vm3598, %v3620, 0.0
        %v3635 = vsel %vm3599, %v3620, 0.0
        %v3636 = vsel %vm3600, %v3620, 0.0
        %v3637 = vsel %vm3601, %v3620, 0.0
        %v3638 = vsel %vm3602, %v3620, 0.0
        %v3639 = vsel %vm3603, %v3620, 0.0
        %v3640 = vsel %vm3604, %v3620, 0.0
        %v3641 = vsel %vm3605, %v3620, 0.0
        %v3642 = vsel %vm3606, %v3620, 0.0
        %v3643 = vsel %vm3607, %v3620, 0.0
        %v3644 = vsel %vm3608, %v3620, 0.0
        %v3645 = vsel %vm3609, %v3620, 0.0
        %v3646 = vsel %vm3610, %v3620, 0.0
        %v3647 = vsel %vm3611, %v3620, 0.0
        %v3648 = vsel %vm3612, %v3620, 0.0
        %v3649 = vsel %vm3613, %v3620, 0.0
        %v3650 = vsel %vm3614, %v3620, 0.0
        %v3651 = vsel %vm3615, %v3620, 0.0
        %v3652 = vsel %vm3616, %v3620, 0.0
        %v3653 = vadd.f32 %v3546, %v3621
        %v3654 = vadd.f32 %v3547, %v3622
        %v3655 = vadd.f32 %v3548, %v3623
        %v3656 = vadd.f32 %v3549, %v3624
        %v3657 = vadd.f32 %v3550, %v3625
        %v3658 = vadd.f32 %v3551, %v3626
        %v3659 = vadd.f32 %v3552, %v3627
        %v3660 = vadd.f32 %v3553, %v3628
        %v3661 = vadd.f32 %v3554, %v3629
        %v3662 = vadd.f32 %v3555, %v3630
        %v3663 = vadd.f32 %v3556, %v3631
        %v3664 = vadd.f32 %v3557, %v3632
        %v3665 = vadd.f32 %v3558, %v3633
        %v3666 = vadd.f32 %v3559, %v3634
        %v3667 = vadd.f32 %v3560, %v3635
        %v3668 = vadd.f32 %v3561, %v3636
        %v3669 = vadd.f32 %v3562, %v3637
        %v3670 = vadd.f32 %v3563, %v3638
        %v3671 = vadd.f32 %v3564, %v3639
        %v3672 = vadd.f32 %v3565, %v3640
        %v3673 = vadd.f32 %v3566, %v3641
        %v3674 = vadd.f32 %v3567, %v3642
        %v3675 = vadd.f32 %v3568, %v3643
        %v3676 = vadd.f32 %v3569, %v3644
        %v3677 = vadd.f32 %v3570, %v3645
        %v3678 = vadd.f32 %v3571, %v3646
        %v3679 = vadd.f32 %v3572, %v3647
        %v3680 = vadd.f32 %v3573, %v3648
        %v3681 = vadd.f32 %v3574, %v3649
        %v3682 = vadd.f32 %v3575, %v3650
        %v3683 = vadd.f32 %v3576, %v3651
        %v3684 = vadd.f32 %v3577, %v3652
        %v3685 = vld [vmem:[%s3] sm:$0xf]
        %v3686 = vpack.c.bf16 %v3654, %v3653
        %v3687 = vpack.c.bf16 %v3656, %v3655
        %v3688 = vpack.c.bf16 %v3658, %v3657
        %v3689 = vpack.c.bf16 %v3660, %v3659
        %v3690 = vpack.c.bf16 %v3662, %v3661
        %v3691 = vpack.c.bf16 %v3664, %v3663
        %v3692 = vpack.c.bf16 %v3666, %v3665
        %v3693 = vpack.c.bf16 %v3668, %v3667
        %v3694 = vpack.c.bf16 %v3670, %v3669
        %v3695 = vpack.c.bf16 %v3672, %v3671
        %v3696 = vpack.c.bf16 %v3674, %v3673
        %v3697 = vpack.c.bf16 %v3676, %v3675
        %v3698 = vpack.c.bf16 %v3678, %v3677
        %v3699 = vpack.c.bf16 %v3680, %v3679
        %v3700 = vpack.c.bf16 %v3682, %v3681
        %v3701 = vpack.c.bf16 %v3684, %v3683
        %v3704 = vunpack.c.l.s4 1983009808
        %v3705 = vunpack.c.0.s8 %v3704
        %v3706 = vlaneseq
        %v3707 = vshrl.u32 %v3706, 7
        %v3708 = vsub.s32 %v3705, %v3707
        %v3709 = vrot.slane %v3685, %v3708
        %v3710 = vcombine.high %v3709, %v3709
        %3713 = vmatprep.subr.bf16.mxu0 0
        %3714 = vmatpush1.bf16.msra.mxu0 %v3686
        %3715 = vmatprep.subr.bf16.mxu0 0
        %3716 = vmatpush1.bf16.msra.mxu0 %v3687
        %3717 = vmatprep.subr.bf16.mxu0 0
        %3718 = vmatpush1.bf16.msra.mxu0 %v3688
        %3719 = vmatprep.subr.bf16.mxu0 0
        %3720 = vmatpush1.bf16.msra.mxu0 %v3689
        %3721 = vmatprep.subr.bf16.mxu0 0
        %3722 = vmatpush1.bf16.msra.mxu0 %v3690
        %3723 = vmatprep.subr.bf16.mxu0 0
        %3724 = vmatpush1.bf16.msra.mxu0 %v3691
        %3725 = vmatprep.subr.bf16.mxu0 0
        %3726 = vmatpush1.bf16.msra.mxu0 %v3692
        %3727 = vmatprep.subr.bf16.mxu0 0
        %3728 = vmatpush1.bf16.msra.mxu0 %v3693
        %3729 = vmatprep.subr.bf16.mxu0 0
        %3730 = vmatpush1.bf16.msra.mxu0 %v3694
        %3731 = vmatprep.subr.bf16.mxu0 0
        %3732 = vmatpush1.bf16.msra.mxu0 %v3695
        %3733 = vmatprep.subr.bf16.mxu0 0
        %3734 = vmatpush1.bf16.msra.mxu0 %v3696
        %3735 = vmatprep.subr.bf16.mxu0 0
        %3736 = vmatpush1.bf16.msra.mxu0 %v3697
        %3737 = vmatprep.subr.bf16.mxu0 0
        %3738 = vmatpush1.bf16.msra.mxu0 %v3698
        %3739 = vmatprep.subr.bf16.mxu0 0
        %3740 = vmatpush1.bf16.msra.mxu0 %v3699
        %3741 = vmatprep.subr.bf16.mxu0 0
        %3742 = vmatpush1.bf16.msra.mxu0 %v3700
        %3743 = vmatprep.subr.bf16.mxu0 0
        %3744 = vmatpush1.bf16.msra.mxu0 %v3701
        %3745 = vmatprep.mubr.bf16.mxu0 %v3710
        %3746 = vmatmul.mubr.bf16.gmra.mrb[0].mxu0 %v3709
        %v3747 = vpop.f32.mrb[0].mxu0
        %v3748 = vadd.f32 0.0, %v3747
        %v3749 = vpop.f32.mrb[0].mxu0
        %v3750 = vpop.f32.mrb[0].mxu0
        %v3751 = vpop.f32.mrb[0].mxu0
        %3752 = vdwg.mxu0
        %v3753 = vrot.slane %v2744, 2
        %v3755 = vmul.f32 %v2744, %v3753
        %v3756 = vrot.slane %v2749, 2
        %v3757 = vadd.s32 %v2743, %v3756
        %v3758 = vand.u32 %v3757, 255
        %v3759 = vlaneseq
        %v3760 = vshrl.u32 %v3759, 7
        %v3761 = vsub.s32 0, %v3760
        %v3762 = vrot.slane %v3758, %v3761
        %vm3763 = vcmp.eq.s32.totalorder %v3762, %v289
        %vm3764 = vcmp.eq.s32.totalorder %v3762, %v290
        %vm3765 = vcmp.eq.s32.totalorder %v3762, %v291
        %vm3766 = vcmp.eq.s32.totalorder %v3762, %v292
        %vm3767 = vcmp.eq.s32.totalorder %v3762, %v293
        %vm3768 = vcmp.eq.s32.totalorder %v3762, %v294
        %vm3769 = vcmp.eq.s32.totalorder %v3762, %v295
        %vm3770 = vcmp.eq.s32.totalorder %v3762, %v296
        %vm3771 = vcmp.eq.s32.totalorder %v3762, %v297
        %vm3772 = vcmp.eq.s32.totalorder %v3762, %v298
        %vm3773 = vcmp.eq.s32.totalorder %v3762, %v299
        %vm3774 = vcmp.eq.s32.totalorder %v3762, %v300
        %vm3775 = vcmp.eq.s32.totalorder %v3762, %v301
        %vm3776 = vcmp.eq.s32.totalorder %v3762, %v302
        %vm3777 = vcmp.eq.s32.totalorder %v3762, %v303
        %vm3778 = vcmp.eq.s32.totalorder %v3762, %v304
        %vm3779 = vcmp.eq.s32.totalorder %v3762, %v305
        %vm3780 = vcmp.eq.s32.totalorder %v3762, %v306
        %vm3781 = vcmp.eq.s32.totalorder %v3762, %v307
        %vm3782 = vcmp.eq.s32.totalorder %v3762, %v308
        %vm3783 = vcmp.eq.s32.totalorder %v3762, %v309
        %vm3784 = vcmp.eq.s32.totalorder %v3762, %v310
        %vm3785 = vcmp.eq.s32.totalorder %v3762, %v311
        %vm3786 = vcmp.eq.s32.totalorder %v3762, %v312
        %vm3787 = vcmp.eq.s32.totalorder %v3762, %v313
        %vm3788 = vcmp.eq.s32.totalorder %v3762, %v314
        %vm3789 = vcmp.eq.s32.totalorder %v3762, %v315
        %vm3790 = vcmp.eq.s32.totalorder %v3762, %v316
        %vm3791 = vcmp.eq.s32.totalorder %v3762, %v317
        %vm3792 = vcmp.eq.s32.totalorder %v3762, %v318
        %vm3793 = vcmp.eq.s32.totalorder %v3762, %v319
        %vm3794 = vcmp.eq.s32.totalorder %v3762, %v320
        %v3795 = vlaneseq
        %v3796 = vshrl.u32 %v3795, 7
        %v3797 = vsub.s32 0, %v3796
        %v3798 = vrot.slane %v3755, %v3797
        %v3799 = vsel %vm3763, %v3798, 0.0
        %v3800 = vsel %vm3764, %v3798, 0.0
        %v3801 = vsel %vm3765, %v3798, 0.0
        %v3802 = vsel %vm3766, %v3798, 0.0
        %v3803 = vsel %vm3767, %v3798, 0.0
        %v3804 = vsel %vm3768, %v3798, 0.0
        %v3805 = vsel %vm3769, %v3798, 0.0
        %v3806 = vsel %vm3770, %v3798, 0.0
        %v3807 = vsel %vm3771, %v3798, 0.0
        %v3808 = vsel %vm3772, %v3798, 0.0
        %v3809 = vsel %vm3773, %v3798, 0.0
        %v3810 = vsel %vm3774, %v3798, 0.0
        %v3811 = vsel %vm3775, %v3798, 0.0
        %v3812 = vsel %vm3776, %v3798, 0.0
        %v3813 = vsel %vm3777, %v3798, 0.0
        %v3814 = vsel %vm3778, %v3798, 0.0
        %v3815 = vsel %vm3779, %v3798, 0.0
        %v3816 = vsel %vm3780, %v3798, 0.0
        %v3817 = vsel %vm3781, %v3798, 0.0
        %v3818 = vsel %vm3782, %v3798, 0.0
        %v3819 = vsel %vm3783, %v3798, 0.0
        %v3820 = vsel %vm3784, %v3798, 0.0
        %v3821 = vsel %vm3785, %v3798, 0.0
        %v3822 = vsel %vm3786, %v3798, 0.0
        %v3823 = vsel %vm3787, %v3798, 0.0
        %v3824 = vsel %vm3788, %v3798, 0.0
        %v3825 = vsel %vm3789, %v3798, 0.0
        %v3826 = vsel %vm3790, %v3798, 0.0
        %v3827 = vsel %vm3791, %v3798, 0.0
        %v3828 = vsel %vm3792, %v3798, 0.0
        %v3829 = vsel %vm3793, %v3798, 0.0
        %v3830 = vsel %vm3794, %v3798, 0.0
        %v3831 = vadd.f32 %v3799, 0.0
        %v3832 = vadd.f32 %v3800, 0.0
        %v3833 = vadd.f32 %v3801, 0.0
        %v3834 = vadd.f32 %v3802, 0.0
        %v3835 = vadd.f32 %v3803, 0.0
        %v3836 = vadd.f32 %v3804, 0.0
        %v3837 = vadd.f32 %v3805, 0.0
        %v3838 = vadd.f32 %v3806, 0.0
        %v3839 = vadd.f32 %v3807, 0.0
        %v3840 = vadd.f32 %v3808, 0.0
        %v3841 = vadd.f32 %v3809, 0.0
        %v3842 = vadd.f32 %v3810, 0.0
        %v3843 = vadd.f32 %v3811, 0.0
        %v3844 = vadd.f32 %v3812, 0.0
        %v3845 = vadd.f32 %v3813, 0.0
        %v3846 = vadd.f32 %v3814, 0.0
        %v3847 = vadd.f32 %v3815, 0.0
        %v3848 = vadd.f32 %v3816, 0.0
        %v3849 = vadd.f32 %v3817, 0.0
        %v3850 = vadd.f32 %v3818, 0.0
        %v3851 = vadd.f32 %v3819, 0.0
        %v3852 = vadd.f32 %v3820, 0.0
        %v3853 = vadd.f32 %v3821, 0.0
        %v3854 = vadd.f32 %v3822, 0.0
        %v3855 = vadd.f32 %v3823, 0.0
        %v3856 = vadd.f32 %v3824, 0.0
        %v3857 = vadd.f32 %v3825, 0.0
        %v3858 = vadd.f32 %v3826, 0.0
        %v3859 = vadd.f32 %v3827, 0.0
        %v3860 = vadd.f32 %v3828, 0.0
        %v3861 = vadd.f32 %v3829, 0.0
        %v3862 = vadd.f32 %v3830, 0.0
        %v3863 = vmul.f32 %v2740, %v3753
        %v3864 = vadd.s32 %v2859, %v3756
        %v3865 = vand.u32 %v3864, 255
        %v3866 = vlaneseq
        %v3867 = vshrl.u32 %v3866, 7
        %v3868 = vsub.s32 0, %v3867
        %v3869 = vrot.slane %v3865, %v3868
        %vm3870 = vcmp.eq.s32.totalorder %v3869, %v289
        %vm3871 = vcmp.eq.s32.totalorder %v3869, %v290
        %vm3872 = vcmp.eq.s32.totalorder %v3869, %v291
        %vm3873 = vcmp.eq.s32.totalorder %v3869, %v292
        %vm3874 = vcmp.eq.s32.totalorder %v3869, %v293
        %vm3875 = vcmp.eq.s32.totalorder %v3869, %v294
        %vm3876 = vcmp.eq.s32.totalorder %v3869, %v295
        %vm3877 = vcmp.eq.s32.totalorder %v3869, %v296
        %vm3878 = vcmp.eq.s32.totalorder %v3869, %v297
        %vm3879 = vcmp.eq.s32.totalorder %v3869, %v298
        %vm3880 = vcmp.eq.s32.totalorder %v3869, %v299
        %vm3881 = vcmp.eq.s32.totalorder %v3869, %v300
        %vm3882 = vcmp.eq.s32.totalorder %v3869, %v301
        %vm3883 = vcmp.eq.s32.totalorder %v3869, %v302
        %vm3884 = vcmp.eq.s32.totalorder %v3869, %v303
        %vm3885 = vcmp.eq.s32.totalorder %v3869, %v304
        %vm3886 = vcmp.eq.s32.totalorder %v3869, %v305
        %vm3887 = vcmp.eq.s32.totalorder %v3869, %v306
        %vm3888 = vcmp.eq.s32.totalorder %v3869, %v307
        %vm3889 = vcmp.eq.s32.totalorder %v3869, %v308
        %vm3890 = vcmp.eq.s32.totalorder %v3869, %v309
        %vm3891 = vcmp.eq.s32.totalorder %v3869, %v310
        %vm3892 = vcmp.eq.s32.totalorder %v3869, %v311
        %vm3893 = vcmp.eq.s32.totalorder %v3869, %v312
        %vm3894 = vcmp.eq.s32.totalorder %v3869, %v313
        %vm3895 = vcmp.eq.s32.totalorder %v3869, %v314
        %vm3896 = vcmp.eq.s32.totalorder %v3869, %v315
        %vm3897 = vcmp.eq.s32.totalorder %v3869, %v316
        %vm3898 = vcmp.eq.s32.totalorder %v3869, %v317
        %vm3899 = vcmp.eq.s32.totalorder %v3869, %v318
        %vm3900 = vcmp.eq.s32.totalorder %v3869, %v319
        %vm3901 = vcmp.eq.s32.totalorder %v3869, %v320
        %v3902 = vlaneseq
        %v3903 = vshrl.u32 %v3902, 7
        %v3904 = vsub.s32 0, %v3903
        %v3905 = vrot.slane %v3863, %v3904
        %v3906 = vsel %vm3870, %v3905, 0.0
        %v3907 = vsel %vm3871, %v3905, 0.0
        %v3908 = vsel %vm3872, %v3905, 0.0
        %v3909 = vsel %vm3873, %v3905, 0.0
        %v3910 = vsel %vm3874, %v3905, 0.0
        %v3911 = vsel %vm3875, %v3905, 0.0
        %v3912 = vsel %vm3876, %v3905, 0.0
        %v3913 = vsel %vm3877, %v3905, 0.0
        %v3914 = vsel %vm3878, %v3905, 0.0
        %v3915 = vsel %vm3879, %v3905, 0.0
        %v3916 = vsel %vm3880, %v3905, 0.0
        %v3917 = vsel %vm3881, %v3905, 0.0
        %v3918 = vsel %vm3882, %v3905, 0.0
        %v3919 = vsel %vm3883, %v3905, 0.0
        %v3920 = vsel %vm3884, %v3905, 0.0
        %v3921 = vsel %vm3885, %v3905, 0.0
        %v3922 = vsel %vm3886, %v3905, 0.0
        %v3923 = vsel %vm3887, %v3905, 0.0
        %v3924 = vsel %vm3888, %v3905, 0.0
        %v3925 = vsel %vm3889, %v3905, 0.0
        %v3926 = vsel %vm3890, %v3905, 0.0
        %v3927 = vsel %vm3891, %v3905, 0.0
        %v3928 = vsel %vm3892, %v3905, 0.0
        %v3929 = vsel %vm3893, %v3905, 0.0
        %v3930 = vsel %vm3894, %v3905, 0.0
        %v3931 = vsel %vm3895, %v3905, 0.0
        %v3932 = vsel %vm3896, %v3905, 0.0
        %v3933 = vsel %vm3897, %v3905, 0.0
        %v3934 = vsel %vm3898, %v3905, 0.0
        %v3935 = vsel %vm3899, %v3905, 0.0
        %v3936 = vsel %vm3900, %v3905, 0.0
        %v3937 = vsel %vm3901, %v3905, 0.0
        %v3938 = vadd.f32 %v3831, %v3906
        %v3939 = vadd.f32 %v3832, %v3907
        %v3940 = vadd.f32 %v3833, %v3908
        %v3941 = vadd.f32 %v3834, %v3909
        %v3942 = vadd.f32 %v3835, %v3910
        %v3943 = vadd.f32 %v3836, %v3911
        %v3944 = vadd.f32 %v3837, %v3912
        %v3945 = vadd.f32 %v3838, %v3913
        %v3946 = vadd.f32 %v3839, %v3914
        %v3947 = vadd.f32 %v3840, %v3915
        %v3948 = vadd.f32 %v3841, %v3916
        %v3949 = vadd.f32 %v3842, %v3917
        %v3950 = vadd.f32 %v3843, %v3918
        %v3951 = vadd.f32 %v3844, %v3919
        %v3952 = vadd.f32 %v3845, %v3920
        %v3953 = vadd.f32 %v3846, %v3921
        %v3954 = vadd.f32 %v3847, %v3922
        %v3955 = vadd.f32 %v3848, %v3923
        %v3956 = vadd.f32 %v3849, %v3924
        %v3957 = vadd.f32 %v3850, %v3925
        %v3958 = vadd.f32 %v3851, %v3926
        %v3959 = vadd.f32 %v3852, %v3927
        %v3960 = vadd.f32 %v3853, %v3928
        %v3961 = vadd.f32 %v3854, %v3929
        %v3962 = vadd.f32 %v3855, %v3930
        %v3963 = vadd.f32 %v3856, %v3931
        %v3964 = vadd.f32 %v3857, %v3932
        %v3965 = vadd.f32 %v3858, %v3933
        %v3966 = vadd.f32 %v3859, %v3934
        %v3967 = vadd.f32 %v3860, %v3935
        %v3968 = vadd.f32 %v3861, %v3936
        %v3969 = vadd.f32 %v3862, %v3937
        %v3970 = vrot.slane %v2740, 2
        %v3972 = vmul.f32 %v2744, %v3970
        %v3973 = vrot.slane %v2971, 2
        %v3974 = vadd.s32 %v2743, %v3973
        %v3975 = vand.u32 %v3974, 255
        %v3976 = vlaneseq
        %v3977 = vshrl.u32 %v3976, 7
        %v3978 = vsub.s32 0, %v3977
        %v3979 = vrot.slane %v3975, %v3978
        %vm3980 = vcmp.eq.s32.totalorder %v3979, %v289
        %vm3981 = vcmp.eq.s32.totalorder %v3979, %v290
        %vm3982 = vcmp.eq.s32.totalorder %v3979, %v291
        %vm3983 = vcmp.eq.s32.totalorder %v3979, %v292
        %vm3984 = vcmp.eq.s32.totalorder %v3979, %v293
        %vm3985 = vcmp.eq.s32.totalorder %v3979, %v294
        %vm3986 = vcmp.eq.s32.totalorder %v3979, %v295
        %vm3987 = vcmp.eq.s32.totalorder %v3979, %v296
        %vm3988 = vcmp.eq.s32.totalorder %v3979, %v297
        %vm3989 = vcmp.eq.s32.totalorder %v3979, %v298
        %vm3990 = vcmp.eq.s32.totalorder %v3979, %v299
        %vm3991 = vcmp.eq.s32.totalorder %v3979, %v300
        %vm3992 = vcmp.eq.s32.totalorder %v3979, %v301
        %vm3993 = vcmp.eq.s32.totalorder %v3979, %v302
        %vm3994 = vcmp.eq.s32.totalorder %v3979, %v303
        %vm3995 = vcmp.eq.s32.totalorder %v3979, %v304
        %vm3996 = vcmp.eq.s32.totalorder %v3979, %v305
        %vm3997 = vcmp.eq.s32.totalorder %v3979, %v306
        %vm3998 = vcmp.eq.s32.totalorder %v3979, %v307
        %vm3999 = vcmp.eq.s32.totalorder %v3979, %v308
        %vm4000 = vcmp.eq.s32.totalorder %v3979, %v309
        %vm4001 = vcmp.eq.s32.totalorder %v3979, %v310
        %vm4002 = vcmp.eq.s32.totalorder %v3979, %v311
        %vm4003 = vcmp.eq.s32.totalorder %v3979, %v312
        %vm4004 = vcmp.eq.s32.totalorder %v3979, %v313
        %vm4005 = vcmp.eq.s32.totalorder %v3979, %v314
        %vm4006 = vcmp.eq.s32.totalorder %v3979, %v315
        %vm4007 = vcmp.eq.s32.totalorder %v3979, %v316
        %vm4008 = vcmp.eq.s32.totalorder %v3979, %v317
        %vm4009 = vcmp.eq.s32.totalorder %v3979, %v318
        %vm4010 = vcmp.eq.s32.totalorder %v3979, %v319
        %vm4011 = vcmp.eq.s32.totalorder %v3979, %v320
        %v4012 = vlaneseq
        %v4013 = vshrl.u32 %v4012, 7
        %v4014 = vsub.s32 0, %v4013
        %v4015 = vrot.slane %v3972, %v4014
        %v4016 = vsel %vm3980, %v4015, 0.0
        %v4017 = vsel %vm3981, %v4015, 0.0
        %v4018 = vsel %vm3982, %v4015, 0.0
        %v4019 = vsel %vm3983, %v4015, 0.0
        %v4020 = vsel %vm3984, %v4015, 0.0
        %v4021 = vsel %vm3985, %v4015, 0.0
        %v4022 = vsel %vm3986, %v4015, 0.0
        %v4023 = vsel %vm3987, %v4015, 0.0
        %v4024 = vsel %vm3988, %v4015, 0.0
        %v4025 = vsel %vm3989, %v4015, 0.0
        %v4026 = vsel %vm3990, %v4015, 0.0
        %v4027 = vsel %vm3991, %v4015, 0.0
        %v4028 = vsel %vm3992, %v4015, 0.0
        %v4029 = vsel %vm3993, %v4015, 0.0
        %v4030 = vsel %vm3994, %v4015, 0.0
        %v4031 = vsel %vm3995, %v4015, 0.0
        %v4032 = vsel %vm3996, %v4015, 0.0
        %v4033 = vsel %vm3997, %v4015, 0.0
        %v4034 = vsel %vm3998, %v4015, 0.0
        %v4035 = vsel %vm3999, %v4015, 0.0
        %v4036 = vsel %vm4000, %v4015, 0.0
        %v4037 = vsel %vm4001, %v4015, 0.0
        %v4038 = vsel %vm4002, %v4015, 0.0
        %v4039 = vsel %vm4003, %v4015, 0.0
        %v4040 = vsel %vm4004, %v4015, 0.0
        %v4041 = vsel %vm4005, %v4015, 0.0
        %v4042 = vsel %vm4006, %v4015, 0.0
        %v4043 = vsel %vm4007, %v4015, 0.0
        %v4044 = vsel %vm4008, %v4015, 0.0
        %v4045 = vsel %vm4009, %v4015, 0.0
        %v4046 = vsel %vm4010, %v4015, 0.0
        %v4047 = vsel %vm4011, %v4015, 0.0
        %v4048 = vadd.f32 %v3938, %v4016
        %v4049 = vadd.f32 %v3939, %v4017
        %v4050 = vadd.f32 %v3940, %v4018
        %v4051 = vadd.f32 %v3941, %v4019
        %v4052 = vadd.f32 %v3942, %v4020
        %v4053 = vadd.f32 %v3943, %v4021
        %v4054 = vadd.f32 %v3944, %v4022
        %v4055 = vadd.f32 %v3945, %v4023
        %v4056 = vadd.f32 %v3946, %v4024
        %v4057 = vadd.f32 %v3947, %v4025
        %v4058 = vadd.f32 %v3948, %v4026
        %v4059 = vadd.f32 %v3949, %v4027
        %v4060 = vadd.f32 %v3950, %v4028
        %v4061 = vadd.f32 %v3951, %v4029
        %v4062 = vadd.f32 %v3952, %v4030
        %v4063 = vadd.f32 %v3953, %v4031
        %v4064 = vadd.f32 %v3954, %v4032
        %v4065 = vadd.f32 %v3955, %v4033
        %v4066 = vadd.f32 %v3956, %v4034
        %v4067 = vadd.f32 %v3957, %v4035
        %v4068 = vadd.f32 %v3958, %v4036
        %v4069 = vadd.f32 %v3959, %v4037
        %v4070 = vadd.f32 %v3960, %v4038
        %v4071 = vadd.f32 %v3961, %v4039
        %v4072 = vadd.f32 %v3962, %v4040
        %v4073 = vadd.f32 %v3963, %v4041
        %v4074 = vadd.f32 %v3964, %v4042
        %v4075 = vadd.f32 %v3965, %v4043
        %v4076 = vadd.f32 %v3966, %v4044
        %v4077 = vadd.f32 %v3967, %v4045
        %v4078 = vadd.f32 %v3968, %v4046
        %v4079 = vadd.f32 %v3969, %v4047
        %v4080 = vmul.f32 %v2740, %v3970
        %v4081 = vadd.s32 %v2859, %v3973
        %v4082 = vand.u32 %v4081, 255
        %v4083 = vlaneseq
        %v4084 = vshrl.u32 %v4083, 7
        %v4085 = vsub.s32 0, %v4084
        %v4086 = vrot.slane %v4082, %v4085
        %vm4087 = vcmp.eq.s32.totalorder %v4086, %v289
        %vm4088 = vcmp.eq.s32.totalorder %v4086, %v290
        %vm4089 = vcmp.eq.s32.totalorder %v4086, %v291
        %vm4090 = vcmp.eq.s32.totalorder %v4086, %v292
        %vm4091 = vcmp.eq.s32.totalorder %v4086, %v293
        %vm4092 = vcmp.eq.s32.totalorder %v4086, %v294
        %vm4093 = vcmp.eq.s32.totalorder %v4086, %v295
        %vm4094 = vcmp.eq.s32.totalorder %v4086, %v296
        %vm4095 = vcmp.eq.s32.totalorder %v4086, %v297
        %vm4096 = vcmp.eq.s32.totalorder %v4086, %v298
        %vm4097 = vcmp.eq.s32.totalorder %v4086, %v299
        %vm4098 = vcmp.eq.s32.totalorder %v4086, %v300
        %vm4099 = vcmp.eq.s32.totalorder %v4086, %v301
        %vm4100 = vcmp.eq.s32.totalorder %v4086, %v302
        %vm4101 = vcmp.eq.s32.totalorder %v4086, %v303
        %vm4102 = vcmp.eq.s32.totalorder %v4086, %v304
        %vm4103 = vcmp.eq.s32.totalorder %v4086, %v305
        %vm4104 = vcmp.eq.s32.totalorder %v4086, %v306
        %vm4105 = vcmp.eq.s32.totalorder %v4086, %v307
        %vm4106 = vcmp.eq.s32.totalorder %v4086, %v308
        %vm4107 = vcmp.eq.s32.totalorder %v4086, %v309
        %vm4108 = vcmp.eq.s32.totalorder %v4086, %v310
        %vm4109 = vcmp.eq.s32.totalorder %v4086, %v311
        %vm4110 = vcmp.eq.s32.totalorder %v4086, %v312
        %vm4111 = vcmp.eq.s32.totalorder %v4086, %v313
        %vm4112 = vcmp.eq.s32.totalorder %v4086, %v314
        %vm4113 = vcmp.eq.s32.totalorder %v4086, %v315
        %vm4114 = vcmp.eq.s32.totalorder %v4086, %v316
        %vm4115 = vcmp.eq.s32.totalorder %v4086, %v317
        %vm4116 = vcmp.eq.s32.totalorder %v4086, %v318
        %vm4117 = vcmp.eq.s32.totalorder %v4086, %v319
        %vm4118 = vcmp.eq.s32.totalorder %v4086, %v320
        %v4119 = vlaneseq
        %v4120 = vshrl.u32 %v4119, 7
        %v4121 = vsub.s32 0, %v4120
        %v4122 = vrot.slane %v4080, %v4121
        %v4123 = vsel %vm4087, %v4122, 0.0
        %v4124 = vsel %vm4088, %v4122, 0.0
        %v4125 = vsel %vm4089, %v4122, 0.0
        %v4126 = vsel %vm4090, %v4122, 0.0
        %v4127 = vsel %vm4091, %v4122, 0.0
        %v4128 = vsel %vm4092, %v4122, 0.0
        %v4129 = vsel %vm4093, %v4122, 0.0
        %v4130 = vsel %vm4094, %v4122, 0.0
        %v4131 = vsel %vm4095, %v4122, 0.0
        %v4132 = vsel %vm4096, %v4122, 0.0
        %v4133 = vsel %vm4097, %v4122, 0.0
        %v4134 = vsel %vm4098, %v4122, 0.0
        %v4135 = vsel %vm4099, %v4122, 0.0
        %v4136 = vsel %vm4100, %v4122, 0.0
        %v4137 = vsel %vm4101, %v4122, 0.0
        %v4138 = vsel %vm4102, %v4122, 0.0
        %v4139 = vsel %vm4103, %v4122, 0.0
        %v4140 = vsel %vm4104, %v4122, 0.0
        %v4141 = vsel %vm4105, %v4122, 0.0
        %v4142 = vsel %vm4106, %v4122, 0.0
        %v4143 = vsel %vm4107, %v4122, 0.0
        %v4144 = vsel %vm4108, %v4122, 0.0
        %v4145 = vsel %vm4109, %v4122, 0.0
        %v4146 = vsel %vm4110, %v4122, 0.0
        %v4147 = vsel %vm4111, %v4122, 0.0
        %v4148 = vsel %vm4112, %v4122, 0.0
        %v4149 = vsel %vm4113, %v4122, 0.0
        %v4150 = vsel %vm4114, %v4122, 0.0
        %v4151 = vsel %vm4115, %v4122, 0.0
        %v4152 = vsel %vm4116, %v4122, 0.0
        %v4153 = vsel %vm4117, %v4122, 0.0
        %v4154 = vsel %vm4118, %v4122, 0.0
        %v4155 = vadd.f32 %v4048, %v4123
        %v4156 = vadd.f32 %v4049, %v4124
        %v4157 = vadd.f32 %v4050, %v4125
        %v4158 = vadd.f32 %v4051, %v4126
        %v4159 = vadd.f32 %v4052, %v4127
        %v4160 = vadd.f32 %v4053, %v4128
        %v4161 = vadd.f32 %v4054, %v4129
        %v4162 = vadd.f32 %v4055, %v4130
        %v4163 = vadd.f32 %v4056, %v4131
        %v4164 = vadd.f32 %v4057, %v4132
        %v4165 = vadd.f32 %v4058, %v4133
        %v4166 = vadd.f32 %v4059, %v4134
        %v4167 = vadd.f32 %v4060, %v4135
        %v4168 = vadd.f32 %v4061, %v4136
        %v4169 = vadd.f32 %v4062, %v4137
        %v4170 = vadd.f32 %v4063, %v4138
        %v4171 = vadd.f32 %v4064, %v4139
        %v4172 = vadd.f32 %v4065, %v4140
        %v4173 = vadd.f32 %v4066, %v4141
        %v4174 = vadd.f32 %v4067, %v4142
        %v4175 = vadd.f32 %v4068, %v4143
        %v4176 = vadd.f32 %v4069, %v4144
        %v4177 = vadd.f32 %v4070, %v4145
        %v4178 = vadd.f32 %v4071, %v4146
        %v4179 = vadd.f32 %v4072, %v4147
        %v4180 = vadd.f32 %v4073, %v4148
        %v4181 = vadd.f32 %v4074, %v4149
        %v4182 = vadd.f32 %v4075, %v4150
        %v4183 = vadd.f32 %v4076, %v4151
        %v4184 = vadd.f32 %v4077, %v4152
        %v4185 = vadd.f32 %v4078, %v4153
        %v4186 = vadd.f32 %v4079, %v4154
        %s4187 = scalar_lea.vmem %s3, 4
        %v4188 = vld [vmem:[%s4187] sm:$0xf]
        %v4189 = vpack.c.bf16 %v4156, %v4155
        %v4190 = vpack.c.bf16 %v4158, %v4157
        %v4191 = vpack.c.bf16 %v4160, %v4159
        %v4192 = vpack.c.bf16 %v4162, %v4161
        %v4193 = vpack.c.bf16 %v4164, %v4163
        %v4194 = vpack.c.bf16 %v4166, %v4165
        %v4195 = vpack.c.bf16 %v4168, %v4167
        %v4196 = vpack.c.bf16 %v4170, %v4169
        %v4197 = vpack.c.bf16 %v4172, %v4171
        %v4198 = vpack.c.bf16 %v4174, %v4173
        %v4199 = vpack.c.bf16 %v4176, %v4175
        %v4200 = vpack.c.bf16 %v4178, %v4177
        %v4201 = vpack.c.bf16 %v4180, %v4179
        %v4202 = vpack.c.bf16 %v4182, %v4181
        %v4203 = vpack.c.bf16 %v4184, %v4183
        %v4204 = vpack.c.bf16 %v4186, %v4185
        %v4207 = vunpack.c.l.s4 1983009808
        %v4208 = vunpack.c.0.s8 %v4207
        %v4209 = vlaneseq
        %v4210 = vshrl.u32 %v4209, 7
        %v4211 = vsub.s32 %v4208, %v4210
        %v4212 = vrot.slane %v4188, %v4211
        %v4213 = vcombine.high %v4212, %v4212
        %4216 = vmatprep.subr.bf16.mxu0 0
        %4217 = vmatpush1.bf16.msra.mxu0 %v4189
        %4218 = vmatprep.subr.bf16.mxu0 0
        %4219 = vmatpush1.bf16.msra.mxu0 %v4190
        %4220 = vmatprep.subr.bf16.mxu0 0
        %4221 = vmatpush1.bf16.msra.mxu0 %v4191
        %4222 = vmatprep.subr.bf16.mxu0 0
        %4223 = vmatpush1.bf16.msra.mxu0 %v4192
        %4224 = vmatprep.subr.bf16.mxu0 0
        %4225 = vmatpush1.bf16.msra.mxu0 %v4193
        %4226 = vmatprep.subr.bf16.mxu0 0
        %4227 = vmatpush1.bf16.msra.mxu0 %v4194
        %4228 = vmatprep.subr.bf16.mxu0 0
        %4229 = vmatpush1.bf16.msra.mxu0 %v4195
        %4230 = vmatprep.subr.bf16.mxu0 0
        %4231 = vmatpush1.bf16.msra.mxu0 %v4196
        %4232 = vmatprep.subr.bf16.mxu0 0
        %4233 = vmatpush1.bf16.msra.mxu0 %v4197
        %4234 = vmatprep.subr.bf16.mxu0 0
        %4235 = vmatpush1.bf16.msra.mxu0 %v4198
        %4236 = vmatprep.subr.bf16.mxu0 0
        %4237 = vmatpush1.bf16.msra.mxu0 %v4199
        %4238 = vmatprep.subr.bf16.mxu0 0
        %4239 = vmatpush1.bf16.msra.mxu0 %v4200
        %4240 = vmatprep.subr.bf16.mxu0 0
        %4241 = vmatpush1.bf16.msra.mxu0 %v4201
        %4242 = vmatprep.subr.bf16.mxu0 0
        %4243 = vmatpush1.bf16.msra.mxu0 %v4202
        %4244 = vmatprep.subr.bf16.mxu0 0
        %4245 = vmatpush1.bf16.msra.mxu0 %v4203
        %4246 = vmatprep.subr.bf16.mxu0 0
        %4247 = vmatpush1.bf16.msra.mxu0 %v4204
        %4248 = vmatprep.mubr.bf16.mxu0 %v4213
        %4249 = vmatmul.mubr.bf16.gmra.mrb[0].mxu0 %v4212
        %v4250 = vpop.f32.mrb[0].mxu0
        %v4251 = vadd.f32 0.0, %v4250
        %v4252 = vpop.f32.mrb[0].mxu0
        %v4253 = vpop.f32.mrb[0].mxu0
        %v4254 = vpop.f32.mrb[0].mxu0
        %4255 = vdwg.mxu0
        %v4256 = vlaneseq
        %v4257 = vshrl.u32 %v4256, 7
        %v4258 = vsub.s32 1, %v4257
        %v4259 = vrot.slane %v2245, %v4258
        %vm4260 = vcmp.eq.s32.totalorder %v4259, %v289
        %vm4261 = vcmp.eq.s32.totalorder %v4259, %v290
        %vm4262 = vcmp.eq.s32.totalorder %v4259, %v291
        %vm4263 = vcmp.eq.s32.totalorder %v4259, %v292
        %vm4264 = vcmp.eq.s32.totalorder %v4259, %v293
        %vm4265 = vcmp.eq.s32.totalorder %v4259, %v294
        %vm4266 = vcmp.eq.s32.totalorder %v4259, %v295
        %vm4267 = vcmp.eq.s32.totalorder %v4259, %v296
        %vm4268 = vcmp.eq.s32.totalorder %v4259, %v297
        %vm4269 = vcmp.eq.s32.totalorder %v4259, %v298
        %vm4270 = vcmp.eq.s32.totalorder %v4259, %v299
        %vm4271 = vcmp.eq.s32.totalorder %v4259, %v300
        %vm4272 = vcmp.eq.s32.totalorder %v4259, %v301
        %vm4273 = vcmp.eq.s32.totalorder %v4259, %v302
        %vm4274 = vcmp.eq.s32.totalorder %v4259, %v303
        %vm4275 = vcmp.eq.s32.totalorder %v4259, %v304
        %vm4276 = vcmp.eq.s32.totalorder %v4259, %v305
        %vm4277 = vcmp.eq.s32.totalorder %v4259, %v306
        %vm4278 = vcmp.eq.s32.totalorder %v4259, %v307
        %vm4279 = vcmp.eq.s32.totalorder %v4259, %v308
        %vm4280 = vcmp.eq.s32.totalorder %v4259, %v309
        %vm4281 = vcmp.eq.s32.totalorder %v4259, %v310
        %vm4282 = vcmp.eq.s32.totalorder %v4259, %v311
        %vm4283 = vcmp.eq.s32.totalorder %v4259, %v312
        %vm4284 = vcmp.eq.s32.totalorder %v4259, %v313
        %vm4285 = vcmp.eq.s32.totalorder %v4259, %v314
        %vm4286 = vcmp.eq.s32.totalorder %v4259, %v315
        %vm4287 = vcmp.eq.s32.totalorder %v4259, %v316
        %vm4288 = vcmp.eq.s32.totalorder %v4259, %v317
        %vm4289 = vcmp.eq.s32.totalorder %v4259, %v318
        %vm4290 = vcmp.eq.s32.totalorder %v4259, %v319
        %vm4291 = vcmp.eq.s32.totalorder %v4259, %v320
        %v4292 = vlaneseq
        %v4293 = vshrl.u32 %v4292, 7
        %v4294 = vsub.s32 1, %v4293
        %v4295 = vrot.slane %v1291, %v4294
        %v4296 = vsel %vm4260, %v4295, 0.0
        %v4297 = vsel %vm4261, %v4295, 0.0
        %v4298 = vsel %vm4262, %v4295, 0.0
        %v4299 = vsel %vm4263, %v4295, 0.0
        %v4300 = vsel %vm4264, %v4295, 0.0
        %v4301 = vsel %vm4265, %v4295, 0.0
        %v4302 = vsel %vm4266, %v4295, 0.0
        %v4303 = vsel %vm4267, %v4295, 0.0
        %v4304 = vsel %vm4268, %v4295, 0.0
        %v4305 = vsel %vm4269, %v4295, 0.0
        %v4306 = vsel %vm4270, %v4295, 0.0
        %v4307 = vsel %vm4271, %v4295, 0.0
        %v4308 = vsel %vm4272, %v4295, 0.0
        %v4309 = vsel %vm4273, %v4295, 0.0
        %v4310 = vsel %vm4274, %v4295, 0.0
        %v4311 = vsel %vm4275, %v4295, 0.0
        %v4312 = vsel %vm4276, %v4295, 0.0
        %v4313 = vsel %vm4277, %v4295, 0.0
        %v4314 = vsel %vm4278, %v4295, 0.0
        %v4315 = vsel %vm4279, %v4295, 0.0
        %v4316 = vsel %vm4280, %v4295, 0.0
        %v4317 = vsel %vm4281, %v4295, 0.0
        %v4318 = vsel %vm4282, %v4295, 0.0
        %v4319 = vsel %vm4283, %v4295, 0.0
        %v4320 = vsel %vm4284, %v4295, 0.0
        %v4321 = vsel %vm4285, %v4295, 0.0
        %v4322 = vsel %vm4286, %v4295, 0.0
        %v4323 = vsel %vm4287, %v4295, 0.0
        %v4324 = vsel %vm4288, %v4295, 0.0
        %v4325 = vsel %vm4289, %v4295, 0.0
        %v4326 = vsel %vm4290, %v4295, 0.0
        %v4327 = vsel %vm4291, %v4295, 0.0
        %v4328 = vadd.f32 %v4296, 0.0
        %v4329 = vadd.f32 %v4297, 0.0
        %v4330 = vadd.f32 %v4298, 0.0
        %v4331 = vadd.f32 %v4299, 0.0
        %v4332 = vadd.f32 %v4300, 0.0
        %v4333 = vadd.f32 %v4301, 0.0
        %v4334 = vadd.f32 %v4302, 0.0
        %v4335 = vadd.f32 %v4303, 0.0
        %v4336 = vadd.f32 %v4304, 0.0
        %v4337 = vadd.f32 %v4305, 0.0
        %v4338 = vadd.f32 %v4306, 0.0
        %v4339 = vadd.f32 %v4307, 0.0
        %v4340 = vadd.f32 %v4308, 0.0
        %v4341 = vadd.f32 %v4309, 0.0
        %v4342 = vadd.f32 %v4310, 0.0
        %v4343 = vadd.f32 %v4311, 0.0
        %v4344 = vadd.f32 %v4312, 0.0
        %v4345 = vadd.f32 %v4313, 0.0
        %v4346 = vadd.f32 %v4314, 0.0
        %v4347 = vadd.f32 %v4315, 0.0
        %v4348 = vadd.f32 %v4316, 0.0
        %v4349 = vadd.f32 %v4317, 0.0
        %v4350 = vadd.f32 %v4318, 0.0
        %v4351 = vadd.f32 %v4319, 0.0
        %v4352 = vadd.f32 %v4320, 0.0
        %v4353 = vadd.f32 %v4321, 0.0
        %v4354 = vadd.f32 %v4322, 0.0
        %v4355 = vadd.f32 %v4323, 0.0
        %v4356 = vadd.f32 %v4324, 0.0
        %v4357 = vadd.f32 %v4325, 0.0
        %v4358 = vadd.f32 %v4326, 0.0
        %v4359 = vadd.f32 %v4327, 0.0
        %v4360 = vlaneseq
        %v4361 = vshrl.u32 %v4360, 7
        %v4362 = vsub.s32 1, %v4361
        %v4363 = vrot.slane %v2351, %v4362
        %vm4364 = vcmp.eq.s32.totalorder %v4363, %v289
        %vm4365 = vcmp.eq.s32.totalorder %v4363, %v290
        %vm4366 = vcmp.eq.s32.totalorder %v4363, %v291
        %vm4367 = vcmp.eq.s32.totalorder %v4363, %v292
        %vm4368 = vcmp.eq.s32.totalorder %v4363, %v293
        %vm4369 = vcmp.eq.s32.totalorder %v4363, %v294
        %vm4370 = vcmp.eq.s32.totalorder %v4363, %v295
        %vm4371 = vcmp.eq.s32.totalorder %v4363, %v296
        %vm4372 = vcmp.eq.s32.totalorder %v4363, %v297
        %vm4373 = vcmp.eq.s32.totalorder %v4363, %v298
        %vm4374 = vcmp.eq.s32.totalorder %v4363, %v299
        %vm4375 = vcmp.eq.s32.totalorder %v4363, %v300
        %vm4376 = vcmp.eq.s32.totalorder %v4363, %v301
        %vm4377 = vcmp.eq.s32.totalorder %v4363, %v302
        %vm4378 = vcmp.eq.s32.totalorder %v4363, %v303
        %vm4379 = vcmp.eq.s32.totalorder %v4363, %v304
        %vm4380 = vcmp.eq.s32.totalorder %v4363, %v305
        %vm4381 = vcmp.eq.s32.totalorder %v4363, %v306
        %vm4382 = vcmp.eq.s32.totalorder %v4363, %v307
        %vm4383 = vcmp.eq.s32.totalorder %v4363, %v308
        %vm4384 = vcmp.eq.s32.totalorder %v4363, %v309
        %vm4385 = vcmp.eq.s32.totalorder %v4363, %v310
        %vm4386 = vcmp.eq.s32.totalorder %v4363, %v311
        %vm4387 = vcmp.eq.s32.totalorder %v4363, %v312
        %vm4388 = vcmp.eq.s32.totalorder %v4363, %v313
        %vm4389 = vcmp.eq.s32.totalorder %v4363, %v314
        %vm4390 = vcmp.eq.s32.totalorder %v4363, %v315
        %vm4391 = vcmp.eq.s32.totalorder %v4363, %v316
        %vm4392 = vcmp.eq.s32.totalorder %v4363, %v317
        %vm4393 = vcmp.eq.s32.totalorder %v4363, %v318
        %vm4394 = vcmp.eq.s32.totalorder %v4363, %v319
        %vm4395 = vcmp.eq.s32.totalorder %v4363, %v320
        %v4396 = vlaneseq
        %v4397 = vshrl.u32 %v4396, 7
        %v4398 = vsub.s32 1, %v4397
        %v4399 = vrot.slane %v1409, %v4398
        %v4400 = vsel %vm4364, %v4399, 0.0
        %v4401 = vsel %vm4365, %v4399, 0.0
        %v4402 = vsel %vm4366, %v4399, 0.0
        %v4403 = vsel %vm4367, %v4399, 0.0
        %v4404 = vsel %vm4368, %v4399, 0.0
        %v4405 = vsel %vm4369, %v4399, 0.0
        %v4406 = vsel %vm4370, %v4399, 0.0
        %v4407 = vsel %vm4371, %v4399, 0.0
        %v4408 = vsel %vm4372, %v4399, 0.0
        %v4409 = vsel %vm4373, %v4399, 0.0
        %v4410 = vsel %vm4374, %v4399, 0.0
        %v4411 = vsel %vm4375, %v4399, 0.0
        %v4412 = vsel %vm4376, %v4399, 0.0
        %v4413 = vsel %vm4377, %v4399, 0.0
        %v4414 = vsel %vm4378, %v4399, 0.0
        %v4415 = vsel %vm4379, %v4399, 0.0
        %v4416 = vsel %vm4380, %v4399, 0.0
        %v4417 = vsel %vm4381, %v4399, 0.0
        %v4418 = vsel %vm4382, %v4399, 0.0
        %v4419 = vsel %vm4383, %v4399, 0.0
        %v4420 = vsel %vm4384, %v4399, 0.0
        %v4421 = vsel %vm4385, %v4399, 0.0
        %v4422 = vsel %vm4386, %v4399, 0.0
        %v4423 = vsel %vm4387, %v4399, 0.0
        %v4424 = vsel %vm4388, %v4399, 0.0
        %v4425 = vsel %vm4389, %v4399, 0.0
        %v4426 = vsel %vm4390, %v4399, 0.0
        %v4427 = vsel %vm4391, %v4399, 0.0
        %v4428 = vsel %vm4392, %v4399, 0.0
        %v4429 = vsel %vm4393, %v4399, 0.0
        %v4430 = vsel %vm4394, %v4399, 0.0
        %v4431 = vsel %vm4395, %v4399, 0.0
        %v4432 = vadd.f32 %v4328, %v4400
        %v4433 = vadd.f32 %v4329, %v4401
        %v4434 = vadd.f32 %v4330, %v4402
        %v4435 = vadd.f32 %v4331, %v4403
        %v4436 = vadd.f32 %v4332, %v4404
        %v4437 = vadd.f32 %v4333, %v4405
        %v4438 = vadd.f32 %v4334, %v4406
        %v4439 = vadd.f32 %v4335, %v4407
        %v4440 = vadd.f32 %v4336, %v4408
        %v4441 = vadd.f32 %v4337, %v4409
        %v4442 = vadd.f32 %v4338, %v4410
        %v4443 = vadd.f32 %v4339, %v4411
        %v4444 = vadd.f32 %v4340, %v4412
        %v4445 = vadd.f32 %v4341, %v4413
        %v4446 = vadd.f32 %v4342, %v4414
        %v4447 = vadd.f32 %v4343, %v4415
        %v4448 = vadd.f32 %v4344, %v4416
        %v4449 = vadd.f32 %v4345, %v4417
        %v4450 = vadd.f32 %v4346, %v4418
        %v4451 = vadd.f32 %v4347, %v4419
        %v4452 = vadd.f32 %v4348, %v4420
        %v4453 = vadd.f32 %v4349, %v4421
        %v4454 = vadd.f32 %v4350, %v4422
        %v4455 = vadd.f32 %v4351, %v4423
        %v4456 = vadd.f32 %v4352, %v4424
        %v4457 = vadd.f32 %v4353, %v4425
        %v4458 = vadd.f32 %v4354, %v4426
        %v4459 = vadd.f32 %v4355, %v4427
        %v4460 = vadd.f32 %v4356, %v4428
        %v4461 = vadd.f32 %v4357, %v4429
        %v4462 = vadd.f32 %v4358, %v4430
        %v4463 = vadd.f32 %v4359, %v4431
        %v4464 = vlaneseq
        %v4465 = vshrl.u32 %v4464, 7
        %v4466 = vsub.s32 1, %v4465
        %v4467 = vrot.slane %v2459, %v4466
        %vm4468 = vcmp.eq.s32.totalorder %v4467, %v289
        %vm4469 = vcmp.eq.s32.totalorder %v4467, %v290
        %vm4470 = vcmp.eq.s32.totalorder %v4467, %v291
        %vm4471 = vcmp.eq.s32.totalorder %v4467, %v292
        %vm4472 = vcmp.eq.s32.totalorder %v4467, %v293
        %vm4473 = vcmp.eq.s32.totalorder %v4467, %v294
        %vm4474 = vcmp.eq.s32.totalorder %v4467, %v295
        %vm4475 = vcmp.eq.s32.totalorder %v4467, %v296
        %vm4476 = vcmp.eq.s32.totalorder %v4467, %v297
        %vm4477 = vcmp.eq.s32.totalorder %v4467, %v298
        %vm4478 = vcmp.eq.s32.totalorder %v4467, %v299
        %vm4479 = vcmp.eq.s32.totalorder %v4467, %v300
        %vm4480 = vcmp.eq.s32.totalorder %v4467, %v301
        %vm4481 = vcmp.eq.s32.totalorder %v4467, %v302
        %vm4482 = vcmp.eq.s32.totalorder %v4467, %v303
        %vm4483 = vcmp.eq.s32.totalorder %v4467, %v304
        %vm4484 = vcmp.eq.s32.totalorder %v4467, %v305
        %vm4485 = vcmp.eq.s32.totalorder %v4467, %v306
        %vm4486 = vcmp.eq.s32.totalorder %v4467, %v307
        %vm4487 = vcmp.eq.s32.totalorder %v4467, %v308
        %vm4488 = vcmp.eq.s32.totalorder %v4467, %v309
        %vm4489 = vcmp.eq.s32.totalorder %v4467, %v310
        %vm4490 = vcmp.eq.s32.totalorder %v4467, %v311
        %vm4491 = vcmp.eq.s32.totalorder %v4467, %v312
        %vm4492 = vcmp.eq.s32.totalorder %v4467, %v313
        %vm4493 = vcmp.eq.s32.totalorder %v4467, %v314
        %vm4494 = vcmp.eq.s32.totalorder %v4467, %v315
        %vm4495 = vcmp.eq.s32.totalorder %v4467, %v316
        %vm4496 = vcmp.eq.s32.totalorder %v4467, %v317
        %vm4497 = vcmp.eq.s32.totalorder %v4467, %v318
        %vm4498 = vcmp.eq.s32.totalorder %v4467, %v319
        %vm4499 = vcmp.eq.s32.totalorder %v4467, %v320
        %v4500 = vlaneseq
        %v4501 = vshrl.u32 %v4500, 7
        %v4502 = vsub.s32 1, %v4501
        %v4503 = vrot.slane %v1521, %v4502
        %v4504 = vsel %vm4468, %v4503, 0.0
        %v4505 = vsel %vm4469, %v4503, 0.0
        %v4506 = vsel %vm4470, %v4503, 0.0
        %v4507 = vsel %vm4471, %v4503, 0.0
        %v4508 = vsel %vm4472, %v4503, 0.0
        %v4509 = vsel %vm4473, %v4503, 0.0
        %v4510 = vsel %vm4474, %v4503, 0.0
        %v4511 = vsel %vm4475, %v4503, 0.0
        %v4512 = vsel %vm4476, %v4503, 0.0
        %v4513 = vsel %vm4477, %v4503, 0.0
        %v4514 = vsel %vm4478, %v4503, 0.0
        %v4515 = vsel %vm4479, %v4503, 0.0
        %v4516 = vsel %vm4480, %v4503, 0.0
        %v4517 = vsel %vm4481, %v4503, 0.0
        %v4518 = vsel %vm4482, %v4503, 0.0
        %v4519 = vsel %vm4483, %v4503, 0.0
        %v4520 = vsel %vm4484, %v4503, 0.0
        %v4521 = vsel %vm4485, %v4503, 0.0
        %v4522 = vsel %vm4486, %v4503, 0.0
        %v4523 = vsel %vm4487, %v4503, 0.0
        %v4524 = vsel %vm4488, %v4503, 0.0
        %v4525 = vsel %vm4489, %v4503, 0.0
        %v4526 = vsel %vm4490, %v4503, 0.0
        %v4527 = vsel %vm4491, %v4503, 0.0
        %v4528 = vsel %vm4492, %v4503, 0.0
        %v4529 = vsel %vm4493, %v4503, 0.0
        %v4530 = vsel %vm4494, %v4503, 0.0
        %v4531 = vsel %vm4495, %v4503, 0.0
        %v4532 = vsel %vm4496, %v4503, 0.0
        %v4533 = vsel %vm4497, %v4503, 0.0
        %v4534 = vsel %vm4498, %v4503, 0.0
        %v4535 = vsel %vm4499, %v4503, 0.0
        %v4536 = vadd.f32 %v4432, %v4504
        %v4537 = vadd.f32 %v4433, %v4505
        %v4538 = vadd.f32 %v4434, %v4506
        %v4539 = vadd.f32 %v4435, %v4507
        %v4540 = vadd.f32 %v4436, %v4508
        %v4541 = vadd.f32 %v4437, %v4509
        %v4542 = vadd.f32 %v4438, %v4510
        %v4543 = vadd.f32 %v4439, %v4511
        %v4544 = vadd.f32 %v4440, %v4512
        %v4545 = vadd.f32 %v4441, %v4513
        %v4546 = vadd.f32 %v4442, %v4514
        %v4547 = vadd.f32 %v4443, %v4515
        %v4548 = vadd.f32 %v4444, %v4516
        %v4549 = vadd.f32 %v4445, %v4517
        %v4550 = vadd.f32 %v4446, %v4518
        %v4551 = vadd.f32 %v4447, %v4519
        %v4552 = vadd.f32 %v4448, %v4520
        %v4553 = vadd.f32 %v4449, %v4521
        %v4554 = vadd.f32 %v4450, %v4522
        %v4555 = vadd.f32 %v4451, %v4523
        %v4556 = vadd.f32 %v4452, %v4524
        %v4557 = vadd.f32 %v4453, %v4525
        %v4558 = vadd.f32 %v4454, %v4526
        %v4559 = vadd.f32 %v4455, %v4527
        %v4560 = vadd.f32 %v4456, %v4528
        %v4561 = vadd.f32 %v4457, %v4529
        %v4562 = vadd.f32 %v4458, %v4530
        %v4563 = vadd.f32 %v4459, %v4531
        %v4564 = vadd.f32 %v4460, %v4532
        %v4565 = vadd.f32 %v4461, %v4533
        %v4566 = vadd.f32 %v4462, %v4534
        %v4567 = vadd.f32 %v4463, %v4535
        %v4568 = vlaneseq
        %v4569 = vshrl.u32 %v4568, 7
        %v4570 = vsub.s32 1, %v4569
        %v4571 = vrot.slane %v2565, %v4570
        %vm4572 = vcmp.eq.s32.totalorder %v4571, %v289
        %vm4573 = vcmp.eq.s32.totalorder %v4571, %v290
        %vm4574 = vcmp.eq.s32.totalorder %v4571, %v291
        %vm4575 = vcmp.eq.s32.totalorder %v4571, %v292
        %vm4576 = vcmp.eq.s32.totalorder %v4571, %v293
        %vm4577 = vcmp.eq.s32.totalorder %v4571, %v294
        %vm4578 = vcmp.eq.s32.totalorder %v4571, %v295
        %vm4579 = vcmp.eq.s32.totalorder %v4571, %v296
        %vm4580 = vcmp.eq.s32.totalorder %v4571, %v297
        %vm4581 = vcmp.eq.s32.totalorder %v4571, %v298
        %vm4582 = vcmp.eq.s32.totalorder %v4571, %v299
        %vm4583 = vcmp.eq.s32.totalorder %v4571, %v300
        %vm4584 = vcmp.eq.s32.totalorder %v4571, %v301
        %vm4585 = vcmp.eq.s32.totalorder %v4571, %v302
        %vm4586 = vcmp.eq.s32.totalorder %v4571, %v303
        %vm4587 = vcmp.eq.s32.totalorder %v4571, %v304
        %vm4588 = vcmp.eq.s32.totalorder %v4571, %v305
        %vm4589 = vcmp.eq.s32.totalorder %v4571, %v306
        %vm4590 = vcmp.eq.s32.totalorder %v4571, %v307
        %vm4591 = vcmp.eq.s32.totalorder %v4571, %v308
        %vm4592 = vcmp.eq.s32.totalorder %v4571, %v309
        %vm4593 = vcmp.eq.s32.totalorder %v4571, %v310
        %vm4594 = vcmp.eq.s32.totalorder %v4571, %v311
        %vm4595 = vcmp.eq.s32.totalorder %v4571, %v312
        %vm4596 = vcmp.eq.s32.totalorder %v4571, %v313
        %vm4597 = vcmp.eq.s32.totalorder %v4571, %v314
        %vm4598 = vcmp.eq.s32.totalorder %v4571, %v315
        %vm4599 = vcmp.eq.s32.totalorder %v4571, %v316
        %vm4600 = vcmp.eq.s32.totalorder %v4571, %v317
        %vm4601 = vcmp.eq.s32.totalorder %v4571, %v318
        %vm4602 = vcmp.eq.s32.totalorder %v4571, %v319
        %vm4603 = vcmp.eq.s32.totalorder %v4571, %v320
        %v4604 = vlaneseq
        %v4605 = vshrl.u32 %v4604, 7
        %v4606 = vsub.s32 1, %v4605
        %v4607 = vrot.slane %v1632, %v4606
        %v4608 = vsel %vm4572, %v4607, 0.0
        %v4609 = vsel %vm4573, %v4607, 0.0
        %v4610 = vsel %vm4574, %v4607, 0.0
        %v4611 = vsel %vm4575, %v4607, 0.0
        %v4612 = vsel %vm4576, %v4607, 0.0
        %v4613 = vsel %vm4577, %v4607, 0.0
        %v4614 = vsel %vm4578, %v4607, 0.0
        %v4615 = vsel %vm4579, %v4607, 0.0
        %v4616 = vsel %vm4580, %v4607, 0.0
        %v4617 = vsel %vm4581, %v4607, 0.0
        %v4618 = vsel %vm4582, %v4607, 0.0
        %v4619 = vsel %vm4583, %v4607, 0.0
        %v4620 = vsel %vm4584, %v4607, 0.0
        %v4621 = vsel %vm4585, %v4607, 0.0
        %v4622 = vsel %vm4586, %v4607, 0.0
        %v4623 = vsel %vm4587, %v4607, 0.0
        %v4624 = vsel %vm4588, %v4607, 0.0
        %v4625 = vsel %vm4589, %v4607, 0.0
        %v4626 = vsel %vm4590, %v4607, 0.0
        %v4627 = vsel %vm4591, %v4607, 0.0
        %v4628 = vsel %vm4592, %v4607, 0.0
        %v4629 = vsel %vm4593, %v4607, 0.0
        %v4630 = vsel %vm4594, %v4607, 0.0
        %v4631 = vsel %vm4595, %v4607, 0.0
        %v4632 = vsel %vm4596, %v4607, 0.0
        %v4633 = vsel %vm4597, %v4607, 0.0
        %v4634 = vsel %vm4598, %v4607, 0.0
        %v4635 = vsel %vm4599, %v4607, 0.0
        %v4636 = vsel %vm4600, %v4607, 0.0
        %v4637 = vsel %vm4601, %v4607, 0.0
        %v4638 = vsel %vm4602, %v4607, 0.0
        %v4639 = vsel %vm4603, %v4607, 0.0
        %v4640 = vadd.f32 %v4536, %v4608
        %v4641 = vadd.f32 %v4537, %v4609
        %v4642 = vadd.f32 %v4538, %v4610
        %v4643 = vadd.f32 %v4539, %v4611
        %v4644 = vadd.f32 %v4540, %v4612
        %v4645 = vadd.f32 %v4541, %v4613
        %v4646 = vadd.f32 %v4542, %v4614
        %v4647 = vadd.f32 %v4543, %v4615
        %v4648 = vadd.f32 %v4544, %v4616
        %v4649 = vadd.f32 %v4545, %v4617
        %v4650 = vadd.f32 %v4546, %v4618
        %v4651 = vadd.f32 %v4547, %v4619
        %v4652 = vadd.f32 %v4548, %v4620
        %v4653 = vadd.f32 %v4549, %v4621
        %v4654 = vadd.f32 %v4550, %v4622
        %v4655 = vadd.f32 %v4551, %v4623
        %v4656 = vadd.f32 %v4552, %v4624
        %v4657 = vadd.f32 %v4553, %v4625
        %v4658 = vadd.f32 %v4554, %v4626
        %v4659 = vadd.f32 %v4555, %v4627
        %v4660 = vadd.f32 %v4556, %v4628
        %v4661 = vadd.f32 %v4557, %v4629
        %v4662 = vadd.f32 %v4558, %v4630
        %v4663 = vadd.f32 %v4559, %v4631
        %v4664 = vadd.f32 %v4560, %v4632
        %v4665 = vadd.f32 %v4561, %v4633
        %v4666 = vadd.f32 %v4562, %v4634
        %v4667 = vadd.f32 %v4563, %v4635
        %v4668 = vadd.f32 %v4564, %v4636
        %v4669 = vadd.f32 %v4565, %v4637
        %v4670 = vadd.f32 %v4566, %v4638
        %v4671 = vadd.f32 %v4567, %v4639
        %v4672 = vld [vmem:[#allocation8] sm:$0xf]
        %v4673 = vpack.c.bf16 %v4641, %v4640
        %v4674 = vpack.c.bf16 %v4643, %v4642
        %v4675 = vpack.c.bf16 %v4645, %v4644
        %v4676 = vpack.c.bf16 %v4647, %v4646
        %v4677 = vpack.c.bf16 %v4649, %v4648
        %v4678 = vpack.c.bf16 %v4651, %v4650
        %v4679 = vpack.c.bf16 %v4653, %v4652
        %v4680 = vpack.c.bf16 %v4655, %v4654
        %v4681 = vpack.c.bf16 %v4657, %v4656
        %v4682 = vpack.c.bf16 %v4659, %v4658
        %v4683 = vpack.c.bf16 %v4661, %v4660
        %v4684 = vpack.c.bf16 %v4663, %v4662
        %v4685 = vpack.c.bf16 %v4665, %v4664
        %v4686 = vpack.c.bf16 %v4667, %v4666
        %v4687 = vpack.c.bf16 %v4669, %v4668
        %v4688 = vpack.c.bf16 %v4671, %v4670
        %v4691 = vunpack.c.l.s4 1983009808
        %v4692 = vunpack.c.0.s8 %v4691
        %v4693 = vlaneseq
        %v4694 = vshrl.u32 %v4693, 7
        %v4695 = vsub.s32 %v4692, %v4694
        %v4696 = vrot.slane %v4672, %v4695
        %v4697 = vcombine.high %v4696, %v4696
        %4700 = vmatprep.subr.bf16.mxu0 0
        %4701 = vmatpush1.bf16.msra.mxu0 %v4673
        %4702 = vmatprep.subr.bf16.mxu0 0
        %4703 = vmatpush1.bf16.msra.mxu0 %v4674
        %4704 = vmatprep.subr.bf16.mxu0 0
        %4705 = vmatpush1.bf16.msra.mxu0 %v4675
        %4706 = vmatprep.subr.bf16.mxu0 0
        %4707 = vmatpush1.bf16.msra.mxu0 %v4676
        %4708 = vmatprep.subr.bf16.mxu0 0
        %4709 = vmatpush1.bf16.msra.mxu0 %v4677
        %4710 = vmatprep.subr.bf16.mxu0 0
        %4711 = vmatpush1.bf16.msra.mxu0 %v4678
        %4712 = vmatprep.subr.bf16.mxu0 0
        %4713 = vmatpush1.bf16.msra.mxu0 %v4679
        %4714 = vmatprep.subr.bf16.mxu0 0
        %4715 = vmatpush1.bf16.msra.mxu0 %v4680
        %4716 = vmatprep.subr.bf16.mxu0 0
        %4717 = vmatpush1.bf16.msra.mxu0 %v4681
        %4718 = vmatprep.subr.bf16.mxu0 0
        %4719 = vmatpush1.bf16.msra.mxu0 %v4682
        %4720 = vmatprep.subr.bf16.mxu0 0
        %4721 = vmatpush1.bf16.msra.mxu0 %v4683
        %4722 = vmatprep.subr.bf16.mxu0 0
        %4723 = vmatpush1.bf16.msra.mxu0 %v4684
        %4724 = vmatprep.subr.bf16.mxu0 0
        %4725 = vmatpush1.bf16.msra.mxu0 %v4685
        %4726 = vmatprep.subr.bf16.mxu0 0
        %4727 = vmatpush1.bf16.msra.mxu0 %v4686
        %4728 = vmatprep.subr.bf16.mxu0 0
        %4729 = vmatpush1.bf16.msra.mxu0 %v4687
        %4730 = vmatprep.subr.bf16.mxu0 0
        %4731 = vmatpush1.bf16.msra.mxu0 %v4688
        %4732 = vmatprep.mubr.bf16.mxu0 %v4697
        %4733 = vmatmul.mubr.bf16.gmra.mrb[0].mxu0 %v4696
        %v4734 = vpop.f32.mrb[0].mxu0
        %v4735 = vadd.f32 0.0, %v4734
        %v4736 = vpop.f32.mrb[0].mxu0
        %v4737 = vpop.f32.mrb[0].mxu0
        %v4738 = vpop.f32.mrb[0].mxu0
        %4739 = vdwg.mxu0
        %v4740 = vlaneseq
        %v4741 = vshrl.u32 %v4740, 7
        %v4742 = vsub.s32 1, %v4741
        %v4743 = vrot.slane %v2752, %v4742
        %vm4744 = vcmp.eq.s32.totalorder %v4743, %v289
        %vm4745 = vcmp.eq.s32.totalorder %v4743, %v290
        %vm4746 = vcmp.eq.s32.totalorder %v4743, %v291
        %vm4747 = vcmp.eq.s32.totalorder %v4743, %v292
        %vm4748 = vcmp.eq.s32.totalorder %v4743, %v293
        %vm4749 = vcmp.eq.s32.totalorder %v4743, %v294
        %vm4750 = vcmp.eq.s32.totalorder %v4743, %v295
        %vm4751 = vcmp.eq.s32.totalorder %v4743, %v296
        %vm4752 = vcmp.eq.s32.totalorder %v4743, %v297
        %vm4753 = vcmp.eq.s32.totalorder %v4743, %v298
        %vm4754 = vcmp.eq.s32.totalorder %v4743, %v299
        %vm4755 = vcmp.eq.s32.totalorder %v4743, %v300
        %vm4756 = vcmp.eq.s32.totalorder %v4743, %v301
        %vm4757 = vcmp.eq.s32.totalorder %v4743, %v302
        %vm4758 = vcmp.eq.s32.totalorder %v4743, %v303
        %vm4759 = vcmp.eq.s32.totalorder %v4743, %v304
        %vm4760 = vcmp.eq.s32.totalorder %v4743, %v305
        %vm4761 = vcmp.eq.s32.totalorder %v4743, %v306
        %vm4762 = vcmp.eq.s32.totalorder %v4743, %v307
        %vm4763 = vcmp.eq.s32.totalorder %v4743, %v308
        %vm4764 = vcmp.eq.s32.totalorder %v4743, %v309
        %vm4765 = vcmp.eq.s32.totalorder %v4743, %v310
        %vm4766 = vcmp.eq.s32.totalorder %v4743, %v311
        %vm4767 = vcmp.eq.s32.totalorder %v4743, %v312
        %vm4768 = vcmp.eq.s32.totalorder %v4743, %v313
        %vm4769 = vcmp.eq.s32.totalorder %v4743, %v314
        %vm4770 = vcmp.eq.s32.totalorder %v4743, %v315
        %vm4771 = vcmp.eq.s32.totalorder %v4743, %v316
        %vm4772 = vcmp.eq.s32.totalorder %v4743, %v317
        %vm4773 = vcmp.eq.s32.totalorder %v4743, %v318
        %vm4774 = vcmp.eq.s32.totalorder %v4743, %v319
        %vm4775 = vcmp.eq.s32.totalorder %v4743, %v320
        %v4776 = vlaneseq
        %v4777 = vshrl.u32 %v4776, 7
        %v4778 = vsub.s32 1, %v4777
        %v4779 = vrot.slane %v2748, %v4778
        %v4780 = vsel %vm4744, %v4779, 0.0
        %v4781 = vsel %vm4745, %v4779, 0.0
        %v4782 = vsel %vm4746, %v4779, 0.0
        %v4783 = vsel %vm4747, %v4779, 0.0
        %v4784 = vsel %vm4748, %v4779, 0.0
        %v4785 = vsel %vm4749, %v4779, 0.0
        %v4786 = vsel %vm4750, %v4779, 0.0
        %v4787 = vsel %vm4751, %v4779, 0.0
        %v4788 = vsel %vm4752, %v4779, 0.0
        %v4789 = vsel %vm4753, %v4779, 0.0
        %v4790 = vsel %vm4754, %v4779, 0.0
        %v4791 = vsel %vm4755, %v4779, 0.0
        %v4792 = vsel %vm4756, %v4779, 0.0
        %v4793 = vsel %vm4757, %v4779, 0.0
        %v4794 = vsel %vm4758, %v4779, 0.0
        %v4795 = vsel %vm4759, %v4779, 0.0
        %v4796 = vsel %vm4760, %v4779, 0.0
        %v4797 = vsel %vm4761, %v4779, 0.0
        %v4798 = vsel %vm4762, %v4779, 0.0
        %v4799 = vsel %vm4763, %v4779, 0.0
        %v4800 = vsel %vm4764, %v4779, 0.0
        %v4801 = vsel %vm4765, %v4779, 0.0
        %v4802 = vsel %vm4766, %v4779, 0.0
        %v4803 = vsel %vm4767, %v4779, 0.0
        %v4804 = vsel %vm4768, %v4779, 0.0
        %v4805 = vsel %vm4769, %v4779, 0.0
        %v4806 = vsel %vm4770, %v4779, 0.0
        %v4807 = vsel %vm4771, %v4779, 0.0
        %v4808 = vsel %vm4772, %v4779, 0.0
        %v4809 = vsel %vm4773, %v4779, 0.0
        %v4810 = vsel %vm4774, %v4779, 0.0
        %v4811 = vsel %vm4775, %v4779, 0.0
        %v4812 = vadd.f32 %v4780, 0.0
        %v4813 = vadd.f32 %v4781, 0.0
        %v4814 = vadd.f32 %v4782, 0.0
        %v4815 = vadd.f32 %v4783, 0.0
        %v4816 = vadd.f32 %v4784, 0.0
        %v4817 = vadd.f32 %v4785, 0.0
        %v4818 = vadd.f32 %v4786, 0.0
        %v4819 = vadd.f32 %v4787, 0.0
        %v4820 = vadd.f32 %v4788, 0.0
        %v4821 = vadd.f32 %v4789, 0.0
        %v4822 = vadd.f32 %v4790, 0.0
        %v4823 = vadd.f32 %v4791, 0.0
        %v4824 = vadd.f32 %v4792, 0.0
        %v4825 = vadd.f32 %v4793, 0.0
        %v4826 = vadd.f32 %v4794, 0.0
        %v4827 = vadd.f32 %v4795, 0.0
        %v4828 = vadd.f32 %v4796, 0.0
        %v4829 = vadd.f32 %v4797, 0.0
        %v4830 = vadd.f32 %v4798, 0.0
        %v4831 = vadd.f32 %v4799, 0.0
        %v4832 = vadd.f32 %v4800, 0.0
        %v4833 = vadd.f32 %v4801, 0.0
        %v4834 = vadd.f32 %v4802, 0.0
        %v4835 = vadd.f32 %v4803, 0.0
        %v4836 = vadd.f32 %v4804, 0.0
        %v4837 = vadd.f32 %v4805, 0.0
        %v4838 = vadd.f32 %v4806, 0.0
        %v4839 = vadd.f32 %v4807, 0.0
        %v4840 = vadd.f32 %v4808, 0.0
        %v4841 = vadd.f32 %v4809, 0.0
        %v4842 = vadd.f32 %v4810, 0.0
        %v4843 = vadd.f32 %v4811, 0.0
        %v4844 = vlaneseq
        %v4845 = vshrl.u32 %v4844, 7
        %v4846 = vsub.s32 1, %v4845
        %v4847 = vrot.slane %v2862, %v4846
        %vm4848 = vcmp.eq.s32.totalorder %v4847, %v289
        %vm4849 = vcmp.eq.s32.totalorder %v4847, %v290
        %vm4850 = vcmp.eq.s32.totalorder %v4847, %v291
        %vm4851 = vcmp.eq.s32.totalorder %v4847, %v292
        %vm4852 = vcmp.eq.s32.totalorder %v4847, %v293
        %vm4853 = vcmp.eq.s32.totalorder %v4847, %v294
        %vm4854 = vcmp.eq.s32.totalorder %v4847, %v295
        %vm4855 = vcmp.eq.s32.totalorder %v4847, %v296
        %vm4856 = vcmp.eq.s32.totalorder %v4847, %v297
        %vm4857 = vcmp.eq.s32.totalorder %v4847, %v298
        %vm4858 = vcmp.eq.s32.totalorder %v4847, %v299
        %vm4859 = vcmp.eq.s32.totalorder %v4847, %v300
        %vm4860 = vcmp.eq.s32.totalorder %v4847, %v301
        %vm4861 = vcmp.eq.s32.totalorder %v4847, %v302
        %vm4862 = vcmp.eq.s32.totalorder %v4847, %v303
        %vm4863 = vcmp.eq.s32.totalorder %v4847, %v304
        %vm4864 = vcmp.eq.s32.totalorder %v4847, %v305
        %vm4865 = vcmp.eq.s32.totalorder %v4847, %v306
        %vm4866 = vcmp.eq.s32.totalorder %v4847, %v307
        %vm4867 = vcmp.eq.s32.totalorder %v4847, %v308
        %vm4868 = vcmp.eq.s32.totalorder %v4847, %v309
        %vm4869 = vcmp.eq.s32.totalorder %v4847, %v310
        %vm4870 = vcmp.eq.s32.totalorder %v4847, %v311
        %vm4871 = vcmp.eq.s32.totalorder %v4847, %v312
        %vm4872 = vcmp.eq.s32.totalorder %v4847, %v313
        %vm4873 = vcmp.eq.s32.totalorder %v4847, %v314
        %vm4874 = vcmp.eq.s32.totalorder %v4847, %v315
        %vm4875 = vcmp.eq.s32.totalorder %v4847, %v316
        %vm4876 = vcmp.eq.s32.totalorder %v4847, %v317
        %vm4877 = vcmp.eq.s32.totalorder %v4847, %v318
        %vm4878 = vcmp.eq.s32.totalorder %v4847, %v319
        %vm4879 = vcmp.eq.s32.totalorder %v4847, %v320
        %v4880 = vlaneseq
        %v4881 = vshrl.u32 %v4880, 7
        %v4882 = vsub.s32 1, %v4881
        %v4883 = vrot.slane %v2860, %v4882
        %v4884 = vsel %vm4848, %v4883, 0.0
        %v4885 = vsel %vm4849, %v4883, 0.0
        %v4886 = vsel %vm4850, %v4883, 0.0
        %v4887 = vsel %vm4851, %v4883, 0.0
        %v4888 = vsel %vm4852, %v4883, 0.0
        %v4889 = vsel %vm4853, %v4883, 0.0
        %v4890 = vsel %vm4854, %v4883, 0.0
        %v4891 = vsel %vm4855, %v4883, 0.0
        %v4892 = vsel %vm4856, %v4883, 0.0
        %v4893 = vsel %vm4857, %v4883, 0.0
        %v4894 = vsel %vm4858, %v4883, 0.0
        %v4895 = vsel %vm4859, %v4883, 0.0
        %v4896 = vsel %vm4860, %v4883, 0.0
        %v4897 = vsel %vm4861, %v4883, 0.0
        %v4898 = vsel %vm4862, %v4883, 0.0
        %v4899 = vsel %vm4863, %v4883, 0.0
        %v4900 = vsel %vm4864, %v4883, 0.0
        %v4901 = vsel %vm4865, %v4883, 0.0
        %v4902 = vsel %vm4866, %v4883, 0.0
        %v4903 = vsel %vm4867, %v4883, 0.0
        %v4904 = vsel %vm4868, %v4883, 0.0
        %v4905 = vsel %vm4869, %v4883, 0.0
        %v4906 = vsel %vm4870, %v4883, 0.0
        %v4907 = vsel %vm4871, %v4883, 0.0
        %v4908 = vsel %vm4872, %v4883, 0.0
        %v4909 = vsel %vm4873, %v4883, 0.0
        %v4910 = vsel %vm4874, %v4883, 0.0
        %v4911 = vsel %vm4875, %v4883, 0.0
        %v4912 = vsel %vm4876, %v4883, 0.0
        %v4913 = vsel %vm4877, %v4883, 0.0
        %v4914 = vsel %vm4878, %v4883, 0.0
        %v4915 = vsel %vm4879, %v4883, 0.0
        %v4916 = vadd.f32 %v4812, %v4884
        %v4917 = vadd.f32 %v4813, %v4885
        %v4918 = vadd.f32 %v4814, %v4886
        %v4919 = vadd.f32 %v4815, %v4887
        %v4920 = vadd.f32 %v4816, %v4888
        %v4921 = vadd.f32 %v4817, %v4889
        %v4922 = vadd.f32 %v4818, %v4890
        %v4923 = vadd.f32 %v4819, %v4891
        %v4924 = vadd.f32 %v4820, %v4892
        %v4925 = vadd.f32 %v4821, %v4893
        %v4926 = vadd.f32 %v4822, %v4894
        %v4927 = vadd.f32 %v4823, %v4895
        %v4928 = vadd.f32 %v4824, %v4896
        %v4929 = vadd.f32 %v4825, %v4897
        %v4930 = vadd.f32 %v4826, %v4898
        %v4931 = vadd.f32 %v4827, %v4899
        %v4932 = vadd.f32 %v4828, %v4900
        %v4933 = vadd.f32 %v4829, %v4901
        %v4934 = vadd.f32 %v4830, %v4902
        %v4935 = vadd.f32 %v4831, %v4903
        %v4936 = vadd.f32 %v4832, %v4904
        %v4937 = vadd.f32 %v4833, %v4905
        %v4938 = vadd.f32 %v4834, %v4906
        %v4939 = vadd.f32 %v4835, %v4907
        %v4940 = vadd.f32 %v4836, %v4908
        %v4941 = vadd.f32 %v4837, %v4909
        %v4942 = vadd.f32 %v4838, %v4910
        %v4943 = vadd.f32 %v4839, %v4911
        %v4944 = vadd.f32 %v4840, %v4912
        %v4945 = vadd.f32 %v4841, %v4913
        %v4946 = vadd.f32 %v4842, %v4914
        %v4947 = vadd.f32 %v4843, %v4915
        %v4948 = vlaneseq
        %v4949 = vshrl.u32 %v4948, 7
        %v4950 = vsub.s32 1, %v4949
        %v4951 = vrot.slane %v2974, %v4950
        %vm4952 = vcmp.eq.s32.totalorder %v4951, %v289
        %vm4953 = vcmp.eq.s32.totalorder %v4951, %v290
        %vm4954 = vcmp.eq.s32.totalorder %v4951, %v291
        %vm4955 = vcmp.eq.s32.totalorder %v4951, %v292
        %vm4956 = vcmp.eq.s32.totalorder %v4951, %v293
        %vm4957 = vcmp.eq.s32.totalorder %v4951, %v294
        %vm4958 = vcmp.eq.s32.totalorder %v4951, %v295
        %vm4959 = vcmp.eq.s32.totalorder %v4951, %v296
        %vm4960 = vcmp.eq.s32.totalorder %v4951, %v297
        %vm4961 = vcmp.eq.s32.totalorder %v4951, %v298
        %vm4962 = vcmp.eq.s32.totalorder %v4951, %v299
        %vm4963 = vcmp.eq.s32.totalorder %v4951, %v300
        %vm4964 = vcmp.eq.s32.totalorder %v4951, %v301
        %vm4965 = vcmp.eq.s32.totalorder %v4951, %v302
        %vm4966 = vcmp.eq.s32.totalorder %v4951, %v303
        %vm4967 = vcmp.eq.s32.totalorder %v4951, %v304
        %vm4968 = vcmp.eq.s32.totalorder %v4951, %v305
        %vm4969 = vcmp.eq.s32.totalorder %v4951, %v306
        %vm4970 = vcmp.eq.s32.totalorder %v4951, %v307
        %vm4971 = vcmp.eq.s32.totalorder %v4951, %v308
        %vm4972 = vcmp.eq.s32.totalorder %v4951, %v309
        %vm4973 = vcmp.eq.s32.totalorder %v4951, %v310
        %vm4974 = vcmp.eq.s32.totalorder %v4951, %v311
        %vm4975 = vcmp.eq.s32.totalorder %v4951, %v312
        %vm4976 = vcmp.eq.s32.totalorder %v4951, %v313
        %vm4977 = vcmp.eq.s32.totalorder %v4951, %v314
        %vm4978 = vcmp.eq.s32.totalorder %v4951, %v315
        %vm4979 = vcmp.eq.s32.totalorder %v4951, %v316
        %vm4980 = vcmp.eq.s32.totalorder %v4951, %v317
        %vm4981 = vcmp.eq.s32.totalorder %v4951, %v318
        %vm4982 = vcmp.eq.s32.totalorder %v4951, %v319
        %vm4983 = vcmp.eq.s32.totalorder %v4951, %v320
        %v4984 = vlaneseq
        %v4985 = vshrl.u32 %v4984, 7
        %v4986 = vsub.s32 1, %v4985
        %v4987 = vrot.slane %v2970, %v4986
        %v4988 = vsel %vm4952, %v4987, 0.0
        %v4989 = vsel %vm4953, %v4987, 0.0
        %v4990 = vsel %vm4954, %v4987, 0.0
        %v4991 = vsel %vm4955, %v4987, 0.0
        %v4992 = vsel %vm4956, %v4987, 0.0
        %v4993 = vsel %vm4957, %v4987, 0.0
        %v4994 = vsel %vm4958, %v4987, 0.0
        %v4995 = vsel %vm4959, %v4987, 0.0
        %v4996 = vsel %vm4960, %v4987, 0.0
        %v4997 = vsel %vm4961, %v4987, 0.0
        %v4998 = vsel %vm4962, %v4987, 0.0
        %v4999 = vsel %vm4963, %v4987, 0.0
        %v5000 = vsel %vm4964, %v4987, 0.0
        %v5001 = vsel %vm4965, %v4987, 0.0
        %v5002 = vsel %vm4966, %v4987, 0.0
        %v5003 = vsel %vm4967, %v4987, 0.0
        %v5004 = vsel %vm4968, %v4987, 0.0
        %v5005 = vsel %vm4969, %v4987, 0.0
        %v5006 = vsel %vm4970, %v4987, 0.0
        %v5007 = vsel %vm4971, %v4987, 0.0
        %v5008 = vsel %vm4972, %v4987, 0.0
        %v5009 = vsel %vm4973, %v4987, 0.0
        %v5010 = vsel %vm4974, %v4987, 0.0
        %v5011 = vsel %vm4975, %v4987, 0.0
        %v5012 = vsel %vm4976, %v4987, 0.0
        %v5013 = vsel %vm4977, %v4987, 0.0
        %v5014 = vsel %vm4978, %v4987, 0.0
        %v5015 = vsel %vm4979, %v4987, 0.0
        %v5016 = vsel %vm4980, %v4987, 0.0
        %v5017 = vsel %vm4981, %v4987, 0.0
        %v5018 = vsel %vm4982, %v4987, 0.0
        %v5019 = vsel %vm4983, %v4987, 0.0
        %v5020 = vadd.f32 %v4916, %v4988
        %v5021 = vadd.f32 %v4917, %v4989
        %v5022 = vadd.f32 %v4918, %v4990
        %v5023 = vadd.f32 %v4919, %v4991
        %v5024 = vadd.f32 %v4920, %v4992
        %v5025 = vadd.f32 %v4921, %v4993
        %v5026 = vadd.f32 %v4922, %v4994
        %v5027 = vadd.f32 %v4923, %v4995
        %v5028 = vadd.f32 %v4924, %v4996
        %v5029 = vadd.f32 %v4925, %v4997
        %v5030 = vadd.f32 %v4926, %v4998
        %v5031 = vadd.f32 %v4927, %v4999
        %v5032 = vadd.f32 %v4928, %v5000
        %v5033 = vadd.f32 %v4929, %v5001
        %v5034 = vadd.f32 %v4930, %v5002
        %v5035 = vadd.f32 %v4931, %v5003
        %v5036 = vadd.f32 %v4932, %v5004
        %v5037 = vadd.f32 %v4933, %v5005
        %v5038 = vadd.f32 %v4934, %v5006
        %v5039 = vadd.f32 %v4935, %v5007
        %v5040 = vadd.f32 %v4936, %v5008
        %v5041 = vadd.f32 %v4937, %v5009
        %v5042 = vadd.f32 %v4938, %v5010
        %v5043 = vadd.f32 %v4939, %v5011
        %v5044 = vadd.f32 %v4940, %v5012
        %v5045 = vadd.f32 %v4941, %v5013
        %v5046 = vadd.f32 %v4942, %v5014
        %v5047 = vadd.f32 %v4943, %v5015
        %v5048 = vadd.f32 %v4944, %v5016
        %v5049 = vadd.f32 %v4945, %v5017
        %v5050 = vadd.f32 %v4946, %v5018
        %v5051 = vadd.f32 %v4947, %v5019
        %v5052 = vlaneseq
        %v5053 = vshrl.u32 %v5052, 7
        %v5054 = vsub.s32 1, %v5053
        %v5055 = vrot.slane %v3081, %v5054
        %vm5056 = vcmp.eq.s32.totalorder %v5055, %v289
        %vm5057 = vcmp.eq.s32.totalorder %v5055, %v290
        %vm5058 = vcmp.eq.s32.totalorder %v5055, %v291
        %vm5059 = vcmp.eq.s32.totalorder %v5055, %v292
        %vm5060 = vcmp.eq.s32.totalorder %v5055, %v293
        %vm5061 = vcmp.eq.s32.totalorder %v5055, %v294
        %vm5062 = vcmp.eq.s32.totalorder %v5055, %v295
        %vm5063 = vcmp.eq.s32.totalorder %v5055, %v296
        %vm5064 = vcmp.eq.s32.totalorder %v5055, %v297
        %vm5065 = vcmp.eq.s32.totalorder %v5055, %v298
        %vm5066 = vcmp.eq.s32.totalorder %v5055, %v299
        %vm5067 = vcmp.eq.s32.totalorder %v5055, %v300
        %vm5068 = vcmp.eq.s32.totalorder %v5055, %v301
        %vm5069 = vcmp.eq.s32.totalorder %v5055, %v302
        %vm5070 = vcmp.eq.s32.totalorder %v5055, %v303
        %vm5071 = vcmp.eq.s32.totalorder %v5055, %v304
        %vm5072 = vcmp.eq.s32.totalorder %v5055, %v305
        %vm5073 = vcmp.eq.s32.totalorder %v5055, %v306
        %vm5074 = vcmp.eq.s32.totalorder %v5055, %v307
        %vm5075 = vcmp.eq.s32.totalorder %v5055, %v308
        %vm5076 = vcmp.eq.s32.totalorder %v5055, %v309
        %vm5077 = vcmp.eq.s32.totalorder %v5055, %v310
        %vm5078 = vcmp.eq.s32.totalorder %v5055, %v311
        %vm5079 = vcmp.eq.s32.totalorder %v5055, %v312
        %vm5080 = vcmp.eq.s32.totalorder %v5055, %v313
        %vm5081 = vcmp.eq.s32.totalorder %v5055, %v314
        %vm5082 = vcmp.eq.s32.totalorder %v5055, %v315
        %vm5083 = vcmp.eq.s32.totalorder %v5055, %v316
        %vm5084 = vcmp.eq.s32.totalorder %v5055, %v317
        %vm5085 = vcmp.eq.s32.totalorder %v5055, %v318
        %vm5086 = vcmp.eq.s32.totalorder %v5055, %v319
        %vm5087 = vcmp.eq.s32.totalorder %v5055, %v320
        %v5088 = vlaneseq
        %v5089 = vshrl.u32 %v5088, 7
        %v5090 = vsub.s32 1, %v5089
        %v5091 = vrot.slane %v3079, %v5090
        %v5092 = vsel %vm5056, %v5091, 0.0
        %v5093 = vsel %vm5057, %v5091, 0.0
        %v5094 = vsel %vm5058, %v5091, 0.0
        %v5095 = vsel %vm5059, %v5091, 0.0
        %v5096 = vsel %vm5060, %v5091, 0.0
        %v5097 = vsel %vm5061, %v5091, 0.0
        %v5098 = vsel %vm5062, %v5091, 0.0
        %v5099 = vsel %vm5063, %v5091, 0.0
        %v5100 = vsel %vm5064, %v5091, 0.0
        %v5101 = vsel %vm5065, %v5091, 0.0
        %v5102 = vsel %vm5066, %v5091, 0.0
        %v5103 = vsel %vm5067, %v5091, 0.0
        %v5104 = vsel %vm5068, %v5091, 0.0
        %v5105 = vsel %vm5069, %v5091, 0.0
        %v5106 = vsel %vm5070, %v5091, 0.0
        %v5107 = vsel %vm5071, %v5091, 0.0
        %v5108 = vsel %vm5072, %v5091, 0.0
        %v5109 = vsel %vm5073, %v5091, 0.0
        %v5110 = vsel %vm5074, %v5091, 0.0
        %v5111 = vsel %vm5075, %v5091, 0.0
        %v5112 = vsel %vm5076, %v5091, 0.0
        %v5113 = vsel %vm5077, %v5091, 0.0
        %v5114 = vsel %vm5078, %v5091, 0.0
        %v5115 = vsel %vm5079, %v5091, 0.0
        %v5116 = vsel %vm5080, %v5091, 0.0
        %v5117 = vsel %vm5081, %v5091, 0.0
        %v5118 = vsel %vm5082, %v5091, 0.0
        %v5119 = vsel %vm5083, %v5091, 0.0
        %v5120 = vsel %vm5084, %v5091, 0.0
        %v5121 = vsel %vm5085, %v5091, 0.0
        %v5122 = vsel %vm5086, %v5091, 0.0
        %v5123 = vsel %vm5087, %v5091, 0.0
        %v5124 = vadd.f32 %v5020, %v5092
        %v5125 = vadd.f32 %v5021, %v5093
        %v5126 = vadd.f32 %v5022, %v5094
        %v5127 = vadd.f32 %v5023, %v5095
        %v5128 = vadd.f32 %v5024, %v5096
        %v5129 = vadd.f32 %v5025, %v5097
        %v5130 = vadd.f32 %v5026, %v5098
        %v5131 = vadd.f32 %v5027, %v5099
        %v5132 = vadd.f32 %v5028, %v5100
        %v5133 = vadd.f32 %v5029, %v5101
        %v5134 = vadd.f32 %v5030, %v5102
        %v5135 = vadd.f32 %v5031, %v5103
        %v5136 = vadd.f32 %v5032, %v5104
        %v5137 = vadd.f32 %v5033, %v5105
        %v5138 = vadd.f32 %v5034, %v5106
        %v5139 = vadd.f32 %v5035, %v5107
        %v5140 = vadd.f32 %v5036, %v5108
        %v5141 = vadd.f32 %v5037, %v5109
        %v5142 = vadd.f32 %v5038, %v5110
        %v5143 = vadd.f32 %v5039, %v5111
        %v5144 = vadd.f32 %v5040, %v5112
        %v5145 = vadd.f32 %v5041, %v5113
        %v5146 = vadd.f32 %v5042, %v5114
        %v5147 = vadd.f32 %v5043, %v5115
        %v5148 = vadd.f32 %v5044, %v5116
        %v5149 = vadd.f32 %v5045, %v5117
        %v5150 = vadd.f32 %v5046, %v5118
        %v5151 = vadd.f32 %v5047, %v5119
        %v5152 = vadd.f32 %v5048, %v5120
        %v5153 = vadd.f32 %v5049, %v5121
        %v5154 = vadd.f32 %v5050, %v5122
        %v5155 = vadd.f32 %v5051, %v5123
        %s5156 = scalar_lea.vmem [#allocation8], 4
        %v5157 = vld [vmem:[%s5156] sm:$0xf]
        %v5158 = vpack.c.bf16 %v5125, %v5124
        %v5159 = vpack.c.bf16 %v5127, %v5126
        %v5160 = vpack.c.bf16 %v5129, %v5128
        %v5161 = vpack.c.bf16 %v5131, %v5130
        %v5162 = vpack.c.bf16 %v5133, %v5132
        %v5163 = vpack.c.bf16 %v5135, %v5134
        %v5164 = vpack.c.bf16 %v5137, %v5136
        %v5165 = vpack.c.bf16 %v5139, %v5138
        %v5166 = vpack.c.bf16 %v5141, %v5140
        %v5167 = vpack.c.bf16 %v5143, %v5142
        %v5168 = vpack.c.bf16 %v5145, %v5144
        %v5169 = vpack.c.bf16 %v5147, %v5146
        %v5170 = vpack.c.bf16 %v5149, %v5148
        %v5171 = vpack.c.bf16 %v5151, %v5150
        %v5172 = vpack.c.bf16 %v5153, %v5152
        %v5173 = vpack.c.bf16 %v5155, %v5154
        %v5176 = vunpack.c.l.s4 1983009808
        %v5177 = vunpack.c.0.s8 %v5176
        %v5178 = vlaneseq
        %v5179 = vshrl.u32 %v5178, 7
        %v5180 = vsub.s32 %v5177, %v5179
        %v5181 = vrot.slane %v5157, %v5180
        %v5182 = vcombine.high %v5181, %v5181
        %5185 = vmatprep.subr.bf16.mxu0 0
        %5186 = vmatpush1.bf16.msra.mxu0 %v5158
        %5187 = vmatprep.subr.bf16.mxu0 0
        %5188 = vmatpush1.bf16.msra.mxu0 %v5159
        %5189 = vmatprep.subr.bf16.mxu0 0
        %5190 = vmatpush1.bf16.msra.mxu0 %v5160
        %5191 = vmatprep.subr.bf16.mxu0 0
        %5192 = vmatpush1.bf16.msra.mxu0 %v5161
        %5193 = vmatprep.subr.bf16.mxu0 0
        %5194 = vmatpush1.bf16.msra.mxu0 %v5162
        %5195 = vmatprep.subr.bf16.mxu0 0
        %5196 = vmatpush1.bf16.msra.mxu0 %v5163
        %5197 = vmatprep.subr.bf16.mxu0 0
        %5198 = vmatpush1.bf16.msra.mxu0 %v5164
        %5199 = vmatprep.subr.bf16.mxu0 0
        %5200 = vmatpush1.bf16.msra.mxu0 %v5165
        %5201 = vmatprep.subr.bf16.mxu0 0
        %5202 = vmatpush1.bf16.msra.mxu0 %v5166
        %5203 = vmatprep.subr.bf16.mxu0 0
        %5204 = vmatpush1.bf16.msra.mxu0 %v5167
        %5205 = vmatprep.subr.bf16.mxu0 0
        %5206 = vmatpush1.bf16.msra.mxu0 %v5168
        %5207 = vmatprep.subr.bf16.mxu0 0
        %5208 = vmatpush1.bf16.msra.mxu0 %v5169
        %5209 = vmatprep.subr.bf16.mxu0 0
        %5210 = vmatpush1.bf16.msra.mxu0 %v5170
        %5211 = vmatprep.subr.bf16.mxu0 0
        %5212 = vmatpush1.bf16.msra.mxu0 %v5171
        %5213 = vmatprep.subr.bf16.mxu0 0
        %5214 = vmatpush1.bf16.msra.mxu0 %v5172
        %5215 = vmatprep.subr.bf16.mxu0 0
        %5216 = vmatpush1.bf16.msra.mxu0 %v5173
        %5217 = vmatprep.mubr.bf16.mxu0 %v5182
        %5218 = vmatmul.mubr.bf16.gmra.mrb[0].mxu0 %v5181
        %v5219 = vpop.f32.mrb[0].mxu0
        %v5220 = vadd.f32 0.0, %v5219
        %v5221 = vpop.f32.mrb[0].mxu0
        %v5222 = vpop.f32.mrb[0].mxu0
        %v5223 = vpop.f32.mrb[0].mxu0
        %5224 = vdwg.mxu0
        %v5226 = vrot.slane %v2237, 4
        %v5229 = vrot.slane %v3250, 4
        %v5232 = vrot.slane %v4251, 4
        %v5235 = vrot.slane %v5220, 4
        %vm5237 = vcmask 1043456
        %v5238 = vsel %vm5237, %v1276, %v5226
        %v5239 = vsel %vm5237, %v2733, %v5229
        %v5240 = vsel %vm5237, %v3748, %v5232
        %v5241 = vsel %vm5237, %v4735, %v5235
        %5242 = vst [vmem:[%s283] sm:$0xff] %v5238
        %5243 = vst [vmem:[%s283 + $0x8] sm:$0xff] %v5239
        %5244 = vst [vmem:[%s283 + $0x10] sm:$0xff] %v5240
        %5245 = vst [vmem:[%s283 + $0x18] sm:$0xff] %v5241
        %s5246 = sand.u32 %s142, 1
        %s5247 = scalar_lea.sflag [#allocation4], %s5246
        %s5248 = sand.u32 %s142, 1
        %s5249 = smul.addr %s5248, 32
        %s5250 = scalar_lea.vmem [#allocation10], %s5249
        // Predicated region
        $region57: #{tpu_custom_call.1} parent=39 // pred_check
          %p5251 = pneg %p152
        $region58: #{tpu_custom_call.1} parent=39 // pred_check_branch
          %5253 = sbr.rel (%p5251) target = $region60
        $region59: #{tpu_custom_call.1} parent=39 // pred_region
          %s5255 = ssub.s32 512, 512
          %5256 = vsyncadd %s5247, %s5255
          %s5257 = smul.addr %s24, 128
          %s5258 = scalar_lea.hbm %s5, %s5257
          %s5259 = sshll.u32 %s5250, 4
          %s5260 = int_to_ptr.vmem [resolvable:$true] %s5259
          %5265 = dma.vmem_to_hbm [thread:$0]  %s5260, 512, %s5258, %s5247, 128, 256, 8
        $region60: #{tpu_custom_call.1} parent=39 // pred_fallthru
          _
      $region40: #{tpu_custom_call.1} parent=5 // pred_fallthru
        _
      %p5266 = scmp.le.s32.totalorder 2, %s19
      // Predicated region
      $region61: #{tpu_custom_call.1} parent=5 // pred_check
        %p5267 = pneg %p5266
      $region62: #{tpu_custom_call.1} parent=5 // pred_check_branch
        %5269 = sbr.rel (%p5267) target = $region64
      $region63: #{tpu_custom_call.1} parent=5 // pred_region
        %s5270 = ssub.s32 %s19, 2
        // Predicated region
        $region65: #{tpu_custom_call.1} parent=63 // pred_check
          %p5271 = pneg %p158
        $region66: #{tpu_custom_call.1} parent=63 // pred_check_branch
          %5273 = sbr.rel (%p5271) target = $region68
        $region67: #{tpu_custom_call.1} parent=63 // pred_region
          %s5274 = sand.u32 %s143, 1
          %s5275 = scalar_lea.sflag [#allocation4], %s5274
          %s5276 = sand.u32 %s143, 1
          %s5277 = smul.addr %s5276, 32
          %s5278 = scalar_lea.vmem [#allocation10], %s5277
          %5279 = dma.done %s5275, 512
        $region68: #{tpu_custom_call.1} parent=63 // pred_fallthru
          _
      $region64: #{tpu_custom_call.1} parent=5 // pred_fallthru
        _
    $region6: #{tpu_custom_call.1} parent=1 // loop_footer
      %s23 = sadd.s32 1, %s19
    $region7: #{tpu_custom_call.1} parent=1 // loop_footer_branch
      %18 = sbr.rel target = $region3
    $region8: #{tpu_custom_call.1} parent=1 // loop_exit
      _
    %5280 = vsyncpa [#allocation3], 1
    %s5281 = scalar_lea.sflag [#allocation3], 1
    %5282 = vsyncpa %s5281, 1
    %5283 = vsyncpa [#allocation6], 1
    %5284 = vsyncpa [#allocation9], 1
    %5285 = vsyncpa [#allocation4], 1
    %s5286 = scalar_lea.sflag [#allocation4], 1
    %5287 = vsyncpa %s5286, 1

</llo_original>
